<compile_context>
chip_gen: v5e
topology: v5e:2x2
jax: 0.10.0
libtpu: 0.0.40
codegen_flags: <defaults>
</compile_context>

<pallas_src>
import math
from functools import partial

import jax
import jax.numpy as jnp
from jax import lax
from jax.experimental import pallas as pl
from jax.experimental.pallas import tpu as pltpu


# --------------------------------------------------------------------------
# helpers
# --------------------------------------------------------------------------
def _row_tile(m, target=512):
    """Largest row tile <= target that evenly divides m."""
    for t in (target, 256, 128, 64, 32, 16, 8):
        if t <= m and m % t == 0:
            return t
    return m


def _query_tile(L, cdtype):
    """Query-row tile for attention: bf16 blocks are half-sized -> allow 32."""
    if jnp.dtype(cdtype) == jnp.dtype(jnp.bfloat16):
        targets = (32, 16, 8)
    else:
        targets = (16, 8)
    for t in targets:
        if t <= L and L % t == 0:
            return t
    return L


def _make_mdot(cdtype):
    """MXU dot: cast inputs to the compute dtype, accumulate in f32.

    float32 mode pins precision=HIGHEST (used only for strict verification);
    bf16 mode feeds the MXU natively (single pass) with f32 accumulation.
    """
    cdtype = jnp.dtype(cdtype)
    prec = (jax.lax.Precision.HIGHEST if cdtype == jnp.float32
            else jax.lax.Precision.DEFAULT)

    def mdot(a, b):
        return jnp.dot(a.astype(cdtype), b.astype(cdtype),
                       preferred_element_type=jnp.float32, precision=prec)
    return mdot


_VMEM_LIMIT = 64 * 1024 * 1024   # safe on v5e/v6e/v7x, above the scoped defaults


# --------------------------------------------------------------------------
# Row-tiled linear kernel: y = x @ W + b   (fused q|k|v projection)
# --------------------------------------------------------------------------
def _linear_kernel(x_ref, w_ref, b_ref, o_ref, *, mdot):
    o_ref[...] = (mdot(x_ref[...], w_ref[...]) + b_ref[...]).astype(o_ref.dtype)


def tiled_linear(x, w, b, out_dtype, mdot):
    M, K = x.shape
    N = w.shape[-1]
    tm = _row_tile(M)
    return pl.pallas_call(
        partial(_linear_kernel, mdot=mdot),
        out_shape=jax.ShapeDtypeStruct((M, N), out_dtype),
        grid=(M // tm,),
        in_specs=[pl.BlockSpec((tm, K), lambda i: (i, 0)),
                  pl.BlockSpec((K, N), lambda i: (0, 0)),
                  pl.BlockSpec((1, N), lambda i: (0, 0))],
        out_specs=pl.BlockSpec((tm, N), lambda i: (i, 0)),
        compiler_params=pltpu.CompilerParams(
            dimension_semantics=("parallel",)),
    )(x, w, b.reshape(1, N))


# --------------------------------------------------------------------------
# Fused edge-pipeline + attention + output-projection kernel.
# Per grid step (batch b, query-row tile i of size TI):
#   edge  = ReLU(LN(nx2d_tile @ Wpre + bpre))              (computed in VMEM)
#   efq|efk = edge @ Wef + bef                             (never hits HBM)
#   s_h[i,j,h] = (sum_{c in h} q[i,c]k[j,c] + efk[i,j,c]q[j,c]) * scale
#                (head-compact via (C,H) one-hot MXU matmul)
#   w_h = softmax_j(s_h)  on (TI, L, H)
#   attn[i,c] = sum_j w_h[i,j,h(c)] v[j,c] + s_h[i,j,h(c)] efq[i,j,c]
#               (expanded back to lane-dense C via the (H,C) one-hot)
#   out = attn @ Wfc + bfc   (fc fused into the epilogue)
# --------------------------------------------------------------------------
def _attn_edge_kernel(oh_ch_ref, oh_hc_ref, qkv_ref, x2d_ref,
                      wpre_ref, bpre_ref, gpre_ref, bepre_ref,
                      wef_ref, bef_ref, wfc_ref, bfc_ref,
                      o_ref, *, scale, mdot, approx):
    ti, L, d2p = x2d_ref.shape
    C = wfc_ref.shape[0]
    H = oh_ch_ref.shape[1]

    # ---- edge pipeline for this (b, i-tile): Linear -> LN -> ReLU -> Linear(2C)
    xe = x2d_ref[...].reshape(ti * L, d2p)
    h = mdot(xe, wpre_ref[...]) + bpre_ref[...]                     # (ti*L, C) f32
    mu = jnp.mean(h, axis=-1, keepdims=True)
    var = jnp.mean((h - mu) ** 2, axis=-1, keepdims=True)
    h = (h - mu) * lax.rsqrt(var + 1e-5) * gpre_ref[...] + bepre_ref[...]
    edge = jnp.maximum(h, 0.0)
    ef = mdot(edge, wef_ref[...]) + bef_ref[...]                    # (ti*L, 2C) f32
    efq = ef[:, :C].reshape(ti, L, C)
    efk = ef[:, C:].reshape(ti, L, C)

    # ---- q / k / v, lane-dense C (no head transposes)
    qkv = qkv_ref[...]                                              # (L, 3C)
    q_all = qkv[:, :C].astype(jnp.float32)                          # (L, C)
    k = qkv[:, C:2 * C].astype(jnp.float32)                         # (L, C)
    v = qkv[:, 2 * C:].astype(jnp.float32)                          # (L, C)
    i0 = pl.multiple_of(pl.program_id(1) * ti, ti)
    qt = qkv_ref[pl.ds(i0, ti), :][:, :C].astype(jnp.float32)       # (ti, C)

    # ---- head-compact scores: reduce C -> H with the (C, H) one-hot (MXU)
    u = qt[:, None, :] * k[None, :, :]                              # (ti, L, C)
    s_h = mdot(u.reshape(ti * L, C), oh_ch_ref[...])                # (ti*L, H)
    t = efk * q_all[None, :, :]                                     # (ti, L, C)
    s_h = s_h + mdot(t.reshape(ti * L, C), oh_ch_ref[...])
    s_h = (s_h * scale).reshape(ti, L, H)                           # scaled scores

    # ---- per-head softmax over keys (16x less exp / max / sum work)
    mmax = jnp.max(s_h, axis=1, keepdims=True)                      # (ti, 1, H)
    e = jnp.exp(s_h - mmax)
    denom = jnp.sum(e, axis=1, keepdims=True)                       # (ti, 1, H)
    w_h = e * pl.reciprocal(denom, approx=approx)                   # (ti, L, H)

    # ---- expand back to lane-dense C via (H, C) one-hot, combine, fused fc
    w_c = mdot(w_h.reshape(ti * L, H), oh_hc_ref[...]).reshape(ti, L, C)
    s_c = mdot(s_h.reshape(ti * L, H), oh_hc_ref[...]).reshape(ti, L, C)
    attn = jnp.sum(w_c * v[None, :, :] + s_c * efq, axis=1)         # (ti, C)
    o_ref[...] = (mdot(attn, wfc_ref[...]) + bfc_ref[...]).astype(o_ref.dtype)


def attention_edge(qkv, nx2d, pp, nhead, cdtype):
    B, L, C3 = qkv.shape
    C = C3 // 3
    d2p = nx2d.shape[-1]
    dh = C // nhead
    ti = _query_tile(L, cdtype)
    scale = 1.0 / math.sqrt(dh)
    mdot = _make_mdot(cdtype)
    approx = jnp.dtype(cdtype) != jnp.float32

    # one-hot head maps: (C, H) reduce, (H, C) expand
    oh_ch = jnp.repeat(jnp.eye(nhead, dtype=jnp.float32), dh, axis=0).astype(cdtype)
    oh_hc = oh_ch.T

    return pl.pallas_call(
        partial(_attn_edge_kernel, scale=scale, mdot=mdot, approx=approx),
        out_shape=jax.ShapeDtypeStruct((B, L, C), jnp.float32),
        grid=(B, L // ti),
        in_specs=[
            pl.BlockSpec((C, nhead), lambda b, i: (0, 0)),               # one-hot C->H
            pl.BlockSpec((nhead, C), lambda b, i: (0, 0)),               # one-hot H->C
            pl.BlockSpec((None, L, 3 * C), lambda b, i: (b, 0, 0)),      # q|k|v rows
            pl.BlockSpec((None, ti, L, d2p), lambda b, i: (b, i, 0, 0)), # nx2d rows
            pl.BlockSpec((d2p, C), lambda b, i: (0, 0)),                 # wpre
            pl.BlockSpec((1, C), lambda b, i: (0, 0)),                   # bpre
            pl.BlockSpec((1, C), lambda b, i: (0, 0)),                   # gpre
            pl.BlockSpec((1, C), lambda b, i: (0, 0)),                   # bepre
            pl.BlockSpec((C, 2 * C), lambda b, i: (0, 0)),               # wef (efq|efk)
            pl.BlockSpec((1, 2 * C), lambda b, i: (0, 0)),               # bef
            pl.BlockSpec((C, C), lambda b, i: (0, 0)),                   # wfc
            pl.BlockSpec((1, C), lambda b, i: (0, 0)),                   # bfc
        ],
        out_specs=pl.BlockSpec((None, ti, C), lambda b, i: (b, i, 0)),
        compiler_params=pltpu.CompilerParams(
            dimension_semantics=("parallel", "parallel"),
            vmem_limit_bytes=_VMEM_LIMIT),
    )(oh_ch, oh_hc, qkv, nx2d,
      pp['wpre'], pp['bpre'].reshape(1, C), pp['gpre'].reshape(1, C),
      pp['bepre'].reshape(1, C), pp['wef'], pp['bef'].reshape(1, 2 * C),
      pp['wfc'], pp['bfc'].reshape(1, C))


# --------------------------------------------------------------------------
# FeedForward kernel (row-tiled over M = B*L):
#   residual + LN1 + (Linear->ReLU->Linear) + residual + LN2
# --------------------------------------------------------------------------
def _ffn_kernel(x_ref, br_ref, w1_ref, b1_ref, w2_ref, b2_ref,
                g1_ref, be1_ref, g2_ref, be2_ref, o_ref, *, mdot):
    def ln(h, g, b):
        mu = jnp.mean(h, axis=-1, keepdims=True)
        var = jnp.mean((h - mu) ** 2, axis=-1, keepdims=True)
        return (h - mu) * lax.rsqrt(var + 1e-5) * g + b

    x = x_ref[...] + br_ref[...]
    x = ln(x, g1_ref[...], be1_ref[...])
    hmid = jnp.maximum(mdot(x, w1_ref[...]) + b1_ref[...], 0.0)
    y = mdot(hmid, w2_ref[...]) + b2_ref[...]
    o_ref[...] = ln(x + y, g2_ref[...], be2_ref[...]).astype(o_ref.dtype)


def feed_forward(x3d, branch, pp, mdot):
    B, L, C = x3d.shape
    F = pp['w1'].shape[-1]
    M = B * L
    tm = _row_tile(M)
    out = pl.pallas_call(
        partial(_ffn_kernel, mdot=mdot),
        out_shape=jax.ShapeDtypeStruct((M, C), jnp.float32),
        grid=(M // tm,),
        in_specs=[pl.BlockSpec((tm, C), lambda i: (i, 0)),
                  pl.BlockSpec((tm, C), lambda i: (i, 0)),
                  pl.BlockSpec((C, F), lambda i: (0, 0)),
                  pl.BlockSpec((1, F), lambda i: (0, 0)),
                  pl.BlockSpec((F, C), lambda i: (0, 0)),
                  pl.BlockSpec((1, C), lambda i: (0, 0)),
                  pl.BlockSpec((1, C), lambda i: (0, 0)),
                  pl.BlockSpec((1, C), lambda i: (0, 0)),
                  pl.BlockSpec((1, C), lambda i: (0, 0)),
                  pl.BlockSpec((1, C), lambda i: (0, 0))],
        out_specs=pl.BlockSpec((tm, C), lambda i: (i, 0)),
        compiler_params=pltpu.CompilerParams(
            dimension_semantics=("parallel",)),
    )(x3d.reshape(M, C), branch.reshape(M, C),
      pp['w1'], pp['b1'].reshape(1, F), pp['w2'], pp['b2'].reshape(1, C),
      pp['g1'].reshape(1, C), pp['be1'].reshape(1, C),
      pp['g2'].reshape(1, C), pp['be2'].reshape(1, C))
    return out.reshape(B, L, C)


# --------------------------------------------------------------------------
# Parameter preparation (runs ONCE, outside the jitted forward):
# pre-concatenate fused weights and pre-cast MXU operands to the compute dtype.
# --------------------------------------------------------------------------
def prepare_params(p, compute_dtype):
    cd = jnp.dtype(compute_dtype)
    return dict(
        wqkv=jnp.concatenate([p['wq'], p['wk'], p['wv']], axis=1).astype(cd),
        bqkv=jnp.concatenate([p['bq'], p['bk'], p['bv']], axis=0),
        wpre=p['wpre'].astype(cd), bpre=p['bpre'],
        gpre=p['gpre'], bepre=p['bepre'],
        wef=jnp.concatenate([p['wefq'], p['wefk']], axis=1).astype(cd),
        bef=jnp.concatenate([p['befq'], p['befk']], axis=0),
        wfc=p['wfc'].astype(cd), bfc=p['bfc'],
        w1=p['w1'].astype(cd), b1=p['b1'],
        w2=p['w2'].astype(cd), b2=p['b2'],
        g1=p['g1'], be1=p['be1'], g2=p['g2'], be2=p['be2'],
    )


# --------------------------------------------------------------------------
# Full layer forward
# --------------------------------------------------------------------------
def x3d_transformer_layer(pp, x2d, x3d, pt, pr, *, nhead,
                          compute_dtype=jnp.bfloat16):
    B, L, C = x3d.shape
    cdtype = jnp.dtype(compute_dtype)
    mdot = _make_mdot(cdtype)

    # pose feature: tiny 3-vector math, kept in plain JAX glue (not a hot path)
    diff = pt[:, None, :, :] - pt[:, :, None, :]                    # (B,L,L,3)
    pose = jnp.einsum('bimn,bijn->bijm', pr, diff) / 10.0
    nx2d = jnp.concatenate([x2d, pose, jnp.swapaxes(pose, 1, 2)],
                           axis=-1).astype(cdtype)                  # (B,L,L,d2p)

    # fused q|k|v projection (single Pallas call, x3d read once)
    qkv = tiled_linear(x3d.reshape(B * L, C), pp['wqkv'], pp['bqkv'],
                       out_dtype=cdtype, mdot=mdot).reshape(B, L, 3 * C)

    # fused edge pipeline + attention + output projection (one kernel,
    # ef never materialized in HBM)
    branch = attention_edge(qkv, nx2d, pp, nhead, cdtype)           # (B,L,C) f32

    # FFN with residuals + layer norms
    x3d_new = feed_forward(x3d, branch, pp, mdot)
    return x2d, x3d_new


# --------------------------------------------------------------------------
# Pure-JAX reference (mirrors the PyTorch forward exactly)
# --------------------------------------------------------------------------
def reference_forward(p, x2d, x3d, pt, pr, nhead):
    B, L, C = x3d.shape
    d = C // nhead

    def lin(x, w, b): return x @ w + b

    def ln(x, g, b):
        mu = x.mean(-1, keepdims=True)
        var = ((x - mu) ** 2).mean(-1, keepdims=True)
        return (x - mu) / jnp.sqrt(var + 1e-5) * g + b

    def heads(x):
        return jnp.swapaxes(x.reshape(*x.shape[:-1], nhead, d), -3, -2)

    diff = pt[:, None, :, :] - pt[:, :, None, :]
    pose = jnp.einsum('bimn,bijn->bijm', pr, diff) / 10.0
    nx2d = jnp.concatenate([x2d, pose, jnp.swapaxes(pose, 1, 2)], axis=-1)

    q = heads(lin(x3d, p['wq'], p['bq']))
    k = heads(lin(x3d, p['wk'], p['bk']))
    v = heads(lin(x3d, p['wv'], p['bv']))
    edge = jax.nn.relu(ln(lin(nx2d, p['wpre'], p['bpre']), p['gpre'], p['bepre']))
    efq = heads(lin(edge, p['wefq'], p['befq']))                     # (B,L,H,L,d)
    efk = heads(lin(edge, p['wefk'], p['befk']))

    scores = jnp.einsum('bhid,bhjd->bhij', q, k)
    ex = jnp.einsum('bihjd,bhjd->bhij', efk, q)
    scores = (scores + ex) / math.sqrt(C / nhead)
    w = jax.nn.softmax(scores, axis=-1)
    x1 = jnp.einsum('bhij,bhjd->bhid', w, v)
    x2 = jnp.einsum('bhij,bihjd->bhdi', scores, efq)
    x = x1 + jnp.swapaxes(x2, -1, -2)
    x = jnp.swapaxes(x, 1, 2).reshape(B, L, C)
    branch = lin(x, p['wfc'], p['bfc'])

    xx = x3d + branch
    xx = ln(xx, p['g1'], p['be1'])
    br = lin(jax.nn.relu(lin(xx, p['w1'], p['b1'])), p['w2'], p['b2'])
    xx = ln(xx + br, p['g2'], p['be2'])
    return x2d, xx


# --------------------------------------------------------------------------
# Deterministic parameter init (shapes follow the PyTorch module __init__)
# --------------------------------------------------------------------------
def init_params(key, ninp, nhead, dim_ff, dim2d):
    d2 = dim2d + 6
    ks = jax.random.split(key, 20)

    def wmat(k, i, o): return 0.1 * jax.random.normal(k, (i, o), jnp.float32)
    def bvec(k, o): return 0.02 * jax.random.normal(k, (o,), jnp.float32)

    p = dict(
        wq=wmat(ks[0], ninp, ninp),   bq=bvec(ks[1], ninp),
        wk=wmat(ks[2], ninp, ninp),   bk=bvec(ks[3], ninp),
        wv=wmat(ks[4], ninp, ninp),   bv=bvec(ks[5], ninp),
        wpre=wmat(ks[6], d2, ninp),   bpre=bvec(ks[7], ninp),
        gpre=jnp.ones((ninp,), jnp.float32), bepre=jnp.zeros((ninp,), jnp.float32),
        wefq=wmat(ks[8], ninp, ninp), befq=bvec(ks[9], ninp),
        wefk=wmat(ks[10], ninp, ninp), befk=bvec(ks[11], ninp),
        wfc=wmat(ks[12], ninp, ninp), bfc=bvec(ks[13], ninp),
        w1=wmat(ks[14], ninp, dim_ff), b1=bvec(ks[15], dim_ff),
        w2=wmat(ks[16], dim_ff, ninp), b2=bvec(ks[17], ninp),
        g1=jnp.ones((ninp,), jnp.float32), be1=jnp.zeros((ninp,), jnp.float32),
        g2=jnp.ones((ninp,), jnp.float32), be2=jnp.zeros((ninp,), jnp.float32),
    )
    return p


if __name__ == "__main__":
    # 'highest' only affects the pure-JAX reference (and tiny wrapper glue);
    # the Pallas kernels pin their own matmul precision explicitly.
    jax.config.update("jax_default_matmul_precision", "highest")

    # small but lane-aligned shapes (real model: C=256, H=16, dh=16)
    B, L, C, H, FF, DIM2D = 2, 8, 128, 8, 256, 10

    key = jax.random.PRNGKey(0)
    kx2d, kx3d, kpt, kpr, kp = jax.random.split(key, 5)
    x2d = jax.random.normal(kx2d, (B, L, L, DIM2D), jnp.float32)
    x3d = jax.random.normal(kx3d, (B, L, C), jnp.float32)
    pt = jax.random.normal(kpt, (B, L, 3), jnp.float32)
    pr = jax.random.normal(kpr, (B, L, 3, 3), jnp.float32)
    params = init_params(kp, C, H, FF, DIM2D)

    ref2d, ref3d = reference_forward(params, x2d, x3d, pt, pr, H)

    # ---- strict float32 path: validates kernel logic against the reference
    pp32 = prepare_params(params, jnp.float32)
    f32_fwd = jax.jit(partial(x3d_transformer_layer, nhead=H,
                              compute_dtype=jnp.float32))
    o2d, o3d = f32_fwd(pp32, x2d, x3d, pt, pr)
    jax.block_until_ready(o3d)
    assert o3d.shape == (B, L, C)
    assert jnp.allclose(o2d, ref2d)
    err32 = float(jnp.max(jnp.abs(o3d - ref3d)))
    assert err32 < 2e-3, f"f32 path max abs err {err32}"

    # ---- bf16 production path: bf16 MXU inputs, f32 accumulation
    ppbf = prepare_params(params, jnp.bfloat16)
    bf_fwd = jax.jit(partial(x3d_transformer_layer, nhead=H,
                             compute_dtype=jnp.bfloat16))
    b2d, b3d = bf_fwd(ppbf, x2d, x3d, pt, pr)
    jax.block_until_ready(b3d)
    assert jnp.all(jnp.isfinite(b3d))
    errbf = float(jnp.max(jnp.abs(b3d - ref3d)))
    merrbf = float(jnp.mean(jnp.abs(b3d - ref3d)))
    assert errbf < 0.3 and merrbf < 0.05, f"bf16 path err max {errbf} mean {merrbf}"

    print("KERNEL_OK")
</pallas_src>

<mosaic_0001>
module attributes {stable_mosaic.version = 11 : i64} {
  func.func @_linear_kernel(%arg0: i32, %arg1: memref<16x128xf32, #tpu.memory_space<vmem>>, %arg2: memref<128x384xf32, #tpu.memory_space<vmem>>, %arg3: memref<1x384xf32, #tpu.memory_space<vmem>>, %arg4: memref<16x384xf32, #tpu.memory_space<vmem>>) attributes {dimension_semantics = [#tpu.dimension_semantics<parallel>], iteration_bounds = array<i64: 1>, scalar_prefetch = 0 : i64, scratch_operands = 0 : i64, tpu.core_type = #tpu.core_type<tc>, window_params = [{transform_indices = @transform_0, window_bounds = array<i64: 16, 128>}, {pipeline_mode = #tpu.pipeline_mode<synchronous>, transform_indices = @transform_1, window_bounds = array<i64: 128, 384>}, {pipeline_mode = #tpu.pipeline_mode<synchronous>, transform_indices = @transform_2, window_bounds = array<i64: 1, 384>}, {transform_indices = @transform_3, window_bounds = array<i64: 16, 384>}]} {
    %c0 = arith.constant 0 : index
    %c0_0 = arith.constant 0 : index
    %0 = vector.load %arg1[%c0, %c0_0] : memref<16x128xf32, #tpu.memory_space<vmem>>, vector<16x128xf32>
    %c0_1 = arith.constant 0 : index
    %c0_2 = arith.constant 0 : index
    %1 = vector.load %arg2[%c0_1, %c0_2] : memref<128x384xf32, #tpu.memory_space<vmem>>, vector<128x384xf32>
    %cst = arith.constant dense<0.000000e+00> : vector<16x384xf32>
    %2 = tpu.matmul %0, %1, %cst {dimension_numbers = #tpu.dot_dimension_numbers<[1], [0], [0], [1], [0, 0, 1, 1], [], []>, precision = #tpu.contract_precision<fp32>} : vector<16x128xf32>, vector<128x384xf32>, vector<16x384xf32> -> vector<16x384xf32>
    %c0_3 = arith.constant 0 : index
    %c0_4 = arith.constant 0 : index
    %3 = vector.load %arg3[%c0_3, %c0_4] : memref<1x384xf32, #tpu.memory_space<vmem>>, vector<1x384xf32>
    %4 = vector.broadcast %3 : vector<1x384xf32> to vector<16x384xf32>
    %5 = arith.addf %2, %4 : vector<16x384xf32>
    %c0_5 = arith.constant 0 : index
    %c0_6 = arith.constant 0 : index
    %6 = vector.load %arg4[%c0_5, %c0_6] : memref<16x384xf32, #tpu.memory_space<vmem>>, vector<16x384xf32>
    tpu.vector_store %arg4[%c0_5, %c0_6], %5 {strides = array<i32>} : memref<16x384xf32, #tpu.memory_space<vmem>>, vector<16x384xf32>,
    return
  }
  func.func @transform_0(%arg0: i32) -> (i32, i32) {
    %c0_i32 = arith.constant 0 : i32
    %c0_i32_0 = arith.constant 0 : i32
    return %arg0, %c0_i32 : i32, i32
  }
  func.func @transform_1(%arg0: i32) -> (i32, i32) {
    %c0_i32 = arith.constant 0 : i32
    %c0_i32_0 = arith.constant 0 : i32
    %c0_i32_1 = arith.constant 0 : i32
    return %c0_i32, %c0_i32_0 : i32, i32
  }
  func.func @transform_2(%arg0: i32) -> (i32, i32) {
    %c0_i32 = arith.constant 0 : i32
    %c0_i32_0 = arith.constant 0 : i32
    %c0_i32_1 = arith.constant 0 : i32
    return %c0_i32, %c0_i32_0 : i32, i32
  }
  func.func @transform_3(%arg0: i32) -> (i32, i32) {
    %c0_i32 = arith.constant 0 : i32
    %c0_i32_0 = arith.constant 0 : i32
    return %arg0, %c0_i32 : i32, i32
  }
}

module attributes {stable_mosaic.version = 11 : i64} {
  func.func @_attn_edge_kernel(%arg0: i32, %arg1: i32, %arg2: memref<128x8xf32, #tpu.memory_space<vmem>>, %arg3: memref<8x128xf32, #tpu.memory_space<vmem>>, %arg4: memref<1x8x384xf32, #tpu.memory_space<vmem>>, %arg5: memref<1x8x8x16xf32, #tpu.memory_space<vmem>>, %arg6: memref<16x128xf32, #tpu.memory_space<vmem>>, %arg7: memref<1x128xf32, #tpu.memory_space<vmem>>, %arg8: memref<1x128xf32, #tpu.memory_space<vmem>>, %arg9: memref<1x128xf32, #tpu.memory_space<vmem>>, %arg10: memref<128x256xf32, #tpu.memory_space<vmem>>, %arg11: memref<1x256xf32, #tpu.memory_space<vmem>>, %arg12: memref<128x128xf32, #tpu.memory_space<vmem>>, %arg13: memref<1x128xf32, #tpu.memory_space<vmem>>, %arg14: memref<1x8x128xf32, #tpu.memory_space<vmem>>) attributes {dimension_semantics = [#tpu.dimension_semantics<parallel>, #tpu.dimension_semantics<parallel>], iteration_bounds = array<i64: 2, 1>, scalar_prefetch = 0 : i64, scratch_operands = 0 : i64, tpu.core_type = #tpu.core_type<tc>, window_params = [{pipeline_mode = #tpu.pipeline_mode<synchronous>, transform_indices = @transform_0, window_bounds = array<i64: 128, 8>}, {pipeline_mode = #tpu.pipeline_mode<synchronous>, transform_indices = @transform_1, window_bounds = array<i64: 8, 128>}, {transform_indices = @transform_2, window_bounds = array<i64: 1, 8, 384>}, {transform_indices = @transform_3, window_bounds = array<i64: 1, 8, 8, 16>}, {pipeline_mode = #tpu.pipeline_mode<synchronous>, transform_indices = @transform_4, window_bounds = array<i64: 16, 128>}, {pipeline_mode = #tpu.pipeline_mode<synchronous>, transform_indices = @transform_5, window_bounds = array<i64: 1, 128>}, {pipeline_mode = #tpu.pipeline_mode<synchronous>, transform_indices = @transform_6, window_bounds = array<i64: 1, 128>}, {pipeline_mode = #tpu.pipeline_mode<synchronous>, transform_indices = @transform_7, window_bounds = array<i64: 1, 128>}, {pipeline_mode = #tpu.pipeline_mode<synchronous>, transform_indices = @transform_8, window_bounds = array<i64: 128, 256>}, {pipeline_mode = #tpu.pipeline_mode<synchronous>, transform_indices = @transform_9, window_bounds = array<i64: 1, 256>}, {pipeline_mode = #tpu.pipeline_mode<synchronous>, transform_indices = @transform_10, window_bounds = array<i64: 128, 128>}, {pipeline_mode = #tpu.pipeline_mode<synchronous>, transform_indices = @transform_11, window_bounds = array<i64: 1, 128>}, {transform_indices = @transform_12, window_bounds = array<i64: 1, 8, 128>}]} {
    %c0 = arith.constant 0 : index
    %c0_0 = arith.constant 0 : index
    %c0_1 = arith.constant 0 : index
    %c0_2 = arith.constant 0 : index
    %0 = vector.load %arg5[%c0, %c0_0, %c0_1, %c0_2] : memref<1x8x8x16xf32, #tpu.memory_space<vmem>>, vector<1x8x8x16xf32>
    %1 = vector.shape_cast %0 : vector<1x8x8x16xf32> to vector<8x8x16xf32>
    %2 = vector.shape_cast %1 : vector<8x8x16xf32> to vector<64x16xf32>
    %c0_3 = arith.constant 0 : index
    %c0_4 = arith.constant 0 : index
    %3 = vector.load %arg6[%c0_3, %c0_4] : memref<16x128xf32, #tpu.memory_space<vmem>>, vector<16x128xf32>
    %cst = arith.constant dense<0.000000e+00> : vector<64x128xf32>
    %4 = tpu.matmul %2, %3, %cst {dimension_numbers = #tpu.dot_dimension_numbers<[1], [0], [0], [1], [0, 0, 1, 1], [], []>, precision = #tpu.contract_precision<fp32>} : vector<64x16xf32>, vector<16x128xf32>, vector<64x128xf32> -> vector<64x128xf32>
    %c0_5 = arith.constant 0 : index
    %c0_6 = arith.constant 0 : index
    %5 = vector.load %arg7[%c0_5, %c0_6] : memref<1x128xf32, #tpu.memory_space<vmem>>, vector<1x128xf32>
    %6 = vector.broadcast %5 : vector<1x128xf32> to vector<64x128xf32>
    %7 = arith.addf %4, %6 : vector<64x128xf32>
    %cst_7 = arith.constant dense<0.000000e+00> : vector<64xf32>
    %8 = vector.multi_reduction <add>, %7, %cst_7 [1] : vector<64x128xf32> to vector<64xf32>
    %9 = vector.shape_cast %8 : vector<64xf32> to vector<64x1xf32>
    %cst_8 = arith.constant 1.280000e+02 : f32
    %10 = vector.broadcast %cst_8 : f32 to vector<64x1xf32>
    %11 = arith.divf %9, %10 : vector<64x1xf32>
    %12 = vector.broadcast %11 : vector<64x1xf32> to vector<64x128xf32>
    %13 = arith.subf %7, %12 : vector<64x128xf32>
    %14 = arith.mulf %13, %13 : vector<64x128xf32>
    %cst_9 = arith.constant dense<0.000000e+00> : vector<64xf32>
    %15 = vector.multi_reduction <add>, %14, %cst_9 [1] : vector<64x128xf32> to vector<64xf32>
    %16 = vector.shape_cast %15 : vector<64xf32> to vector<64x1xf32>
    %cst_10 = arith.constant 1.280000e+02 : f32
    %17 = vector.broadcast %cst_10 : f32 to vector<64x1xf32>
    %18 = arith.divf %16, %17 : vector<64x1xf32>
    %19 = vector.broadcast %11 : vector<64x1xf32> to vector<64x128xf32>
    %20 = arith.subf %7, %19 : vector<64x128xf32>
    %cst_11 = arith.constant 9.99999974E-6 : f32
    %21 = vector.broadcast %cst_11 : f32 to vector<64x1xf32>
    %22 = arith.addf %18, %21 : vector<64x1xf32>
    %23 = math.rsqrt %22 : vector<64x1xf32>
    %24 = vector.broadcast %23 : vector<64x1xf32> to vector<64x128xf32>
    %25 = arith.mulf %20, %24 : vector<64x128xf32>
    %c0_12 = arith.constant 0 : index
    %c0_13 = arith.constant 0 : index
    %26 = vector.load %arg8[%c0_12, %c0_13] : memref<1x128xf32, #tpu.memory_space<vmem>>, vector<1x128xf32>
    %27 = vector.broadcast %26 : vector<1x128xf32> to vector<64x128xf32>
    %28 = arith.mulf %25, %27 : vector<64x128xf32>
    %c0_14 = arith.constant 0 : index
    %c0_15 = arith.constant 0 : index
    %29 = vector.load %arg9[%c0_14, %c0_15] : memref<1x128xf32, #tpu.memory_space<vmem>>, vector<1x128xf32>
    %30 = vector.broadcast %29 : vector<1x128xf32> to vector<64x128xf32>
    %31 = arith.addf %28, %30 : vector<64x128xf32>
    %cst_16 = arith.constant 0.000000e+00 : f32
    %32 = vector.broadcast %cst_16 : f32 to vector<64x128xf32>
    %33 = arith.maximumf %31, %32 : vector<64x128xf32>
    %c0_17 = arith.constant 0 : index
    %c0_18 = arith.constant 0 : index
    %34 = vector.load %arg10[%c0_17, %c0_18] : memref<128x256xf32, #tpu.memory_space<vmem>>, vector<128x256xf32>
    %cst_19 = arith.constant dense<0.000000e+00> : vector<64x256xf32>
    %35 = tpu.matmul %33, %34, %cst_19 {dimension_numbers = #tpu.dot_dimension_numbers<[1], [0], [0], [1], [0, 0, 1, 1], [], []>, precision = #tpu.contract_precision<fp32>} : vector<64x128xf32>, vector<128x256xf32>, vector<64x256xf32> -> vector<64x256xf32>
    %c0_20 = arith.constant 0 : index
    %c0_21 = arith.constant 0 : index
    %36 = vector.load %arg11[%c0_20, %c0_21] : memref<1x256xf32, #tpu.memory_space<vmem>>, vector<1x256xf32>
    %37 = vector.broadcast %36 : vector<1x256xf32> to vector<64x256xf32>
    %38 = arith.addf %35, %37 : vector<64x256xf32>
    %39 = vector.extract_strided_slice %38 {offsets = [0, 0], sizes = [64, 128], strides = [1, 1]} : vector<64x256xf32> to vector<64x128xf32>
    %40 = vector.shape_cast %39 : vector<64x128xf32> to vector<8x8x128xf32>
    %41 = vector.extract_strided_slice %38 {offsets = [0, 128], sizes = [64, 128], strides = [1, 1]} : vector<64x256xf32> to vector<64x128xf32>
    %42 = vector.shape_cast %41 : vector<64x128xf32> to vector<8x8x128xf32>
    %c0_22 = arith.constant 0 : index
    %c0_23 = arith.constant 0 : index
    %c0_24 = arith.constant 0 : index
    %43 = vector.load %arg4[%c0_22, %c0_23, %c0_24] : memref<1x8x384xf32, #tpu.memory_space<vmem>>, vector<1x8x384xf32>
    %44 = vector.shape_cast %43 : vector<1x8x384xf32> to vector<8x384xf32>
    %45 = vector.extract_strided_slice %44 {offsets = [0, 0], sizes = [8, 128], strides = [1, 1]} : vector<8x384xf32> to vector<8x128xf32>
    %46 = vector.extract_strided_slice %44 {offsets = [0, 128], sizes = [8, 128], strides = [1, 1]} : vector<8x384xf32> to vector<8x128xf32>
    %47 = vector.extract_strided_slice %44 {offsets = [0, 256], sizes = [8, 128], strides = [1, 1]} : vector<8x384xf32> to vector<8x128xf32>
    %c8_i32 = arith.constant 8 : i32
    %48 = arith.muli %arg1, %c8_i32 : i32
    %49 = tpu.assume_multiple %48, 8 : i32
    %c0_25 = arith.constant 0 : index
    %50 = arith.index_cast %49 : i32 to index
    %c0_26 = arith.constant 0 : index
    %51 = vector.load %arg4[%c0_25, %50, %c0_26] : memref<1x8x384xf32, #tpu.memory_space<vmem>>, vector<1x8x384xf32>
    %52 = vector.shape_cast %51 : vector<1x8x384xf32> to vector<8x384xf32>
    %53 = vector.extract_strided_slice %52 {offsets = [0, 0], sizes = [8, 128], strides = [1, 1]} : vector<8x384xf32> to vector<8x128xf32>
    %54 = vector.shape_cast %53 : vector<8x128xf32> to vector<8x1x128xf32>
    %55 = vector.shape_cast %46 : vector<8x128xf32> to vector<1x8x128xf32>
    %56 = vector.broadcast %54 : vector<8x1x128xf32> to vector<8x8x128xf32>
    %57 = vector.broadcast %55 : vector<1x8x128xf32> to vector<8x8x128xf32>
    %58 = arith.mulf %56, %57 : vector<8x8x128xf32>
    %59 = vector.shape_cast %58 : vector<8x8x128xf32> to vector<64x128xf32>
    %c0_27 = arith.constant 0 : index
    %c0_28 = arith.constant 0 : index
    %60 = vector.load %arg2[%c0_27, %c0_28] : memref<128x8xf32, #tpu.memory_space<vmem>>, vector<128x8xf32>
    %cst_29 = arith.constant dense<0.000000e+00> : vector<64x8xf32>
    %61 = tpu.matmul %59, %60, %cst_29 {dimension_numbers = #tpu.dot_dimension_numbers<[1], [0], [0], [1], [0, 0, 1, 1], [], []>, precision = #tpu.contract_precision<fp32>} : vector<64x128xf32>, vector<128x8xf32>, vector<64x8xf32> -> vector<64x8xf32>
    %62 = vector.shape_cast %45 : vector<8x128xf32> to vector<1x8x128xf32>
    %63 = vector.broadcast %62 : vector<1x8x128xf32> to vector<8x8x128xf32>
    %64 = arith.mulf %42, %63 : vector<8x8x128xf32>
    %65 = vector.shape_cast %64 : vector<8x8x128xf32> to vector<64x128xf32>
    %c0_30 = arith.constant 0 : index
    %c0_31 = arith.constant 0 : index
    %66 = vector.load %arg2[%c0_30, %c0_31] : memref<128x8xf32, #tpu.memory_space<vmem>>, vector<128x8xf32>
    %cst_32 = arith.constant dense<0.000000e+00> : vector<64x8xf32>
    %67 = tpu.matmul %65, %66, %cst_32 {dimension_numbers = #tpu.dot_dimension_numbers<[1], [0], [0], [1], [0, 0, 1, 1], [], []>, precision = #tpu.contract_precision<fp32>} : vector<64x128xf32>, vector<128x8xf32>, vector<64x8xf32> -> vector<64x8xf32>
    %68 = arith.addf %61, %67 : vector<64x8xf32>
    %cst_33 = arith.constant 2.500000e-01 : f32
    %69 = vector.broadcast %cst_33 : f32 to vector<64x8xf32>
    %70 = arith.mulf %68, %69 : vector<64x8xf32>
    %71 = vector.shape_cast %70 : vector<64x8xf32> to vector<8x8x8xf32>
    %cst_34 = arith.constant dense<0xFF800000> : vector<8x8xf32>
    %72 = vector.multi_reduction <maximumf>, %71, %cst_34 [1] : vector<8x8x8xf32> to vector<8x8xf32>
    %73 = vector.shape_cast %72 : vector<8x8xf32> to vector<8x1x8xf32>
    %74 = vector.broadcast %73 : vector<8x1x8xf32> to vector<8x8x8xf32>
    %75 = arith.subf %71, %74 : vector<8x8x8xf32>
    %76 = math.exp %75 : vector<8x8x8xf32>
    %cst_35 = arith.constant dense<0.000000e+00> : vector<8x8xf32>
    %77 = vector.multi_reduction <add>, %76, %cst_35 [1] : vector<8x8x8xf32> to vector<8x8xf32>
    %78 = vector.shape_cast %77 : vector<8x8xf32> to vector<8x1x8xf32>
    %79 = tpu.reciprocal %78 : vector<8x1x8xf32> -> vector<8x1x8xf32>
    %80 = vector.broadcast %79 : vector<8x1x8xf32> to vector<8x8x8xf32>
    %81 = arith.mulf %76, %80 : vector<8x8x8xf32>
    %82 = vector.shape_cast %81 : vector<8x8x8xf32> to vector<64x8xf32>
    %c0_36 = arith.constant 0 : index
    %c0_37 = arith.constant 0 : index
    %83 = vector.load %arg3[%c0_36, %c0_37] : memref<8x128xf32, #tpu.memory_space<vmem>>, vector<8x128xf32>
    %cst_38 = arith.constant dense<0.000000e+00> : vector<64x128xf32>
    %84 = tpu.matmul %82, %83, %cst_38 {dimension_numbers = #tpu.dot_dimension_numbers<[1], [0], [0], [1], [0, 0, 1, 1], [], []>, precision = #tpu.contract_precision<fp32>} : vector<64x8xf32>, vector<8x128xf32>, vector<64x128xf32> -> vector<64x128xf32>
    %85 = vector.shape_cast %84 : vector<64x128xf32> to vector<8x8x128xf32>
    %86 = vector.shape_cast %71 : vector<8x8x8xf32> to vector<64x8xf32>
    %c0_39 = arith.constant 0 : index
    %c0_40 = arith.constant 0 : index
    %87 = vector.load %arg3[%c0_39, %c0_40] : memref<8x128xf32, #tpu.memory_space<vmem>>, vector<8x128xf32>
    %cst_41 = arith.constant dense<0.000000e+00> : vector<64x128xf32>
    %88 = tpu.matmul %86, %87, %cst_41 {dimension_numbers = #tpu.dot_dimension_numbers<[1], [0], [0], [1], [0, 0, 1, 1], [], []>, precision = #tpu.contract_precision<fp32>} : vector<64x8xf32>, vector<8x128xf32>, vector<64x128xf32> -> vector<64x128xf32>
    %89 = vector.shape_cast %88 : vector<64x128xf32> to vector<8x8x128xf32>
    %90 = vector.shape_cast %47 : vector<8x128xf32> to vector<1x8x128xf32>
    %91 = vector.broadcast %90 : vector<1x8x128xf32> to vector<8x8x128xf32>
    %92 = arith.mulf %85, %91 : vector<8x8x128xf32>
    %93 = arith.mulf %89, %40 : vector<8x8x128xf32>
    %94 = arith.addf %92, %93 : vector<8x8x128xf32>
    %cst_42 = arith.constant dense<0.000000e+00> : vector<8x128xf32>
    %95 = vector.multi_reduction <add>, %94, %cst_42 [1] : vector<8x8x128xf32> to vector<8x128xf32>
    %c0_43 = arith.constant 0 : index
    %c0_44 = arith.constant 0 : index
    %96 = vector.load %arg12[%c0_43, %c0_44] : memref<128x128xf32, #tpu.memory_space<vmem>>, vector<128x128xf32>
    %cst_45 = arith.constant dense<0.000000e+00> : vector<8x128xf32>
    %97 = tpu.matmul %95, %96, %cst_45 {dimension_numbers = #tpu.dot_dimension_numbers<[1], [0], [0], [1], [0, 0, 1, 1], [], []>, precision = #tpu.contract_precision<fp32>} : vector<8x128xf32>, vector<128x128xf32>, vector<8x128xf32> -> vector<8x128xf32>
    %c0_46 = arith.constant 0 : index
    %c0_47 = arith.constant 0 : index
    %98 = vector.load %arg13[%c0_46, %c0_47] : memref<1x128xf32, #tpu.memory_space<vmem>>, vector<1x128xf32>
    %99 = vector.broadcast %98 : vector<1x128xf32> to vector<8x128xf32>
    %100 = arith.addf %97, %99 : vector<8x128xf32>
    %c0_48 = arith.constant 0 : index
    %c0_49 = arith.constant 0 : index
    %c0_50 = arith.constant 0 : index
    %101 = vector.load %arg14[%c0_48, %c0_49, %c0_50] : memref<1x8x128xf32, #tpu.memory_space<vmem>>, vector<1x8x128xf32>
    %102 = vector.shape_cast %101 : vector<1x8x128xf32> to vector<8x128xf32>
    %103 = vector.shape_cast %100 : vector<8x128xf32> to vector<1x8x128xf32>
    tpu.vector_store %arg14[%c0_48, %c0_49, %c0_50], %103 {strides = array<i32>} : memref<1x8x128xf32, #tpu.memory_space<vmem>>, vector<1x8x128xf32>,
    return
  }
  func.func @transform_0(%arg0: i32, %arg1: i32) -> (i32, i32) {
    %c0_i32 = arith.constant 0 : i32
    %c0_i32_0 = arith.constant 0 : i32
    %c0_i32_1 = arith.constant 0 : i32
    return %c0_i32, %c0_i32_0 : i32, i32
  }
  func.func @transform_1(%arg0: i32, %arg1: i32) -> (i32, i32) {
    %c0_i32 = arith.constant 0 : i32
    %c0_i32_0 = arith.constant 0 : i32
    %c0_i32_1 = arith.constant 0 : i32
    return %c0_i32, %c0_i32_0 : i32, i32
  }
  func.func @transform_2(%arg0: i32, %arg1: i32) -> (i32, i32, i32) {
    %c0_i32 = arith.constant 0 : i32
    %c0_i32_0 = arith.constant 0 : i32
    %c0_i32_1 = arith.constant 0 : i32
    return %arg0, %c0_i32, %c0_i32_0 : i32, i32, i32
  }
  func.func @transform_3(%arg0: i32, %arg1: i32) -> (i32, i32, i32, i32) {
    %c0_i32 = arith.constant 0 : i32
    %c0_i32_0 = arith.constant 0 : i32
    %c0_i32_1 = arith.constant 0 : i32
    return %arg0, %arg1, %c0_i32, %c0_i32_0 : i32, i32, i32, i32
  }
  func.func @transform_4(%arg0: i32, %arg1: i32) -> (i32, i32) {
    %c0_i32 = arith.constant 0 : i32
    %c0_i32_0 = arith.constant 0 : i32
    %c0_i32_1 = arith.constant 0 : i32
    return %c0_i32, %c0_i32_0 : i32, i32
  }
  func.func @transform_5(%arg0: i32, %arg1: i32) -> (i32, i32) {
    %c0_i32 = arith.constant 0 : i32
    %c0_i32_0 = arith.constant 0 : i32
    %c0_i32_1 = arith.constant 0 : i32
    return %c0_i32, %c0_i32_0 : i32, i32
  }
  func.func @transform_6(%arg0: i32, %arg1: i32) -> (i32, i32) {
    %c0_i32 = arith.constant 0 : i32
    %c0_i32_0 = arith.constant 0 : i32
    %c0_i32_1 = arith.constant 0 : i32
    return %c0_i32, %c0_i32_0 : i32, i32
  }
  func.func @transform_7(%arg0: i32, %arg1: i32) -> (i32, i32) {
    %c0_i32 = arith.constant 0 : i32
    %c0_i32_0 = arith.constant 0 : i32
    %c0_i32_1 = arith.constant 0 : i32
    return %c0_i32, %c0_i32_0 : i32, i32
  }
  func.func @transform_8(%arg0: i32, %arg1: i32) -> (i32, i32) {
    %c0_i32 = arith.constant 0 : i32
    %c0_i32_0 = arith.constant 0 : i32
    %c0_i32_1 = arith.constant 0 : i32
    return %c0_i32, %c0_i32_0 : i32, i32
  }
  func.func @transform_9(%arg0: i32, %arg1: i32) -> (i32, i32) {
    %c0_i32 = arith.constant 0 : i32
    %c0_i32_0 = arith.constant 0 : i32
    %c0_i32_1 = arith.constant 0 : i32
    return %c0_i32, %c0_i32_0 : i32, i32
  }
  func.func @transform_10(%arg0: i32, %arg1: i32) -> (i32, i32) {
    %c0_i32 = arith.constant 0 : i32
    %c0_i32_0 = arith.constant 0 : i32
    %c0_i32_1 = arith.constant 0 : i32
    return %c0_i32, %c0_i32_0 : i32, i32
  }
  func.func @transform_11(%arg0: i32, %arg1: i32) -> (i32, i32) {
    %c0_i32 = arith.constant 0 : i32
    %c0_i32_0 = arith.constant 0 : i32
    %c0_i32_1 = arith.constant 0 : i32
    return %c0_i32, %c0_i32_0 : i32, i32
  }
  func.func @transform_12(%arg0: i32, %arg1: i32) -> (i32, i32, i32) {
    %c0_i32 = arith.constant 0 : i32
    %c0_i32_0 = arith.constant 0 : i32
    return %arg0, %arg1, %c0_i32 : i32, i32, i32
  }
}

module attributes {stable_mosaic.version = 11 : i64} {
  func.func @_ffn_kernel(%arg0: i32, %arg1: memref<16x128xf32, #tpu.memory_space<vmem>>, %arg2: memref<16x128xf32, #tpu.memory_space<vmem>>, %arg3: memref<128x256xf32, #tpu.memory_space<vmem>>, %arg4: memref<1x256xf32, #tpu.memory_space<vmem>>, %arg5: memref<256x128xf32, #tpu.memory_space<vmem>>, %arg6: memref<1x128xf32, #tpu.memory_space<vmem>>, %arg7: memref<1x128xf32, #tpu.memory_space<vmem>>, %arg8: memref<1x128xf32, #tpu.memory_space<vmem>>, %arg9: memref<1x128xf32, #tpu.memory_space<vmem>>, %arg10: memref<1x128xf32, #tpu.memory_space<vmem>>, %arg11: memref<16x128xf32, #tpu.memory_space<vmem>>) attributes {dimension_semantics = [#tpu.dimension_semantics<parallel>], iteration_bounds = array<i64: 1>, scalar_prefetch = 0 : i64, scratch_operands = 0 : i64, tpu.core_type = #tpu.core_type<tc>, window_params = [{transform_indices = @transform_0, window_bounds = array<i64: 16, 128>}, {transform_indices = @transform_1, window_bounds = array<i64: 16, 128>}, {pipeline_mode = #tpu.pipeline_mode<synchronous>, transform_indices = @transform_2, window_bounds = array<i64: 128, 256>}, {pipeline_mode = #tpu.pipeline_mode<synchronous>, transform_indices = @transform_3, window_bounds = array<i64: 1, 256>}, {pipeline_mode = #tpu.pipeline_mode<synchronous>, transform_indices = @transform_4, window_bounds = array<i64: 256, 128>}, {pipeline_mode = #tpu.pipeline_mode<synchronous>, transform_indices = @transform_5, window_bounds = array<i64: 1, 128>}, {pipeline_mode = #tpu.pipeline_mode<synchronous>, transform_indices = @transform_6, window_bounds = array<i64: 1, 128>}, {pipeline_mode = #tpu.pipeline_mode<synchronous>, transform_indices = @transform_7, window_bounds = array<i64: 1, 128>}, {pipeline_mode = #tpu.pipeline_mode<synchronous>, transform_indices = @transform_8, window_bounds = array<i64: 1, 128>}, {pipeline_mode = #tpu.pipeline_mode<synchronous>, transform_indices = @transform_9, window_bounds = array<i64: 1, 128>}, {transform_indices = @transform_10, window_bounds = array<i64: 16, 128>}]} {
    %c0 = arith.constant 0 : index
    %c0_0 = arith.constant 0 : index
    %0 = vector.load %arg1[%c0, %c0_0] : memref<16x128xf32, #tpu.memory_space<vmem>>, vector<16x128xf32>
    %c0_1 = arith.constant 0 : index
    %c0_2 = arith.constant 0 : index
    %1 = vector.load %arg2[%c0_1, %c0_2] : memref<16x128xf32, #tpu.memory_space<vmem>>, vector<16x128xf32>
    %2 = arith.addf %0, %1 : vector<16x128xf32>
    %c0_3 = arith.constant 0 : index
    %c0_4 = arith.constant 0 : index
    %3 = vector.load %arg7[%c0_3, %c0_4] : memref<1x128xf32, #tpu.memory_space<vmem>>, vector<1x128xf32>
    %c0_5 = arith.constant 0 : index
    %c0_6 = arith.constant 0 : index
    %4 = vector.load %arg8[%c0_5, %c0_6] : memref<1x128xf32, #tpu.memory_space<vmem>>, vector<1x128xf32>
    %cst = arith.constant dense<0.000000e+00> : vector<16xf32>
    %5 = vector.multi_reduction <add>, %2, %cst [1] : vector<16x128xf32> to vector<16xf32>
    %6 = vector.shape_cast %5 : vector<16xf32> to vector<16x1xf32>
    %cst_7 = arith.constant 1.280000e+02 : f32
    %7 = vector.broadcast %cst_7 : f32 to vector<16x1xf32>
    %8 = arith.divf %6, %7 : vector<16x1xf32>
    %9 = vector.broadcast %8 : vector<16x1xf32> to vector<16x128xf32>
    %10 = arith.subf %2, %9 : vector<16x128xf32>
    %11 = arith.mulf %10, %10 : vector<16x128xf32>
    %cst_8 = arith.constant dense<0.000000e+00> : vector<16xf32>
    %12 = vector.multi_reduction <add>, %11, %cst_8 [1] : vector<16x128xf32> to vector<16xf32>
    %13 = vector.shape_cast %12 : vector<16xf32> to vector<16x1xf32>
    %cst_9 = arith.constant 1.280000e+02 : f32
    %14 = vector.broadcast %cst_9 : f32 to vector<16x1xf32>
    %15 = arith.divf %13, %14 : vector<16x1xf32>
    %16 = vector.broadcast %8 : vector<16x1xf32> to vector<16x128xf32>
    %17 = arith.subf %2, %16 : vector<16x128xf32>
    %cst_10 = arith.constant 9.99999974E-6 : f32
    %18 = vector.broadcast %cst_10 : f32 to vector<16x1xf32>
    %19 = arith.addf %15, %18 : vector<16x1xf32>
    %20 = math.rsqrt %19 : vector<16x1xf32>
    %21 = vector.broadcast %20 : vector<16x1xf32> to vector<16x128xf32>
    %22 = arith.mulf %17, %21 : vector<16x128xf32>
    %23 = vector.broadcast %3 : vector<1x128xf32> to vector<16x128xf32>
    %24 = arith.mulf %22, %23 : vector<16x128xf32>
    %25 = vector.broadcast %4 : vector<1x128xf32> to vector<16x128xf32>
    %26 = arith.addf %24, %25 : vector<16x128xf32>
    %c0_11 = arith.constant 0 : index
    %c0_12 = arith.constant 0 : index
    %27 = vector.load %arg3[%c0_11, %c0_12] : memref<128x256xf32, #tpu.memory_space<vmem>>, vector<128x256xf32>
    %cst_13 = arith.constant dense<0.000000e+00> : vector<16x256xf32>
    %28 = tpu.matmul %26, %27, %cst_13 {dimension_numbers = #tpu.dot_dimension_numbers<[1], [0], [0], [1], [0, 0, 1, 1], [], []>, precision = #tpu.contract_precision<fp32>} : vector<16x128xf32>, vector<128x256xf32>, vector<16x256xf32> -> vector<16x256xf32>
    %c0_14 = arith.constant 0 : index
    %c0_15 = arith.constant 0 : index
    %29 = vector.load %arg4[%c0_14, %c0_15] : memref<1x256xf32, #tpu.memory_space<vmem>>, vector<1x256xf32>
    %30 = vector.broadcast %29 : vector<1x256xf32> to vector<16x256xf32>
    %31 = arith.addf %28, %30 : vector<16x256xf32>
    %cst_16 = arith.constant 0.000000e+00 : f32
    %32 = vector.broadcast %cst_16 : f32 to vector<16x256xf32>
    %33 = arith.maximumf %31, %32 : vector<16x256xf32>
    %c0_17 = arith.constant 0 : index
    %c0_18 = arith.constant 0 : index
    %34 = vector.load %arg5[%c0_17, %c0_18] : memref<256x128xf32, #tpu.memory_space<vmem>>, vector<256x128xf32>
    %cst_19 = arith.constant dense<0.000000e+00> : vector<16x128xf32>
    %35 = tpu.matmul %33, %34, %cst_19 {dimension_numbers = #tpu.dot_dimension_numbers<[1], [0], [0], [1], [0, 0, 1, 1], [], []>, precision = #tpu.contract_precision<fp32>} : vector<16x256xf32>, vector<256x128xf32>, vector<16x128xf32> -> vector<16x128xf32>
    %c0_20 = arith.constant 0 : index
    %c0_21 = arith.constant 0 : index
    %36 = vector.load %arg6[%c0_20, %c0_21] : memref<1x128xf32, #tpu.memory_space<vmem>>, vector<1x128xf32>
    %37 = vector.broadcast %36 : vector<1x128xf32> to vector<16x128xf32>
    %38 = arith.addf %35, %37 : vector<16x128xf32>
    %39 = arith.addf %26, %38 : vector<16x128xf32>
    %c0_22 = arith.constant 0 : index
    %c0_23 = arith.constant 0 : index
    %40 = vector.load %arg9[%c0_22, %c0_23] : memref<1x128xf32, #tpu.memory_space<vmem>>, vector<1x128xf32>
    %c0_24 = arith.constant 0 : index
    %c0_25 = arith.constant 0 : index
    %41 = vector.load %arg10[%c0_24, %c0_25] : memref<1x128xf32, #tpu.memory_space<vmem>>, vector<1x128xf32>
    %cst_26 = arith.constant dense<0.000000e+00> : vector<16xf32>
    %42 = vector.multi_reduction <add>, %39, %cst_26 [1] : vector<16x128xf32> to vector<16xf32>
    %43 = vector.shape_cast %42 : vector<16xf32> to vector<16x1xf32>
    %cst_27 = arith.constant 1.280000e+02 : f32
    %44 = vector.broadcast %cst_27 : f32 to vector<16x1xf32>
    %45 = arith.divf %43, %44 : vector<16x1xf32>
    %46 = vector.broadcast %45 : vector<16x1xf32> to vector<16x128xf32>
    %47 = arith.subf %39, %46 : vector<16x128xf32>
    %48 = arith.mulf %47, %47 : vector<16x128xf32>
    %cst_28 = arith.constant dense<0.000000e+00> : vector<16xf32>
    %49 = vector.multi_reduction <add>, %48, %cst_28 [1] : vector<16x128xf32> to vector<16xf32>
    %50 = vector.shape_cast %49 : vector<16xf32> to vector<16x1xf32>
    %cst_29 = arith.constant 1.280000e+02 : f32
    %51 = vector.broadcast %cst_29 : f32 to vector<16x1xf32>
    %52 = arith.divf %50, %51 : vector<16x1xf32>
    %53 = vector.broadcast %45 : vector<16x1xf32> to vector<16x128xf32>
    %54 = arith.subf %39, %53 : vector<16x128xf32>
    %cst_30 = arith.constant 9.99999974E-6 : f32
    %55 = vector.broadcast %cst_30 : f32 to vector<16x1xf32>
    %56 = arith.addf %52, %55 : vector<16x1xf32>
    %57 = math.rsqrt %56 : vector<16x1xf32>
    %58 = vector.broadcast %57 : vector<16x1xf32> to vector<16x128xf32>
    %59 = arith.mulf %54, %58 : vector<16x128xf32>
    %60 = vector.broadcast %40 : vector<1x128xf32> to vector<16x128xf32>
    %61 = arith.mulf %59, %60 : vector<16x128xf32>
    %62 = vector.broadcast %41 : vector<1x128xf32> to vector<16x128xf32>
    %63 = arith.addf %61, %62 : vector<16x128xf32>
    %c0_31 = arith.constant 0 : index
    %c0_32 = arith.constant 0 : index
    %64 = vector.load %arg11[%c0_31, %c0_32] : memref<16x128xf32, #tpu.memory_space<vmem>>, vector<16x128xf32>
    tpu.vector_store %arg11[%c0_31, %c0_32], %63 {strides = array<i32>} : memref<16x128xf32, #tpu.memory_space<vmem>>, vector<16x128xf32>,
    return
  }
  func.func @transform_0(%arg0: i32) -> (i32, i32) {
    %c0_i32 = arith.constant 0 : i32
    %c0_i32_0 = arith.constant 0 : i32
    return %arg0, %c0_i32 : i32, i32
  }
  func.func @transform_1(%arg0: i32) -> (i32, i32) {
    %c0_i32 = arith.constant 0 : i32
    %c0_i32_0 = arith.constant 0 : i32
    return %arg0, %c0_i32 : i32, i32
  }
  func.func @transform_2(%arg0: i32) -> (i32, i32) {
    %c0_i32 = arith.constant 0 : i32
    %c0_i32_0 = arith.constant 0 : i32
    %c0_i32_1 = arith.constant 0 : i32
    return %c0_i32, %c0_i32_0 : i32, i32
  }
  func.func @transform_3(%arg0: i32) -> (i32, i32) {
    %c0_i32 = arith.constant 0 : i32
    %c0_i32_0 = arith.constant 0 : i32
    %c0_i32_1 = arith.constant 0 : i32
    return %c0_i32, %c0_i32_0 : i32, i32
  }
  func.func @transform_4(%arg0: i32) -> (i32, i32) {
    %c0_i32 = arith.constant 0 : i32
    %c0_i32_0 = arith.constant 0 : i32
    %c0_i32_1 = arith.constant 0 : i32
    return %c0_i32, %c0_i32_0 : i32, i32
  }
  func.func @transform_5(%arg0: i32) -> (i32, i32) {
    %c0_i32 = arith.constant 0 : i32
    %c0_i32_0 = arith.constant 0 : i32
    %c0_i32_1 = arith.constant 0 : i32
    return %c0_i32, %c0_i32_0 : i32, i32
  }
  func.func @transform_6(%arg0: i32) -> (i32, i32) {
    %c0_i32 = arith.constant 0 : i32
    %c0_i32_0 = arith.constant 0 : i32
    %c0_i32_1 = arith.constant 0 : i32
    return %c0_i32, %c0_i32_0 : i32, i32
  }
  func.func @transform_7(%arg0: i32) -> (i32, i32) {
    %c0_i32 = arith.constant 0 : i32
    %c0_i32_0 = arith.constant 0 : i32
    %c0_i32_1 = arith.constant 0 : i32
    return %c0_i32, %c0_i32_0 : i32, i32
  }
  func.func @transform_8(%arg0: i32) -> (i32, i32) {
    %c0_i32 = arith.constant 0 : i32
    %c0_i32_0 = arith.constant 0 : i32
    %c0_i32_1 = arith.constant 0 : i32
    return %c0_i32, %c0_i32_0 : i32, i32
  }
  func.func @transform_9(%arg0: i32) -> (i32, i32) {
    %c0_i32 = arith.constant 0 : i32
    %c0_i32_0 = arith.constant 0 : i32
    %c0_i32_1 = arith.constant 0 : i32
    return %c0_i32, %c0_i32_0 : i32, i32
  }
  func.func @transform_10(%arg0: i32) -> (i32, i32) {
    %c0_i32 = arith.constant 0 : i32
    %c0_i32_0 = arith.constant 0 : i32
    return %arg0, %c0_i32 : i32, i32
  }
}

</mosaic_0001>

<llo_original>
// kernel: x3d_transformer_layer.3
$region0: #{x3d_transformer_layer.3}
  #allocation0 [shape = 'u32[]', space=smem, size = 0x4, offset = 0x4, fixed_abs, tag = 'smem constant byte address 0x4 - core index']
  #allocation1 [shape = 'u32[72,128]{1,0:T(1,128)}', space=vmem, size = 0x9000, scoped, tag = 'internal scratch']
  %s0 = inlined_call_operand.vmem [shape: f32[16,128], index: 0, kind: input, shape index: {}]
  %s1 = inlined_call_operand.vmem [shape: f32[128,384], index: 1, kind: input, shape index: {}]
  %s2 = inlined_call_operand.vmem [shape: f32[1,384], index: 2, kind: input, shape index: {}]
  %s3 = inlined_call_operand.vmem [shape: f32[16,384], index: 3, kind: output, shape index: {}]
  %s4 = sld [smem:[#allocation0]]
  $region22: #{x3d_transformer_layer.3} parent=0
    _
  %s6 = ssub.s32 1, %s4
  %s7 = scalar_select 0, %s6, %s4
  // Predicated region
  $region2: #{x3d_transformer_layer.3} parent=0 // pred_check
    _
  $region3: #{x3d_transformer_layer.3} parent=0 // pred_check_branch
    %9 = sbr.rel (0) target = $region5
  $region4: #{x3d_transformer_layer.3} parent=0 // pred_region
    _
  $region5: #{x3d_transformer_layer.3} parent=0 // pred_fallthru
    _
  // Predicated region
  $region6: #{x3d_transformer_layer.3} parent=0 // pred_check
    _
  $region7: #{x3d_transformer_layer.3} parent=0 // pred_check_branch
    %11 = sbr.rel (0) target = $region9
  $region8: #{x3d_transformer_layer.3} parent=0 // pred_region
    _
  $region9: #{x3d_transformer_layer.3} parent=0 // pred_fallthru
    _
  // Predicated region
  $region10: #{x3d_transformer_layer.3} parent=0 // pred_check
    _
  $region11: #{x3d_transformer_layer.3} parent=0 // pred_check_branch
    %13 = sbr.rel (0) target = $region13
  $region12: #{x3d_transformer_layer.3} parent=0 // pred_region
    _
  $region13: #{x3d_transformer_layer.3} parent=0 // pred_fallthru
    _
  %v14 = vld [vmem:[%s0] sm:$0xff]
  %v15 = vld [vmem:[%s0 + $0x8] sm:$0xff]
  %v16 = vld [vmem:[%s1] sm:$0xff]
  %v17 = vld [vmem:[%s1 + $0x8] sm:$0xff]
  %v18 = vld [vmem:[%s1 + $0x10] sm:$0xff]
  %v19 = vld [vmem:[%s1 + $0x18] sm:$0xff]
  %v20 = vld [vmem:[%s1 + $0x20] sm:$0xff]
  %v21 = vld [vmem:[%s1 + $0x28] sm:$0xff]
  %v22 = vld [vmem:[%s1 + $0x30] sm:$0xff]
  %v23 = vld [vmem:[%s1 + $0x38] sm:$0xff]
  %v24 = vld [vmem:[%s1 + $0x40] sm:$0xff]
  %v25 = vld [vmem:[%s1 + $0x48] sm:$0xff]
  %v26 = vld [vmem:[%s1 + $0x50] sm:$0xff]
  %v27 = vld [vmem:[%s1 + $0x58] sm:$0xff]
  %v28 = vld [vmem:[%s1 + $0x60] sm:$0xff]
  %v29 = vld [vmem:[%s1 + $0x68] sm:$0xff]
  %v30 = vld [vmem:[%s1 + $0x70] sm:$0xff]
  %v31 = vld [vmem:[%s1 + $0x78] sm:$0xff]
  %v32 = vld [vmem:[%s1 + $0x80] sm:$0xff]
  %v33 = vld [vmem:[%s1 + $0x88] sm:$0xff]
  %v34 = vld [vmem:[%s1 + $0x90] sm:$0xff]
  %v35 = vld [vmem:[%s1 + $0x98] sm:$0xff]
  %v36 = vld [vmem:[%s1 + $0xa0] sm:$0xff]
  %v37 = vld [vmem:[%s1 + $0xa8] sm:$0xff]
  %v38 = vld [vmem:[%s1 + $0xb0] sm:$0xff]
  %v39 = vld [vmem:[%s1 + $0xb8] sm:$0xff]
  %v40 = vld [vmem:[%s1 + $0xc0] sm:$0xff]
  %v41 = vld [vmem:[%s1 + $0xc8] sm:$0xff]
  %v42 = vld [vmem:[%s1 + $0xd0] sm:$0xff]
  %v43 = vld [vmem:[%s1 + $0xd8] sm:$0xff]
  %v44 = vld [vmem:[%s1 + $0xe0] sm:$0xff]
  %v45 = vld [vmem:[%s1 + $0xe8] sm:$0xff]
  %v46 = vld [vmem:[%s1 + $0xf0] sm:$0xff]
  %v47 = vld [vmem:[%s1 + $0xf8] sm:$0xff]
  %v48 = vld [vmem:[%s1 + $0x100] sm:$0xff]
  %v49 = vld [vmem:[%s1 + $0x108] sm:$0xff]
  %v50 = vld [vmem:[%s1 + $0x110] sm:$0xff]
  %v51 = vld [vmem:[%s1 + $0x118] sm:$0xff]
  %v52 = vld [vmem:[%s1 + $0x120] sm:$0xff]
  %v53 = vld [vmem:[%s1 + $0x128] sm:$0xff]
  %v54 = vld [vmem:[%s1 + $0x130] sm:$0xff]
  %v55 = vld [vmem:[%s1 + $0x138] sm:$0xff]
  %v56 = vld [vmem:[%s1 + $0x140] sm:$0xff]
  %v57 = vld [vmem:[%s1 + $0x148] sm:$0xff]
  %v58 = vld [vmem:[%s1 + $0x150] sm:$0xff]
  %v59 = vld [vmem:[%s1 + $0x158] sm:$0xff]
  %v60 = vld [vmem:[%s1 + $0x160] sm:$0xff]
  %v61 = vld [vmem:[%s1 + $0x168] sm:$0xff]
  %v62 = vld [vmem:[%s1 + $0x170] sm:$0xff]
  %v63 = vld [vmem:[%s1 + $0x178] sm:$0xff]
  %v64 = vld [vmem:[%s2] sm:$0x7]
  %v66 = vperm.slane %v64, 0
  %v67 = vperm.slane %v64, 1
  %v68 = vperm.slane %v64, 2
  %v72 = vand.u32 %v61, 4294901760
  %73 = vmatpush.msra.mxu0 %v72
  %v74 = vand.u32 %v58, 4294901760
  %75 = vmatpush.msra.mxu0 %v74
  %v76 = vand.u32 %v55, 4294901760
  %77 = vmatpush.msra.mxu0 %v76
  %v78 = vand.u32 %v52, 4294901760
  %79 = vmatpush.msra.mxu0 %v78
  %v80 = vand.u32 %v49, 4294901760
  %81 = vmatpush.msra.mxu0 %v80
  %v82 = vand.u32 %v46, 4294901760
  %83 = vmatpush.msra.mxu0 %v82
  %v84 = vand.u32 %v43, 4294901760
  %85 = vmatpush.msra.mxu0 %v84
  %v86 = vand.u32 %v40, 4294901760
  %87 = vmatpush.msra.mxu0 %v86
  %v88 = vand.u32 %v37, 4294901760
  %89 = vmatpush.msra.mxu0 %v88
  %v90 = vand.u32 %v34, 4294901760
  %91 = vmatpush.msra.mxu0 %v90
  %v92 = vand.u32 %v31, 4294901760
  %93 = vmatpush.msra.mxu0 %v92
  %v94 = vand.u32 %v28, 4294901760
  %95 = vmatpush.msra.mxu0 %v94
  %v96 = vand.u32 %v25, 4294901760
  %97 = vmatpush.msra.mxu0 %v96
  %v98 = vand.u32 %v22, 4294901760
  %99 = vmatpush.msra.mxu0 %v98
  %v100 = vand.u32 %v19, 4294901760
  %101 = vmatpush.msra.mxu0 %v100
  %v102 = vand.u32 %v16, 4294901760
  %103 = vmatpush.msra.mxu0 %v102
  %v104 = vand.u32 %v14, 4294901760
  %v105 = vsub.f32 %v14, %v104
  %v106 = vand.u32 %v105, 4294901760
  %v107 = vsub.f32 %v105, %v106
  %v108 = vand.u32 %v107, 4294901760
  %109 = vmatmul.f32.gmra.mxu0 %v108
  %v110 = vpop.f32.mrf.mxu0
  %v111 = vadd.f32 %v66, %v110
  %v112 = vand.u32 %v15, 4294901760
  %v113 = vsub.f32 %v15, %v112
  %v114 = vand.u32 %v113, 4294901760
  %v115 = vsub.f32 %v113, %v114
  %v116 = vand.u32 %v115, 4294901760
  %117 = vmatmul.f32.gmra.mxu0 %v116
  %v118 = vpop.f32.mrf.mxu0
  %v119 = vadd.f32 %v66, %v118
  %120 = vdwg.mxu0
  %v121 = vand.u32 %v61, 4294901760
  %v122 = vsub.f32 %v61, %v121
  %v123 = vand.u32 %v122, 4294901760
  %v124 = vsub.f32 %v122, %v123
  %v125 = vand.u32 %v124, 4294901760
  %126 = vmatpush.msra.mxu0 %v125
  %v127 = vand.u32 %v58, 4294901760
  %v128 = vsub.f32 %v58, %v127
  %v129 = vand.u32 %v128, 4294901760
  %v130 = vsub.f32 %v128, %v129
  %v131 = vand.u32 %v130, 4294901760
  %132 = vmatpush.msra.mxu0 %v131
  %v133 = vand.u32 %v55, 4294901760
  %v134 = vsub.f32 %v55, %v133
  %v135 = vand.u32 %v134, 4294901760
  %v136 = vsub.f32 %v134, %v135
  %v137 = vand.u32 %v136, 4294901760
  %138 = vmatpush.msra.mxu0 %v137
  %v139 = vand.u32 %v52, 4294901760
  %v140 = vsub.f32 %v52, %v139
  %v141 = vand.u32 %v140, 4294901760
  %v142 = vsub.f32 %v140, %v141
  %v143 = vand.u32 %v142, 4294901760
  %144 = vmatpush.msra.mxu0 %v143
  %v145 = vand.u32 %v49, 4294901760
  %v146 = vsub.f32 %v49, %v145
  %v147 = vand.u32 %v146, 4294901760
  %v148 = vsub.f32 %v146, %v147
  %v149 = vand.u32 %v148, 4294901760
  %150 = vmatpush.msra.mxu0 %v149
  %v151 = vand.u32 %v46, 4294901760
  %v152 = vsub.f32 %v46, %v151
  %v153 = vand.u32 %v152, 4294901760
  %v154 = vsub.f32 %v152, %v153
  %v155 = vand.u32 %v154, 4294901760
  %156 = vmatpush.msra.mxu0 %v155
  %v157 = vand.u32 %v43, 4294901760
  %v158 = vsub.f32 %v43, %v157
  %v159 = vand.u32 %v158, 4294901760
  %v160 = vsub.f32 %v158, %v159
  %v161 = vand.u32 %v160, 4294901760
  %162 = vmatpush.msra.mxu0 %v161
  %v163 = vand.u32 %v40, 4294901760
  %v164 = vsub.f32 %v40, %v163
  %v165 = vand.u32 %v164, 4294901760
  %v166 = vsub.f32 %v164, %v165
  %v167 = vand.u32 %v166, 4294901760
  %168 = vmatpush.msra.mxu0 %v167
  %v169 = vand.u32 %v37, 4294901760
  %v170 = vsub.f32 %v37, %v169
  %v171 = vand.u32 %v170, 4294901760
  %v172 = vsub.f32 %v170, %v171
  %v173 = vand.u32 %v172, 4294901760
  %174 = vmatpush.msra.mxu0 %v173
  %v175 = vand.u32 %v34, 4294901760
  %v176 = vsub.f32 %v34, %v175
  %v177 = vand.u32 %v176, 4294901760
  %v178 = vsub.f32 %v176, %v177
  %v179 = vand.u32 %v178, 4294901760
  %180 = vmatpush.msra.mxu0 %v179
  %v181 = vand.u32 %v31, 4294901760
  %v182 = vsub.f32 %v31, %v181
  %v183 = vand.u32 %v182, 4294901760
  %v184 = vsub.f32 %v182, %v183
  %v185 = vand.u32 %v184, 4294901760
  %186 = vmatpush.msra.mxu0 %v185
  %v187 = vand.u32 %v28, 4294901760
  %v188 = vsub.f32 %v28, %v187
  %v189 = vand.u32 %v188, 4294901760
  %v190 = vsub.f32 %v188, %v189
  %v191 = vand.u32 %v190, 4294901760
  %192 = vmatpush.msra.mxu0 %v191
  %v193 = vand.u32 %v25, 4294901760
  %v194 = vsub.f32 %v25, %v193
  %v195 = vand.u32 %v194, 4294901760
  %v196 = vsub.f32 %v194, %v195
  %v197 = vand.u32 %v196, 4294901760
  %198 = vmatpush.msra.mxu0 %v197
  %v199 = vand.u32 %v22, 4294901760
  %v200 = vsub.f32 %v22, %v199
  %v201 = vand.u32 %v200, 4294901760
  %v202 = vsub.f32 %v200, %v201
  %v203 = vand.u32 %v202, 4294901760
  %204 = vmatpush.msra.mxu0 %v203
  %v205 = vand.u32 %v19, 4294901760
  %v206 = vsub.f32 %v19, %v205
  %v207 = vand.u32 %v206, 4294901760
  %v208 = vsub.f32 %v206, %v207
  %v209 = vand.u32 %v208, 4294901760
  %210 = vmatpush.msra.mxu0 %v209
  %v211 = vand.u32 %v16, 4294901760
  %v212 = vsub.f32 %v16, %v211
  %v213 = vand.u32 %v212, 4294901760
  %v214 = vsub.f32 %v212, %v213
  %v215 = vand.u32 %v214, 4294901760
  %216 = vmatpush.msra.mxu0 %v215
  %v217 = vand.u32 %v14, 4294901760
  %218 = vmatmul.f32.gmra.mxu0 %v217
  %v219 = vpop.f32.mrf.mxu0
  %v220 = vadd.f32 %v111, %v219
  %v221 = vand.u32 %v15, 4294901760
  %222 = vmatmul.f32.gmra.mxu0 %v221
  %v223 = vpop.f32.mrf.mxu0
  %v224 = vadd.f32 %v119, %v223
  %225 = vdwg.mxu0
  %v226 = vand.u32 %v61, 4294901760
  %v227 = vsub.f32 %v61, %v226
  %228 = vmatpush.msra.mxu0 %v227
  %v229 = vand.u32 %v58, 4294901760
  %v230 = vsub.f32 %v58, %v229
  %231 = vmatpush.msra.mxu0 %v230
  %v232 = vand.u32 %v55, 4294901760
  %v233 = vsub.f32 %v55, %v232
  %234 = vmatpush.msra.mxu0 %v233
  %v235 = vand.u32 %v52, 4294901760
  %v236 = vsub.f32 %v52, %v235
  %237 = vmatpush.msra.mxu0 %v236
  %v238 = vand.u32 %v49, 4294901760
  %v239 = vsub.f32 %v49, %v238
  %240 = vmatpush.msra.mxu0 %v239
  %v241 = vand.u32 %v46, 4294901760
  %v242 = vsub.f32 %v46, %v241
  %243 = vmatpush.msra.mxu0 %v242
  %v244 = vand.u32 %v43, 4294901760
  %v245 = vsub.f32 %v43, %v244
  %246 = vmatpush.msra.mxu0 %v245
  %v247 = vand.u32 %v40, 4294901760
  %v248 = vsub.f32 %v40, %v247
  %249 = vmatpush.msra.mxu0 %v248
  %v250 = vand.u32 %v37, 4294901760
  %v251 = vsub.f32 %v37, %v250
  %252 = vmatpush.msra.mxu0 %v251
  %v253 = vand.u32 %v34, 4294901760
  %v254 = vsub.f32 %v34, %v253
  %255 = vmatpush.msra.mxu0 %v254
  %v256 = vand.u32 %v31, 4294901760
  %v257 = vsub.f32 %v31, %v256
  %258 = vmatpush.msra.mxu0 %v257
  %v259 = vand.u32 %v28, 4294901760
  %v260 = vsub.f32 %v28, %v259
  %261 = vmatpush.msra.mxu0 %v260
  %v262 = vand.u32 %v25, 4294901760
  %v263 = vsub.f32 %v25, %v262
  %264 = vmatpush.msra.mxu0 %v263
  %v265 = vand.u32 %v22, 4294901760
  %v266 = vsub.f32 %v22, %v265
  %267 = vmatpush.msra.mxu0 %v266
  %v268 = vand.u32 %v19, 4294901760
  %v269 = vsub.f32 %v19, %v268
  %270 = vmatpush.msra.mxu0 %v269
  %v271 = vand.u32 %v16, 4294901760
  %v272 = vsub.f32 %v16, %v271
  %273 = vmatpush.msra.mxu0 %v272
  %v274 = vand.u32 %v14, 4294901760
  %v275 = vsub.f32 %v14, %v274
  %276 = vmatmul.f32.gmra.mxu0 %v275
  %v277 = vpop.f32.mrf.mxu0
  %v278 = vadd.f32 %v220, %v277
  %v279 = vand.u32 %v15, 4294901760
  %v280 = vsub.f32 %v15, %v279
  %281 = vmatmul.f32.gmra.mxu0 %v280
  %v282 = vpop.f32.mrf.mxu0
  %v283 = vadd.f32 %v224, %v282
  %284 = vdwg.mxu0
  %v285 = vand.u32 %v61, 4294901760
  %286 = vmatpush.msra.mxu0 %v285
  %v287 = vand.u32 %v58, 4294901760
  %288 = vmatpush.msra.mxu0 %v287
  %v289 = vand.u32 %v55, 4294901760
  %290 = vmatpush.msra.mxu0 %v289
  %v291 = vand.u32 %v52, 4294901760
  %292 = vmatpush.msra.mxu0 %v291
  %v293 = vand.u32 %v49, 4294901760
  %294 = vmatpush.msra.mxu0 %v293
  %v295 = vand.u32 %v46, 4294901760
  %296 = vmatpush.msra.mxu0 %v295
  %v297 = vand.u32 %v43, 4294901760
  %298 = vmatpush.msra.mxu0 %v297
  %v299 = vand.u32 %v40, 4294901760
  %300 = vmatpush.msra.mxu0 %v299
  %v301 = vand.u32 %v37, 4294901760
  %302 = vmatpush.msra.mxu0 %v301
  %v303 = vand.u32 %v34, 4294901760
  %304 = vmatpush.msra.mxu0 %v303
  %v305 = vand.u32 %v31, 4294901760
  %306 = vmatpush.msra.mxu0 %v305
  %v307 = vand.u32 %v28, 4294901760
  %308 = vmatpush.msra.mxu0 %v307
  %v309 = vand.u32 %v25, 4294901760
  %310 = vmatpush.msra.mxu0 %v309
  %v311 = vand.u32 %v22, 4294901760
  %312 = vmatpush.msra.mxu0 %v311
  %v313 = vand.u32 %v19, 4294901760
  %314 = vmatpush.msra.mxu0 %v313
  %v315 = vand.u32 %v16, 4294901760
  %316 = vmatpush.msra.mxu0 %v315
  %v317 = vand.u32 %v14, 4294901760
  %v318 = vsub.f32 %v14, %v317
  %v319 = vand.u32 %v318, 4294901760
  %320 = vmatmul.f32.gmra.mxu0 %v319
  %v321 = vpop.f32.mrf.mxu0
  %v322 = vadd.f32 %v278, %v321
  %v323 = vand.u32 %v15, 4294901760
  %v324 = vsub.f32 %v15, %v323
  %v325 = vand.u32 %v324, 4294901760
  %326 = vmatmul.f32.gmra.mxu0 %v325
  %v327 = vpop.f32.mrf.mxu0
  %v328 = vadd.f32 %v283, %v327
  %329 = vdwg.mxu0
  %v330 = vand.u32 %v61, 4294901760
  %v331 = vsub.f32 %v61, %v330
  %v332 = vand.u32 %v331, 4294901760
  %333 = vmatpush.msra.mxu0 %v332
  %v334 = vand.u32 %v58, 4294901760
  %v335 = vsub.f32 %v58, %v334
  %v336 = vand.u32 %v335, 4294901760
  %337 = vmatpush.msra.mxu0 %v336
  %v338 = vand.u32 %v55, 4294901760
  %v339 = vsub.f32 %v55, %v338
  %v340 = vand.u32 %v339, 4294901760
  %341 = vmatpush.msra.mxu0 %v340
  %v342 = vand.u32 %v52, 4294901760
  %v343 = vsub.f32 %v52, %v342
  %v344 = vand.u32 %v343, 4294901760
  %345 = vmatpush.msra.mxu0 %v344
  %v346 = vand.u32 %v49, 4294901760
  %v347 = vsub.f32 %v49, %v346
  %v348 = vand.u32 %v347, 4294901760
  %349 = vmatpush.msra.mxu0 %v348
  %v350 = vand.u32 %v46, 4294901760
  %v351 = vsub.f32 %v46, %v350
  %v352 = vand.u32 %v351, 4294901760
  %353 = vmatpush.msra.mxu0 %v352
  %v354 = vand.u32 %v43, 4294901760
  %v355 = vsub.f32 %v43, %v354
  %v356 = vand.u32 %v355, 4294901760
  %357 = vmatpush.msra.mxu0 %v356
  %v358 = vand.u32 %v40, 4294901760
  %v359 = vsub.f32 %v40, %v358
  %v360 = vand.u32 %v359, 4294901760
  %361 = vmatpush.msra.mxu0 %v360
  %v362 = vand.u32 %v37, 4294901760
  %v363 = vsub.f32 %v37, %v362
  %v364 = vand.u32 %v363, 4294901760
  %365 = vmatpush.msra.mxu0 %v364
  %v366 = vand.u32 %v34, 4294901760
  %v367 = vsub.f32 %v34, %v366
  %v368 = vand.u32 %v367, 4294901760
  %369 = vmatpush.msra.mxu0 %v368
  %v370 = vand.u32 %v31, 4294901760
  %v371 = vsub.f32 %v31, %v370
  %v372 = vand.u32 %v371, 4294901760
  %373 = vmatpush.msra.mxu0 %v372
  %v374 = vand.u32 %v28, 4294901760
  %v375 = vsub.f32 %v28, %v374
  %v376 = vand.u32 %v375, 4294901760
  %377 = vmatpush.msra.mxu0 %v376
  %v378 = vand.u32 %v25, 4294901760
  %v379 = vsub.f32 %v25, %v378
  %v380 = vand.u32 %v379, 4294901760
  %381 = vmatpush.msra.mxu0 %v380
  %v382 = vand.u32 %v22, 4294901760
  %v383 = vsub.f32 %v22, %v382
  %v384 = vand.u32 %v383, 4294901760
  %385 = vmatpush.msra.mxu0 %v384
  %v386 = vand.u32 %v19, 4294901760
  %v387 = vsub.f32 %v19, %v386
  %v388 = vand.u32 %v387, 4294901760
  %389 = vmatpush.msra.mxu0 %v388
  %v390 = vand.u32 %v16, 4294901760
  %v391 = vsub.f32 %v16, %v390
  %v392 = vand.u32 %v391, 4294901760
  %393 = vmatpush.msra.mxu0 %v392
  %v394 = vand.u32 %v14, 4294901760
  %395 = vmatmul.f32.gmra.mxu0 %v394
  %v396 = vpop.f32.mrf.mxu0
  %v397 = vadd.f32 %v322, %v396
  %v398 = vand.u32 %v15, 4294901760
  %399 = vmatmul.f32.gmra.mxu0 %v398
  %v400 = vpop.f32.mrf.mxu0
  %v401 = vadd.f32 %v328, %v400
  %402 = vdwg.mxu0
  %v403 = vand.u32 %v61, 4294901760
  %404 = vmatpush.msra.mxu0 %v403
  %v405 = vand.u32 %v58, 4294901760
  %406 = vmatpush.msra.mxu0 %v405
  %v407 = vand.u32 %v55, 4294901760
  %408 = vmatpush.msra.mxu0 %v407
  %v409 = vand.u32 %v52, 4294901760
  %410 = vmatpush.msra.mxu0 %v409
  %v411 = vand.u32 %v49, 4294901760
  %412 = vmatpush.msra.mxu0 %v411
  %v413 = vand.u32 %v46, 4294901760
  %414 = vmatpush.msra.mxu0 %v413
  %v415 = vand.u32 %v43, 4294901760
  %416 = vmatpush.msra.mxu0 %v415
  %v417 = vand.u32 %v40, 4294901760
  %418 = vmatpush.msra.mxu0 %v417
  %v419 = vand.u32 %v37, 4294901760
  %420 = vmatpush.msra.mxu0 %v419
  %v421 = vand.u32 %v34, 4294901760
  %422 = vmatpush.msra.mxu0 %v421
  %v423 = vand.u32 %v31, 4294901760
  %424 = vmatpush.msra.mxu0 %v423
  %v425 = vand.u32 %v28, 4294901760
  %426 = vmatpush.msra.mxu0 %v425
  %v427 = vand.u32 %v25, 4294901760
  %428 = vmatpush.msra.mxu0 %v427
  %v429 = vand.u32 %v22, 4294901760
  %430 = vmatpush.msra.mxu0 %v429
  %v431 = vand.u32 %v19, 4294901760
  %432 = vmatpush.msra.mxu0 %v431
  %v433 = vand.u32 %v16, 4294901760
  %434 = vmatpush.msra.mxu0 %v433
  %v435 = vand.u32 %v14, 4294901760
  %436 = vmatmul.f32.gmra.mxu0 %v435
  %v437 = vpop.f32.mrf.mxu0
  %v438 = vadd.f32 %v397, %v437
  %v439 = vand.u32 %v15, 4294901760
  %440 = vmatmul.f32.gmra.mxu0 %v439
  %v441 = vpop.f32.mrf.mxu0
  %v442 = vadd.f32 %v401, %v441
  %443 = vdwg.mxu0
  %v444 = vand.u32 %v62, 4294901760
  %445 = vmatpush.msra.mxu0 %v444
  %v446 = vand.u32 %v59, 4294901760
  %447 = vmatpush.msra.mxu0 %v446
  %v448 = vand.u32 %v56, 4294901760
  %449 = vmatpush.msra.mxu0 %v448
  %v450 = vand.u32 %v53, 4294901760
  %451 = vmatpush.msra.mxu0 %v450
  %v452 = vand.u32 %v50, 4294901760
  %453 = vmatpush.msra.mxu0 %v452
  %v454 = vand.u32 %v47, 4294901760
  %455 = vmatpush.msra.mxu0 %v454
  %v456 = vand.u32 %v44, 4294901760
  %457 = vmatpush.msra.mxu0 %v456
  %v458 = vand.u32 %v41, 4294901760
  %459 = vmatpush.msra.mxu0 %v458
  %v460 = vand.u32 %v38, 4294901760
  %461 = vmatpush.msra.mxu0 %v460
  %v462 = vand.u32 %v35, 4294901760
  %463 = vmatpush.msra.mxu0 %v462
  %v464 = vand.u32 %v32, 4294901760
  %465 = vmatpush.msra.mxu0 %v464
  %v466 = vand.u32 %v29, 4294901760
  %467 = vmatpush.msra.mxu0 %v466
  %v468 = vand.u32 %v26, 4294901760
  %469 = vmatpush.msra.mxu0 %v468
  %v470 = vand.u32 %v23, 4294901760
  %471 = vmatpush.msra.mxu0 %v470
  %v472 = vand.u32 %v20, 4294901760
  %473 = vmatpush.msra.mxu0 %v472
  %v474 = vand.u32 %v17, 4294901760
  %475 = vmatpush.msra.mxu0 %v474
  %v476 = vand.u32 %v14, 4294901760
  %v477 = vsub.f32 %v14, %v476
  %v478 = vand.u32 %v477, 4294901760
  %v479 = vsub.f32 %v477, %v478
  %v480 = vand.u32 %v479, 4294901760
  %481 = vmatmul.f32.gmra.mxu0 %v480
  %v482 = vpop.f32.mrf.mxu0
  %v483 = vadd.f32 %v67, %v482
  %v484 = vand.u32 %v15, 4294901760
  %v485 = vsub.f32 %v15, %v484
  %v486 = vand.u32 %v485, 4294901760
  %v487 = vsub.f32 %v485, %v486
  %v488 = vand.u32 %v487, 4294901760
  %489 = vmatmul.f32.gmra.mxu0 %v488
  %v490 = vpop.f32.mrf.mxu0
  %v491 = vadd.f32 %v67, %v490
  %492 = vdwg.mxu0
  %v493 = vand.u32 %v62, 4294901760
  %v494 = vsub.f32 %v62, %v493
  %v495 = vand.u32 %v494, 4294901760
  %v496 = vsub.f32 %v494, %v495
  %v497 = vand.u32 %v496, 4294901760
  %498 = vmatpush.msra.mxu0 %v497
  %v499 = vand.u32 %v59, 4294901760
  %v500 = vsub.f32 %v59, %v499
  %v501 = vand.u32 %v500, 4294901760
  %v502 = vsub.f32 %v500, %v501
  %v503 = vand.u32 %v502, 4294901760
  %504 = vmatpush.msra.mxu0 %v503
  %v505 = vand.u32 %v56, 4294901760
  %v506 = vsub.f32 %v56, %v505
  %v507 = vand.u32 %v506, 4294901760
  %v508 = vsub.f32 %v506, %v507
  %v509 = vand.u32 %v508, 4294901760
  %510 = vmatpush.msra.mxu0 %v509
  %v511 = vand.u32 %v53, 4294901760
  %v512 = vsub.f32 %v53, %v511
  %v513 = vand.u32 %v512, 4294901760
  %v514 = vsub.f32 %v512, %v513
  %v515 = vand.u32 %v514, 4294901760
  %516 = vmatpush.msra.mxu0 %v515
  %v517 = vand.u32 %v50, 4294901760
  %v518 = vsub.f32 %v50, %v517
  %v519 = vand.u32 %v518, 4294901760
  %v520 = vsub.f32 %v518, %v519
  %v521 = vand.u32 %v520, 4294901760
  %522 = vmatpush.msra.mxu0 %v521
  %v523 = vand.u32 %v47, 4294901760
  %v524 = vsub.f32 %v47, %v523
  %v525 = vand.u32 %v524, 4294901760
  %v526 = vsub.f32 %v524, %v525
  %v527 = vand.u32 %v526, 4294901760
  %528 = vmatpush.msra.mxu0 %v527
  %v529 = vand.u32 %v44, 4294901760
  %v530 = vsub.f32 %v44, %v529
  %v531 = vand.u32 %v530, 4294901760
  %v532 = vsub.f32 %v530, %v531
  %v533 = vand.u32 %v532, 4294901760
  %534 = vmatpush.msra.mxu0 %v533
  %v535 = vand.u32 %v41, 4294901760
  %v536 = vsub.f32 %v41, %v535
  %v537 = vand.u32 %v536, 4294901760
  %v538 = vsub.f32 %v536, %v537
  %v539 = vand.u32 %v538, 4294901760
  %540 = vmatpush.msra.mxu0 %v539
  %v541 = vand.u32 %v38, 4294901760
  %v542 = vsub.f32 %v38, %v541
  %v543 = vand.u32 %v542, 4294901760
  %v544 = vsub.f32 %v542, %v543
  %v545 = vand.u32 %v544, 4294901760
  %546 = vmatpush.msra.mxu0 %v545
  %v547 = vand.u32 %v35, 4294901760
  %v548 = vsub.f32 %v35, %v547
  %v549 = vand.u32 %v548, 4294901760
  %v550 = vsub.f32 %v548, %v549
  %v551 = vand.u32 %v550, 4294901760
  %552 = vmatpush.msra.mxu0 %v551
  %v553 = vand.u32 %v32, 4294901760
  %v554 = vsub.f32 %v32, %v553
  %v555 = vand.u32 %v554, 4294901760
  %v556 = vsub.f32 %v554, %v555
  %v557 = vand.u32 %v556, 4294901760
  %558 = vmatpush.msra.mxu0 %v557
  %v559 = vand.u32 %v29, 4294901760
  %v560 = vsub.f32 %v29, %v559
  %v561 = vand.u32 %v560, 4294901760
  %v562 = vsub.f32 %v560, %v561
  %v563 = vand.u32 %v562, 4294901760
  %564 = vmatpush.msra.mxu0 %v563
  %v565 = vand.u32 %v26, 4294901760
  %v566 = vsub.f32 %v26, %v565
  %v567 = vand.u32 %v566, 4294901760
  %v568 = vsub.f32 %v566, %v567
  %v569 = vand.u32 %v568, 4294901760
  %570 = vmatpush.msra.mxu0 %v569
  %v571 = vand.u32 %v23, 4294901760
  %v572 = vsub.f32 %v23, %v571
  %v573 = vand.u32 %v572, 4294901760
  %v574 = vsub.f32 %v572, %v573
  %v575 = vand.u32 %v574, 4294901760
  %576 = vmatpush.msra.mxu0 %v575
  %v577 = vand.u32 %v20, 4294901760
  %v578 = vsub.f32 %v20, %v577
  %v579 = vand.u32 %v578, 4294901760
  %v580 = vsub.f32 %v578, %v579
  %v581 = vand.u32 %v580, 4294901760
  %582 = vmatpush.msra.mxu0 %v581
  %v583 = vand.u32 %v17, 4294901760
  %v584 = vsub.f32 %v17, %v583
  %v585 = vand.u32 %v584, 4294901760
  %v586 = vsub.f32 %v584, %v585
  %v587 = vand.u32 %v586, 4294901760
  %588 = vmatpush.msra.mxu0 %v587
  %v589 = vand.u32 %v14, 4294901760
  %590 = vmatmul.f32.gmra.mxu0 %v589
  %v591 = vpop.f32.mrf.mxu0
  %v592 = vadd.f32 %v483, %v591
  %v593 = vand.u32 %v15, 4294901760
  %594 = vmatmul.f32.gmra.mxu0 %v593
  %v595 = vpop.f32.mrf.mxu0
  %v596 = vadd.f32 %v491, %v595
  %597 = vdwg.mxu0
  %v598 = vand.u32 %v62, 4294901760
  %v599 = vsub.f32 %v62, %v598
  %600 = vmatpush.msra.mxu0 %v599
  %v601 = vand.u32 %v59, 4294901760
  %v602 = vsub.f32 %v59, %v601
  %603 = vmatpush.msra.mxu0 %v602
  %v604 = vand.u32 %v56, 4294901760
  %v605 = vsub.f32 %v56, %v604
  %606 = vmatpush.msra.mxu0 %v605
  %v607 = vand.u32 %v53, 4294901760
  %v608 = vsub.f32 %v53, %v607
  %609 = vmatpush.msra.mxu0 %v608
  %v610 = vand.u32 %v50, 4294901760
  %v611 = vsub.f32 %v50, %v610
  %612 = vmatpush.msra.mxu0 %v611
  %v613 = vand.u32 %v47, 4294901760
  %v614 = vsub.f32 %v47, %v613
  %615 = vmatpush.msra.mxu0 %v614
  %v616 = vand.u32 %v44, 4294901760
  %v617 = vsub.f32 %v44, %v616
  %618 = vmatpush.msra.mxu0 %v617
  %v619 = vand.u32 %v41, 4294901760
  %v620 = vsub.f32 %v41, %v619
  %621 = vmatpush.msra.mxu0 %v620
  %v622 = vand.u32 %v38, 4294901760
  %v623 = vsub.f32 %v38, %v622
  %624 = vmatpush.msra.mxu0 %v623
  %v625 = vand.u32 %v35, 4294901760
  %v626 = vsub.f32 %v35, %v625
  %627 = vmatpush.msra.mxu0 %v626
  %v628 = vand.u32 %v32, 4294901760
  %v629 = vsub.f32 %v32, %v628
  %630 = vmatpush.msra.mxu0 %v629
  %v631 = vand.u32 %v29, 4294901760
  %v632 = vsub.f32 %v29, %v631
  %633 = vmatpush.msra.mxu0 %v632
  %v634 = vand.u32 %v26, 4294901760
  %v635 = vsub.f32 %v26, %v634
  %636 = vmatpush.msra.mxu0 %v635
  %v637 = vand.u32 %v23, 4294901760
  %v638 = vsub.f32 %v23, %v637
  %639 = vmatpush.msra.mxu0 %v638
  %v640 = vand.u32 %v20, 4294901760
  %v641 = vsub.f32 %v20, %v640
  %642 = vmatpush.msra.mxu0 %v641
  %v643 = vand.u32 %v17, 4294901760
  %v644 = vsub.f32 %v17, %v643
  %645 = vmatpush.msra.mxu0 %v644
  %v646 = vand.u32 %v14, 4294901760
  %v647 = vsub.f32 %v14, %v646
  %648 = vmatmul.f32.gmra.mxu0 %v647
  %v649 = vpop.f32.mrf.mxu0
  %v650 = vadd.f32 %v592, %v649
  %v651 = vand.u32 %v15, 4294901760
  %v652 = vsub.f32 %v15, %v651
  %653 = vmatmul.f32.gmra.mxu0 %v652
  %v654 = vpop.f32.mrf.mxu0
  %v655 = vadd.f32 %v596, %v654
  %656 = vdwg.mxu0
  %v657 = vand.u32 %v62, 4294901760
  %658 = vmatpush.msra.mxu0 %v657
  %v659 = vand.u32 %v59, 4294901760
  %660 = vmatpush.msra.mxu0 %v659
  %v661 = vand.u32 %v56, 4294901760
  %662 = vmatpush.msra.mxu0 %v661
  %v663 = vand.u32 %v53, 4294901760
  %664 = vmatpush.msra.mxu0 %v663
  %v665 = vand.u32 %v50, 4294901760
  %666 = vmatpush.msra.mxu0 %v665
  %v667 = vand.u32 %v47, 4294901760
  %668 = vmatpush.msra.mxu0 %v667
  %v669 = vand.u32 %v44, 4294901760
  %670 = vmatpush.msra.mxu0 %v669
  %v671 = vand.u32 %v41, 4294901760
  %672 = vmatpush.msra.mxu0 %v671
  %v673 = vand.u32 %v38, 4294901760
  %674 = vmatpush.msra.mxu0 %v673
  %v675 = vand.u32 %v35, 4294901760
  %676 = vmatpush.msra.mxu0 %v675
  %v677 = vand.u32 %v32, 4294901760
  %678 = vmatpush.msra.mxu0 %v677
  %v679 = vand.u32 %v29, 4294901760
  %680 = vmatpush.msra.mxu0 %v679
  %v681 = vand.u32 %v26, 4294901760
  %682 = vmatpush.msra.mxu0 %v681
  %v683 = vand.u32 %v23, 4294901760
  %684 = vmatpush.msra.mxu0 %v683
  %v685 = vand.u32 %v20, 4294901760
  %686 = vmatpush.msra.mxu0 %v685
  %v687 = vand.u32 %v17, 4294901760
  %688 = vmatpush.msra.mxu0 %v687
  %v689 = vand.u32 %v14, 4294901760
  %v690 = vsub.f32 %v14, %v689
  %v691 = vand.u32 %v690, 4294901760
  %692 = vmatmul.f32.gmra.mxu0 %v691
  %v693 = vpop.f32.mrf.mxu0
  %v694 = vadd.f32 %v650, %v693
  %v695 = vand.u32 %v15, 4294901760
  %v696 = vsub.f32 %v15, %v695
  %v697 = vand.u32 %v696, 4294901760
  %698 = vmatmul.f32.gmra.mxu0 %v697
  %v699 = vpop.f32.mrf.mxu0
  %v700 = vadd.f32 %v655, %v699
  %701 = vdwg.mxu0
  %v702 = vand.u32 %v62, 4294901760
  %v703 = vsub.f32 %v62, %v702
  %v704 = vand.u32 %v703, 4294901760
  %705 = vmatpush.msra.mxu0 %v704
  %v706 = vand.u32 %v59, 4294901760
  %v707 = vsub.f32 %v59, %v706
  %v708 = vand.u32 %v707, 4294901760
  %709 = vmatpush.msra.mxu0 %v708
  %v710 = vand.u32 %v56, 4294901760
  %v711 = vsub.f32 %v56, %v710
  %v712 = vand.u32 %v711, 4294901760
  %713 = vmatpush.msra.mxu0 %v712
  %v714 = vand.u32 %v53, 4294901760
  %v715 = vsub.f32 %v53, %v714
  %v716 = vand.u32 %v715, 4294901760
  %717 = vmatpush.msra.mxu0 %v716
  %v718 = vand.u32 %v50, 4294901760
  %v719 = vsub.f32 %v50, %v718
  %v720 = vand.u32 %v719, 4294901760
  %721 = vmatpush.msra.mxu0 %v720
  %v722 = vand.u32 %v47, 4294901760
  %v723 = vsub.f32 %v47, %v722
  %v724 = vand.u32 %v723, 4294901760
  %725 = vmatpush.msra.mxu0 %v724
  %v726 = vand.u32 %v44, 4294901760
  %v727 = vsub.f32 %v44, %v726
  %v728 = vand.u32 %v727, 4294901760
  %729 = vmatpush.msra.mxu0 %v728
  %v730 = vand.u32 %v41, 4294901760
  %v731 = vsub.f32 %v41, %v730
  %v732 = vand.u32 %v731, 4294901760
  %733 = vmatpush.msra.mxu0 %v732
  %v734 = vand.u32 %v38, 4294901760
  %v735 = vsub.f32 %v38, %v734
  %v736 = vand.u32 %v735, 4294901760
  %737 = vmatpush.msra.mxu0 %v736
  %v738 = vand.u32 %v35, 4294901760
  %v739 = vsub.f32 %v35, %v738
  %v740 = vand.u32 %v739, 4294901760
  %741 = vmatpush.msra.mxu0 %v740
  %v742 = vand.u32 %v32, 4294901760
  %v743 = vsub.f32 %v32, %v742
  %v744 = vand.u32 %v743, 4294901760
  %745 = vmatpush.msra.mxu0 %v744
  %v746 = vand.u32 %v29, 4294901760
  %v747 = vsub.f32 %v29, %v746
  %v748 = vand.u32 %v747, 4294901760
  %749 = vmatpush.msra.mxu0 %v748
  %v750 = vand.u32 %v26, 4294901760
  %v751 = vsub.f32 %v26, %v750
  %v752 = vand.u32 %v751, 4294901760
  %753 = vmatpush.msra.mxu0 %v752
  %v754 = vand.u32 %v23, 4294901760
  %v755 = vsub.f32 %v23, %v754
  %v756 = vand.u32 %v755, 4294901760
  %757 = vmatpush.msra.mxu0 %v756
  %v758 = vand.u32 %v20, 4294901760
  %v759 = vsub.f32 %v20, %v758
  %v760 = vand.u32 %v759, 4294901760
  %761 = vmatpush.msra.mxu0 %v760
  %v762 = vand.u32 %v17, 4294901760
  %v763 = vsub.f32 %v17, %v762
  %v764 = vand.u32 %v763, 4294901760
  %765 = vmatpush.msra.mxu0 %v764
  %v766 = vand.u32 %v14, 4294901760
  %767 = vmatmul.f32.gmra.mxu0 %v766
  %v768 = vpop.f32.mrf.mxu0
  %v769 = vadd.f32 %v694, %v768
  %v770 = vand.u32 %v15, 4294901760
  %771 = vmatmul.f32.gmra.mxu0 %v770
  %v772 = vpop.f32.mrf.mxu0
  %v773 = vadd.f32 %v700, %v772
  %774 = vdwg.mxu0
  %v775 = vand.u32 %v62, 4294901760
  %776 = vmatpush.msra.mxu0 %v775
  %v777 = vand.u32 %v59, 4294901760
  %778 = vmatpush.msra.mxu0 %v777
  %v779 = vand.u32 %v56, 4294901760
  %780 = vmatpush.msra.mxu0 %v779
  %v781 = vand.u32 %v53, 4294901760
  %782 = vmatpush.msra.mxu0 %v781
  %v783 = vand.u32 %v50, 4294901760
  %784 = vmatpush.msra.mxu0 %v783
  %v785 = vand.u32 %v47, 4294901760
  %786 = vmatpush.msra.mxu0 %v785
  %v787 = vand.u32 %v44, 4294901760
  %788 = vmatpush.msra.mxu0 %v787
  %v789 = vand.u32 %v41, 4294901760
  %790 = vmatpush.msra.mxu0 %v789
  %v791 = vand.u32 %v38, 4294901760
  %792 = vmatpush.msra.mxu0 %v791
  %v793 = vand.u32 %v35, 4294901760
  %794 = vmatpush.msra.mxu0 %v793
  %v795 = vand.u32 %v32, 4294901760
  %796 = vmatpush.msra.mxu0 %v795
  %v797 = vand.u32 %v29, 4294901760
  %798 = vmatpush.msra.mxu0 %v797
  %v799 = vand.u32 %v26, 4294901760
  %800 = vmatpush.msra.mxu0 %v799
  %v801 = vand.u32 %v23, 4294901760
  %802 = vmatpush.msra.mxu0 %v801
  %v803 = vand.u32 %v20, 4294901760
  %804 = vmatpush.msra.mxu0 %v803
  %v805 = vand.u32 %v17, 4294901760
  %806 = vmatpush.msra.mxu0 %v805
  %v807 = vand.u32 %v14, 4294901760
  %808 = vmatmul.f32.gmra.mxu0 %v807
  %v809 = vpop.f32.mrf.mxu0
  %v810 = vadd.f32 %v769, %v809
  %v811 = vand.u32 %v15, 4294901760
  %812 = vmatmul.f32.gmra.mxu0 %v811
  %v813 = vpop.f32.mrf.mxu0
  %v814 = vadd.f32 %v773, %v813
  %815 = vdwg.mxu0
  %v816 = vand.u32 %v63, 4294901760
  %817 = vmatpush.msra.mxu0 %v816
  %v818 = vand.u32 %v60, 4294901760
  %819 = vmatpush.msra.mxu0 %v818
  %v820 = vand.u32 %v57, 4294901760
  %821 = vmatpush.msra.mxu0 %v820
  %v822 = vand.u32 %v54, 4294901760
  %823 = vmatpush.msra.mxu0 %v822
  %v824 = vand.u32 %v51, 4294901760
  %825 = vmatpush.msra.mxu0 %v824
  %v826 = vand.u32 %v48, 4294901760
  %827 = vmatpush.msra.mxu0 %v826
  %v828 = vand.u32 %v45, 4294901760
  %829 = vmatpush.msra.mxu0 %v828
  %v830 = vand.u32 %v42, 4294901760
  %831 = vmatpush.msra.mxu0 %v830
  %v832 = vand.u32 %v39, 4294901760
  %833 = vmatpush.msra.mxu0 %v832
  %v834 = vand.u32 %v36, 4294901760
  %835 = vmatpush.msra.mxu0 %v834
  %v836 = vand.u32 %v33, 4294901760
  %837 = vmatpush.msra.mxu0 %v836
  %v838 = vand.u32 %v30, 4294901760
  %839 = vmatpush.msra.mxu0 %v838
  %v840 = vand.u32 %v27, 4294901760
  %841 = vmatpush.msra.mxu0 %v840
  %v842 = vand.u32 %v24, 4294901760
  %843 = vmatpush.msra.mxu0 %v842
  %v844 = vand.u32 %v21, 4294901760
  %845 = vmatpush.msra.mxu0 %v844
  %v846 = vand.u32 %v18, 4294901760
  %847 = vmatpush.msra.mxu0 %v846
  %v848 = vand.u32 %v14, 4294901760
  %v849 = vsub.f32 %v14, %v848
  %v850 = vand.u32 %v849, 4294901760
  %v851 = vsub.f32 %v849, %v850
  %v852 = vand.u32 %v851, 4294901760
  %853 = vmatmul.f32.gmra.mxu0 %v852
  %v854 = vpop.f32.mrf.mxu0
  %v855 = vadd.f32 %v68, %v854
  %v856 = vand.u32 %v15, 4294901760
  %v857 = vsub.f32 %v15, %v856
  %v858 = vand.u32 %v857, 4294901760
  %v859 = vsub.f32 %v857, %v858
  %v860 = vand.u32 %v859, 4294901760
  %861 = vmatmul.f32.gmra.mxu0 %v860
  %v862 = vpop.f32.mrf.mxu0
  %v863 = vadd.f32 %v68, %v862
  %864 = vdwg.mxu0
  %v865 = vand.u32 %v63, 4294901760
  %v866 = vsub.f32 %v63, %v865
  %v867 = vand.u32 %v866, 4294901760
  %v868 = vsub.f32 %v866, %v867
  %v869 = vand.u32 %v868, 4294901760
  %870 = vmatpush.msra.mxu0 %v869
  %v871 = vand.u32 %v60, 4294901760
  %v872 = vsub.f32 %v60, %v871
  %v873 = vand.u32 %v872, 4294901760
  %v874 = vsub.f32 %v872, %v873
  %v875 = vand.u32 %v874, 4294901760
  %876 = vmatpush.msra.mxu0 %v875
  %v877 = vand.u32 %v57, 4294901760
  %v878 = vsub.f32 %v57, %v877
  %v879 = vand.u32 %v878, 4294901760
  %v880 = vsub.f32 %v878, %v879
  %v881 = vand.u32 %v880, 4294901760
  %882 = vmatpush.msra.mxu0 %v881
  %v883 = vand.u32 %v54, 4294901760
  %v884 = vsub.f32 %v54, %v883
  %v885 = vand.u32 %v884, 4294901760
  %v886 = vsub.f32 %v884, %v885
  %v887 = vand.u32 %v886, 4294901760
  %888 = vmatpush.msra.mxu0 %v887
  %v889 = vand.u32 %v51, 4294901760
  %v890 = vsub.f32 %v51, %v889
  %v891 = vand.u32 %v890, 4294901760
  %v892 = vsub.f32 %v890, %v891
  %v893 = vand.u32 %v892, 4294901760
  %894 = vmatpush.msra.mxu0 %v893
  %v895 = vand.u32 %v48, 4294901760
  %v896 = vsub.f32 %v48, %v895
  %v897 = vand.u32 %v896, 4294901760
  %v898 = vsub.f32 %v896, %v897
  %v899 = vand.u32 %v898, 4294901760
  %900 = vmatpush.msra.mxu0 %v899
  %v901 = vand.u32 %v45, 4294901760
  %v902 = vsub.f32 %v45, %v901
  %v903 = vand.u32 %v902, 4294901760
  %v904 = vsub.f32 %v902, %v903
  %v905 = vand.u32 %v904, 4294901760
  %906 = vmatpush.msra.mxu0 %v905
  %v907 = vand.u32 %v42, 4294901760
  %v908 = vsub.f32 %v42, %v907
  %v909 = vand.u32 %v908, 4294901760
  %v910 = vsub.f32 %v908, %v909
  %v911 = vand.u32 %v910, 4294901760
  %912 = vmatpush.msra.mxu0 %v911
  %v913 = vand.u32 %v39, 4294901760
  %v914 = vsub.f32 %v39, %v913
  %v915 = vand.u32 %v914, 4294901760
  %v916 = vsub.f32 %v914, %v915
  %v917 = vand.u32 %v916, 4294901760
  %918 = vmatpush.msra.mxu0 %v917
  %v919 = vand.u32 %v36, 4294901760
  %v920 = vsub.f32 %v36, %v919
  %v921 = vand.u32 %v920, 4294901760
  %v922 = vsub.f32 %v920, %v921
  %v923 = vand.u32 %v922, 4294901760
  %924 = vmatpush.msra.mxu0 %v923
  %v925 = vand.u32 %v33, 4294901760
  %v926 = vsub.f32 %v33, %v925
  %v927 = vand.u32 %v926, 4294901760
  %v928 = vsub.f32 %v926, %v927
  %v929 = vand.u32 %v928, 4294901760
  %930 = vmatpush.msra.mxu0 %v929
  %v931 = vand.u32 %v30, 4294901760
  %v932 = vsub.f32 %v30, %v931
  %v933 = vand.u32 %v932, 4294901760
  %v934 = vsub.f32 %v932, %v933
  %v935 = vand.u32 %v934, 4294901760
  %936 = vmatpush.msra.mxu0 %v935
  %v937 = vand.u32 %v27, 4294901760
  %v938 = vsub.f32 %v27, %v937
  %v939 = vand.u32 %v938, 4294901760
  %v940 = vsub.f32 %v938, %v939
  %v941 = vand.u32 %v940, 4294901760
  %942 = vmatpush.msra.mxu0 %v941
  %v943 = vand.u32 %v24, 4294901760
  %v944 = vsub.f32 %v24, %v943
  %v945 = vand.u32 %v944, 4294901760
  %v946 = vsub.f32 %v944, %v945
  %v947 = vand.u32 %v946, 4294901760
  %948 = vmatpush.msra.mxu0 %v947
  %v949 = vand.u32 %v21, 4294901760
  %v950 = vsub.f32 %v21, %v949
  %v951 = vand.u32 %v950, 4294901760
  %v952 = vsub.f32 %v950, %v951
  %v953 = vand.u32 %v952, 4294901760
  %954 = vmatpush.msra.mxu0 %v953
  %v955 = vand.u32 %v18, 4294901760
  %v956 = vsub.f32 %v18, %v955
  %v957 = vand.u32 %v956, 4294901760
  %v958 = vsub.f32 %v956, %v957
  %v959 = vand.u32 %v958, 4294901760
  %960 = vmatpush.msra.mxu0 %v959
  %v961 = vand.u32 %v14, 4294901760
  %962 = vmatmul.f32.gmra.mxu0 %v961
  %v963 = vpop.f32.mrf.mxu0
  %v964 = vadd.f32 %v855, %v963
  %v965 = vand.u32 %v15, 4294901760
  %966 = vmatmul.f32.gmra.mxu0 %v965
  %v967 = vpop.f32.mrf.mxu0
  %v968 = vadd.f32 %v863, %v967
  %969 = vdwg.mxu0
  %v970 = vand.u32 %v63, 4294901760
  %v971 = vsub.f32 %v63, %v970
  %972 = vmatpush.msra.mxu0 %v971
  %v973 = vand.u32 %v60, 4294901760
  %v974 = vsub.f32 %v60, %v973
  %975 = vmatpush.msra.mxu0 %v974
  %v976 = vand.u32 %v57, 4294901760
  %v977 = vsub.f32 %v57, %v976
  %978 = vmatpush.msra.mxu0 %v977
  %v979 = vand.u32 %v54, 4294901760
  %v980 = vsub.f32 %v54, %v979
  %981 = vmatpush.msra.mxu0 %v980
  %v982 = vand.u32 %v51, 4294901760
  %v983 = vsub.f32 %v51, %v982
  %984 = vmatpush.msra.mxu0 %v983
  %v985 = vand.u32 %v48, 4294901760
  %v986 = vsub.f32 %v48, %v985
  %987 = vmatpush.msra.mxu0 %v986
  %v988 = vand.u32 %v45, 4294901760
  %v989 = vsub.f32 %v45, %v988
  %990 = vmatpush.msra.mxu0 %v989
  %v991 = vand.u32 %v42, 4294901760
  %v992 = vsub.f32 %v42, %v991
  %993 = vmatpush.msra.mxu0 %v992
  %v994 = vand.u32 %v39, 4294901760
  %v995 = vsub.f32 %v39, %v994
  %996 = vmatpush.msra.mxu0 %v995
  %v997 = vand.u32 %v36, 4294901760
  %v998 = vsub.f32 %v36, %v997
  %999 = vmatpush.msra.mxu0 %v998
  %v1000 = vand.u32 %v33, 4294901760
  %v1001 = vsub.f32 %v33, %v1000
  %1002 = vmatpush.msra.mxu0 %v1001
  %v1003 = vand.u32 %v30, 4294901760
  %v1004 = vsub.f32 %v30, %v1003
  %1005 = vmatpush.msra.mxu0 %v1004
  %v1006 = vand.u32 %v27, 4294901760
  %v1007 = vsub.f32 %v27, %v1006
  %1008 = vmatpush.msra.mxu0 %v1007
  %v1009 = vand.u32 %v24, 4294901760
  %v1010 = vsub.f32 %v24, %v1009
  %1011 = vmatpush.msra.mxu0 %v1010
  %v1012 = vand.u32 %v21, 4294901760
  %v1013 = vsub.f32 %v21, %v1012
  %1014 = vmatpush.msra.mxu0 %v1013
  %v1015 = vand.u32 %v18, 4294901760
  %v1016 = vsub.f32 %v18, %v1015
  %1017 = vmatpush.msra.mxu0 %v1016
  %v1018 = vand.u32 %v14, 4294901760
  %v1019 = vsub.f32 %v14, %v1018
  %1020 = vmatmul.f32.gmra.mxu0 %v1019
  %v1021 = vpop.f32.mrf.mxu0
  %v1022 = vadd.f32 %v964, %v1021
  %v1023 = vand.u32 %v15, 4294901760
  %v1024 = vsub.f32 %v15, %v1023
  %1025 = vmatmul.f32.gmra.mxu0 %v1024
  %v1026 = vpop.f32.mrf.mxu0
  %v1027 = vadd.f32 %v968, %v1026
  %1028 = vdwg.mxu0
  %v1029 = vand.u32 %v63, 4294901760
  %1030 = vmatpush.msra.mxu0 %v1029
  %v1031 = vand.u32 %v60, 4294901760
  %1032 = vmatpush.msra.mxu0 %v1031
  %v1033 = vand.u32 %v57, 4294901760
  %1034 = vmatpush.msra.mxu0 %v1033
  %v1035 = vand.u32 %v54, 4294901760
  %1036 = vmatpush.msra.mxu0 %v1035
  %v1037 = vand.u32 %v51, 4294901760
  %1038 = vmatpush.msra.mxu0 %v1037
  %v1039 = vand.u32 %v48, 4294901760
  %1040 = vmatpush.msra.mxu0 %v1039
  %v1041 = vand.u32 %v45, 4294901760
  %1042 = vmatpush.msra.mxu0 %v1041
  %v1043 = vand.u32 %v42, 4294901760
  %1044 = vmatpush.msra.mxu0 %v1043
  %v1045 = vand.u32 %v39, 4294901760
  %1046 = vmatpush.msra.mxu0 %v1045
  %v1047 = vand.u32 %v36, 4294901760
  %1048 = vmatpush.msra.mxu0 %v1047
  %v1049 = vand.u32 %v33, 4294901760
  %1050 = vmatpush.msra.mxu0 %v1049
  %v1051 = vand.u32 %v30, 4294901760
  %1052 = vmatpush.msra.mxu0 %v1051
  %v1053 = vand.u32 %v27, 4294901760
  %1054 = vmatpush.msra.mxu0 %v1053
  %v1055 = vand.u32 %v24, 4294901760
  %1056 = vmatpush.msra.mxu0 %v1055
  %v1057 = vand.u32 %v21, 4294901760
  %1058 = vmatpush.msra.mxu0 %v1057
  %v1059 = vand.u32 %v18, 4294901760
  %1060 = vmatpush.msra.mxu0 %v1059
  %v1061 = vand.u32 %v14, 4294901760
  %v1062 = vsub.f32 %v14, %v1061
  %v1063 = vand.u32 %v1062, 4294901760
  %1064 = vmatmul.f32.gmra.mxu0 %v1063
  %v1065 = vpop.f32.mrf.mxu0
  %v1066 = vadd.f32 %v1022, %v1065
  %v1067 = vand.u32 %v15, 4294901760
  %v1068 = vsub.f32 %v15, %v1067
  %v1069 = vand.u32 %v1068, 4294901760
  %1070 = vmatmul.f32.gmra.mxu0 %v1069
  %v1071 = vpop.f32.mrf.mxu0
  %v1072 = vadd.f32 %v1027, %v1071
  %1073 = vdwg.mxu0
  %v1074 = vand.u32 %v63, 4294901760
  %v1075 = vsub.f32 %v63, %v1074
  %v1076 = vand.u32 %v1075, 4294901760
  %1077 = vmatpush.msra.mxu0 %v1076
  %v1078 = vand.u32 %v60, 4294901760
  %v1079 = vsub.f32 %v60, %v1078
  %v1080 = vand.u32 %v1079, 4294901760
  %1081 = vmatpush.msra.mxu0 %v1080
  %v1082 = vand.u32 %v57, 4294901760
  %v1083 = vsub.f32 %v57, %v1082
  %v1084 = vand.u32 %v1083, 4294901760
  %1085 = vmatpush.msra.mxu0 %v1084
  %v1086 = vand.u32 %v54, 4294901760
  %v1087 = vsub.f32 %v54, %v1086
  %v1088 = vand.u32 %v1087, 4294901760
  %1089 = vmatpush.msra.mxu0 %v1088
  %v1090 = vand.u32 %v51, 4294901760
  %v1091 = vsub.f32 %v51, %v1090
  %v1092 = vand.u32 %v1091, 4294901760
  %1093 = vmatpush.msra.mxu0 %v1092
  %v1094 = vand.u32 %v48, 4294901760
  %v1095 = vsub.f32 %v48, %v1094
  %v1096 = vand.u32 %v1095, 4294901760
  %1097 = vmatpush.msra.mxu0 %v1096
  %v1098 = vand.u32 %v45, 4294901760
  %v1099 = vsub.f32 %v45, %v1098
  %v1100 = vand.u32 %v1099, 4294901760
  %1101 = vmatpush.msra.mxu0 %v1100
  %v1102 = vand.u32 %v42, 4294901760
  %v1103 = vsub.f32 %v42, %v1102
  %v1104 = vand.u32 %v1103, 4294901760
  %1105 = vmatpush.msra.mxu0 %v1104
  %v1106 = vand.u32 %v39, 4294901760
  %v1107 = vsub.f32 %v39, %v1106
  %v1108 = vand.u32 %v1107, 4294901760
  %1109 = vmatpush.msra.mxu0 %v1108
  %v1110 = vand.u32 %v36, 4294901760
  %v1111 = vsub.f32 %v36, %v1110
  %v1112 = vand.u32 %v1111, 4294901760
  %1113 = vmatpush.msra.mxu0 %v1112
  %v1114 = vand.u32 %v33, 4294901760
  %v1115 = vsub.f32 %v33, %v1114
  %v1116 = vand.u32 %v1115, 4294901760
  %1117 = vmatpush.msra.mxu0 %v1116
  %v1118 = vand.u32 %v30, 4294901760
  %v1119 = vsub.f32 %v30, %v1118
  %v1120 = vand.u32 %v1119, 4294901760
  %1121 = vmatpush.msra.mxu0 %v1120
  %v1122 = vand.u32 %v27, 4294901760
  %v1123 = vsub.f32 %v27, %v1122
  %v1124 = vand.u32 %v1123, 4294901760
  %1125 = vmatpush.msra.mxu0 %v1124
  %v1126 = vand.u32 %v24, 4294901760
  %v1127 = vsub.f32 %v24, %v1126
  %v1128 = vand.u32 %v1127, 4294901760
  %1129 = vmatpush.msra.mxu0 %v1128
  %v1130 = vand.u32 %v21, 4294901760
  %v1131 = vsub.f32 %v21, %v1130
  %v1132 = vand.u32 %v1131, 4294901760
  %1133 = vmatpush.msra.mxu0 %v1132
  %v1134 = vand.u32 %v18, 4294901760
  %v1135 = vsub.f32 %v18, %v1134
  %v1136 = vand.u32 %v1135, 4294901760
  %1137 = vmatpush.msra.mxu0 %v1136
  %v1138 = vand.u32 %v14, 4294901760
  %1139 = vmatmul.f32.gmra.mxu0 %v1138
  %v1140 = vpop.f32.mrf.mxu0
  %v1141 = vadd.f32 %v1066, %v1140
  %v1142 = vand.u32 %v15, 4294901760
  %1143 = vmatmul.f32.gmra.mxu0 %v1142
  %v1144 = vpop.f32.mrf.mxu0
  %v1145 = vadd.f32 %v1072, %v1144
  %1146 = vdwg.mxu0
  %v1147 = vand.u32 %v63, 4294901760
  %1148 = vmatpush.msra.mxu0 %v1147
  %v1149 = vand.u32 %v60, 4294901760
  %1150 = vmatpush.msra.mxu0 %v1149
  %v1151 = vand.u32 %v57, 4294901760
  %1152 = vmatpush.msra.mxu0 %v1151
  %v1153 = vand.u32 %v54, 4294901760
  %1154 = vmatpush.msra.mxu0 %v1153
  %v1155 = vand.u32 %v51, 4294901760
  %1156 = vmatpush.msra.mxu0 %v1155
  %v1157 = vand.u32 %v48, 4294901760
  %1158 = vmatpush.msra.mxu0 %v1157
  %v1159 = vand.u32 %v45, 4294901760
  %1160 = vmatpush.msra.mxu0 %v1159
  %v1161 = vand.u32 %v42, 4294901760
  %1162 = vmatpush.msra.mxu0 %v1161
  %v1163 = vand.u32 %v39, 4294901760
  %1164 = vmatpush.msra.mxu0 %v1163
  %v1165 = vand.u32 %v36, 4294901760
  %1166 = vmatpush.msra.mxu0 %v1165
  %v1167 = vand.u32 %v33, 4294901760
  %1168 = vmatpush.msra.mxu0 %v1167
  %v1169 = vand.u32 %v30, 4294901760
  %1170 = vmatpush.msra.mxu0 %v1169
  %v1171 = vand.u32 %v27, 4294901760
  %1172 = vmatpush.msra.mxu0 %v1171
  %v1173 = vand.u32 %v24, 4294901760
  %1174 = vmatpush.msra.mxu0 %v1173
  %v1175 = vand.u32 %v21, 4294901760
  %1176 = vmatpush.msra.mxu0 %v1175
  %v1177 = vand.u32 %v18, 4294901760
  %1178 = vmatpush.msra.mxu0 %v1177
  %v1179 = vand.u32 %v14, 4294901760
  %1180 = vmatmul.f32.gmra.mxu0 %v1179
  %v1181 = vpop.f32.mrf.mxu0
  %v1182 = vadd.f32 %v1141, %v1181
  %v1183 = vand.u32 %v15, 4294901760
  %1184 = vmatmul.f32.gmra.mxu0 %v1183
  %v1185 = vpop.f32.mrf.mxu0
  %v1186 = vadd.f32 %v1145, %v1185
  %1187 = vdwg.mxu0
  %1188 = vst [vmem:[%s3] sm:$0xff] %v438
  %1189 = vst [vmem:[%s3 + $0x8] sm:$0xff] %v810
  %1190 = vst [vmem:[%s3 + $0x10] sm:$0xff] %v1182
  %1191 = vst [vmem:[%s3 + $0x18] sm:$0xff] %v442
  %1192 = vst [vmem:[%s3 + $0x20] sm:$0xff] %v814
  %1193 = vst [vmem:[%s3 + $0x28] sm:$0xff] %v1186
  // Predicated region
  $region14: #{x3d_transformer_layer.3} parent=0 // pred_check
    _
  $region15: #{x3d_transformer_layer.3} parent=0 // pred_check_branch
    %1195 = sbr.rel (0) target = $region17
  $region16: #{x3d_transformer_layer.3} parent=0 // pred_region
    _
  $region17: #{x3d_transformer_layer.3} parent=0 // pred_fallthru
    _
  // Predicated region
  $region18: #{x3d_transformer_layer.3} parent=0 // pred_check
    _
  $region19: #{x3d_transformer_layer.3} parent=0 // pred_check_branch
    %1197 = sbr.rel (0) target = $region21
  $region20: #{x3d_transformer_layer.3} parent=0 // pred_region
    _
  $region21: #{x3d_transformer_layer.3} parent=0 // pred_fallthru
    _

// kernel: x3d_transformer_layer.5
$region0: #{x3d_transformer_layer.5}
  #allocation0 [shape = 'u32[]', space=smem, size = 0x4, offset = 0x4, fixed_abs, tag = 'smem constant byte address 0x4 - core index']
  #allocation1 [shape = 'u32[72,128]{1,0:T(1,128)}', space=vmem, size = 0x9000, scoped, tag = 'internal scratch']
  %s0 = inlined_call_operand.vmem [shape: f32[16,128], index: 0, kind: input, shape index: {}]
  %s1 = inlined_call_operand.vmem [shape: f32[16,128], index: 1, kind: input, shape index: {}]
  %s2 = inlined_call_operand.vmem [shape: f32[128,256], index: 2, kind: input, shape index: {}]
  %s3 = inlined_call_operand.vmem [shape: f32[1,256], index: 3, kind: input, shape index: {}]
  %s4 = inlined_call_operand.vmem [shape: f32[256,128], index: 4, kind: input, shape index: {}]
  %s5 = inlined_call_operand.vmem [shape: f32[1,128], index: 5, kind: input, shape index: {}]
  %s6 = inlined_call_operand.vmem [shape: f32[1,128], index: 6, kind: input, shape index: {}]
  %s7 = inlined_call_operand.vmem [shape: f32[1,128], index: 7, kind: input, shape index: {}]
  %s8 = inlined_call_operand.vmem [shape: f32[1,128], index: 8, kind: input, shape index: {}]
  %s9 = inlined_call_operand.vmem [shape: f32[1,128], index: 9, kind: input, shape index: {}]
  %s10 = inlined_call_operand.hbm [shape: f32[16,128], index: 10, kind: output, shape index: {}]
  %s11 = sld [smem:[#allocation0]]
  $region50: #{x3d_transformer_layer.5} parent=0
    _
  %s13 = ssub.s32 1, %s11
  %s14 = scalar_select 0, %s13, %s11
  $region1: #{x3d_transformer_layer.5} parent=0
    #allocation2 [shape = 'u8[8192]{0}', space=vmem, size = 0x2000, scoped, tag = 'output window, operand 0, single buffered']
    #allocation3 [shape = 's32[1]{0}', space=sflag, size = 0x4, scoped, tag = 'scoped memory for x3d_transformer_layer.5']
    %15 = vsyncpa [#allocation3], 0
    // Predicated region
    $region2: #{x3d_transformer_layer.5} parent=1 // pred_check
      _
    $region3: #{x3d_transformer_layer.5} parent=1 // pred_check_branch
      %17 = sbr.rel (0) target = $region5
    $region4: #{x3d_transformer_layer.5} parent=1 // pred_region
      _
    $region5: #{x3d_transformer_layer.5} parent=1 // pred_fallthru
      _
    // Predicated region
    $region6: #{x3d_transformer_layer.5} parent=1 // pred_check
      _
    $region7: #{x3d_transformer_layer.5} parent=1 // pred_check_branch
      %19 = sbr.rel (0) target = $region9
    $region8: #{x3d_transformer_layer.5} parent=1 // pred_region
      _
    $region9: #{x3d_transformer_layer.5} parent=1 // pred_fallthru
      _
    // Predicated region
    $region10: #{x3d_transformer_layer.5} parent=1 // pred_check
      _
    $region11: #{x3d_transformer_layer.5} parent=1 // pred_check_branch
      %21 = sbr.rel (0) target = $region13
    $region12: #{x3d_transformer_layer.5} parent=1 // pred_region
      _
    $region13: #{x3d_transformer_layer.5} parent=1 // pred_fallthru
      _
    // Predicated region
    $region14: #{x3d_transformer_layer.5} parent=1 // pred_check
      _
    $region15: #{x3d_transformer_layer.5} parent=1 // pred_check_branch
      %23 = sbr.rel (0) target = $region17
    $region16: #{x3d_transformer_layer.5} parent=1 // pred_region
      _
    $region17: #{x3d_transformer_layer.5} parent=1 // pred_fallthru
      _
    // Predicated region
    $region18: #{x3d_transformer_layer.5} parent=1 // pred_check
      _
    $region19: #{x3d_transformer_layer.5} parent=1 // pred_check_branch
      %25 = sbr.rel (0) target = $region21
    $region20: #{x3d_transformer_layer.5} parent=1 // pred_region
      _
    $region21: #{x3d_transformer_layer.5} parent=1 // pred_fallthru
      _
    // Predicated region
    $region22: #{x3d_transformer_layer.5} parent=1 // pred_check
      _
    $region23: #{x3d_transformer_layer.5} parent=1 // pred_check_branch
      %27 = sbr.rel (0) target = $region25
    $region24: #{x3d_transformer_layer.5} parent=1 // pred_region
      _
    $region25: #{x3d_transformer_layer.5} parent=1 // pred_fallthru
      _
    // Predicated region
    $region26: #{x3d_transformer_layer.5} parent=1 // pred_check
      _
    $region27: #{x3d_transformer_layer.5} parent=1 // pred_check_branch
      %29 = sbr.rel (0) target = $region29
    $region28: #{x3d_transformer_layer.5} parent=1 // pred_region
      _
    $region29: #{x3d_transformer_layer.5} parent=1 // pred_fallthru
      _
    // Predicated region
    $region30: #{x3d_transformer_layer.5} parent=1 // pred_check
      _
    $region31: #{x3d_transformer_layer.5} parent=1 // pred_check_branch
      %31 = sbr.rel (0) target = $region33
    $region32: #{x3d_transformer_layer.5} parent=1 // pred_region
      _
    $region33: #{x3d_transformer_layer.5} parent=1 // pred_fallthru
      _
    // Predicated region
    $region34: #{x3d_transformer_layer.5} parent=1 // pred_check
      _
    $region35: #{x3d_transformer_layer.5} parent=1 // pred_check_branch
      %33 = sbr.rel (0) target = $region37
    $region36: #{x3d_transformer_layer.5} parent=1 // pred_region
      _
    $region37: #{x3d_transformer_layer.5} parent=1 // pred_fallthru
      _
    // Predicated region
    $region38: #{x3d_transformer_layer.5} parent=1 // pred_check
      _
    $region39: #{x3d_transformer_layer.5} parent=1 // pred_check_branch
      %35 = sbr.rel (0) target = $region41
    $region40: #{x3d_transformer_layer.5} parent=1 // pred_region
      _
    $region41: #{x3d_transformer_layer.5} parent=1 // pred_fallthru
      _
    %v36 = vld [vmem:[%s0] sm:$0xff]
    %v37 = vld [vmem:[%s0 + $0x8] sm:$0xff]
    %v38 = vld [vmem:[%s1] sm:$0xff]
    %v39 = vld [vmem:[%s1 + $0x8] sm:$0xff]
    %v40 = vadd.f32 %v36, %v38
    %v41 = vadd.f32 %v37, %v39
    %v42 = vld [vmem:[%s6] sm:$0x1]
    %v43 = vld [vmem:[%s7] sm:$0x1]
    %44 = vadd.xlane.f32.xlu0 %v40
    %v45 = vpop.xlane.xlu0 %44
    %46 = vadd.xlane.f32.xlu0 %v41
    %v47 = vpop.xlane.xlu0 %46
    %v48 = vrcp.pop 128.0
    %v49 = vmul.f32 128.0, %v48
    %v50 = vsub.f32 1.0, %v49
    %v51 = vmul.f32 %v48, %v50
    %v52 = vadd.f32 %v48, %v51
    %vm53 = vweird.f32 %v48
    %v54 = vsel %vm53, %v48, %v52
    %v55 = vmul.f32 %v45, %v54
    %v56 = vmul.f32 %v47, %v54
    %v57 = vsub.f32 %v40, %v55
    %v58 = vsub.f32 %v41, %v56
    %v59 = vmul.f32 %v57, %v57
    %v60 = vmul.f32 %v58, %v58
    %61 = vadd.xlane.f32.xlu0 %v59
    %v62 = vpop.xlane.xlu0 %61
    %63 = vadd.xlane.f32.xlu0 %v60
    %v64 = vpop.xlane.xlu0 %63
    %v65 = vmul.f32 %v62, %v54
    %v66 = vmul.f32 %v64, %v54
    %v67 = vadd.f32 %v65, 1e-05
    %v68 = vadd.f32 %v66, 1e-05
    %v69 = vrsqrt.pop %v67
    %v70 = vmul.f32 %v69, %v67
    %v71 = vmul.f32 %v70, %v69
    %v72 = vmul.f32 0.5, %v71
    %v73 = vsub.f32 1.5, %v72
    %v74 = vmul.f32 %v69, %v73
    %vm75 = vweird.f32 %v67
    %vm76 = vweird.f32 %v69
    %vm77 = vmor %vm75, %vm76
    %v78 = vsel %vm77, %v69, %v74
    %v79 = vrsqrt.pop %v68
    %v80 = vmul.f32 %v79, %v68
    %v81 = vmul.f32 %v80, %v79
    %v82 = vmul.f32 0.5, %v81
    %v83 = vsub.f32 1.5, %v82
    %v84 = vmul.f32 %v79, %v83
    %vm85 = vweird.f32 %v68
    %vm86 = vweird.f32 %v79
    %vm87 = vmor %vm85, %vm86
    %v88 = vsel %vm87, %v79, %v84
    %v89 = vmul.f32 %v57, %v78
    %v90 = vmul.f32 %v58, %v88
    %v92 = vperm.slane %v42, 0
    %v94 = vmul.f32 %v89, %v92
    %v95 = vmul.f32 %v90, %v92
    %v97 = vperm.slane %v43, 0
    %v99 = vadd.f32 %v94, %v97
    %v100 = vadd.f32 %v95, %v97
    %v101 = vld [vmem:[%s2] sm:$0xff]
    %v102 = vld [vmem:[%s2 + $0x8] sm:$0xff]
    %v103 = vld [vmem:[%s2 + $0x10] sm:$0xff]
    %v104 = vld [vmem:[%s2 + $0x18] sm:$0xff]
    %v105 = vld [vmem:[%s2 + $0x20] sm:$0xff]
    %v106 = vld [vmem:[%s2 + $0x28] sm:$0xff]
    %v107 = vld [vmem:[%s2 + $0x30] sm:$0xff]
    %v108 = vld [vmem:[%s2 + $0x38] sm:$0xff]
    %v109 = vld [vmem:[%s2 + $0x40] sm:$0xff]
    %v110 = vld [vmem:[%s2 + $0x48] sm:$0xff]
    %v111 = vld [vmem:[%s2 + $0x50] sm:$0xff]
    %v112 = vld [vmem:[%s2 + $0x58] sm:$0xff]
    %v113 = vld [vmem:[%s2 + $0x60] sm:$0xff]
    %v114 = vld [vmem:[%s2 + $0x68] sm:$0xff]
    %v115 = vld [vmem:[%s2 + $0x70] sm:$0xff]
    %v116 = vld [vmem:[%s2 + $0x78] sm:$0xff]
    %v117 = vld [vmem:[%s2 + $0x80] sm:$0xff]
    %v118 = vld [vmem:[%s2 + $0x88] sm:$0xff]
    %v119 = vld [vmem:[%s2 + $0x90] sm:$0xff]
    %v120 = vld [vmem:[%s2 + $0x98] sm:$0xff]
    %v121 = vld [vmem:[%s2 + $0xa0] sm:$0xff]
    %v122 = vld [vmem:[%s2 + $0xa8] sm:$0xff]
    %v123 = vld [vmem:[%s2 + $0xb0] sm:$0xff]
    %v124 = vld [vmem:[%s2 + $0xb8] sm:$0xff]
    %v125 = vld [vmem:[%s2 + $0xc0] sm:$0xff]
    %v126 = vld [vmem:[%s2 + $0xc8] sm:$0xff]
    %v127 = vld [vmem:[%s2 + $0xd0] sm:$0xff]
    %v128 = vld [vmem:[%s2 + $0xd8] sm:$0xff]
    %v129 = vld [vmem:[%s2 + $0xe0] sm:$0xff]
    %v130 = vld [vmem:[%s2 + $0xe8] sm:$0xff]
    %v131 = vld [vmem:[%s2 + $0xf0] sm:$0xff]
    %v132 = vld [vmem:[%s2 + $0xf8] sm:$0xff]
    %v133 = vld [vmem:[%s3] sm:$0x3]
    %v135 = vperm.slane %v133, 0
    %v136 = vperm.slane %v133, 1
    %v139 = vand.u32 %v131, 4294901760
    %140 = vmatpush.msra.mxu0 %v139
    %v141 = vand.u32 %v129, 4294901760
    %142 = vmatpush.msra.mxu0 %v141
    %v143 = vand.u32 %v127, 4294901760
    %144 = vmatpush.msra.mxu0 %v143
    %v145 = vand.u32 %v125, 4294901760
    %146 = vmatpush.msra.mxu0 %v145
    %v147 = vand.u32 %v123, 4294901760
    %148 = vmatpush.msra.mxu0 %v147
    %v149 = vand.u32 %v121, 4294901760
    %150 = vmatpush.msra.mxu0 %v149
    %v151 = vand.u32 %v119, 4294901760
    %152 = vmatpush.msra.mxu0 %v151
    %v153 = vand.u32 %v117, 4294901760
    %154 = vmatpush.msra.mxu0 %v153
    %v155 = vand.u32 %v115, 4294901760
    %156 = vmatpush.msra.mxu0 %v155
    %v157 = vand.u32 %v113, 4294901760
    %158 = vmatpush.msra.mxu0 %v157
    %v159 = vand.u32 %v111, 4294901760
    %160 = vmatpush.msra.mxu0 %v159
    %v161 = vand.u32 %v109, 4294901760
    %162 = vmatpush.msra.mxu0 %v161
    %v163 = vand.u32 %v107, 4294901760
    %164 = vmatpush.msra.mxu0 %v163
    %v165 = vand.u32 %v105, 4294901760
    %166 = vmatpush.msra.mxu0 %v165
    %v167 = vand.u32 %v103, 4294901760
    %168 = vmatpush.msra.mxu0 %v167
    %v169 = vand.u32 %v101, 4294901760
    %170 = vmatpush.msra.mxu0 %v169
    %v171 = vand.u32 %v99, 4294901760
    %v172 = vsub.f32 %v99, %v171
    %v173 = vand.u32 %v172, 4294901760
    %v174 = vsub.f32 %v172, %v173
    %v175 = vand.u32 %v174, 4294901760
    %176 = vmatmul.f32.gmra.mxu0 %v175
    %v177 = vpop.f32.mrf.mxu0
    %v178 = vadd.f32 %v135, %v177
    %v179 = vand.u32 %v100, 4294901760
    %v180 = vsub.f32 %v100, %v179
    %v181 = vand.u32 %v180, 4294901760
    %v182 = vsub.f32 %v180, %v181
    %v183 = vand.u32 %v182, 4294901760
    %184 = vmatmul.f32.gmra.mxu0 %v183
    %v185 = vpop.f32.mrf.mxu0
    %v186 = vadd.f32 %v135, %v185
    %187 = vdwg.mxu0
    %v188 = vand.u32 %v131, 4294901760
    %v189 = vsub.f32 %v131, %v188
    %v190 = vand.u32 %v189, 4294901760
    %v191 = vsub.f32 %v189, %v190
    %v192 = vand.u32 %v191, 4294901760
    %193 = vmatpush.msra.mxu0 %v192
    %v194 = vand.u32 %v129, 4294901760
    %v195 = vsub.f32 %v129, %v194
    %v196 = vand.u32 %v195, 4294901760
    %v197 = vsub.f32 %v195, %v196
    %v198 = vand.u32 %v197, 4294901760
    %199 = vmatpush.msra.mxu0 %v198
    %v200 = vand.u32 %v127, 4294901760
    %v201 = vsub.f32 %v127, %v200
    %v202 = vand.u32 %v201, 4294901760
    %v203 = vsub.f32 %v201, %v202
    %v204 = vand.u32 %v203, 4294901760
    %205 = vmatpush.msra.mxu0 %v204
    %v206 = vand.u32 %v125, 4294901760
    %v207 = vsub.f32 %v125, %v206
    %v208 = vand.u32 %v207, 4294901760
    %v209 = vsub.f32 %v207, %v208
    %v210 = vand.u32 %v209, 4294901760
    %211 = vmatpush.msra.mxu0 %v210
    %v212 = vand.u32 %v123, 4294901760
    %v213 = vsub.f32 %v123, %v212
    %v214 = vand.u32 %v213, 4294901760
    %v215 = vsub.f32 %v213, %v214
    %v216 = vand.u32 %v215, 4294901760
    %217 = vmatpush.msra.mxu0 %v216
    %v218 = vand.u32 %v121, 4294901760
    %v219 = vsub.f32 %v121, %v218
    %v220 = vand.u32 %v219, 4294901760
    %v221 = vsub.f32 %v219, %v220
    %v222 = vand.u32 %v221, 4294901760
    %223 = vmatpush.msra.mxu0 %v222
    %v224 = vand.u32 %v119, 4294901760
    %v225 = vsub.f32 %v119, %v224
    %v226 = vand.u32 %v225, 4294901760
    %v227 = vsub.f32 %v225, %v226
    %v228 = vand.u32 %v227, 4294901760
    %229 = vmatpush.msra.mxu0 %v228
    %v230 = vand.u32 %v117, 4294901760
    %v231 = vsub.f32 %v117, %v230
    %v232 = vand.u32 %v231, 4294901760
    %v233 = vsub.f32 %v231, %v232
    %v234 = vand.u32 %v233, 4294901760
    %235 = vmatpush.msra.mxu0 %v234
    %v236 = vand.u32 %v115, 4294901760
    %v237 = vsub.f32 %v115, %v236
    %v238 = vand.u32 %v237, 4294901760
    %v239 = vsub.f32 %v237, %v238
    %v240 = vand.u32 %v239, 4294901760
    %241 = vmatpush.msra.mxu0 %v240
    %v242 = vand.u32 %v113, 4294901760
    %v243 = vsub.f32 %v113, %v242
    %v244 = vand.u32 %v243, 4294901760
    %v245 = vsub.f32 %v243, %v244
    %v246 = vand.u32 %v245, 4294901760
    %247 = vmatpush.msra.mxu0 %v246
    %v248 = vand.u32 %v111, 4294901760
    %v249 = vsub.f32 %v111, %v248
    %v250 = vand.u32 %v249, 4294901760
    %v251 = vsub.f32 %v249, %v250
    %v252 = vand.u32 %v251, 4294901760
    %253 = vmatpush.msra.mxu0 %v252
    %v254 = vand.u32 %v109, 4294901760
    %v255 = vsub.f32 %v109, %v254
    %v256 = vand.u32 %v255, 4294901760
    %v257 = vsub.f32 %v255, %v256
    %v258 = vand.u32 %v257, 4294901760
    %259 = vmatpush.msra.mxu0 %v258
    %v260 = vand.u32 %v107, 4294901760
    %v261 = vsub.f32 %v107, %v260
    %v262 = vand.u32 %v261, 4294901760
    %v263 = vsub.f32 %v261, %v262
    %v264 = vand.u32 %v263, 4294901760
    %265 = vmatpush.msra.mxu0 %v264
    %v266 = vand.u32 %v105, 4294901760
    %v267 = vsub.f32 %v105, %v266
    %v268 = vand.u32 %v267, 4294901760
    %v269 = vsub.f32 %v267, %v268
    %v270 = vand.u32 %v269, 4294901760
    %271 = vmatpush.msra.mxu0 %v270
    %v272 = vand.u32 %v103, 4294901760
    %v273 = vsub.f32 %v103, %v272
    %v274 = vand.u32 %v273, 4294901760
    %v275 = vsub.f32 %v273, %v274
    %v276 = vand.u32 %v275, 4294901760
    %277 = vmatpush.msra.mxu0 %v276
    %v278 = vand.u32 %v101, 4294901760
    %v279 = vsub.f32 %v101, %v278
    %v280 = vand.u32 %v279, 4294901760
    %v281 = vsub.f32 %v279, %v280
    %v282 = vand.u32 %v281, 4294901760
    %283 = vmatpush.msra.mxu0 %v282
    %v284 = vand.u32 %v99, 4294901760
    %285 = vmatmul.f32.gmra.mxu0 %v284
    %v286 = vpop.f32.mrf.mxu0
    %v287 = vadd.f32 %v178, %v286
    %v288 = vand.u32 %v100, 4294901760
    %289 = vmatmul.f32.gmra.mxu0 %v288
    %v290 = vpop.f32.mrf.mxu0
    %v291 = vadd.f32 %v186, %v290
    %292 = vdwg.mxu0
    %v293 = vand.u32 %v131, 4294901760
    %v294 = vsub.f32 %v131, %v293
    %295 = vmatpush.msra.mxu0 %v294
    %v296 = vand.u32 %v129, 4294901760
    %v297 = vsub.f32 %v129, %v296
    %298 = vmatpush.msra.mxu0 %v297
    %v299 = vand.u32 %v127, 4294901760
    %v300 = vsub.f32 %v127, %v299
    %301 = vmatpush.msra.mxu0 %v300
    %v302 = vand.u32 %v125, 4294901760
    %v303 = vsub.f32 %v125, %v302
    %304 = vmatpush.msra.mxu0 %v303
    %v305 = vand.u32 %v123, 4294901760
    %v306 = vsub.f32 %v123, %v305
    %307 = vmatpush.msra.mxu0 %v306
    %v308 = vand.u32 %v121, 4294901760
    %v309 = vsub.f32 %v121, %v308
    %310 = vmatpush.msra.mxu0 %v309
    %v311 = vand.u32 %v119, 4294901760
    %v312 = vsub.f32 %v119, %v311
    %313 = vmatpush.msra.mxu0 %v312
    %v314 = vand.u32 %v117, 4294901760
    %v315 = vsub.f32 %v117, %v314
    %316 = vmatpush.msra.mxu0 %v315
    %v317 = vand.u32 %v115, 4294901760
    %v318 = vsub.f32 %v115, %v317
    %319 = vmatpush.msra.mxu0 %v318
    %v320 = vand.u32 %v113, 4294901760
    %v321 = vsub.f32 %v113, %v320
    %322 = vmatpush.msra.mxu0 %v321
    %v323 = vand.u32 %v111, 4294901760
    %v324 = vsub.f32 %v111, %v323
    %325 = vmatpush.msra.mxu0 %v324
    %v326 = vand.u32 %v109, 4294901760
    %v327 = vsub.f32 %v109, %v326
    %328 = vmatpush.msra.mxu0 %v327
    %v329 = vand.u32 %v107, 4294901760
    %v330 = vsub.f32 %v107, %v329
    %331 = vmatpush.msra.mxu0 %v330
    %v332 = vand.u32 %v105, 4294901760
    %v333 = vsub.f32 %v105, %v332
    %334 = vmatpush.msra.mxu0 %v333
    %v335 = vand.u32 %v103, 4294901760
    %v336 = vsub.f32 %v103, %v335
    %337 = vmatpush.msra.mxu0 %v336
    %v338 = vand.u32 %v101, 4294901760
    %v339 = vsub.f32 %v101, %v338
    %340 = vmatpush.msra.mxu0 %v339
    %v341 = vand.u32 %v99, 4294901760
    %v342 = vsub.f32 %v99, %v341
    %343 = vmatmul.f32.gmra.mxu0 %v342
    %v344 = vpop.f32.mrf.mxu0
    %v345 = vadd.f32 %v287, %v344
    %v346 = vand.u32 %v100, 4294901760
    %v347 = vsub.f32 %v100, %v346
    %348 = vmatmul.f32.gmra.mxu0 %v347
    %v349 = vpop.f32.mrf.mxu0
    %v350 = vadd.f32 %v291, %v349
    %351 = vdwg.mxu0
    %v352 = vand.u32 %v131, 4294901760
    %353 = vmatpush.msra.mxu0 %v352
    %v354 = vand.u32 %v129, 4294901760
    %355 = vmatpush.msra.mxu0 %v354
    %v356 = vand.u32 %v127, 4294901760
    %357 = vmatpush.msra.mxu0 %v356
    %v358 = vand.u32 %v125, 4294901760
    %359 = vmatpush.msra.mxu0 %v358
    %v360 = vand.u32 %v123, 4294901760
    %361 = vmatpush.msra.mxu0 %v360
    %v362 = vand.u32 %v121, 4294901760
    %363 = vmatpush.msra.mxu0 %v362
    %v364 = vand.u32 %v119, 4294901760
    %365 = vmatpush.msra.mxu0 %v364
    %v366 = vand.u32 %v117, 4294901760
    %367 = vmatpush.msra.mxu0 %v366
    %v368 = vand.u32 %v115, 4294901760
    %369 = vmatpush.msra.mxu0 %v368
    %v370 = vand.u32 %v113, 4294901760
    %371 = vmatpush.msra.mxu0 %v370
    %v372 = vand.u32 %v111, 4294901760
    %373 = vmatpush.msra.mxu0 %v372
    %v374 = vand.u32 %v109, 4294901760
    %375 = vmatpush.msra.mxu0 %v374
    %v376 = vand.u32 %v107, 4294901760
    %377 = vmatpush.msra.mxu0 %v376
    %v378 = vand.u32 %v105, 4294901760
    %379 = vmatpush.msra.mxu0 %v378
    %v380 = vand.u32 %v103, 4294901760
    %381 = vmatpush.msra.mxu0 %v380
    %v382 = vand.u32 %v101, 4294901760
    %383 = vmatpush.msra.mxu0 %v382
    %v384 = vand.u32 %v99, 4294901760
    %v385 = vsub.f32 %v99, %v384
    %v386 = vand.u32 %v385, 4294901760
    %387 = vmatmul.f32.gmra.mxu0 %v386
    %v388 = vpop.f32.mrf.mxu0
    %v389 = vadd.f32 %v345, %v388
    %v390 = vand.u32 %v100, 4294901760
    %v391 = vsub.f32 %v100, %v390
    %v392 = vand.u32 %v391, 4294901760
    %393 = vmatmul.f32.gmra.mxu0 %v392
    %v394 = vpop.f32.mrf.mxu0
    %v395 = vadd.f32 %v350, %v394
    %396 = vdwg.mxu0
    %v397 = vand.u32 %v131, 4294901760
    %v398 = vsub.f32 %v131, %v397
    %v399 = vand.u32 %v398, 4294901760
    %400 = vmatpush.msra.mxu0 %v399
    %v401 = vand.u32 %v129, 4294901760
    %v402 = vsub.f32 %v129, %v401
    %v403 = vand.u32 %v402, 4294901760
    %404 = vmatpush.msra.mxu0 %v403
    %v405 = vand.u32 %v127, 4294901760
    %v406 = vsub.f32 %v127, %v405
    %v407 = vand.u32 %v406, 4294901760
    %408 = vmatpush.msra.mxu0 %v407
    %v409 = vand.u32 %v125, 4294901760
    %v410 = vsub.f32 %v125, %v409
    %v411 = vand.u32 %v410, 4294901760
    %412 = vmatpush.msra.mxu0 %v411
    %v413 = vand.u32 %v123, 4294901760
    %v414 = vsub.f32 %v123, %v413
    %v415 = vand.u32 %v414, 4294901760
    %416 = vmatpush.msra.mxu0 %v415
    %v417 = vand.u32 %v121, 4294901760
    %v418 = vsub.f32 %v121, %v417
    %v419 = vand.u32 %v418, 4294901760
    %420 = vmatpush.msra.mxu0 %v419
    %v421 = vand.u32 %v119, 4294901760
    %v422 = vsub.f32 %v119, %v421
    %v423 = vand.u32 %v422, 4294901760
    %424 = vmatpush.msra.mxu0 %v423
    %v425 = vand.u32 %v117, 4294901760
    %v426 = vsub.f32 %v117, %v425
    %v427 = vand.u32 %v426, 4294901760
    %428 = vmatpush.msra.mxu0 %v427
    %v429 = vand.u32 %v115, 4294901760
    %v430 = vsub.f32 %v115, %v429
    %v431 = vand.u32 %v430, 4294901760
    %432 = vmatpush.msra.mxu0 %v431
    %v433 = vand.u32 %v113, 4294901760
    %v434 = vsub.f32 %v113, %v433
    %v435 = vand.u32 %v434, 4294901760
    %436 = vmatpush.msra.mxu0 %v435
    %v437 = vand.u32 %v111, 4294901760
    %v438 = vsub.f32 %v111, %v437
    %v439 = vand.u32 %v438, 4294901760
    %440 = vmatpush.msra.mxu0 %v439
    %v441 = vand.u32 %v109, 4294901760
    %v442 = vsub.f32 %v109, %v441
    %v443 = vand.u32 %v442, 4294901760
    %444 = vmatpush.msra.mxu0 %v443
    %v445 = vand.u32 %v107, 4294901760
    %v446 = vsub.f32 %v107, %v445
    %v447 = vand.u32 %v446, 4294901760
    %448 = vmatpush.msra.mxu0 %v447
    %v449 = vand.u32 %v105, 4294901760
    %v450 = vsub.f32 %v105, %v449
    %v451 = vand.u32 %v450, 4294901760
    %452 = vmatpush.msra.mxu0 %v451
    %v453 = vand.u32 %v103, 4294901760
    %v454 = vsub.f32 %v103, %v453
    %v455 = vand.u32 %v454, 4294901760
    %456 = vmatpush.msra.mxu0 %v455
    %v457 = vand.u32 %v101, 4294901760
    %v458 = vsub.f32 %v101, %v457
    %v459 = vand.u32 %v458, 4294901760
    %460 = vmatpush.msra.mxu0 %v459
    %v461 = vand.u32 %v99, 4294901760
    %462 = vmatmul.f32.gmra.mxu0 %v461
    %v463 = vpop.f32.mrf.mxu0
    %v464 = vadd.f32 %v389, %v463
    %v465 = vand.u32 %v100, 4294901760
    %466 = vmatmul.f32.gmra.mxu0 %v465
    %v467 = vpop.f32.mrf.mxu0
    %v468 = vadd.f32 %v395, %v467
    %469 = vdwg.mxu0
    %v470 = vand.u32 %v131, 4294901760
    %471 = vmatpush.msra.mxu0 %v470
    %v472 = vand.u32 %v129, 4294901760
    %473 = vmatpush.msra.mxu0 %v472
    %v474 = vand.u32 %v127, 4294901760
    %475 = vmatpush.msra.mxu0 %v474
    %v476 = vand.u32 %v125, 4294901760
    %477 = vmatpush.msra.mxu0 %v476
    %v478 = vand.u32 %v123, 4294901760
    %479 = vmatpush.msra.mxu0 %v478
    %v480 = vand.u32 %v121, 4294901760
    %481 = vmatpush.msra.mxu0 %v480
    %v482 = vand.u32 %v119, 4294901760
    %483 = vmatpush.msra.mxu0 %v482
    %v484 = vand.u32 %v117, 4294901760
    %485 = vmatpush.msra.mxu0 %v484
    %v486 = vand.u32 %v115, 4294901760
    %487 = vmatpush.msra.mxu0 %v486
    %v488 = vand.u32 %v113, 4294901760
    %489 = vmatpush.msra.mxu0 %v488
    %v490 = vand.u32 %v111, 4294901760
    %491 = vmatpush.msra.mxu0 %v490
    %v492 = vand.u32 %v109, 4294901760
    %493 = vmatpush.msra.mxu0 %v492
    %v494 = vand.u32 %v107, 4294901760
    %495 = vmatpush.msra.mxu0 %v494
    %v496 = vand.u32 %v105, 4294901760
    %497 = vmatpush.msra.mxu0 %v496
    %v498 = vand.u32 %v103, 4294901760
    %499 = vmatpush.msra.mxu0 %v498
    %v500 = vand.u32 %v101, 4294901760
    %501 = vmatpush.msra.mxu0 %v500
    %v502 = vand.u32 %v99, 4294901760
    %503 = vmatmul.f32.gmra.mxu0 %v502
    %v504 = vpop.f32.mrf.mxu0
    %v505 = vadd.f32 %v464, %v504
    %v506 = vand.u32 %v100, 4294901760
    %507 = vmatmul.f32.gmra.mxu0 %v506
    %v508 = vpop.f32.mrf.mxu0
    %v509 = vadd.f32 %v468, %v508
    %510 = vdwg.mxu0
    %v511 = vand.u32 %v132, 4294901760
    %512 = vmatpush.msra.mxu0 %v511
    %v513 = vand.u32 %v130, 4294901760
    %514 = vmatpush.msra.mxu0 %v513
    %v515 = vand.u32 %v128, 4294901760
    %516 = vmatpush.msra.mxu0 %v515
    %v517 = vand.u32 %v126, 4294901760
    %518 = vmatpush.msra.mxu0 %v517
    %v519 = vand.u32 %v124, 4294901760
    %520 = vmatpush.msra.mxu0 %v519
    %v521 = vand.u32 %v122, 4294901760
    %522 = vmatpush.msra.mxu0 %v521
    %v523 = vand.u32 %v120, 4294901760
    %524 = vmatpush.msra.mxu0 %v523
    %v525 = vand.u32 %v118, 4294901760
    %526 = vmatpush.msra.mxu0 %v525
    %v527 = vand.u32 %v116, 4294901760
    %528 = vmatpush.msra.mxu0 %v527
    %v529 = vand.u32 %v114, 4294901760
    %530 = vmatpush.msra.mxu0 %v529
    %v531 = vand.u32 %v112, 4294901760
    %532 = vmatpush.msra.mxu0 %v531
    %v533 = vand.u32 %v110, 4294901760
    %534 = vmatpush.msra.mxu0 %v533
    %v535 = vand.u32 %v108, 4294901760
    %536 = vmatpush.msra.mxu0 %v535
    %v537 = vand.u32 %v106, 4294901760
    %538 = vmatpush.msra.mxu0 %v537
    %v539 = vand.u32 %v104, 4294901760
    %540 = vmatpush.msra.mxu0 %v539
    %v541 = vand.u32 %v102, 4294901760
    %542 = vmatpush.msra.mxu0 %v541
    %v543 = vand.u32 %v99, 4294901760
    %v544 = vsub.f32 %v99, %v543
    %v545 = vand.u32 %v544, 4294901760
    %v546 = vsub.f32 %v544, %v545
    %v547 = vand.u32 %v546, 4294901760
    %548 = vmatmul.f32.gmra.mxu0 %v547
    %v549 = vpop.f32.mrf.mxu0
    %v550 = vadd.f32 %v136, %v549
    %v551 = vand.u32 %v100, 4294901760
    %v552 = vsub.f32 %v100, %v551
    %v553 = vand.u32 %v552, 4294901760
    %v554 = vsub.f32 %v552, %v553
    %v555 = vand.u32 %v554, 4294901760
    %556 = vmatmul.f32.gmra.mxu0 %v555
    %v557 = vpop.f32.mrf.mxu0
    %v558 = vadd.f32 %v136, %v557
    %559 = vdwg.mxu0
    %v560 = vand.u32 %v132, 4294901760
    %v561 = vsub.f32 %v132, %v560
    %v562 = vand.u32 %v561, 4294901760
    %v563 = vsub.f32 %v561, %v562
    %v564 = vand.u32 %v563, 4294901760
    %565 = vmatpush.msra.mxu0 %v564
    %v566 = vand.u32 %v130, 4294901760
    %v567 = vsub.f32 %v130, %v566
    %v568 = vand.u32 %v567, 4294901760
    %v569 = vsub.f32 %v567, %v568
    %v570 = vand.u32 %v569, 4294901760
    %571 = vmatpush.msra.mxu0 %v570
    %v572 = vand.u32 %v128, 4294901760
    %v573 = vsub.f32 %v128, %v572
    %v574 = vand.u32 %v573, 4294901760
    %v575 = vsub.f32 %v573, %v574
    %v576 = vand.u32 %v575, 4294901760
    %577 = vmatpush.msra.mxu0 %v576
    %v578 = vand.u32 %v126, 4294901760
    %v579 = vsub.f32 %v126, %v578
    %v580 = vand.u32 %v579, 4294901760
    %v581 = vsub.f32 %v579, %v580
    %v582 = vand.u32 %v581, 4294901760
    %583 = vmatpush.msra.mxu0 %v582
    %v584 = vand.u32 %v124, 4294901760
    %v585 = vsub.f32 %v124, %v584
    %v586 = vand.u32 %v585, 4294901760
    %v587 = vsub.f32 %v585, %v586
    %v588 = vand.u32 %v587, 4294901760
    %589 = vmatpush.msra.mxu0 %v588
    %v590 = vand.u32 %v122, 4294901760
    %v591 = vsub.f32 %v122, %v590
    %v592 = vand.u32 %v591, 4294901760
    %v593 = vsub.f32 %v591, %v592
    %v594 = vand.u32 %v593, 4294901760
    %595 = vmatpush.msra.mxu0 %v594
    %v596 = vand.u32 %v120, 4294901760
    %v597 = vsub.f32 %v120, %v596
    %v598 = vand.u32 %v597, 4294901760
    %v599 = vsub.f32 %v597, %v598
    %v600 = vand.u32 %v599, 4294901760
    %601 = vmatpush.msra.mxu0 %v600
    %v602 = vand.u32 %v118, 4294901760
    %v603 = vsub.f32 %v118, %v602
    %v604 = vand.u32 %v603, 4294901760
    %v605 = vsub.f32 %v603, %v604
    %v606 = vand.u32 %v605, 4294901760
    %607 = vmatpush.msra.mxu0 %v606
    %v608 = vand.u32 %v116, 4294901760
    %v609 = vsub.f32 %v116, %v608
    %v610 = vand.u32 %v609, 4294901760
    %v611 = vsub.f32 %v609, %v610
    %v612 = vand.u32 %v611, 4294901760
    %613 = vmatpush.msra.mxu0 %v612
    %v614 = vand.u32 %v114, 4294901760
    %v615 = vsub.f32 %v114, %v614
    %v616 = vand.u32 %v615, 4294901760
    %v617 = vsub.f32 %v615, %v616
    %v618 = vand.u32 %v617, 4294901760
    %619 = vmatpush.msra.mxu0 %v618
    %v620 = vand.u32 %v112, 4294901760
    %v621 = vsub.f32 %v112, %v620
    %v622 = vand.u32 %v621, 4294901760
    %v623 = vsub.f32 %v621, %v622
    %v624 = vand.u32 %v623, 4294901760
    %625 = vmatpush.msra.mxu0 %v624
    %v626 = vand.u32 %v110, 4294901760
    %v627 = vsub.f32 %v110, %v626
    %v628 = vand.u32 %v627, 4294901760
    %v629 = vsub.f32 %v627, %v628
    %v630 = vand.u32 %v629, 4294901760
    %631 = vmatpush.msra.mxu0 %v630
    %v632 = vand.u32 %v108, 4294901760
    %v633 = vsub.f32 %v108, %v632
    %v634 = vand.u32 %v633, 4294901760
    %v635 = vsub.f32 %v633, %v634
    %v636 = vand.u32 %v635, 4294901760
    %637 = vmatpush.msra.mxu0 %v636
    %v638 = vand.u32 %v106, 4294901760
    %v639 = vsub.f32 %v106, %v638
    %v640 = vand.u32 %v639, 4294901760
    %v641 = vsub.f32 %v639, %v640
    %v642 = vand.u32 %v641, 4294901760
    %643 = vmatpush.msra.mxu0 %v642
    %v644 = vand.u32 %v104, 4294901760
    %v645 = vsub.f32 %v104, %v644
    %v646 = vand.u32 %v645, 4294901760
    %v647 = vsub.f32 %v645, %v646
    %v648 = vand.u32 %v647, 4294901760
    %649 = vmatpush.msra.mxu0 %v648
    %v650 = vand.u32 %v102, 4294901760
    %v651 = vsub.f32 %v102, %v650
    %v652 = vand.u32 %v651, 4294901760
    %v653 = vsub.f32 %v651, %v652
    %v654 = vand.u32 %v653, 4294901760
    %655 = vmatpush.msra.mxu0 %v654
    %v656 = vand.u32 %v99, 4294901760
    %657 = vmatmul.f32.gmra.mxu0 %v656
    %v658 = vpop.f32.mrf.mxu0
    %v659 = vadd.f32 %v550, %v658
    %v660 = vand.u32 %v100, 4294901760
    %661 = vmatmul.f32.gmra.mxu0 %v660
    %v662 = vpop.f32.mrf.mxu0
    %v663 = vadd.f32 %v558, %v662
    %664 = vdwg.mxu0
    %v665 = vand.u32 %v132, 4294901760
    %v666 = vsub.f32 %v132, %v665
    %667 = vmatpush.msra.mxu0 %v666
    %v668 = vand.u32 %v130, 4294901760
    %v669 = vsub.f32 %v130, %v668
    %670 = vmatpush.msra.mxu0 %v669
    %v671 = vand.u32 %v128, 4294901760
    %v672 = vsub.f32 %v128, %v671
    %673 = vmatpush.msra.mxu0 %v672
    %v674 = vand.u32 %v126, 4294901760
    %v675 = vsub.f32 %v126, %v674
    %676 = vmatpush.msra.mxu0 %v675
    %v677 = vand.u32 %v124, 4294901760
    %v678 = vsub.f32 %v124, %v677
    %679 = vmatpush.msra.mxu0 %v678
    %v680 = vand.u32 %v122, 4294901760
    %v681 = vsub.f32 %v122, %v680
    %682 = vmatpush.msra.mxu0 %v681
    %v683 = vand.u32 %v120, 4294901760
    %v684 = vsub.f32 %v120, %v683
    %685 = vmatpush.msra.mxu0 %v684
    %v686 = vand.u32 %v118, 4294901760
    %v687 = vsub.f32 %v118, %v686
    %688 = vmatpush.msra.mxu0 %v687
    %v689 = vand.u32 %v116, 4294901760
    %v690 = vsub.f32 %v116, %v689
    %691 = vmatpush.msra.mxu0 %v690
    %v692 = vand.u32 %v114, 4294901760
    %v693 = vsub.f32 %v114, %v692
    %694 = vmatpush.msra.mxu0 %v693
    %v695 = vand.u32 %v112, 4294901760
    %v696 = vsub.f32 %v112, %v695
    %697 = vmatpush.msra.mxu0 %v696
    %v698 = vand.u32 %v110, 4294901760
    %v699 = vsub.f32 %v110, %v698
    %700 = vmatpush.msra.mxu0 %v699
    %v701 = vand.u32 %v108, 4294901760
    %v702 = vsub.f32 %v108, %v701
    %703 = vmatpush.msra.mxu0 %v702
    %v704 = vand.u32 %v106, 4294901760
    %v705 = vsub.f32 %v106, %v704
    %706 = vmatpush.msra.mxu0 %v705
    %v707 = vand.u32 %v104, 4294901760
    %v708 = vsub.f32 %v104, %v707
    %709 = vmatpush.msra.mxu0 %v708
    %v710 = vand.u32 %v102, 4294901760
    %v711 = vsub.f32 %v102, %v710
    %712 = vmatpush.msra.mxu0 %v711
    %v713 = vand.u32 %v99, 4294901760
    %v714 = vsub.f32 %v99, %v713
    %715 = vmatmul.f32.gmra.mxu0 %v714
    %v716 = vpop.f32.mrf.mxu0
    %v717 = vadd.f32 %v659, %v716
    %v718 = vand.u32 %v100, 4294901760
    %v719 = vsub.f32 %v100, %v718
    %720 = vmatmul.f32.gmra.mxu0 %v719
    %v721 = vpop.f32.mrf.mxu0
    %v722 = vadd.f32 %v663, %v721
    %723 = vdwg.mxu0
    %v724 = vand.u32 %v132, 4294901760
    %725 = vmatpush.msra.mxu0 %v724
    %v726 = vand.u32 %v130, 4294901760
    %727 = vmatpush.msra.mxu0 %v726
    %v728 = vand.u32 %v128, 4294901760
    %729 = vmatpush.msra.mxu0 %v728
    %v730 = vand.u32 %v126, 4294901760
    %731 = vmatpush.msra.mxu0 %v730
    %v732 = vand.u32 %v124, 4294901760
    %733 = vmatpush.msra.mxu0 %v732
    %v734 = vand.u32 %v122, 4294901760
    %735 = vmatpush.msra.mxu0 %v734
    %v736 = vand.u32 %v120, 4294901760
    %737 = vmatpush.msra.mxu0 %v736
    %v738 = vand.u32 %v118, 4294901760
    %739 = vmatpush.msra.mxu0 %v738
    %v740 = vand.u32 %v116, 4294901760
    %741 = vmatpush.msra.mxu0 %v740
    %v742 = vand.u32 %v114, 4294901760
    %743 = vmatpush.msra.mxu0 %v742
    %v744 = vand.u32 %v112, 4294901760
    %745 = vmatpush.msra.mxu0 %v744
    %v746 = vand.u32 %v110, 4294901760
    %747 = vmatpush.msra.mxu0 %v746
    %v748 = vand.u32 %v108, 4294901760
    %749 = vmatpush.msra.mxu0 %v748
    %v750 = vand.u32 %v106, 4294901760
    %751 = vmatpush.msra.mxu0 %v750
    %v752 = vand.u32 %v104, 4294901760
    %753 = vmatpush.msra.mxu0 %v752
    %v754 = vand.u32 %v102, 4294901760
    %755 = vmatpush.msra.mxu0 %v754
    %v756 = vand.u32 %v99, 4294901760
    %v757 = vsub.f32 %v99, %v756
    %v758 = vand.u32 %v757, 4294901760
    %759 = vmatmul.f32.gmra.mxu0 %v758
    %v760 = vpop.f32.mrf.mxu0
    %v761 = vadd.f32 %v717, %v760
    %v762 = vand.u32 %v100, 4294901760
    %v763 = vsub.f32 %v100, %v762
    %v764 = vand.u32 %v763, 4294901760
    %765 = vmatmul.f32.gmra.mxu0 %v764
    %v766 = vpop.f32.mrf.mxu0
    %v767 = vadd.f32 %v722, %v766
    %768 = vdwg.mxu0
    %v769 = vand.u32 %v132, 4294901760
    %v770 = vsub.f32 %v132, %v769
    %v771 = vand.u32 %v770, 4294901760
    %772 = vmatpush.msra.mxu0 %v771
    %v773 = vand.u32 %v130, 4294901760
    %v774 = vsub.f32 %v130, %v773
    %v775 = vand.u32 %v774, 4294901760
    %776 = vmatpush.msra.mxu0 %v775
    %v777 = vand.u32 %v128, 4294901760
    %v778 = vsub.f32 %v128, %v777
    %v779 = vand.u32 %v778, 4294901760
    %780 = vmatpush.msra.mxu0 %v779
    %v781 = vand.u32 %v126, 4294901760
    %v782 = vsub.f32 %v126, %v781
    %v783 = vand.u32 %v782, 4294901760
    %784 = vmatpush.msra.mxu0 %v783
    %v785 = vand.u32 %v124, 4294901760
    %v786 = vsub.f32 %v124, %v785
    %v787 = vand.u32 %v786, 4294901760
    %788 = vmatpush.msra.mxu0 %v787
    %v789 = vand.u32 %v122, 4294901760
    %v790 = vsub.f32 %v122, %v789
    %v791 = vand.u32 %v790, 4294901760
    %792 = vmatpush.msra.mxu0 %v791
    %v793 = vand.u32 %v120, 4294901760
    %v794 = vsub.f32 %v120, %v793
    %v795 = vand.u32 %v794, 4294901760
    %796 = vmatpush.msra.mxu0 %v795
    %v797 = vand.u32 %v118, 4294901760
    %v798 = vsub.f32 %v118, %v797
    %v799 = vand.u32 %v798, 4294901760
    %800 = vmatpush.msra.mxu0 %v799
    %v801 = vand.u32 %v116, 4294901760
    %v802 = vsub.f32 %v116, %v801
    %v803 = vand.u32 %v802, 4294901760
    %804 = vmatpush.msra.mxu0 %v803
    %v805 = vand.u32 %v114, 4294901760
    %v806 = vsub.f32 %v114, %v805
    %v807 = vand.u32 %v806, 4294901760
    %808 = vmatpush.msra.mxu0 %v807
    %v809 = vand.u32 %v112, 4294901760
    %v810 = vsub.f32 %v112, %v809
    %v811 = vand.u32 %v810, 4294901760
    %812 = vmatpush.msra.mxu0 %v811
    %v813 = vand.u32 %v110, 4294901760
    %v814 = vsub.f32 %v110, %v813
    %v815 = vand.u32 %v814, 4294901760
    %816 = vmatpush.msra.mxu0 %v815
    %v817 = vand.u32 %v108, 4294901760
    %v818 = vsub.f32 %v108, %v817
    %v819 = vand.u32 %v818, 4294901760
    %820 = vmatpush.msra.mxu0 %v819
    %v821 = vand.u32 %v106, 4294901760
    %v822 = vsub.f32 %v106, %v821
    %v823 = vand.u32 %v822, 4294901760
    %824 = vmatpush.msra.mxu0 %v823
    %v825 = vand.u32 %v104, 4294901760
    %v826 = vsub.f32 %v104, %v825
    %v827 = vand.u32 %v826, 4294901760
    %828 = vmatpush.msra.mxu0 %v827
    %v829 = vand.u32 %v102, 4294901760
    %v830 = vsub.f32 %v102, %v829
    %v831 = vand.u32 %v830, 4294901760
    %832 = vmatpush.msra.mxu0 %v831
    %v833 = vand.u32 %v99, 4294901760
    %834 = vmatmul.f32.gmra.mxu0 %v833
    %v835 = vpop.f32.mrf.mxu0
    %v836 = vadd.f32 %v761, %v835
    %v837 = vand.u32 %v100, 4294901760
    %838 = vmatmul.f32.gmra.mxu0 %v837
    %v839 = vpop.f32.mrf.mxu0
    %v840 = vadd.f32 %v767, %v839
    %841 = vdwg.mxu0
    %v842 = vand.u32 %v132, 4294901760
    %843 = vmatpush.msra.mxu0 %v842
    %v844 = vand.u32 %v130, 4294901760
    %845 = vmatpush.msra.mxu0 %v844
    %v846 = vand.u32 %v128, 4294901760
    %847 = vmatpush.msra.mxu0 %v846
    %v848 = vand.u32 %v126, 4294901760
    %849 = vmatpush.msra.mxu0 %v848
    %v850 = vand.u32 %v124, 4294901760
    %851 = vmatpush.msra.mxu0 %v850
    %v852 = vand.u32 %v122, 4294901760
    %853 = vmatpush.msra.mxu0 %v852
    %v854 = vand.u32 %v120, 4294901760
    %855 = vmatpush.msra.mxu0 %v854
    %v856 = vand.u32 %v118, 4294901760
    %857 = vmatpush.msra.mxu0 %v856
    %v858 = vand.u32 %v116, 4294901760
    %859 = vmatpush.msra.mxu0 %v858
    %v860 = vand.u32 %v114, 4294901760
    %861 = vmatpush.msra.mxu0 %v860
    %v862 = vand.u32 %v112, 4294901760
    %863 = vmatpush.msra.mxu0 %v862
    %v864 = vand.u32 %v110, 4294901760
    %865 = vmatpush.msra.mxu0 %v864
    %v866 = vand.u32 %v108, 4294901760
    %867 = vmatpush.msra.mxu0 %v866
    %v868 = vand.u32 %v106, 4294901760
    %869 = vmatpush.msra.mxu0 %v868
    %v870 = vand.u32 %v104, 4294901760
    %871 = vmatpush.msra.mxu0 %v870
    %v872 = vand.u32 %v102, 4294901760
    %873 = vmatpush.msra.mxu0 %v872
    %v874 = vand.u32 %v99, 4294901760
    %875 = vmatmul.f32.gmra.mxu0 %v874
    %v876 = vpop.f32.mrf.mxu0
    %v877 = vadd.f32 %v836, %v876
    %v878 = vand.u32 %v100, 4294901760
    %879 = vmatmul.f32.gmra.mxu0 %v878
    %v880 = vpop.f32.mrf.mxu0
    %v881 = vadd.f32 %v840, %v880
    %882 = vdwg.mxu0
    %v883 = vmax.f32 %v505, 0.0
    %v884 = vmax.f32 %v877, 0.0
    %v885 = vmax.f32 %v509, 0.0
    %v886 = vmax.f32 %v881, 0.0
    %v887 = vld [vmem:[%s4] sm:$0xff]
    %v888 = vld [vmem:[%s4 + $0x8] sm:$0xff]
    %v889 = vld [vmem:[%s4 + $0x10] sm:$0xff]
    %v890 = vld [vmem:[%s4 + $0x18] sm:$0xff]
    %v891 = vld [vmem:[%s4 + $0x20] sm:$0xff]
    %v892 = vld [vmem:[%s4 + $0x28] sm:$0xff]
    %v893 = vld [vmem:[%s4 + $0x30] sm:$0xff]
    %v894 = vld [vmem:[%s4 + $0x38] sm:$0xff]
    %v895 = vld [vmem:[%s4 + $0x40] sm:$0xff]
    %v896 = vld [vmem:[%s4 + $0x48] sm:$0xff]
    %v897 = vld [vmem:[%s4 + $0x50] sm:$0xff]
    %v898 = vld [vmem:[%s4 + $0x58] sm:$0xff]
    %v899 = vld [vmem:[%s4 + $0x60] sm:$0xff]
    %v900 = vld [vmem:[%s4 + $0x68] sm:$0xff]
    %v901 = vld [vmem:[%s4 + $0x70] sm:$0xff]
    %v902 = vld [vmem:[%s4 + $0x78] sm:$0xff]
    %v903 = vld [vmem:[%s4 + $0x80] sm:$0xff]
    %v904 = vld [vmem:[%s4 + $0x88] sm:$0xff]
    %v905 = vld [vmem:[%s4 + $0x90] sm:$0xff]
    %v906 = vld [vmem:[%s4 + $0x98] sm:$0xff]
    %v907 = vld [vmem:[%s4 + $0xa0] sm:$0xff]
    %v908 = vld [vmem:[%s4 + $0xa8] sm:$0xff]
    %v909 = vld [vmem:[%s4 + $0xb0] sm:$0xff]
    %v910 = vld [vmem:[%s4 + $0xb8] sm:$0xff]
    %v911 = vld [vmem:[%s4 + $0xc0] sm:$0xff]
    %v912 = vld [vmem:[%s4 + $0xc8] sm:$0xff]
    %v913 = vld [vmem:[%s4 + $0xd0] sm:$0xff]
    %v914 = vld [vmem:[%s4 + $0xd8] sm:$0xff]
    %v915 = vld [vmem:[%s4 + $0xe0] sm:$0xff]
    %v916 = vld [vmem:[%s4 + $0xe8] sm:$0xff]
    %v917 = vld [vmem:[%s4 + $0xf0] sm:$0xff]
    %v918 = vld [vmem:[%s4 + $0xf8] sm:$0xff]
    %v919 = vld [vmem:[%s5] sm:$0x1]
    %v921 = vperm.slane %v919, 0
    %v923 = vand.u32 %v902, 4294901760
    %924 = vmatpush.msra.mxu0 %v923
    %v925 = vand.u32 %v901, 4294901760
    %926 = vmatpush.msra.mxu0 %v925
    %v927 = vand.u32 %v900, 4294901760
    %928 = vmatpush.msra.mxu0 %v927
    %v929 = vand.u32 %v899, 4294901760
    %930 = vmatpush.msra.mxu0 %v929
    %v931 = vand.u32 %v898, 4294901760
    %932 = vmatpush.msra.mxu0 %v931
    %v933 = vand.u32 %v897, 4294901760
    %934 = vmatpush.msra.mxu0 %v933
    %v935 = vand.u32 %v896, 4294901760
    %936 = vmatpush.msra.mxu0 %v935
    %v937 = vand.u32 %v895, 4294901760
    %938 = vmatpush.msra.mxu0 %v937
    %v939 = vand.u32 %v894, 4294901760
    %940 = vmatpush.msra.mxu0 %v939
    %v941 = vand.u32 %v893, 4294901760
    %942 = vmatpush.msra.mxu0 %v941
    %v943 = vand.u32 %v892, 4294901760
    %944 = vmatpush.msra.mxu0 %v943
    %v945 = vand.u32 %v891, 4294901760
    %946 = vmatpush.msra.mxu0 %v945
    %v947 = vand.u32 %v890, 4294901760
    %948 = vmatpush.msra.mxu0 %v947
    %v949 = vand.u32 %v889, 4294901760
    %950 = vmatpush.msra.mxu0 %v949
    %v951 = vand.u32 %v888, 4294901760
    %952 = vmatpush.msra.mxu0 %v951
    %v953 = vand.u32 %v887, 4294901760
    %954 = vmatpush.msra.mxu0 %v953
    %v955 = vand.u32 %v883, 4294901760
    %v956 = vsub.f32 %v883, %v955
    %v957 = vand.u32 %v956, 4294901760
    %v958 = vsub.f32 %v956, %v957
    %v959 = vand.u32 %v958, 4294901760
    %960 = vmatmul.f32.gmra.mxu0 %v959
    %v961 = vpop.f32.mrf.mxu0
    %v962 = vadd.f32 %v921, %v961
    %v963 = vand.u32 %v885, 4294901760
    %v964 = vsub.f32 %v885, %v963
    %v965 = vand.u32 %v964, 4294901760
    %v966 = vsub.f32 %v964, %v965
    %v967 = vand.u32 %v966, 4294901760
    %968 = vmatmul.f32.gmra.mxu0 %v967
    %v969 = vpop.f32.mrf.mxu0
    %v970 = vadd.f32 %v921, %v969
    %971 = vdwg.mxu0
    %v972 = vand.u32 %v902, 4294901760
    %v973 = vsub.f32 %v902, %v972
    %v974 = vand.u32 %v973, 4294901760
    %v975 = vsub.f32 %v973, %v974
    %v976 = vand.u32 %v975, 4294901760
    %977 = vmatpush.msra.mxu0 %v976
    %v978 = vand.u32 %v901, 4294901760
    %v979 = vsub.f32 %v901, %v978
    %v980 = vand.u32 %v979, 4294901760
    %v981 = vsub.f32 %v979, %v980
    %v982 = vand.u32 %v981, 4294901760
    %983 = vmatpush.msra.mxu0 %v982
    %v984 = vand.u32 %v900, 4294901760
    %v985 = vsub.f32 %v900, %v984
    %v986 = vand.u32 %v985, 4294901760
    %v987 = vsub.f32 %v985, %v986
    %v988 = vand.u32 %v987, 4294901760
    %989 = vmatpush.msra.mxu0 %v988
    %v990 = vand.u32 %v899, 4294901760
    %v991 = vsub.f32 %v899, %v990
    %v992 = vand.u32 %v991, 4294901760
    %v993 = vsub.f32 %v991, %v992
    %v994 = vand.u32 %v993, 4294901760
    %995 = vmatpush.msra.mxu0 %v994
    %v996 = vand.u32 %v898, 4294901760
    %v997 = vsub.f32 %v898, %v996
    %v998 = vand.u32 %v997, 4294901760
    %v999 = vsub.f32 %v997, %v998
    %v1000 = vand.u32 %v999, 4294901760
    %1001 = vmatpush.msra.mxu0 %v1000
    %v1002 = vand.u32 %v897, 4294901760
    %v1003 = vsub.f32 %v897, %v1002
    %v1004 = vand.u32 %v1003, 4294901760
    %v1005 = vsub.f32 %v1003, %v1004
    %v1006 = vand.u32 %v1005, 4294901760
    %1007 = vmatpush.msra.mxu0 %v1006
    %v1008 = vand.u32 %v896, 4294901760
    %v1009 = vsub.f32 %v896, %v1008
    %v1010 = vand.u32 %v1009, 4294901760
    %v1011 = vsub.f32 %v1009, %v1010
    %v1012 = vand.u32 %v1011, 4294901760
    %1013 = vmatpush.msra.mxu0 %v1012
    %v1014 = vand.u32 %v895, 4294901760
    %v1015 = vsub.f32 %v895, %v1014
    %v1016 = vand.u32 %v1015, 4294901760
    %v1017 = vsub.f32 %v1015, %v1016
    %v1018 = vand.u32 %v1017, 4294901760
    %1019 = vmatpush.msra.mxu0 %v1018
    %v1020 = vand.u32 %v894, 4294901760
    %v1021 = vsub.f32 %v894, %v1020
    %v1022 = vand.u32 %v1021, 4294901760
    %v1023 = vsub.f32 %v1021, %v1022
    %v1024 = vand.u32 %v1023, 4294901760
    %1025 = vmatpush.msra.mxu0 %v1024
    %v1026 = vand.u32 %v893, 4294901760
    %v1027 = vsub.f32 %v893, %v1026
    %v1028 = vand.u32 %v1027, 4294901760
    %v1029 = vsub.f32 %v1027, %v1028
    %v1030 = vand.u32 %v1029, 4294901760
    %1031 = vmatpush.msra.mxu0 %v1030
    %v1032 = vand.u32 %v892, 4294901760
    %v1033 = vsub.f32 %v892, %v1032
    %v1034 = vand.u32 %v1033, 4294901760
    %v1035 = vsub.f32 %v1033, %v1034
    %v1036 = vand.u32 %v1035, 4294901760
    %1037 = vmatpush.msra.mxu0 %v1036
    %v1038 = vand.u32 %v891, 4294901760
    %v1039 = vsub.f32 %v891, %v1038
    %v1040 = vand.u32 %v1039, 4294901760
    %v1041 = vsub.f32 %v1039, %v1040
    %v1042 = vand.u32 %v1041, 4294901760
    %1043 = vmatpush.msra.mxu0 %v1042
    %v1044 = vand.u32 %v890, 4294901760
    %v1045 = vsub.f32 %v890, %v1044
    %v1046 = vand.u32 %v1045, 4294901760
    %v1047 = vsub.f32 %v1045, %v1046
    %v1048 = vand.u32 %v1047, 4294901760
    %1049 = vmatpush.msra.mxu0 %v1048
    %v1050 = vand.u32 %v889, 4294901760
    %v1051 = vsub.f32 %v889, %v1050
    %v1052 = vand.u32 %v1051, 4294901760
    %v1053 = vsub.f32 %v1051, %v1052
    %v1054 = vand.u32 %v1053, 4294901760
    %1055 = vmatpush.msra.mxu0 %v1054
    %v1056 = vand.u32 %v888, 4294901760
    %v1057 = vsub.f32 %v888, %v1056
    %v1058 = vand.u32 %v1057, 4294901760
    %v1059 = vsub.f32 %v1057, %v1058
    %v1060 = vand.u32 %v1059, 4294901760
    %1061 = vmatpush.msra.mxu0 %v1060
    %v1062 = vand.u32 %v887, 4294901760
    %v1063 = vsub.f32 %v887, %v1062
    %v1064 = vand.u32 %v1063, 4294901760
    %v1065 = vsub.f32 %v1063, %v1064
    %v1066 = vand.u32 %v1065, 4294901760
    %1067 = vmatpush.msra.mxu0 %v1066
    %v1068 = vand.u32 %v883, 4294901760
    %1069 = vmatmul.f32.gmra.mxu0 %v1068
    %v1070 = vpop.f32.mrf.mxu0
    %v1071 = vadd.f32 %v962, %v1070
    %v1072 = vand.u32 %v885, 4294901760
    %1073 = vmatmul.f32.gmra.mxu0 %v1072
    %v1074 = vpop.f32.mrf.mxu0
    %v1075 = vadd.f32 %v970, %v1074
    %1076 = vdwg.mxu0
    %v1077 = vand.u32 %v902, 4294901760
    %v1078 = vsub.f32 %v902, %v1077
    %1079 = vmatpush.msra.mxu0 %v1078
    %v1080 = vand.u32 %v901, 4294901760
    %v1081 = vsub.f32 %v901, %v1080
    %1082 = vmatpush.msra.mxu0 %v1081
    %v1083 = vand.u32 %v900, 4294901760
    %v1084 = vsub.f32 %v900, %v1083
    %1085 = vmatpush.msra.mxu0 %v1084
    %v1086 = vand.u32 %v899, 4294901760
    %v1087 = vsub.f32 %v899, %v1086
    %1088 = vmatpush.msra.mxu0 %v1087
    %v1089 = vand.u32 %v898, 4294901760
    %v1090 = vsub.f32 %v898, %v1089
    %1091 = vmatpush.msra.mxu0 %v1090
    %v1092 = vand.u32 %v897, 4294901760
    %v1093 = vsub.f32 %v897, %v1092
    %1094 = vmatpush.msra.mxu0 %v1093
    %v1095 = vand.u32 %v896, 4294901760
    %v1096 = vsub.f32 %v896, %v1095
    %1097 = vmatpush.msra.mxu0 %v1096
    %v1098 = vand.u32 %v895, 4294901760
    %v1099 = vsub.f32 %v895, %v1098
    %1100 = vmatpush.msra.mxu0 %v1099
    %v1101 = vand.u32 %v894, 4294901760
    %v1102 = vsub.f32 %v894, %v1101
    %1103 = vmatpush.msra.mxu0 %v1102
    %v1104 = vand.u32 %v893, 4294901760
    %v1105 = vsub.f32 %v893, %v1104
    %1106 = vmatpush.msra.mxu0 %v1105
    %v1107 = vand.u32 %v892, 4294901760
    %v1108 = vsub.f32 %v892, %v1107
    %1109 = vmatpush.msra.mxu0 %v1108
    %v1110 = vand.u32 %v891, 4294901760
    %v1111 = vsub.f32 %v891, %v1110
    %1112 = vmatpush.msra.mxu0 %v1111
    %v1113 = vand.u32 %v890, 4294901760
    %v1114 = vsub.f32 %v890, %v1113
    %1115 = vmatpush.msra.mxu0 %v1114
    %v1116 = vand.u32 %v889, 4294901760
    %v1117 = vsub.f32 %v889, %v1116
    %1118 = vmatpush.msra.mxu0 %v1117
    %v1119 = vand.u32 %v888, 4294901760
    %v1120 = vsub.f32 %v888, %v1119
    %1121 = vmatpush.msra.mxu0 %v1120
    %v1122 = vand.u32 %v887, 4294901760
    %v1123 = vsub.f32 %v887, %v1122
    %1124 = vmatpush.msra.mxu0 %v1123
    %v1125 = vand.u32 %v883, 4294901760
    %v1126 = vsub.f32 %v883, %v1125
    %1127 = vmatmul.f32.gmra.mxu0 %v1126
    %v1128 = vpop.f32.mrf.mxu0
    %v1129 = vadd.f32 %v1071, %v1128
    %v1130 = vand.u32 %v885, 4294901760
    %v1131 = vsub.f32 %v885, %v1130
    %1132 = vmatmul.f32.gmra.mxu0 %v1131
    %v1133 = vpop.f32.mrf.mxu0
    %v1134 = vadd.f32 %v1075, %v1133
    %1135 = vdwg.mxu0
    %v1136 = vand.u32 %v902, 4294901760
    %1137 = vmatpush.msra.mxu0 %v1136
    %v1138 = vand.u32 %v901, 4294901760
    %1139 = vmatpush.msra.mxu0 %v1138
    %v1140 = vand.u32 %v900, 4294901760
    %1141 = vmatpush.msra.mxu0 %v1140
    %v1142 = vand.u32 %v899, 4294901760
    %1143 = vmatpush.msra.mxu0 %v1142
    %v1144 = vand.u32 %v898, 4294901760
    %1145 = vmatpush.msra.mxu0 %v1144
    %v1146 = vand.u32 %v897, 4294901760
    %1147 = vmatpush.msra.mxu0 %v1146
    %v1148 = vand.u32 %v896, 4294901760
    %1149 = vmatpush.msra.mxu0 %v1148
    %v1150 = vand.u32 %v895, 4294901760
    %1151 = vmatpush.msra.mxu0 %v1150
    %v1152 = vand.u32 %v894, 4294901760
    %1153 = vmatpush.msra.mxu0 %v1152
    %v1154 = vand.u32 %v893, 4294901760
    %1155 = vmatpush.msra.mxu0 %v1154
    %v1156 = vand.u32 %v892, 4294901760
    %1157 = vmatpush.msra.mxu0 %v1156
    %v1158 = vand.u32 %v891, 4294901760
    %1159 = vmatpush.msra.mxu0 %v1158
    %v1160 = vand.u32 %v890, 4294901760
    %1161 = vmatpush.msra.mxu0 %v1160
    %v1162 = vand.u32 %v889, 4294901760
    %1163 = vmatpush.msra.mxu0 %v1162
    %v1164 = vand.u32 %v888, 4294901760
    %1165 = vmatpush.msra.mxu0 %v1164
    %v1166 = vand.u32 %v887, 4294901760
    %1167 = vmatpush.msra.mxu0 %v1166
    %v1168 = vand.u32 %v883, 4294901760
    %v1169 = vsub.f32 %v883, %v1168
    %v1170 = vand.u32 %v1169, 4294901760
    %1171 = vmatmul.f32.gmra.mxu0 %v1170
    %v1172 = vpop.f32.mrf.mxu0
    %v1173 = vadd.f32 %v1129, %v1172
    %v1174 = vand.u32 %v885, 4294901760
    %v1175 = vsub.f32 %v885, %v1174
    %v1176 = vand.u32 %v1175, 4294901760
    %1177 = vmatmul.f32.gmra.mxu0 %v1176
    %v1178 = vpop.f32.mrf.mxu0
    %v1179 = vadd.f32 %v1134, %v1178
    %1180 = vdwg.mxu0
    %v1181 = vand.u32 %v902, 4294901760
    %v1182 = vsub.f32 %v902, %v1181
    %v1183 = vand.u32 %v1182, 4294901760
    %1184 = vmatpush.msra.mxu0 %v1183
    %v1185 = vand.u32 %v901, 4294901760
    %v1186 = vsub.f32 %v901, %v1185
    %v1187 = vand.u32 %v1186, 4294901760
    %1188 = vmatpush.msra.mxu0 %v1187
    %v1189 = vand.u32 %v900, 4294901760
    %v1190 = vsub.f32 %v900, %v1189
    %v1191 = vand.u32 %v1190, 4294901760
    %1192 = vmatpush.msra.mxu0 %v1191
    %v1193 = vand.u32 %v899, 4294901760
    %v1194 = vsub.f32 %v899, %v1193
    %v1195 = vand.u32 %v1194, 4294901760
    %1196 = vmatpush.msra.mxu0 %v1195
    %v1197 = vand.u32 %v898, 4294901760
    %v1198 = vsub.f32 %v898, %v1197
    %v1199 = vand.u32 %v1198, 4294901760
    %1200 = vmatpush.msra.mxu0 %v1199
    %v1201 = vand.u32 %v897, 4294901760
    %v1202 = vsub.f32 %v897, %v1201
    %v1203 = vand.u32 %v1202, 4294901760
    %1204 = vmatpush.msra.mxu0 %v1203
    %v1205 = vand.u32 %v896, 4294901760
    %v1206 = vsub.f32 %v896, %v1205
    %v1207 = vand.u32 %v1206, 4294901760
    %1208 = vmatpush.msra.mxu0 %v1207
    %v1209 = vand.u32 %v895, 4294901760
    %v1210 = vsub.f32 %v895, %v1209
    %v1211 = vand.u32 %v1210, 4294901760
    %1212 = vmatpush.msra.mxu0 %v1211
    %v1213 = vand.u32 %v894, 4294901760
    %v1214 = vsub.f32 %v894, %v1213
    %v1215 = vand.u32 %v1214, 4294901760
    %1216 = vmatpush.msra.mxu0 %v1215
    %v1217 = vand.u32 %v893, 4294901760
    %v1218 = vsub.f32 %v893, %v1217
    %v1219 = vand.u32 %v1218, 4294901760
    %1220 = vmatpush.msra.mxu0 %v1219
    %v1221 = vand.u32 %v892, 4294901760
    %v1222 = vsub.f32 %v892, %v1221
    %v1223 = vand.u32 %v1222, 4294901760
    %1224 = vmatpush.msra.mxu0 %v1223
    %v1225 = vand.u32 %v891, 4294901760
    %v1226 = vsub.f32 %v891, %v1225
    %v1227 = vand.u32 %v1226, 4294901760
    %1228 = vmatpush.msra.mxu0 %v1227
    %v1229 = vand.u32 %v890, 4294901760
    %v1230 = vsub.f32 %v890, %v1229
    %v1231 = vand.u32 %v1230, 4294901760
    %1232 = vmatpush.msra.mxu0 %v1231
    %v1233 = vand.u32 %v889, 4294901760
    %v1234 = vsub.f32 %v889, %v1233
    %v1235 = vand.u32 %v1234, 4294901760
    %1236 = vmatpush.msra.mxu0 %v1235
    %v1237 = vand.u32 %v888, 4294901760
    %v1238 = vsub.f32 %v888, %v1237
    %v1239 = vand.u32 %v1238, 4294901760
    %1240 = vmatpush.msra.mxu0 %v1239
    %v1241 = vand.u32 %v887, 4294901760
    %v1242 = vsub.f32 %v887, %v1241
    %v1243 = vand.u32 %v1242, 4294901760
    %1244 = vmatpush.msra.mxu0 %v1243
    %v1245 = vand.u32 %v883, 4294901760
    %1246 = vmatmul.f32.gmra.mxu0 %v1245
    %v1247 = vpop.f32.mrf.mxu0
    %v1248 = vadd.f32 %v1173, %v1247
    %v1249 = vand.u32 %v885, 4294901760
    %1250 = vmatmul.f32.gmra.mxu0 %v1249
    %v1251 = vpop.f32.mrf.mxu0
    %v1252 = vadd.f32 %v1179, %v1251
    %1253 = vdwg.mxu0
    %v1254 = vand.u32 %v902, 4294901760
    %1255 = vmatpush.msra.mxu0 %v1254
    %v1256 = vand.u32 %v901, 4294901760
    %1257 = vmatpush.msra.mxu0 %v1256
    %v1258 = vand.u32 %v900, 4294901760
    %1259 = vmatpush.msra.mxu0 %v1258
    %v1260 = vand.u32 %v899, 4294901760
    %1261 = vmatpush.msra.mxu0 %v1260
    %v1262 = vand.u32 %v898, 4294901760
    %1263 = vmatpush.msra.mxu0 %v1262
    %v1264 = vand.u32 %v897, 4294901760
    %1265 = vmatpush.msra.mxu0 %v1264
    %v1266 = vand.u32 %v896, 4294901760
    %1267 = vmatpush.msra.mxu0 %v1266
    %v1268 = vand.u32 %v895, 4294901760
    %1269 = vmatpush.msra.mxu0 %v1268
    %v1270 = vand.u32 %v894, 4294901760
    %1271 = vmatpush.msra.mxu0 %v1270
    %v1272 = vand.u32 %v893, 4294901760
    %1273 = vmatpush.msra.mxu0 %v1272
    %v1274 = vand.u32 %v892, 4294901760
    %1275 = vmatpush.msra.mxu0 %v1274
    %v1276 = vand.u32 %v891, 4294901760
    %1277 = vmatpush.msra.mxu0 %v1276
    %v1278 = vand.u32 %v890, 4294901760
    %1279 = vmatpush.msra.mxu0 %v1278
    %v1280 = vand.u32 %v889, 4294901760
    %1281 = vmatpush.msra.mxu0 %v1280
    %v1282 = vand.u32 %v888, 4294901760
    %1283 = vmatpush.msra.mxu0 %v1282
    %v1284 = vand.u32 %v887, 4294901760
    %1285 = vmatpush.msra.mxu0 %v1284
    %v1286 = vand.u32 %v883, 4294901760
    %1287 = vmatmul.f32.gmra.mxu0 %v1286
    %v1288 = vpop.f32.mrf.mxu0
    %v1289 = vadd.f32 %v1248, %v1288
    %v1290 = vand.u32 %v885, 4294901760
    %1291 = vmatmul.f32.gmra.mxu0 %v1290
    %v1292 = vpop.f32.mrf.mxu0
    %v1293 = vadd.f32 %v1252, %v1292
    %1294 = vdwg.mxu0
    %v1295 = vand.u32 %v918, 4294901760
    %1296 = vmatpush.msra.mxu0 %v1295
    %v1297 = vand.u32 %v917, 4294901760
    %1298 = vmatpush.msra.mxu0 %v1297
    %v1299 = vand.u32 %v916, 4294901760
    %1300 = vmatpush.msra.mxu0 %v1299
    %v1301 = vand.u32 %v915, 4294901760
    %1302 = vmatpush.msra.mxu0 %v1301
    %v1303 = vand.u32 %v914, 4294901760
    %1304 = vmatpush.msra.mxu0 %v1303
    %v1305 = vand.u32 %v913, 4294901760
    %1306 = vmatpush.msra.mxu0 %v1305
    %v1307 = vand.u32 %v912, 4294901760
    %1308 = vmatpush.msra.mxu0 %v1307
    %v1309 = vand.u32 %v911, 4294901760
    %1310 = vmatpush.msra.mxu0 %v1309
    %v1311 = vand.u32 %v910, 4294901760
    %1312 = vmatpush.msra.mxu0 %v1311
    %v1313 = vand.u32 %v909, 4294901760
    %1314 = vmatpush.msra.mxu0 %v1313
    %v1315 = vand.u32 %v908, 4294901760
    %1316 = vmatpush.msra.mxu0 %v1315
    %v1317 = vand.u32 %v907, 4294901760
    %1318 = vmatpush.msra.mxu0 %v1317
    %v1319 = vand.u32 %v906, 4294901760
    %1320 = vmatpush.msra.mxu0 %v1319
    %v1321 = vand.u32 %v905, 4294901760
    %1322 = vmatpush.msra.mxu0 %v1321
    %v1323 = vand.u32 %v904, 4294901760
    %1324 = vmatpush.msra.mxu0 %v1323
    %v1325 = vand.u32 %v903, 4294901760
    %1326 = vmatpush.msra.mxu0 %v1325
    %v1327 = vand.u32 %v884, 4294901760
    %v1328 = vsub.f32 %v884, %v1327
    %v1329 = vand.u32 %v1328, 4294901760
    %v1330 = vsub.f32 %v1328, %v1329
    %v1331 = vand.u32 %v1330, 4294901760
    %1332 = vmatmul.f32.gmra.mxu0 %v1331
    %v1333 = vpop.f32.mrf.mxu0
    %v1334 = vadd.f32 %v1289, %v1333
    %v1335 = vand.u32 %v886, 4294901760
    %v1336 = vsub.f32 %v886, %v1335
    %v1337 = vand.u32 %v1336, 4294901760
    %v1338 = vsub.f32 %v1336, %v1337
    %v1339 = vand.u32 %v1338, 4294901760
    %1340 = vmatmul.f32.gmra.mxu0 %v1339
    %v1341 = vpop.f32.mrf.mxu0
    %v1342 = vadd.f32 %v1293, %v1341
    %1343 = vdwg.mxu0
    %v1344 = vand.u32 %v918, 4294901760
    %v1345 = vsub.f32 %v918, %v1344
    %v1346 = vand.u32 %v1345, 4294901760
    %v1347 = vsub.f32 %v1345, %v1346
    %v1348 = vand.u32 %v1347, 4294901760
    %1349 = vmatpush.msra.mxu0 %v1348
    %v1350 = vand.u32 %v917, 4294901760
    %v1351 = vsub.f32 %v917, %v1350
    %v1352 = vand.u32 %v1351, 4294901760
    %v1353 = vsub.f32 %v1351, %v1352
    %v1354 = vand.u32 %v1353, 4294901760
    %1355 = vmatpush.msra.mxu0 %v1354
    %v1356 = vand.u32 %v916, 4294901760
    %v1357 = vsub.f32 %v916, %v1356
    %v1358 = vand.u32 %v1357, 4294901760
    %v1359 = vsub.f32 %v1357, %v1358
    %v1360 = vand.u32 %v1359, 4294901760
    %1361 = vmatpush.msra.mxu0 %v1360
    %v1362 = vand.u32 %v915, 4294901760
    %v1363 = vsub.f32 %v915, %v1362
    %v1364 = vand.u32 %v1363, 4294901760
    %v1365 = vsub.f32 %v1363, %v1364
    %v1366 = vand.u32 %v1365, 4294901760
    %1367 = vmatpush.msra.mxu0 %v1366
    %v1368 = vand.u32 %v914, 4294901760
    %v1369 = vsub.f32 %v914, %v1368
    %v1370 = vand.u32 %v1369, 4294901760
    %v1371 = vsub.f32 %v1369, %v1370
    %v1372 = vand.u32 %v1371, 4294901760
    %1373 = vmatpush.msra.mxu0 %v1372
    %v1374 = vand.u32 %v913, 4294901760
    %v1375 = vsub.f32 %v913, %v1374
    %v1376 = vand.u32 %v1375, 4294901760
    %v1377 = vsub.f32 %v1375, %v1376
    %v1378 = vand.u32 %v1377, 4294901760
    %1379 = vmatpush.msra.mxu0 %v1378
    %v1380 = vand.u32 %v912, 4294901760
    %v1381 = vsub.f32 %v912, %v1380
    %v1382 = vand.u32 %v1381, 4294901760
    %v1383 = vsub.f32 %v1381, %v1382
    %v1384 = vand.u32 %v1383, 4294901760
    %1385 = vmatpush.msra.mxu0 %v1384
    %v1386 = vand.u32 %v911, 4294901760
    %v1387 = vsub.f32 %v911, %v1386
    %v1388 = vand.u32 %v1387, 4294901760
    %v1389 = vsub.f32 %v1387, %v1388
    %v1390 = vand.u32 %v1389, 4294901760
    %1391 = vmatpush.msra.mxu0 %v1390
    %v1392 = vand.u32 %v910, 4294901760
    %v1393 = vsub.f32 %v910, %v1392
    %v1394 = vand.u32 %v1393, 4294901760
    %v1395 = vsub.f32 %v1393, %v1394
    %v1396 = vand.u32 %v1395, 4294901760
    %1397 = vmatpush.msra.mxu0 %v1396
    %v1398 = vand.u32 %v909, 4294901760
    %v1399 = vsub.f32 %v909, %v1398
    %v1400 = vand.u32 %v1399, 4294901760
    %v1401 = vsub.f32 %v1399, %v1400
    %v1402 = vand.u32 %v1401, 4294901760
    %1403 = vmatpush.msra.mxu0 %v1402
    %v1404 = vand.u32 %v908, 4294901760
    %v1405 = vsub.f32 %v908, %v1404
    %v1406 = vand.u32 %v1405, 4294901760
    %v1407 = vsub.f32 %v1405, %v1406
    %v1408 = vand.u32 %v1407, 4294901760
    %1409 = vmatpush.msra.mxu0 %v1408
    %v1410 = vand.u32 %v907, 4294901760
    %v1411 = vsub.f32 %v907, %v1410
    %v1412 = vand.u32 %v1411, 4294901760
    %v1413 = vsub.f32 %v1411, %v1412
    %v1414 = vand.u32 %v1413, 4294901760
    %1415 = vmatpush.msra.mxu0 %v1414
    %v1416 = vand.u32 %v906, 4294901760
    %v1417 = vsub.f32 %v906, %v1416
    %v1418 = vand.u32 %v1417, 4294901760
    %v1419 = vsub.f32 %v1417, %v1418
    %v1420 = vand.u32 %v1419, 4294901760
    %1421 = vmatpush.msra.mxu0 %v1420
    %v1422 = vand.u32 %v905, 4294901760
    %v1423 = vsub.f32 %v905, %v1422
    %v1424 = vand.u32 %v1423, 4294901760
    %v1425 = vsub.f32 %v1423, %v1424
    %v1426 = vand.u32 %v1425, 4294901760
    %1427 = vmatpush.msra.mxu0 %v1426
    %v1428 = vand.u32 %v904, 4294901760
    %v1429 = vsub.f32 %v904, %v1428
    %v1430 = vand.u32 %v1429, 4294901760
    %v1431 = vsub.f32 %v1429, %v1430
    %v1432 = vand.u32 %v1431, 4294901760
    %1433 = vmatpush.msra.mxu0 %v1432
    %v1434 = vand.u32 %v903, 4294901760
    %v1435 = vsub.f32 %v903, %v1434
    %v1436 = vand.u32 %v1435, 4294901760
    %v1437 = vsub.f32 %v1435, %v1436
    %v1438 = vand.u32 %v1437, 4294901760
    %1439 = vmatpush.msra.mxu0 %v1438
    %v1440 = vand.u32 %v884, 4294901760
    %1441 = vmatmul.f32.gmra.mxu0 %v1440
    %v1442 = vpop.f32.mrf.mxu0
    %v1443 = vadd.f32 %v1334, %v1442
    %v1444 = vand.u32 %v886, 4294901760
    %1445 = vmatmul.f32.gmra.mxu0 %v1444
    %v1446 = vpop.f32.mrf.mxu0
    %v1447 = vadd.f32 %v1342, %v1446
    %1448 = vdwg.mxu0
    %v1449 = vand.u32 %v918, 4294901760
    %v1450 = vsub.f32 %v918, %v1449
    %1451 = vmatpush.msra.mxu0 %v1450
    %v1452 = vand.u32 %v917, 4294901760
    %v1453 = vsub.f32 %v917, %v1452
    %1454 = vmatpush.msra.mxu0 %v1453
    %v1455 = vand.u32 %v916, 4294901760
    %v1456 = vsub.f32 %v916, %v1455
    %1457 = vmatpush.msra.mxu0 %v1456
    %v1458 = vand.u32 %v915, 4294901760
    %v1459 = vsub.f32 %v915, %v1458
    %1460 = vmatpush.msra.mxu0 %v1459
    %v1461 = vand.u32 %v914, 4294901760
    %v1462 = vsub.f32 %v914, %v1461
    %1463 = vmatpush.msra.mxu0 %v1462
    %v1464 = vand.u32 %v913, 4294901760
    %v1465 = vsub.f32 %v913, %v1464
    %1466 = vmatpush.msra.mxu0 %v1465
    %v1467 = vand.u32 %v912, 4294901760
    %v1468 = vsub.f32 %v912, %v1467
    %1469 = vmatpush.msra.mxu0 %v1468
    %v1470 = vand.u32 %v911, 4294901760
    %v1471 = vsub.f32 %v911, %v1470
    %1472 = vmatpush.msra.mxu0 %v1471
    %v1473 = vand.u32 %v910, 4294901760
    %v1474 = vsub.f32 %v910, %v1473
    %1475 = vmatpush.msra.mxu0 %v1474
    %v1476 = vand.u32 %v909, 4294901760
    %v1477 = vsub.f32 %v909, %v1476
    %1478 = vmatpush.msra.mxu0 %v1477
    %v1479 = vand.u32 %v908, 4294901760
    %v1480 = vsub.f32 %v908, %v1479
    %1481 = vmatpush.msra.mxu0 %v1480
    %v1482 = vand.u32 %v907, 4294901760
    %v1483 = vsub.f32 %v907, %v1482
    %1484 = vmatpush.msra.mxu0 %v1483
    %v1485 = vand.u32 %v906, 4294901760
    %v1486 = vsub.f32 %v906, %v1485
    %1487 = vmatpush.msra.mxu0 %v1486
    %v1488 = vand.u32 %v905, 4294901760
    %v1489 = vsub.f32 %v905, %v1488
    %1490 = vmatpush.msra.mxu0 %v1489
    %v1491 = vand.u32 %v904, 4294901760
    %v1492 = vsub.f32 %v904, %v1491
    %1493 = vmatpush.msra.mxu0 %v1492
    %v1494 = vand.u32 %v903, 4294901760
    %v1495 = vsub.f32 %v903, %v1494
    %1496 = vmatpush.msra.mxu0 %v1495
    %v1497 = vand.u32 %v884, 4294901760
    %v1498 = vsub.f32 %v884, %v1497
    %1499 = vmatmul.f32.gmra.mxu0 %v1498
    %v1500 = vpop.f32.mrf.mxu0
    %v1501 = vadd.f32 %v1443, %v1500
    %v1502 = vand.u32 %v886, 4294901760
    %v1503 = vsub.f32 %v886, %v1502
    %1504 = vmatmul.f32.gmra.mxu0 %v1503
    %v1505 = vpop.f32.mrf.mxu0
    %v1506 = vadd.f32 %v1447, %v1505
    %1507 = vdwg.mxu0
    %v1508 = vand.u32 %v918, 4294901760
    %1509 = vmatpush.msra.mxu0 %v1508
    %v1510 = vand.u32 %v917, 4294901760
    %1511 = vmatpush.msra.mxu0 %v1510
    %v1512 = vand.u32 %v916, 4294901760
    %1513 = vmatpush.msra.mxu0 %v1512
    %v1514 = vand.u32 %v915, 4294901760
    %1515 = vmatpush.msra.mxu0 %v1514
    %v1516 = vand.u32 %v914, 4294901760
    %1517 = vmatpush.msra.mxu0 %v1516
    %v1518 = vand.u32 %v913, 4294901760
    %1519 = vmatpush.msra.mxu0 %v1518
    %v1520 = vand.u32 %v912, 4294901760
    %1521 = vmatpush.msra.mxu0 %v1520
    %v1522 = vand.u32 %v911, 4294901760
    %1523 = vmatpush.msra.mxu0 %v1522
    %v1524 = vand.u32 %v910, 4294901760
    %1525 = vmatpush.msra.mxu0 %v1524
    %v1526 = vand.u32 %v909, 4294901760
    %1527 = vmatpush.msra.mxu0 %v1526
    %v1528 = vand.u32 %v908, 4294901760
    %1529 = vmatpush.msra.mxu0 %v1528
    %v1530 = vand.u32 %v907, 4294901760
    %1531 = vmatpush.msra.mxu0 %v1530
    %v1532 = vand.u32 %v906, 4294901760
    %1533 = vmatpush.msra.mxu0 %v1532
    %v1534 = vand.u32 %v905, 4294901760
    %1535 = vmatpush.msra.mxu0 %v1534
    %v1536 = vand.u32 %v904, 4294901760
    %1537 = vmatpush.msra.mxu0 %v1536
    %v1538 = vand.u32 %v903, 4294901760
    %1539 = vmatpush.msra.mxu0 %v1538
    %v1540 = vand.u32 %v884, 4294901760
    %v1541 = vsub.f32 %v884, %v1540
    %v1542 = vand.u32 %v1541, 4294901760
    %1543 = vmatmul.f32.gmra.mxu0 %v1542
    %v1544 = vpop.f32.mrf.mxu0
    %v1545 = vadd.f32 %v1501, %v1544
    %v1546 = vand.u32 %v886, 4294901760
    %v1547 = vsub.f32 %v886, %v1546
    %v1548 = vand.u32 %v1547, 4294901760
    %1549 = vmatmul.f32.gmra.mxu0 %v1548
    %v1550 = vpop.f32.mrf.mxu0
    %v1551 = vadd.f32 %v1506, %v1550
    %1552 = vdwg.mxu0
    %v1553 = vand.u32 %v918, 4294901760
    %v1554 = vsub.f32 %v918, %v1553
    %v1555 = vand.u32 %v1554, 4294901760
    %1556 = vmatpush.msra.mxu0 %v1555
    %v1557 = vand.u32 %v917, 4294901760
    %v1558 = vsub.f32 %v917, %v1557
    %v1559 = vand.u32 %v1558, 4294901760
    %1560 = vmatpush.msra.mxu0 %v1559
    %v1561 = vand.u32 %v916, 4294901760
    %v1562 = vsub.f32 %v916, %v1561
    %v1563 = vand.u32 %v1562, 4294901760
    %1564 = vmatpush.msra.mxu0 %v1563
    %v1565 = vand.u32 %v915, 4294901760
    %v1566 = vsub.f32 %v915, %v1565
    %v1567 = vand.u32 %v1566, 4294901760
    %1568 = vmatpush.msra.mxu0 %v1567
    %v1569 = vand.u32 %v914, 4294901760
    %v1570 = vsub.f32 %v914, %v1569
    %v1571 = vand.u32 %v1570, 4294901760
    %1572 = vmatpush.msra.mxu0 %v1571
    %v1573 = vand.u32 %v913, 4294901760
    %v1574 = vsub.f32 %v913, %v1573
    %v1575 = vand.u32 %v1574, 4294901760
    %1576 = vmatpush.msra.mxu0 %v1575
    %v1577 = vand.u32 %v912, 4294901760
    %v1578 = vsub.f32 %v912, %v1577
    %v1579 = vand.u32 %v1578, 4294901760
    %1580 = vmatpush.msra.mxu0 %v1579
    %v1581 = vand.u32 %v911, 4294901760
    %v1582 = vsub.f32 %v911, %v1581
    %v1583 = vand.u32 %v1582, 4294901760
    %1584 = vmatpush.msra.mxu0 %v1583
    %v1585 = vand.u32 %v910, 4294901760
    %v1586 = vsub.f32 %v910, %v1585
    %v1587 = vand.u32 %v1586, 4294901760
    %1588 = vmatpush.msra.mxu0 %v1587
    %v1589 = vand.u32 %v909, 4294901760
    %v1590 = vsub.f32 %v909, %v1589
    %v1591 = vand.u32 %v1590, 4294901760
    %1592 = vmatpush.msra.mxu0 %v1591
    %v1593 = vand.u32 %v908, 4294901760
    %v1594 = vsub.f32 %v908, %v1593
    %v1595 = vand.u32 %v1594, 4294901760
    %1596 = vmatpush.msra.mxu0 %v1595
    %v1597 = vand.u32 %v907, 4294901760
    %v1598 = vsub.f32 %v907, %v1597
    %v1599 = vand.u32 %v1598, 4294901760
    %1600 = vmatpush.msra.mxu0 %v1599
    %v1601 = vand.u32 %v906, 4294901760
    %v1602 = vsub.f32 %v906, %v1601
    %v1603 = vand.u32 %v1602, 4294901760
    %1604 = vmatpush.msra.mxu0 %v1603
    %v1605 = vand.u32 %v905, 4294901760
    %v1606 = vsub.f32 %v905, %v1605
    %v1607 = vand.u32 %v1606, 4294901760
    %1608 = vmatpush.msra.mxu0 %v1607
    %v1609 = vand.u32 %v904, 4294901760
    %v1610 = vsub.f32 %v904, %v1609
    %v1611 = vand.u32 %v1610, 4294901760
    %1612 = vmatpush.msra.mxu0 %v1611
    %v1613 = vand.u32 %v903, 4294901760
    %v1614 = vsub.f32 %v903, %v1613
    %v1615 = vand.u32 %v1614, 4294901760
    %1616 = vmatpush.msra.mxu0 %v1615
    %v1617 = vand.u32 %v884, 4294901760
    %1618 = vmatmul.f32.gmra.mxu0 %v1617
    %v1619 = vpop.f32.mrf.mxu0
    %v1620 = vadd.f32 %v1545, %v1619
    %v1621 = vand.u32 %v886, 4294901760
    %1622 = vmatmul.f32.gmra.mxu0 %v1621
    %v1623 = vpop.f32.mrf.mxu0
    %v1624 = vadd.f32 %v1551, %v1623
    %1625 = vdwg.mxu0
    %v1626 = vand.u32 %v918, 4294901760
    %1627 = vmatpush.msra.mxu0 %v1626
    %v1628 = vand.u32 %v917, 4294901760
    %1629 = vmatpush.msra.mxu0 %v1628
    %v1630 = vand.u32 %v916, 4294901760
    %1631 = vmatpush.msra.mxu0 %v1630
    %v1632 = vand.u32 %v915, 4294901760
    %1633 = vmatpush.msra.mxu0 %v1632
    %v1634 = vand.u32 %v914, 4294901760
    %1635 = vmatpush.msra.mxu0 %v1634
    %v1636 = vand.u32 %v913, 4294901760
    %1637 = vmatpush.msra.mxu0 %v1636
    %v1638 = vand.u32 %v912, 4294901760
    %1639 = vmatpush.msra.mxu0 %v1638
    %v1640 = vand.u32 %v911, 4294901760
    %1641 = vmatpush.msra.mxu0 %v1640
    %v1642 = vand.u32 %v910, 4294901760
    %1643 = vmatpush.msra.mxu0 %v1642
    %v1644 = vand.u32 %v909, 4294901760
    %1645 = vmatpush.msra.mxu0 %v1644
    %v1646 = vand.u32 %v908, 4294901760
    %1647 = vmatpush.msra.mxu0 %v1646
    %v1648 = vand.u32 %v907, 4294901760
    %1649 = vmatpush.msra.mxu0 %v1648
    %v1650 = vand.u32 %v906, 4294901760
    %1651 = vmatpush.msra.mxu0 %v1650
    %v1652 = vand.u32 %v905, 4294901760
    %1653 = vmatpush.msra.mxu0 %v1652
    %v1654 = vand.u32 %v904, 4294901760
    %1655 = vmatpush.msra.mxu0 %v1654
    %v1656 = vand.u32 %v903, 4294901760
    %1657 = vmatpush.msra.mxu0 %v1656
    %v1658 = vand.u32 %v884, 4294901760
    %1659 = vmatmul.f32.gmra.mxu0 %v1658
    %v1660 = vpop.f32.mrf.mxu0
    %v1661 = vadd.f32 %v1620, %v1660
    %v1662 = vand.u32 %v886, 4294901760
    %1663 = vmatmul.f32.gmra.mxu0 %v1662
    %v1664 = vpop.f32.mrf.mxu0
    %v1665 = vadd.f32 %v1624, %v1664
    %1666 = vdwg.mxu0
    %v1667 = vadd.f32 %v99, %v1661
    %v1668 = vadd.f32 %v100, %v1665
    %v1669 = vld [vmem:[%s8] sm:$0x1]
    %v1670 = vld [vmem:[%s9] sm:$0x1]
    %1671 = vadd.xlane.f32.xlu0 %v1667
    %v1672 = vpop.xlane.xlu0 %1671
    %1673 = vadd.xlane.f32.xlu0 %v1668
    %v1674 = vpop.xlane.xlu0 %1673
    %v1675 = vmul.f32 %v1672, %v54
    %v1676 = vmul.f32 %v1674, %v54
    %v1677 = vsub.f32 %v1667, %v1675
    %v1678 = vsub.f32 %v1668, %v1676
    %v1679 = vmul.f32 %v1677, %v1677
    %v1680 = vmul.f32 %v1678, %v1678
    %1681 = vadd.xlane.f32.xlu0 %v1679
    %v1682 = vpop.xlane.xlu0 %1681
    %1683 = vadd.xlane.f32.xlu0 %v1680
    %v1684 = vpop.xlane.xlu0 %1683
    %v1685 = vmul.f32 %v1682, %v54
    %v1686 = vmul.f32 %v1684, %v54
    %v1687 = vadd.f32 %v1685, 1e-05
    %v1688 = vadd.f32 %v1686, 1e-05
    %v1689 = vrsqrt.pop %v1687
    %v1690 = vmul.f32 %v1689, %v1687
    %v1691 = vmul.f32 %v1690, %v1689
    %v1692 = vmul.f32 0.5, %v1691
    %v1693 = vsub.f32 1.5, %v1692
    %v1694 = vmul.f32 %v1689, %v1693
    %vm1695 = vweird.f32 %v1687
    %vm1696 = vweird.f32 %v1689
    %vm1697 = vmor %vm1695, %vm1696
    %v1698 = vsel %vm1697, %v1689, %v1694
    %v1699 = vrsqrt.pop %v1688
    %v1700 = vmul.f32 %v1699, %v1688
    %v1701 = vmul.f32 %v1700, %v1699
    %v1702 = vmul.f32 0.5, %v1701
    %v1703 = vsub.f32 1.5, %v1702
    %v1704 = vmul.f32 %v1699, %v1703
    %vm1705 = vweird.f32 %v1688
    %vm1706 = vweird.f32 %v1699
    %vm1707 = vmor %vm1705, %vm1706
    %v1708 = vsel %vm1707, %v1699, %v1704
    %v1709 = vmul.f32 %v1677, %v1698
    %v1710 = vmul.f32 %v1678, %v1708
    %v1712 = vperm.slane %v1669, 0
    %v1714 = vmul.f32 %v1709, %v1712
    %v1715 = vmul.f32 %v1710, %v1712
    %v1717 = vperm.slane %v1670, 0
    %v1719 = vadd.f32 %v1714, %v1717
    %v1720 = vadd.f32 %v1715, %v1717
    %1721 = vst [vmem:[#allocation2] sm:$0xff] %v1719
    %1722 = vst [vmem:[#allocation2 + $0x8] sm:$0xff] %v1720
    // Predicated region
    $region42: #{x3d_transformer_layer.5} parent=1 // pred_check
      _
    $region43: #{x3d_transformer_layer.5} parent=1 // pred_check_branch
      %1724 = sbr.rel (0) target = $region45
    $region44: #{x3d_transformer_layer.5} parent=1 // pred_region
      %1726 = vsyncadd [#allocation3], 0
      %s1727 = sshll.u32 [#allocation2], 4
      %s1728 = int_to_ptr.vmem [resolvable:$true] %s1727
      %s1729 = sshll.u32 %s10, 4
      %s1730 = int_to_ptr.hbm [resolvable:$true] %s1729
      %1735 = dma.vmem_to_hbm [thread:$0]  %s1728, 256, %s1730, [#allocation3], 128, 128, 8
    $region45: #{x3d_transformer_layer.5} parent=1 // pred_fallthru
      _
    // Predicated region
    $region46: #{x3d_transformer_layer.5} parent=1 // pred_check
      _
    $region47: #{x3d_transformer_layer.5} parent=1 // pred_check_branch
      %1737 = sbr.rel (0) target = $region49
    $region48: #{x3d_transformer_layer.5} parent=1 // pred_region
      %1739 = dma.done [#allocation3], 256
    $region49: #{x3d_transformer_layer.5} parent=1 // pred_fallthru
      _
    %1740 = vsyncpa [#allocation3], 1

// kernel: x3d_transformer_layer.4
$region0: #{x3d_transformer_layer.4}
  #allocation0 [shape = 'u32[]', space=smem, size = 0x4, offset = 0x4, fixed_abs, tag = 'smem constant byte address 0x4 - core index']
  #allocation1 [shape = 'u32[72,128]{1,0:T(1,128)}', space=vmem, size = 0x9000, scoped, tag = 'internal scratch']
  %s0 = inlined_call_operand.vmem [shape: f32[128,8], index: 0, kind: input, shape index: {}]
  %s1 = inlined_call_operand.vmem [shape: f32[8,128], index: 1, kind: input, shape index: {}]
  %s2 = inlined_call_operand.vmem [shape: f32[2,8,384], index: 2, kind: input, shape index: {}]
  %s3 = inlined_call_operand.vmem [shape: f32[2,8,8,16], index: 3, kind: input, shape index: {}]
  %s4 = inlined_call_operand.vmem [shape: f32[16,128], index: 4, kind: input, shape index: {}]
  %s5 = inlined_call_operand.vmem [shape: f32[1,128], index: 5, kind: input, shape index: {}]
  %s6 = inlined_call_operand.vmem [shape: f32[1,128], index: 6, kind: input, shape index: {}]
  %s7 = inlined_call_operand.vmem [shape: f32[1,128], index: 7, kind: input, shape index: {}]
  %s8 = inlined_call_operand.vmem [shape: f32[128,256], index: 8, kind: input, shape index: {}]
  %s9 = inlined_call_operand.vmem [shape: f32[1,256], index: 9, kind: input, shape index: {}]
  %s10 = inlined_call_operand.vmem [shape: f32[128,128], index: 10, kind: input, shape index: {}]
  %s11 = inlined_call_operand.vmem [shape: f32[1,128], index: 11, kind: input, shape index: {}]
  %s12 = inlined_call_operand.vmem [shape: f32[2,8,128], index: 12, kind: output, shape index: {}]
  %s13 = sld [smem:[#allocation0]]
  $region81: #{x3d_transformer_layer.4} parent=0
    _
  %s15 = ssub.s32 1, %s13
  %s16 = scalar_select 0, %s15, %s13
  loop: start=0, step=1, limit=4
  $region2: #{x3d_transformer_layer.4} parent=0 // loop_pre_header
    _
  $region3: #{x3d_transformer_layer.4} parent=0 // loop_header
    %s18 = sphi 0, %s22
    %p19 = scmp.ge.s32.totalorder %s18, 4
    %s25 = sphi 0, %s37
    %s26 = sphi 0, %s33
    %s27 = sphi 0, %s25
    %s28 = sphi 0, %s26
    %s29 = sphi 0, %s27
    %s30 = sphi 0, %s28
    %s38 = sphi 0, %s38
    %s40 = sphi 0, %s38
    %s41 = sphi 0, %s40
    %s55 = sphi 0, %s41
    %s59 = sphi 0, %s59
    %s61 = sphi 0, %s59
    %s62 = sphi 0, %s61
    %s76 = sphi 0, %s62
    %s82 = sphi 0, %s84
    %s85 = sphi 0, %s82
    %s86 = sphi 0, %s85
    %s102 = sphi 0, %s86
    %s110 = sphi 0, %s112
    %s113 = sphi 0, %s110
    %s114 = sphi 0, %s113
    %s130 = sphi 0, %s114
    %s134 = sphi 0, %s134
    %s136 = sphi 0, %s134
    %s137 = sphi 0, %s136
    %s151 = sphi 0, %s137
    %s155 = sphi 0, %s155
    %s157 = sphi 0, %s155
    %s158 = sphi 0, %s157
    %s172 = sphi 0, %s158
    %s176 = sphi 0, %s176
    %s178 = sphi 0, %s176
    %s179 = sphi 0, %s178
    %s193 = sphi 0, %s179
    %s197 = sphi 0, %s197
    %s199 = sphi 0, %s197
    %s200 = sphi 0, %s199
    %s214 = sphi 0, %s200
    %s218 = sphi 0, %s218
    %s220 = sphi 0, %s218
    %s221 = sphi 0, %s220
    %s235 = sphi 0, %s221
    %s239 = sphi 0, %s239
    %s241 = sphi 0, %s239
    %s242 = sphi 0, %s241
    %s256 = sphi 0, %s242
    %s260 = sphi 0, %s260
    %s262 = sphi 0, %s260
    %s263 = sphi 0, %s262
    %s277 = sphi 0, %s263
    %s281 = sphi 0, %s281
    %s283 = sphi 0, %s281
    %s284 = sphi 0, %s283
    %s298 = sphi 0, %s284
    %s306 = sphi 0, %s308
    %s309 = sphi 0, %s306
    %s310 = sphi 0, %s309
    %s326 = sphi 0, %s310
  $region4: #{x3d_transformer_layer.4} parent=0 // loop_header_branch
    %21 = sbr.rel (%p19) target = $region8
  $region5: #{x3d_transformer_layer.4} parent=0 // loop_body
    %s23 = ssub.s32 %s18, 1
    %s24 = ssub.s32 %s18, 2
    %s31 = sadd.s32 1, %s26
    %p32 = scmp.ge.s32.totalorder %s31, 1
    %s33 = scalar_select %p32, 0, %s31
    %s34 = sadd.s32 1, %s25
    %s35 = scalar_select %p32, %s34, %s25
    %p36 = scmp.ge.s32.totalorder %s35, 2
    %s37 = scalar_select %p36, 0, %s35
    %s39 = sadd.s32 %s38, 1
    %p42 = scmp.eq.s32.totalorder %s18, 1
    %p43 = scmp.ne.s32.totalorder %s38, %s40
    %p44 = scmp.eq.s32.totalorder %s18, 0
    %p45 = por %p43, %p44
    %p46 = scmp.ne.s32.totalorder %s38, %s40
    %p47 = scmp.eq.s32.totalorder %s23, 1
    %p48 = por %p46, %p47
    %p49 = scmp.ne.s32.totalorder %s40, %s41
    %p50 = scmp.eq.s32.totalorder %s23, 0
    %p51 = por %p49, %p50
    %p52 = scmp.ne.s32.totalorder %s40, %s41
    %p53 = scmp.eq.s32.totalorder %s24, 1
    %p54 = por %p52, %p53
    %p56 = scmp.ne.s32.totalorder %s41, %s55
    %p57 = scmp.eq.s32.totalorder %s24, 0
    %p58 = por %p56, %p57
    %s60 = sadd.s32 %s59, 1
    %p63 = scmp.eq.s32.totalorder %s18, 1
    %p64 = scmp.ne.s32.totalorder %s59, %s61
    %p65 = scmp.eq.s32.totalorder %s18, 0
    %p66 = por %p64, %p65
    %p67 = scmp.ne.s32.totalorder %s59, %s61
    %p68 = scmp.eq.s32.totalorder %s23, 1
    %p69 = por %p67, %p68
    %p70 = scmp.ne.s32.totalorder %s61, %s62
    %p71 = scmp.eq.s32.totalorder %s23, 0
    %p72 = por %p70, %p71
    %p73 = scmp.ne.s32.totalorder %s61, %s62
    %p74 = scmp.eq.s32.totalorder %s24, 1
    %p75 = por %p73, %p74
    %p77 = scmp.ne.s32.totalorder %s62, %s76
    %p78 = scmp.eq.s32.totalorder %s24, 0
    %p79 = por %p77, %p78
    %s80 = ssub.s32 %s25, %s37
    %p81 = scmp.eq.s32.totalorder %s80, 0
    %s83 = sadd.s32 %s82, 1
    %s84 = scalar_select %p81, %s82, %s83
    %p87 = pneg %p81
    %p88 = scmp.eq.s32.totalorder %s18, 1
    %p89 = por %p87, %p88
    %p90 = scmp.ne.s32.totalorder %s82, %s85
    %p91 = scmp.eq.s32.totalorder %s18, 0
    %p92 = por %p90, %p91
    %p93 = scmp.ne.s32.totalorder %s82, %s85
    %p94 = scmp.eq.s32.totalorder %s23, 1
    %p95 = por %p93, %p94
    %p96 = scmp.ne.s32.totalorder %s85, %s86
    %p97 = scmp.eq.s32.totalorder %s23, 0
    %p98 = por %p96, %p97
    %p99 = scmp.ne.s32.totalorder %s85, %s86
    %p100 = scmp.eq.s32.totalorder %s24, 1
    %p101 = por %p99, %p100
    %p103 = scmp.ne.s32.totalorder %s86, %s102
    %p104 = scmp.eq.s32.totalorder %s24, 0
    %p105 = por %p103, %p104
    %s106 = ssub.s32 %s25, %s37
    %s107 = ssub.s32 %s26, %s33
    %s108 = sor.u32 %s106, %s107
    %p109 = scmp.eq.s32.totalorder %s108, 0
    %s111 = sadd.s32 %s110, 1
    %s112 = scalar_select %p109, %s110, %s111
    %p115 = pneg %p109
    %p116 = scmp.eq.s32.totalorder %s18, 1
    %p117 = por %p115, %p116
    %p118 = scmp.ne.s32.totalorder %s110, %s113
    %p119 = scmp.eq.s32.totalorder %s18, 0
    %p120 = por %p118, %p119
    %p121 = scmp.ne.s32.totalorder %s110, %s113
    %p122 = scmp.eq.s32.totalorder %s23, 1
    %p123 = por %p121, %p122
    %p124 = scmp.ne.s32.totalorder %s113, %s114
    %p125 = scmp.eq.s32.totalorder %s23, 0
    %p126 = por %p124, %p125
    %p127 = scmp.ne.s32.totalorder %s113, %s114
    %p128 = scmp.eq.s32.totalorder %s24, 1
    %p129 = por %p127, %p128
    %p131 = scmp.ne.s32.totalorder %s114, %s130
    %p132 = scmp.eq.s32.totalorder %s24, 0
    %p133 = por %p131, %p132
    %s135 = sadd.s32 %s134, 1
    %p138 = scmp.eq.s32.totalorder %s18, 1
    %p139 = scmp.ne.s32.totalorder %s134, %s136
    %p140 = scmp.eq.s32.totalorder %s18, 0
    %p141 = por %p139, %p140
    %p142 = scmp.ne.s32.totalorder %s134, %s136
    %p143 = scmp.eq.s32.totalorder %s23, 1
    %p144 = por %p142, %p143
    %p145 = scmp.ne.s32.totalorder %s136, %s137
    %p146 = scmp.eq.s32.totalorder %s23, 0
    %p147 = por %p145, %p146
    %p148 = scmp.ne.s32.totalorder %s136, %s137
    %p149 = scmp.eq.s32.totalorder %s24, 1
    %p150 = por %p148, %p149
    %p152 = scmp.ne.s32.totalorder %s137, %s151
    %p153 = scmp.eq.s32.totalorder %s24, 0
    %p154 = por %p152, %p153
    %s156 = sadd.s32 %s155, 1
    %p159 = scmp.eq.s32.totalorder %s18, 1
    %p160 = scmp.ne.s32.totalorder %s155, %s157
    %p161 = scmp.eq.s32.totalorder %s18, 0
    %p162 = por %p160, %p161
    %p163 = scmp.ne.s32.totalorder %s155, %s157
    %p164 = scmp.eq.s32.totalorder %s23, 1
    %p165 = por %p163, %p164
    %p166 = scmp.ne.s32.totalorder %s157, %s158
    %p167 = scmp.eq.s32.totalorder %s23, 0
    %p168 = por %p166, %p167
    %p169 = scmp.ne.s32.totalorder %s157, %s158
    %p170 = scmp.eq.s32.totalorder %s24, 1
    %p171 = por %p169, %p170
    %p173 = scmp.ne.s32.totalorder %s158, %s172
    %p174 = scmp.eq.s32.totalorder %s24, 0
    %p175 = por %p173, %p174
    %s177 = sadd.s32 %s176, 1
    %p180 = scmp.eq.s32.totalorder %s18, 1
    %p181 = scmp.ne.s32.totalorder %s176, %s178
    %p182 = scmp.eq.s32.totalorder %s18, 0
    %p183 = por %p181, %p182
    %p184 = scmp.ne.s32.totalorder %s176, %s178
    %p185 = scmp.eq.s32.totalorder %s23, 1
    %p186 = por %p184, %p185
    %p187 = scmp.ne.s32.totalorder %s178, %s179
    %p188 = scmp.eq.s32.totalorder %s23, 0
    %p189 = por %p187, %p188
    %p190 = scmp.ne.s32.totalorder %s178, %s179
    %p191 = scmp.eq.s32.totalorder %s24, 1
    %p192 = por %p190, %p191
    %p194 = scmp.ne.s32.totalorder %s179, %s193
    %p195 = scmp.eq.s32.totalorder %s24, 0
    %p196 = por %p194, %p195
    %s198 = sadd.s32 %s197, 1
    %p201 = scmp.eq.s32.totalorder %s18, 1
    %p202 = scmp.ne.s32.totalorder %s197, %s199
    %p203 = scmp.eq.s32.totalorder %s18, 0
    %p204 = por %p202, %p203
    %p205 = scmp.ne.s32.totalorder %s197, %s199
    %p206 = scmp.eq.s32.totalorder %s23, 1
    %p207 = por %p205, %p206
    %p208 = scmp.ne.s32.totalorder %s199, %s200
    %p209 = scmp.eq.s32.totalorder %s23, 0
    %p210 = por %p208, %p209
    %p211 = scmp.ne.s32.totalorder %s199, %s200
    %p212 = scmp.eq.s32.totalorder %s24, 1
    %p213 = por %p211, %p212
    %p215 = scmp.ne.s32.totalorder %s200, %s214
    %p216 = scmp.eq.s32.totalorder %s24, 0
    %p217 = por %p215, %p216
    %s219 = sadd.s32 %s218, 1
    %p222 = scmp.eq.s32.totalorder %s18, 1
    %p223 = scmp.ne.s32.totalorder %s218, %s220
    %p224 = scmp.eq.s32.totalorder %s18, 0
    %p225 = por %p223, %p224
    %p226 = scmp.ne.s32.totalorder %s218, %s220
    %p227 = scmp.eq.s32.totalorder %s23, 1
    %p228 = por %p226, %p227
    %p229 = scmp.ne.s32.totalorder %s220, %s221
    %p230 = scmp.eq.s32.totalorder %s23, 0
    %p231 = por %p229, %p230
    %p232 = scmp.ne.s32.totalorder %s220, %s221
    %p233 = scmp.eq.s32.totalorder %s24, 1
    %p234 = por %p232, %p233
    %p236 = scmp.ne.s32.totalorder %s221, %s235
    %p237 = scmp.eq.s32.totalorder %s24, 0
    %p238 = por %p236, %p237
    %s240 = sadd.s32 %s239, 1
    %p243 = scmp.eq.s32.totalorder %s18, 1
    %p244 = scmp.ne.s32.totalorder %s239, %s241
    %p245 = scmp.eq.s32.totalorder %s18, 0
    %p246 = por %p244, %p245
    %p247 = scmp.ne.s32.totalorder %s239, %s241
    %p248 = scmp.eq.s32.totalorder %s23, 1
    %p249 = por %p247, %p248
    %p250 = scmp.ne.s32.totalorder %s241, %s242
    %p251 = scmp.eq.s32.totalorder %s23, 0
    %p252 = por %p250, %p251
    %p253 = scmp.ne.s32.totalorder %s241, %s242
    %p254 = scmp.eq.s32.totalorder %s24, 1
    %p255 = por %p253, %p254
    %p257 = scmp.ne.s32.totalorder %s242, %s256
    %p258 = scmp.eq.s32.totalorder %s24, 0
    %p259 = por %p257, %p258
    %s261 = sadd.s32 %s260, 1
    %p264 = scmp.eq.s32.totalorder %s18, 1
    %p265 = scmp.ne.s32.totalorder %s260, %s262
    %p266 = scmp.eq.s32.totalorder %s18, 0
    %p267 = por %p265, %p266
    %p268 = scmp.ne.s32.totalorder %s260, %s262
    %p269 = scmp.eq.s32.totalorder %s23, 1
    %p270 = por %p268, %p269
    %p271 = scmp.ne.s32.totalorder %s262, %s263
    %p272 = scmp.eq.s32.totalorder %s23, 0
    %p273 = por %p271, %p272
    %p274 = scmp.ne.s32.totalorder %s262, %s263
    %p275 = scmp.eq.s32.totalorder %s24, 1
    %p276 = por %p274, %p275
    %p278 = scmp.ne.s32.totalorder %s263, %s277
    %p279 = scmp.eq.s32.totalorder %s24, 0
    %p280 = por %p278, %p279
    %s282 = sadd.s32 %s281, 1
    %p285 = scmp.eq.s32.totalorder %s18, 1
    %p286 = scmp.ne.s32.totalorder %s281, %s283
    %p287 = scmp.eq.s32.totalorder %s18, 0
    %p288 = por %p286, %p287
    %p289 = scmp.ne.s32.totalorder %s281, %s283
    %p290 = scmp.eq.s32.totalorder %s23, 1
    %p291 = por %p289, %p290
    %p292 = scmp.ne.s32.totalorder %s283, %s284
    %p293 = scmp.eq.s32.totalorder %s23, 0
    %p294 = por %p292, %p293
    %p295 = scmp.ne.s32.totalorder %s283, %s284
    %p296 = scmp.eq.s32.totalorder %s24, 1
    %p297 = por %p295, %p296
    %p299 = scmp.ne.s32.totalorder %s284, %s298
    %p300 = scmp.eq.s32.totalorder %s24, 0
    %p301 = por %p299, %p300
    %s302 = ssub.s32 %s25, %s37
    %s303 = ssub.s32 %s26, %s33
    %s304 = sor.u32 %s302, %s303
    %p305 = scmp.eq.s32.totalorder %s304, 0
    %s307 = sadd.s32 %s306, 1
    %s308 = scalar_select %p305, %s306, %s307
    %p311 = pneg %p305
    %p312 = scmp.eq.s32.totalorder %s18, 1
    %p313 = por %p311, %p312
    %p314 = scmp.ne.s32.totalorder %s306, %s309
    %p315 = scmp.eq.s32.totalorder %s18, 0
    %p316 = por %p314, %p315
    %p317 = scmp.ne.s32.totalorder %s306, %s309
    %p318 = scmp.eq.s32.totalorder %s23, 1
    %p319 = por %p317, %p318
    %p320 = scmp.ne.s32.totalorder %s309, %s310
    %p321 = scmp.eq.s32.totalorder %s23, 0
    %p322 = por %p320, %p321
    %p323 = scmp.ne.s32.totalorder %s309, %s310
    %p324 = scmp.eq.s32.totalorder %s24, 1
    %p325 = por %p323, %p324
    %p327 = scmp.ne.s32.totalorder %s310, %s326
    %p328 = scmp.eq.s32.totalorder %s24, 0
    %p329 = por %p327, %p328
    %p330 = scmp.le.s32.totalorder 1, %s18
    %p331 = scmp.lt.s32.totalorder %s18, 3
    %p332 = pnand %p330, %p331
    %p333 = pneg %p332
    // Predicated region
    $region9: #{x3d_transformer_layer.4} parent=5 // pred_check
      _
    $region10: #{x3d_transformer_layer.4} parent=5 // pred_check_branch
      %335 = sbr.rel (%p332) target = $region12
    $region11: #{x3d_transformer_layer.4} parent=5 // pred_region
      %s336 = ssub.s32 %s18, 1
      // Predicated region
      $region13: #{x3d_transformer_layer.4} parent=11 // pred_check
        %p337 = pneg %p51
      $region14: #{x3d_transformer_layer.4} parent=11 // pred_check_branch
        %339 = sbr.rel (%p337) target = $region16
      $region15: #{x3d_transformer_layer.4} parent=11 // pred_region
        _
      $region16: #{x3d_transformer_layer.4} parent=11 // pred_fallthru
        _
      // Predicated region
      $region17: #{x3d_transformer_layer.4} parent=11 // pred_check
        %p340 = pneg %p72
      $region18: #{x3d_transformer_layer.4} parent=11 // pred_check_branch
        %342 = sbr.rel (%p340) target = $region20
      $region19: #{x3d_transformer_layer.4} parent=11 // pred_region
        _
      $region20: #{x3d_transformer_layer.4} parent=11 // pred_fallthru
        _
      // Predicated region
      $region21: #{x3d_transformer_layer.4} parent=11 // pred_check
        %p343 = pneg %p147
      $region22: #{x3d_transformer_layer.4} parent=11 // pred_check_branch
        %345 = sbr.rel (%p343) target = $region24
      $region23: #{x3d_transformer_layer.4} parent=11 // pred_region
        _
      $region24: #{x3d_transformer_layer.4} parent=11 // pred_fallthru
        _
      // Predicated region
      $region25: #{x3d_transformer_layer.4} parent=11 // pred_check
        %p346 = pneg %p168
      $region26: #{x3d_transformer_layer.4} parent=11 // pred_check_branch
        %348 = sbr.rel (%p346) target = $region28
      $region27: #{x3d_transformer_layer.4} parent=11 // pred_region
        _
      $region28: #{x3d_transformer_layer.4} parent=11 // pred_fallthru
        _
      // Predicated region
      $region29: #{x3d_transformer_layer.4} parent=11 // pred_check
        %p349 = pneg %p189
      $region30: #{x3d_transformer_layer.4} parent=11 // pred_check_branch
        %351 = sbr.rel (%p349) target = $region32
      $region31: #{x3d_transformer_layer.4} parent=11 // pred_region
        _
      $region32: #{x3d_transformer_layer.4} parent=11 // pred_fallthru
        _
      // Predicated region
      $region33: #{x3d_transformer_layer.4} parent=11 // pred_check
        %p352 = pneg %p210
      $region34: #{x3d_transformer_layer.4} parent=11 // pred_check_branch
        %354 = sbr.rel (%p352) target = $region36
      $region35: #{x3d_transformer_layer.4} parent=11 // pred_region
        _
      $region36: #{x3d_transformer_layer.4} parent=11 // pred_fallthru
        _
      // Predicated region
      $region37: #{x3d_transformer_layer.4} parent=11 // pred_check
        %p355 = pneg %p231
      $region38: #{x3d_transformer_layer.4} parent=11 // pred_check_branch
        %357 = sbr.rel (%p355) target = $region40
      $region39: #{x3d_transformer_layer.4} parent=11 // pred_region
        _
      $region40: #{x3d_transformer_layer.4} parent=11 // pred_fallthru
        _
      // Predicated region
      $region41: #{x3d_transformer_layer.4} parent=11 // pred_check
        %p358 = pneg %p252
      $region42: #{x3d_transformer_layer.4} parent=11 // pred_check_branch
        %360 = sbr.rel (%p358) target = $region44
      $region43: #{x3d_transformer_layer.4} parent=11 // pred_region
        _
      $region44: #{x3d_transformer_layer.4} parent=11 // pred_fallthru
        _
      // Predicated region
      $region45: #{x3d_transformer_layer.4} parent=11 // pred_check
        %p361 = pneg %p273
      $region46: #{x3d_transformer_layer.4} parent=11 // pred_check_branch
        %363 = sbr.rel (%p361) target = $region48
      $region47: #{x3d_transformer_layer.4} parent=11 // pred_region
        _
      $region48: #{x3d_transformer_layer.4} parent=11 // pred_fallthru
        _
      // Predicated region
      $region49: #{x3d_transformer_layer.4} parent=11 // pred_check
        %p364 = pneg %p294
      $region50: #{x3d_transformer_layer.4} parent=11 // pred_check_branch
        %366 = sbr.rel (%p364) target = $region52
      $region51: #{x3d_transformer_layer.4} parent=11 // pred_region
        _
      $region52: #{x3d_transformer_layer.4} parent=11 // pred_fallthru
        _
    $region12: #{x3d_transformer_layer.4} parent=5 // pred_fallthru
      _
    %p367 = scmp.lt.s32.totalorder %s18, 2
    // Predicated region
    $region53: #{x3d_transformer_layer.4} parent=5 // pred_check
      %p368 = pneg %p367
    $region54: #{x3d_transformer_layer.4} parent=5 // pred_check_branch
      %370 = sbr.rel (%p368) target = $region56
    $region55: #{x3d_transformer_layer.4} parent=5 // pred_region
      // Predicated region
      $region57: #{x3d_transformer_layer.4} parent=55 // pred_check
        %p371 = pneg %p92
      $region58: #{x3d_transformer_layer.4} parent=55 // pred_check_branch
        %373 = sbr.rel (%p371) target = $region60
      $region59: #{x3d_transformer_layer.4} parent=55 // pred_region
        %p374 = scmp.lt.s32.totalorder %s25, 1
        %s375 = scalar_select %p374, %s25, 1
        %s376 = smul.addr %s375, 3
        %s377 = smul.addr %s376, 8
        %s378 = scalar_lea.vmem %s2, %s377
      $region60: #{x3d_transformer_layer.4} parent=55 // pred_fallthru
        _
      // Predicated region
      $region61: #{x3d_transformer_layer.4} parent=55 // pred_check
        %p379 = pneg %p120
      $region62: #{x3d_transformer_layer.4} parent=55 // pred_check_branch
        %381 = sbr.rel (%p379) target = $region64
      $region63: #{x3d_transformer_layer.4} parent=55 // pred_region
        %s382 = smul.u32 8, %s26
        %p383 = scmp.lt.s32.totalorder %s25, 1
        %s384 = scalar_select %p383, %s25, 1
        %p385 = scmp.lt.s32.totalorder %s382, 7
        %s386 = scalar_select %p385, %s382, 7
        %s387 = smul.addr %s384, 8
        %s388 = sadd.s32 %s386, %s387
        %s389 = smul.addr %s388, 8
        %s390 = scalar_lea.vmem %s3, %s389
        %s391 = smul.u32 8, %s26
      $region64: #{x3d_transformer_layer.4} parent=55 // pred_fallthru
        _
    $region56: #{x3d_transformer_layer.4} parent=5 // pred_fallthru
      _
    %p392 = scmp.le.s32.totalorder 1, %s18
    %p393 = scmp.lt.s32.totalorder %s18, 3
    %p394 = pnand %p392, %p393
    %p395 = pneg %p394
    // Predicated region
    $region65: #{x3d_transformer_layer.4} parent=5 // pred_check
      _
    $region66: #{x3d_transformer_layer.4} parent=5 // pred_check_branch
      %397 = sbr.rel (%p394) target = $region68
    $region67: #{x3d_transformer_layer.4} parent=5 // pred_region
      %s398 = ssub.s32 %s18, 1
      %p399 = pneg %p51
      %p400 = pneg %p48
      %p401 = pneg %p72
      %p402 = pneg %p69
      %p403 = scmp.lt.s32.totalorder %s27, 1
      %s404 = scalar_select %p403, %s27, 1
      %s405 = smul.addr %s404, 3
      %s406 = smul.addr %s405, 8
      %s407 = scalar_lea.vmem %s2, %s406
      %p408 = pneg %p98
      %p409 = pneg %p95
      %s410 = smul.u32 8, %s28
      %p411 = scmp.lt.s32.totalorder %s27, 1
      %s412 = scalar_select %p411, %s27, 1
      %p413 = scmp.lt.s32.totalorder %s410, 7
      %s414 = scalar_select %p413, %s410, 7
      %s415 = smul.addr %s412, 8
      %s416 = sadd.s32 %s414, %s415
      %s417 = smul.addr %s416, 8
      %s418 = scalar_lea.vmem %s3, %s417
      %p419 = pneg %p126
      %p420 = pneg %p123
      %p421 = pneg %p147
      %p422 = pneg %p144
      %p423 = pneg %p168
      %p424 = pneg %p165
      %p425 = pneg %p189
      %p426 = pneg %p186
      %p427 = pneg %p210
      %p428 = pneg %p207
      %p429 = pneg %p231
      %p430 = pneg %p228
      %p431 = pneg %p252
      %p432 = pneg %p249
      %p433 = pneg %p273
      %p434 = pneg %p270
      %p435 = pneg %p294
      %p436 = pneg %p291
      %p437 = pneg %p322
      %p438 = pneg %p319
      %p439 = scmp.lt.s32.totalorder %s27, 1
      %s440 = scalar_select %p439, %s27, 1
      %p441 = scmp.lt.s32.totalorder %s28, 0
      %s442 = scalar_select %p441, %s28, 0
      %s443 = sadd.s32 %s442, %s440
      %s444 = smul.addr %s443, 8
      %s445 = scalar_lea.vmem %s12, %s444
      %p446 = scmp.lt.s32.totalorder %s27, 1
      %s447 = scalar_select %p446, %s27, 1
      %s448 = smul.addr %s447, 3
      %s449 = smul.addr %s448, 8
      %s450 = scalar_lea.vmem %s2, %s449
      %s451 = smul.u32 8, %s28
      %p452 = scmp.lt.s32.totalorder %s27, 1
      %s453 = scalar_select %p452, %s27, 1
      %p454 = scmp.lt.s32.totalorder %s451, 7
      %s455 = scalar_select %p454, %s451, 7
      %s456 = smul.addr %s453, 8
      %s457 = sadd.s32 %s455, %s456
      %s458 = smul.addr %s457, 8
      %s459 = scalar_lea.vmem %s3, %s458
      %s460 = smul.u32 8, %s28
      %p461 = scmp.lt.s32.totalorder %s27, 1
      %s462 = scalar_select %p461, %s27, 1
      %p463 = scmp.lt.s32.totalorder %s28, 0
      %s464 = scalar_select %p463, %s28, 0
      %s465 = sadd.s32 %s464, %s462
      %s466 = smul.addr %s465, 8
      %s467 = scalar_lea.vmem %s12, %s466
      %v468 = vld [vmem:[%s459] sm:$0xff]
      %v469 = vld [vmem:[%s459 + $0x8] sm:$0xff]
      %v470 = vld [vmem:[%s459 + $0x10] sm:$0xff]
      %v471 = vld [vmem:[%s459 + $0x18] sm:$0xff]
      %v472 = vld [vmem:[%s459 + $0x20] sm:$0xff]
      %v473 = vld [vmem:[%s459 + $0x28] sm:$0xff]
      %v474 = vld [vmem:[%s459 + $0x30] sm:$0xff]
      %v475 = vld [vmem:[%s459 + $0x38] sm:$0xff]
      %v476 = vld [vmem:[%s4] sm:$0xff]
      %v477 = vld [vmem:[%s4 + $0x8] sm:$0xff]
      %v478 = vld [vmem:[%s5] sm:$0x1]
      %v480 = vperm.slane %v478, 0
      %vm482 = vcmask 130048
      %v484 = vsel %vm482, %v468, 0
      %v487 = vsel %vm482, %v469, 0
      %v490 = vsel %vm482, %v470, 0
      %v493 = vsel %vm482, %v471, 0
      %v496 = vsel %vm482, %v472, 0
      %v499 = vsel %vm482, %v473, 0
      %v502 = vsel %vm482, %v474, 0
      %v505 = vsel %vm482, %v475, 0
      %507 = vmatpush.msra.mxu0 0.0
      %508 = vmatpush.msra.mxu0 0.0
      %509 = vmatpush.msra.mxu0 0.0
      %510 = vmatpush.msra.mxu0 0.0
      %511 = vmatpush.msra.mxu0 0.0
      %512 = vmatpush.msra.mxu0 0.0
      %513 = vmatpush.msra.mxu0 0.0
      %514 = vmatpush.msra.mxu0 0.0
      %515 = vmatpush.msra.mxu0 0.0
      %516 = vmatpush.msra.mxu0 0.0
      %517 = vmatpush.msra.mxu0 0.0
      %518 = vmatpush.msra.mxu0 0.0
      %519 = vmatpush.msra.mxu0 0.0
      %520 = vmatpush.msra.mxu0 0.0
      %v521 = vand.u32 %v477, 4294901760
      %522 = vmatpush.msra.mxu0 %v521
      %v523 = vand.u32 %v476, 4294901760
      %524 = vmatpush.msra.mxu0 %v523
      %v525 = vand.u32 %v484, 4294901760
      %v526 = vsub.f32 %v484, %v525
      %v527 = vand.u32 %v526, 4294901760
      %v528 = vsub.f32 %v526, %v527
      %v529 = vand.u32 %v528, 4294901760
      %530 = vmatmul.f32.gmra.mxu0 %v529
      %v531 = vpop.f32.mrf.mxu0
      %v532 = vadd.f32 %v480, %v531
      %v533 = vand.u32 %v487, 4294901760
      %v534 = vsub.f32 %v487, %v533
      %v535 = vand.u32 %v534, 4294901760
      %v536 = vsub.f32 %v534, %v535
      %v537 = vand.u32 %v536, 4294901760
      %538 = vmatmul.f32.gmra.mxu0 %v537
      %v539 = vpop.f32.mrf.mxu0
      %v540 = vadd.f32 %v480, %v539
      %v541 = vand.u32 %v490, 4294901760
      %v542 = vsub.f32 %v490, %v541
      %v543 = vand.u32 %v542, 4294901760
      %v544 = vsub.f32 %v542, %v543
      %v545 = vand.u32 %v544, 4294901760
      %546 = vmatmul.f32.gmra.mxu0 %v545
      %v547 = vpop.f32.mrf.mxu0
      %v548 = vadd.f32 %v480, %v547
      %v549 = vand.u32 %v493, 4294901760
      %v550 = vsub.f32 %v493, %v549
      %v551 = vand.u32 %v550, 4294901760
      %v552 = vsub.f32 %v550, %v551
      %v553 = vand.u32 %v552, 4294901760
      %554 = vmatmul.f32.gmra.mxu0 %v553
      %v555 = vpop.f32.mrf.mxu0
      %v556 = vadd.f32 %v480, %v555
      %v557 = vand.u32 %v496, 4294901760
      %v558 = vsub.f32 %v496, %v557
      %v559 = vand.u32 %v558, 4294901760
      %v560 = vsub.f32 %v558, %v559
      %v561 = vand.u32 %v560, 4294901760
      %562 = vmatmul.f32.gmra.mxu0 %v561
      %v563 = vpop.f32.mrf.mxu0
      %v564 = vadd.f32 %v480, %v563
      %v565 = vand.u32 %v499, 4294901760
      %v566 = vsub.f32 %v499, %v565
      %v567 = vand.u32 %v566, 4294901760
      %v568 = vsub.f32 %v566, %v567
      %v569 = vand.u32 %v568, 4294901760
      %570 = vmatmul.f32.gmra.mxu0 %v569
      %v571 = vpop.f32.mrf.mxu0
      %v572 = vadd.f32 %v480, %v571
      %v573 = vand.u32 %v502, 4294901760
      %v574 = vsub.f32 %v502, %v573
      %v575 = vand.u32 %v574, 4294901760
      %v576 = vsub.f32 %v574, %v575
      %v577 = vand.u32 %v576, 4294901760
      %578 = vmatmul.f32.gmra.mxu0 %v577
      %v579 = vpop.f32.mrf.mxu0
      %v580 = vadd.f32 %v480, %v579
      %v581 = vand.u32 %v505, 4294901760
      %v582 = vsub.f32 %v505, %v581
      %v583 = vand.u32 %v582, 4294901760
      %v584 = vsub.f32 %v582, %v583
      %v585 = vand.u32 %v584, 4294901760
      %586 = vmatmul.f32.gmra.mxu0 %v585
      %v587 = vpop.f32.mrf.mxu0
      %v588 = vadd.f32 %v480, %v587
      %589 = vdwg.mxu0
      %590 = vmatpush.msra.mxu0 0.0
      %591 = vmatpush.msra.mxu0 0.0
      %592 = vmatpush.msra.mxu0 0.0
      %593 = vmatpush.msra.mxu0 0.0
      %594 = vmatpush.msra.mxu0 0.0
      %595 = vmatpush.msra.mxu0 0.0
      %596 = vmatpush.msra.mxu0 0.0
      %597 = vmatpush.msra.mxu0 0.0
      %598 = vmatpush.msra.mxu0 0.0
      %599 = vmatpush.msra.mxu0 0.0
      %600 = vmatpush.msra.mxu0 0.0
      %601 = vmatpush.msra.mxu0 0.0
      %602 = vmatpush.msra.mxu0 0.0
      %603 = vmatpush.msra.mxu0 0.0
      %v604 = vand.u32 %v477, 4294901760
      %v605 = vsub.f32 %v477, %v604
      %v606 = vand.u32 %v605, 4294901760
      %v607 = vsub.f32 %v605, %v606
      %v608 = vand.u32 %v607, 4294901760
      %609 = vmatpush.msra.mxu0 %v608
      %v610 = vand.u32 %v476, 4294901760
      %v611 = vsub.f32 %v476, %v610
      %v612 = vand.u32 %v611, 4294901760
      %v613 = vsub.f32 %v611, %v612
      %v614 = vand.u32 %v613, 4294901760
      %615 = vmatpush.msra.mxu0 %v614
      %v616 = vand.u32 %v484, 4294901760
      %617 = vmatmul.f32.gmra.mxu0 %v616
      %v618 = vpop.f32.mrf.mxu0
      %v619 = vadd.f32 %v532, %v618
      %v620 = vand.u32 %v487, 4294901760
      %621 = vmatmul.f32.gmra.mxu0 %v620
      %v622 = vpop.f32.mrf.mxu0
      %v623 = vadd.f32 %v540, %v622
      %v624 = vand.u32 %v490, 4294901760
      %625 = vmatmul.f32.gmra.mxu0 %v624
      %v626 = vpop.f32.mrf.mxu0
      %v627 = vadd.f32 %v548, %v626
      %v628 = vand.u32 %v493, 4294901760
      %629 = vmatmul.f32.gmra.mxu0 %v628
      %v630 = vpop.f32.mrf.mxu0
      %v631 = vadd.f32 %v556, %v630
      %v632 = vand.u32 %v496, 4294901760
      %633 = vmatmul.f32.gmra.mxu0 %v632
      %v634 = vpop.f32.mrf.mxu0
      %v635 = vadd.f32 %v564, %v634
      %v636 = vand.u32 %v499, 4294901760
      %637 = vmatmul.f32.gmra.mxu0 %v636
      %v638 = vpop.f32.mrf.mxu0
      %v639 = vadd.f32 %v572, %v638
      %v640 = vand.u32 %v502, 4294901760
      %641 = vmatmul.f32.gmra.mxu0 %v640
      %v642 = vpop.f32.mrf.mxu0
      %v643 = vadd.f32 %v580, %v642
      %v644 = vand.u32 %v505, 4294901760
      %645 = vmatmul.f32.gmra.mxu0 %v644
      %v646 = vpop.f32.mrf.mxu0
      %v647 = vadd.f32 %v588, %v646
      %648 = vdwg.mxu0
      %649 = vmatpush.msra.mxu0 0.0
      %650 = vmatpush.msra.mxu0 0.0
      %651 = vmatpush.msra.mxu0 0.0
      %652 = vmatpush.msra.mxu0 0.0
      %653 = vmatpush.msra.mxu0 0.0
      %654 = vmatpush.msra.mxu0 0.0
      %655 = vmatpush.msra.mxu0 0.0
      %656 = vmatpush.msra.mxu0 0.0
      %657 = vmatpush.msra.mxu0 0.0
      %658 = vmatpush.msra.mxu0 0.0
      %659 = vmatpush.msra.mxu0 0.0
      %660 = vmatpush.msra.mxu0 0.0
      %661 = vmatpush.msra.mxu0 0.0
      %662 = vmatpush.msra.mxu0 0.0
      %v663 = vand.u32 %v477, 4294901760
      %v664 = vsub.f32 %v477, %v663
      %665 = vmatpush.msra.mxu0 %v664
      %v666 = vand.u32 %v476, 4294901760
      %v667 = vsub.f32 %v476, %v666
      %668 = vmatpush.msra.mxu0 %v667
      %v669 = vand.u32 %v484, 4294901760
      %v670 = vsub.f32 %v484, %v669
      %671 = vmatmul.f32.gmra.mxu0 %v670
      %v672 = vpop.f32.mrf.mxu0
      %v673 = vadd.f32 %v619, %v672
      %v674 = vand.u32 %v487, 4294901760
      %v675 = vsub.f32 %v487, %v674
      %676 = vmatmul.f32.gmra.mxu0 %v675
      %v677 = vpop.f32.mrf.mxu0
      %v678 = vadd.f32 %v623, %v677
      %v679 = vand.u32 %v490, 4294901760
      %v680 = vsub.f32 %v490, %v679
      %681 = vmatmul.f32.gmra.mxu0 %v680
      %v682 = vpop.f32.mrf.mxu0
      %v683 = vadd.f32 %v627, %v682
      %v684 = vand.u32 %v493, 4294901760
      %v685 = vsub.f32 %v493, %v684
      %686 = vmatmul.f32.gmra.mxu0 %v685
      %v687 = vpop.f32.mrf.mxu0
      %v688 = vadd.f32 %v631, %v687
      %v689 = vand.u32 %v496, 4294901760
      %v690 = vsub.f32 %v496, %v689
      %691 = vmatmul.f32.gmra.mxu0 %v690
      %v692 = vpop.f32.mrf.mxu0
      %v693 = vadd.f32 %v635, %v692
      %v694 = vand.u32 %v499, 4294901760
      %v695 = vsub.f32 %v499, %v694
      %696 = vmatmul.f32.gmra.mxu0 %v695
      %v697 = vpop.f32.mrf.mxu0
      %v698 = vadd.f32 %v639, %v697
      %v699 = vand.u32 %v502, 4294901760
      %v700 = vsub.f32 %v502, %v699
      %701 = vmatmul.f32.gmra.mxu0 %v700
      %v702 = vpop.f32.mrf.mxu0
      %v703 = vadd.f32 %v643, %v702
      %v704 = vand.u32 %v505, 4294901760
      %v705 = vsub.f32 %v505, %v704
      %706 = vmatmul.f32.gmra.mxu0 %v705
      %v707 = vpop.f32.mrf.mxu0
      %v708 = vadd.f32 %v647, %v707
      %709 = vdwg.mxu0
      %710 = vmatpush.msra.mxu0 0.0
      %711 = vmatpush.msra.mxu0 0.0
      %712 = vmatpush.msra.mxu0 0.0
      %713 = vmatpush.msra.mxu0 0.0
      %714 = vmatpush.msra.mxu0 0.0
      %715 = vmatpush.msra.mxu0 0.0
      %716 = vmatpush.msra.mxu0 0.0
      %717 = vmatpush.msra.mxu0 0.0
      %718 = vmatpush.msra.mxu0 0.0
      %719 = vmatpush.msra.mxu0 0.0
      %720 = vmatpush.msra.mxu0 0.0
      %721 = vmatpush.msra.mxu0 0.0
      %722 = vmatpush.msra.mxu0 0.0
      %723 = vmatpush.msra.mxu0 0.0
      %v724 = vand.u32 %v477, 4294901760
      %725 = vmatpush.msra.mxu0 %v724
      %v726 = vand.u32 %v476, 4294901760
      %727 = vmatpush.msra.mxu0 %v726
      %v728 = vand.u32 %v484, 4294901760
      %v729 = vsub.f32 %v484, %v728
      %v730 = vand.u32 %v729, 4294901760
      %731 = vmatmul.f32.gmra.mxu0 %v730
      %v732 = vpop.f32.mrf.mxu0
      %v733 = vadd.f32 %v673, %v732
      %v734 = vand.u32 %v487, 4294901760
      %v735 = vsub.f32 %v487, %v734
      %v736 = vand.u32 %v735, 4294901760
      %737 = vmatmul.f32.gmra.mxu0 %v736
      %v738 = vpop.f32.mrf.mxu0
      %v739 = vadd.f32 %v678, %v738
      %v740 = vand.u32 %v490, 4294901760
      %v741 = vsub.f32 %v490, %v740
      %v742 = vand.u32 %v741, 4294901760
      %743 = vmatmul.f32.gmra.mxu0 %v742
      %v744 = vpop.f32.mrf.mxu0
      %v745 = vadd.f32 %v683, %v744
      %v746 = vand.u32 %v493, 4294901760
      %v747 = vsub.f32 %v493, %v746
      %v748 = vand.u32 %v747, 4294901760
      %749 = vmatmul.f32.gmra.mxu0 %v748
      %v750 = vpop.f32.mrf.mxu0
      %v751 = vadd.f32 %v688, %v750
      %v752 = vand.u32 %v496, 4294901760
      %v753 = vsub.f32 %v496, %v752
      %v754 = vand.u32 %v753, 4294901760
      %755 = vmatmul.f32.gmra.mxu0 %v754
      %v756 = vpop.f32.mrf.mxu0
      %v757 = vadd.f32 %v693, %v756
      %v758 = vand.u32 %v499, 4294901760
      %v759 = vsub.f32 %v499, %v758
      %v760 = vand.u32 %v759, 4294901760
      %761 = vmatmul.f32.gmra.mxu0 %v760
      %v762 = vpop.f32.mrf.mxu0
      %v763 = vadd.f32 %v698, %v762
      %v764 = vand.u32 %v502, 4294901760
      %v765 = vsub.f32 %v502, %v764
      %v766 = vand.u32 %v765, 4294901760
      %767 = vmatmul.f32.gmra.mxu0 %v766
      %v768 = vpop.f32.mrf.mxu0
      %v769 = vadd.f32 %v703, %v768
      %v770 = vand.u32 %v505, 4294901760
      %v771 = vsub.f32 %v505, %v770
      %v772 = vand.u32 %v771, 4294901760
      %773 = vmatmul.f32.gmra.mxu0 %v772
      %v774 = vpop.f32.mrf.mxu0
      %v775 = vadd.f32 %v708, %v774
      %776 = vdwg.mxu0
      %777 = vmatpush.msra.mxu0 0.0
      %778 = vmatpush.msra.mxu0 0.0
      %779 = vmatpush.msra.mxu0 0.0
      %780 = vmatpush.msra.mxu0 0.0
      %781 = vmatpush.msra.mxu0 0.0
      %782 = vmatpush.msra.mxu0 0.0
      %783 = vmatpush.msra.mxu0 0.0
      %784 = vmatpush.msra.mxu0 0.0
      %785 = vmatpush.msra.mxu0 0.0
      %786 = vmatpush.msra.mxu0 0.0
      %787 = vmatpush.msra.mxu0 0.0
      %788 = vmatpush.msra.mxu0 0.0
      %789 = vmatpush.msra.mxu0 0.0
      %790 = vmatpush.msra.mxu0 0.0
      %v791 = vand.u32 %v477, 4294901760
      %v792 = vsub.f32 %v477, %v791
      %v793 = vand.u32 %v792, 4294901760
      %794 = vmatpush.msra.mxu0 %v793
      %v795 = vand.u32 %v476, 4294901760
      %v796 = vsub.f32 %v476, %v795
      %v797 = vand.u32 %v796, 4294901760
      %798 = vmatpush.msra.mxu0 %v797
      %v799 = vand.u32 %v484, 4294901760
      %800 = vmatmul.f32.gmra.mxu0 %v799
      %v801 = vpop.f32.mrf.mxu0
      %v802 = vadd.f32 %v733, %v801
      %v803 = vand.u32 %v487, 4294901760
      %804 = vmatmul.f32.gmra.mxu0 %v803
      %v805 = vpop.f32.mrf.mxu0
      %v806 = vadd.f32 %v739, %v805
      %v807 = vand.u32 %v490, 4294901760
      %808 = vmatmul.f32.gmra.mxu0 %v807
      %v809 = vpop.f32.mrf.mxu0
      %v810 = vadd.f32 %v745, %v809
      %v811 = vand.u32 %v493, 4294901760
      %812 = vmatmul.f32.gmra.mxu0 %v811
      %v813 = vpop.f32.mrf.mxu0
      %v814 = vadd.f32 %v751, %v813
      %v815 = vand.u32 %v496, 4294901760
      %816 = vmatmul.f32.gmra.mxu0 %v815
      %v817 = vpop.f32.mrf.mxu0
      %v818 = vadd.f32 %v757, %v817
      %v819 = vand.u32 %v499, 4294901760
      %820 = vmatmul.f32.gmra.mxu0 %v819
      %v821 = vpop.f32.mrf.mxu0
      %v822 = vadd.f32 %v763, %v821
      %v823 = vand.u32 %v502, 4294901760
      %824 = vmatmul.f32.gmra.mxu0 %v823
      %v825 = vpop.f32.mrf.mxu0
      %v826 = vadd.f32 %v769, %v825
      %v827 = vand.u32 %v505, 4294901760
      %828 = vmatmul.f32.gmra.mxu0 %v827
      %v829 = vpop.f32.mrf.mxu0
      %v830 = vadd.f32 %v775, %v829
      %831 = vdwg.mxu0
      %832 = vmatpush.msra.mxu0 0.0
      %833 = vmatpush.msra.mxu0 0.0
      %834 = vmatpush.msra.mxu0 0.0
      %835 = vmatpush.msra.mxu0 0.0
      %836 = vmatpush.msra.mxu0 0.0
      %837 = vmatpush.msra.mxu0 0.0
      %838 = vmatpush.msra.mxu0 0.0
      %839 = vmatpush.msra.mxu0 0.0
      %840 = vmatpush.msra.mxu0 0.0
      %841 = vmatpush.msra.mxu0 0.0
      %842 = vmatpush.msra.mxu0 0.0
      %843 = vmatpush.msra.mxu0 0.0
      %844 = vmatpush.msra.mxu0 0.0
      %845 = vmatpush.msra.mxu0 0.0
      %v846 = vand.u32 %v477, 4294901760
      %847 = vmatpush.msra.mxu0 %v846
      %v848 = vand.u32 %v476, 4294901760
      %849 = vmatpush.msra.mxu0 %v848
      %v850 = vand.u32 %v484, 4294901760
      %851 = vmatmul.f32.gmra.mxu0 %v850
      %v852 = vpop.f32.mrf.mxu0
      %v853 = vadd.f32 %v802, %v852
      %v854 = vand.u32 %v487, 4294901760
      %855 = vmatmul.f32.gmra.mxu0 %v854
      %v856 = vpop.f32.mrf.mxu0
      %v857 = vadd.f32 %v806, %v856
      %v858 = vand.u32 %v490, 4294901760
      %859 = vmatmul.f32.gmra.mxu0 %v858
      %v860 = vpop.f32.mrf.mxu0
      %v861 = vadd.f32 %v810, %v860
      %v862 = vand.u32 %v493, 4294901760
      %863 = vmatmul.f32.gmra.mxu0 %v862
      %v864 = vpop.f32.mrf.mxu0
      %v865 = vadd.f32 %v814, %v864
      %v866 = vand.u32 %v496, 4294901760
      %867 = vmatmul.f32.gmra.mxu0 %v866
      %v868 = vpop.f32.mrf.mxu0
      %v869 = vadd.f32 %v818, %v868
      %v870 = vand.u32 %v499, 4294901760
      %871 = vmatmul.f32.gmra.mxu0 %v870
      %v872 = vpop.f32.mrf.mxu0
      %v873 = vadd.f32 %v822, %v872
      %v874 = vand.u32 %v502, 4294901760
      %875 = vmatmul.f32.gmra.mxu0 %v874
      %v876 = vpop.f32.mrf.mxu0
      %v877 = vadd.f32 %v826, %v876
      %v878 = vand.u32 %v505, 4294901760
      %879 = vmatmul.f32.gmra.mxu0 %v878
      %v880 = vpop.f32.mrf.mxu0
      %v881 = vadd.f32 %v830, %v880
      %882 = vdwg.mxu0
      %883 = vadd.xlane.f32.xlu0 %v853
      %v884 = vpop.xlane.xlu0 %883
      %885 = vadd.xlane.f32.xlu0 %v857
      %v886 = vpop.xlane.xlu0 %885
      %887 = vadd.xlane.f32.xlu0 %v861
      %v888 = vpop.xlane.xlu0 %887
      %889 = vadd.xlane.f32.xlu0 %v865
      %v890 = vpop.xlane.xlu0 %889
      %891 = vadd.xlane.f32.xlu0 %v869
      %v892 = vpop.xlane.xlu0 %891
      %893 = vadd.xlane.f32.xlu0 %v873
      %v894 = vpop.xlane.xlu0 %893
      %895 = vadd.xlane.f32.xlu0 %v877
      %v896 = vpop.xlane.xlu0 %895
      %897 = vadd.xlane.f32.xlu0 %v881
      %v898 = vpop.xlane.xlu0 %897
      %v899 = vrcp.pop 128.0
      %v900 = vmul.f32 128.0, %v899
      %v901 = vsub.f32 1.0, %v900
      %v902 = vmul.f32 %v899, %v901
      %v903 = vadd.f32 %v899, %v902
      %vm904 = vweird.f32 %v899
      %v905 = vsel %vm904, %v899, %v903
      %v906 = vmul.f32 %v884, %v905
      %v907 = vmul.f32 %v886, %v905
      %v908 = vmul.f32 %v888, %v905
      %v909 = vmul.f32 %v890, %v905
      %v910 = vmul.f32 %v892, %v905
      %v911 = vmul.f32 %v894, %v905
      %v912 = vmul.f32 %v896, %v905
      %v913 = vmul.f32 %v898, %v905
      %v914 = vsub.f32 %v853, %v906
      %v915 = vsub.f32 %v857, %v907
      %v916 = vsub.f32 %v861, %v908
      %v917 = vsub.f32 %v865, %v909
      %v918 = vsub.f32 %v869, %v910
      %v919 = vsub.f32 %v873, %v911
      %v920 = vsub.f32 %v877, %v912
      %v921 = vsub.f32 %v881, %v913
      %v922 = vmul.f32 %v914, %v914
      %v923 = vmul.f32 %v915, %v915
      %v924 = vmul.f32 %v916, %v916
      %v925 = vmul.f32 %v917, %v917
      %v926 = vmul.f32 %v918, %v918
      %v927 = vmul.f32 %v919, %v919
      %v928 = vmul.f32 %v920, %v920
      %v929 = vmul.f32 %v921, %v921
      %930 = vadd.xlane.f32.xlu0 %v922
      %v931 = vpop.xlane.xlu0 %930
      %932 = vadd.xlane.f32.xlu0 %v923
      %v933 = vpop.xlane.xlu0 %932
      %934 = vadd.xlane.f32.xlu0 %v924
      %v935 = vpop.xlane.xlu0 %934
      %936 = vadd.xlane.f32.xlu0 %v925
      %v937 = vpop.xlane.xlu0 %936
      %938 = vadd.xlane.f32.xlu0 %v926
      %v939 = vpop.xlane.xlu0 %938
      %940 = vadd.xlane.f32.xlu0 %v927
      %v941 = vpop.xlane.xlu0 %940
      %942 = vadd.xlane.f32.xlu0 %v928
      %v943 = vpop.xlane.xlu0 %942
      %944 = vadd.xlane.f32.xlu0 %v929
      %v945 = vpop.xlane.xlu0 %944
      %v946 = vmul.f32 %v931, %v905
      %v947 = vmul.f32 %v933, %v905
      %v948 = vmul.f32 %v935, %v905
      %v949 = vmul.f32 %v937, %v905
      %v950 = vmul.f32 %v939, %v905
      %v951 = vmul.f32 %v941, %v905
      %v952 = vmul.f32 %v943, %v905
      %v953 = vmul.f32 %v945, %v905
      %v954 = vadd.f32 %v946, 1e-05
      %v955 = vadd.f32 %v947, 1e-05
      %v956 = vadd.f32 %v948, 1e-05
      %v957 = vadd.f32 %v949, 1e-05
      %v958 = vadd.f32 %v950, 1e-05
      %v959 = vadd.f32 %v951, 1e-05
      %v960 = vadd.f32 %v952, 1e-05
      %v961 = vadd.f32 %v953, 1e-05
      %v962 = vrsqrt.pop %v954
      %v963 = vmul.f32 %v962, %v954
      %v964 = vmul.f32 %v963, %v962
      %v965 = vmul.f32 0.5, %v964
      %v966 = vsub.f32 1.5, %v965
      %v967 = vmul.f32 %v962, %v966
      %vm968 = vweird.f32 %v954
      %vm969 = vweird.f32 %v962
      %vm970 = vmor %vm968, %vm969
      %v971 = vsel %vm970, %v962, %v967
      %v972 = vrsqrt.pop %v955
      %v973 = vmul.f32 %v972, %v955
      %v974 = vmul.f32 %v973, %v972
      %v975 = vmul.f32 0.5, %v974
      %v976 = vsub.f32 1.5, %v975
      %v977 = vmul.f32 %v972, %v976
      %vm978 = vweird.f32 %v955
      %vm979 = vweird.f32 %v972
      %vm980 = vmor %vm978, %vm979
      %v981 = vsel %vm980, %v972, %v977
      %v982 = vrsqrt.pop %v956
      %v983 = vmul.f32 %v982, %v956
      %v984 = vmul.f32 %v983, %v982
      %v985 = vmul.f32 0.5, %v984
      %v986 = vsub.f32 1.5, %v985
      %v987 = vmul.f32 %v982, %v986
      %vm988 = vweird.f32 %v956
      %vm989 = vweird.f32 %v982
      %vm990 = vmor %vm988, %vm989
      %v991 = vsel %vm990, %v982, %v987
      %v992 = vrsqrt.pop %v957
      %v993 = vmul.f32 %v992, %v957
      %v994 = vmul.f32 %v993, %v992
      %v995 = vmul.f32 0.5, %v994
      %v996 = vsub.f32 1.5, %v995
      %v997 = vmul.f32 %v992, %v996
      %vm998 = vweird.f32 %v957
      %vm999 = vweird.f32 %v992
      %vm1000 = vmor %vm998, %vm999
      %v1001 = vsel %vm1000, %v992, %v997
      %v1002 = vrsqrt.pop %v958
      %v1003 = vmul.f32 %v1002, %v958
      %v1004 = vmul.f32 %v1003, %v1002
      %v1005 = vmul.f32 0.5, %v1004
      %v1006 = vsub.f32 1.5, %v1005
      %v1007 = vmul.f32 %v1002, %v1006
      %vm1008 = vweird.f32 %v958
      %vm1009 = vweird.f32 %v1002
      %vm1010 = vmor %vm1008, %vm1009
      %v1011 = vsel %vm1010, %v1002, %v1007
      %v1012 = vrsqrt.pop %v959
      %v1013 = vmul.f32 %v1012, %v959
      %v1014 = vmul.f32 %v1013, %v1012
      %v1015 = vmul.f32 0.5, %v1014
      %v1016 = vsub.f32 1.5, %v1015
      %v1017 = vmul.f32 %v1012, %v1016
      %vm1018 = vweird.f32 %v959
      %vm1019 = vweird.f32 %v1012
      %vm1020 = vmor %vm1018, %vm1019
      %v1021 = vsel %vm1020, %v1012, %v1017
      %v1022 = vrsqrt.pop %v960
      %v1023 = vmul.f32 %v1022, %v960
      %v1024 = vmul.f32 %v1023, %v1022
      %v1025 = vmul.f32 0.5, %v1024
      %v1026 = vsub.f32 1.5, %v1025
      %v1027 = vmul.f32 %v1022, %v1026
      %vm1028 = vweird.f32 %v960
      %vm1029 = vweird.f32 %v1022
      %vm1030 = vmor %vm1028, %vm1029
      %v1031 = vsel %vm1030, %v1022, %v1027
      %v1032 = vrsqrt.pop %v961
      %v1033 = vmul.f32 %v1032, %v961
      %v1034 = vmul.f32 %v1033, %v1032
      %v1035 = vmul.f32 0.5, %v1034
      %v1036 = vsub.f32 1.5, %v1035
      %v1037 = vmul.f32 %v1032, %v1036
      %vm1038 = vweird.f32 %v961
      %vm1039 = vweird.f32 %v1032
      %vm1040 = vmor %vm1038, %vm1039
      %v1041 = vsel %vm1040, %v1032, %v1037
      %v1042 = vmul.f32 %v914, %v971
      %v1043 = vmul.f32 %v915, %v981
      %v1044 = vmul.f32 %v916, %v991
      %v1045 = vmul.f32 %v917, %v1001
      %v1046 = vmul.f32 %v918, %v1011
      %v1047 = vmul.f32 %v919, %v1021
      %v1048 = vmul.f32 %v920, %v1031
      %v1049 = vmul.f32 %v921, %v1041
      %v1050 = vld [vmem:[%s6] sm:$0x1]
      %v1052 = vperm.slane %v1050, 0
      %v1054 = vmul.f32 %v1042, %v1052
      %v1055 = vmul.f32 %v1043, %v1052
      %v1056 = vmul.f32 %v1044, %v1052
      %v1057 = vmul.f32 %v1045, %v1052
      %v1058 = vmul.f32 %v1046, %v1052
      %v1059 = vmul.f32 %v1047, %v1052
      %v1060 = vmul.f32 %v1048, %v1052
      %v1061 = vmul.f32 %v1049, %v1052
      %v1062 = vld [vmem:[%s7] sm:$0x1]
      %v1064 = vperm.slane %v1062, 0
      %v1066 = vadd.f32 %v1054, %v1064
      %v1067 = vadd.f32 %v1055, %v1064
      %v1068 = vadd.f32 %v1056, %v1064
      %v1069 = vadd.f32 %v1057, %v1064
      %v1070 = vadd.f32 %v1058, %v1064
      %v1071 = vadd.f32 %v1059, %v1064
      %v1072 = vadd.f32 %v1060, %v1064
      %v1073 = vadd.f32 %v1061, %v1064
      %v1074 = vmax.f32 %v1066, 0.0
      %v1075 = vmax.f32 %v1067, 0.0
      %v1076 = vmax.f32 %v1068, 0.0
      %v1077 = vmax.f32 %v1069, 0.0
      %v1078 = vmax.f32 %v1070, 0.0
      %v1079 = vmax.f32 %v1071, 0.0
      %v1080 = vmax.f32 %v1072, 0.0
      %v1081 = vmax.f32 %v1073, 0.0
      %v1082 = vld [vmem:[%s8] sm:$0xff]
      %v1083 = vld [vmem:[%s8 + $0x8] sm:$0xff]
      %v1084 = vld [vmem:[%s8 + $0x10] sm:$0xff]
      %v1085 = vld [vmem:[%s8 + $0x18] sm:$0xff]
      %v1086 = vld [vmem:[%s8 + $0x20] sm:$0xff]
      %v1087 = vld [vmem:[%s8 + $0x28] sm:$0xff]
      %v1088 = vld [vmem:[%s8 + $0x30] sm:$0xff]
      %v1089 = vld [vmem:[%s8 + $0x38] sm:$0xff]
      %v1090 = vld [vmem:[%s8 + $0x40] sm:$0xff]
      %v1091 = vld [vmem:[%s8 + $0x48] sm:$0xff]
      %v1092 = vld [vmem:[%s8 + $0x50] sm:$0xff]
      %v1093 = vld [vmem:[%s8 + $0x58] sm:$0xff]
      %v1094 = vld [vmem:[%s8 + $0x60] sm:$0xff]
      %v1095 = vld [vmem:[%s8 + $0x68] sm:$0xff]
      %v1096 = vld [vmem:[%s8 + $0x70] sm:$0xff]
      %v1097 = vld [vmem:[%s8 + $0x78] sm:$0xff]
      %v1098 = vld [vmem:[%s8 + $0x80] sm:$0xff]
      %v1099 = vld [vmem:[%s8 + $0x88] sm:$0xff]
      %v1100 = vld [vmem:[%s8 + $0x90] sm:$0xff]
      %v1101 = vld [vmem:[%s8 + $0x98] sm:$0xff]
      %v1102 = vld [vmem:[%s8 + $0xa0] sm:$0xff]
      %v1103 = vld [vmem:[%s8 + $0xa8] sm:$0xff]
      %v1104 = vld [vmem:[%s8 + $0xb0] sm:$0xff]
      %v1105 = vld [vmem:[%s8 + $0xb8] sm:$0xff]
      %v1106 = vld [vmem:[%s8 + $0xc0] sm:$0xff]
      %v1107 = vld [vmem:[%s8 + $0xc8] sm:$0xff]
      %v1108 = vld [vmem:[%s8 + $0xd0] sm:$0xff]
      %v1109 = vld [vmem:[%s8 + $0xd8] sm:$0xff]
      %v1110 = vld [vmem:[%s8 + $0xe0] sm:$0xff]
      %v1111 = vld [vmem:[%s8 + $0xe8] sm:$0xff]
      %v1112 = vld [vmem:[%s8 + $0xf0] sm:$0xff]
      %v1113 = vld [vmem:[%s8 + $0xf8] sm:$0xff]
      %v1114 = vld [vmem:[%s9] sm:$0x3]
      %v1116 = vperm.slane %v1114, 0
      %v1117 = vperm.slane %v1114, 1
      %v1120 = vand.u32 %v1112, 4294901760
      %1121 = vmatpush.msra.mxu0 %v1120
      %v1122 = vand.u32 %v1110, 4294901760
      %1123 = vmatpush.msra.mxu0 %v1122
      %v1124 = vand.u32 %v1108, 4294901760
      %1125 = vmatpush.msra.mxu0 %v1124
      %v1126 = vand.u32 %v1106, 4294901760
      %1127 = vmatpush.msra.mxu0 %v1126
      %v1128 = vand.u32 %v1104, 4294901760
      %1129 = vmatpush.msra.mxu0 %v1128
      %v1130 = vand.u32 %v1102, 4294901760
      %1131 = vmatpush.msra.mxu0 %v1130
      %v1132 = vand.u32 %v1100, 4294901760
      %1133 = vmatpush.msra.mxu0 %v1132
      %v1134 = vand.u32 %v1098, 4294901760
      %1135 = vmatpush.msra.mxu0 %v1134
      %v1136 = vand.u32 %v1096, 4294901760
      %1137 = vmatpush.msra.mxu0 %v1136
      %v1138 = vand.u32 %v1094, 4294901760
      %1139 = vmatpush.msra.mxu0 %v1138
      %v1140 = vand.u32 %v1092, 4294901760
      %1141 = vmatpush.msra.mxu0 %v1140
      %v1142 = vand.u32 %v1090, 4294901760
      %1143 = vmatpush.msra.mxu0 %v1142
      %v1144 = vand.u32 %v1088, 4294901760
      %1145 = vmatpush.msra.mxu0 %v1144
      %v1146 = vand.u32 %v1086, 4294901760
      %1147 = vmatpush.msra.mxu0 %v1146
      %v1148 = vand.u32 %v1084, 4294901760
      %1149 = vmatpush.msra.mxu0 %v1148
      %v1150 = vand.u32 %v1082, 4294901760
      %1151 = vmatpush.msra.mxu0 %v1150
      %v1152 = vand.u32 %v1074, 4294901760
      %v1153 = vsub.f32 %v1074, %v1152
      %v1154 = vand.u32 %v1153, 4294901760
      %v1155 = vsub.f32 %v1153, %v1154
      %v1156 = vand.u32 %v1155, 4294901760
      %1157 = vmatmul.f32.gmra.mxu0 %v1156
      %v1158 = vpop.f32.mrf.mxu0
      %v1159 = vadd.f32 %v1116, %v1158
      %v1160 = vand.u32 %v1075, 4294901760
      %v1161 = vsub.f32 %v1075, %v1160
      %v1162 = vand.u32 %v1161, 4294901760
      %v1163 = vsub.f32 %v1161, %v1162
      %v1164 = vand.u32 %v1163, 4294901760
      %1165 = vmatmul.f32.gmra.mxu0 %v1164
      %v1166 = vpop.f32.mrf.mxu0
      %v1167 = vadd.f32 %v1116, %v1166
      %v1168 = vand.u32 %v1076, 4294901760
      %v1169 = vsub.f32 %v1076, %v1168
      %v1170 = vand.u32 %v1169, 4294901760
      %v1171 = vsub.f32 %v1169, %v1170
      %v1172 = vand.u32 %v1171, 4294901760
      %1173 = vmatmul.f32.gmra.mxu0 %v1172
      %v1174 = vpop.f32.mrf.mxu0
      %v1175 = vadd.f32 %v1116, %v1174
      %v1176 = vand.u32 %v1077, 4294901760
      %v1177 = vsub.f32 %v1077, %v1176
      %v1178 = vand.u32 %v1177, 4294901760
      %v1179 = vsub.f32 %v1177, %v1178
      %v1180 = vand.u32 %v1179, 4294901760
      %1181 = vmatmul.f32.gmra.mxu0 %v1180
      %v1182 = vpop.f32.mrf.mxu0
      %v1183 = vadd.f32 %v1116, %v1182
      %v1184 = vand.u32 %v1078, 4294901760
      %v1185 = vsub.f32 %v1078, %v1184
      %v1186 = vand.u32 %v1185, 4294901760
      %v1187 = vsub.f32 %v1185, %v1186
      %v1188 = vand.u32 %v1187, 4294901760
      %1189 = vmatmul.f32.gmra.mxu0 %v1188
      %v1190 = vpop.f32.mrf.mxu0
      %v1191 = vadd.f32 %v1116, %v1190
      %v1192 = vand.u32 %v1079, 4294901760
      %v1193 = vsub.f32 %v1079, %v1192
      %v1194 = vand.u32 %v1193, 4294901760
      %v1195 = vsub.f32 %v1193, %v1194
      %v1196 = vand.u32 %v1195, 4294901760
      %1197 = vmatmul.f32.gmra.mxu0 %v1196
      %v1198 = vpop.f32.mrf.mxu0
      %v1199 = vadd.f32 %v1116, %v1198
      %v1200 = vand.u32 %v1080, 4294901760
      %v1201 = vsub.f32 %v1080, %v1200
      %v1202 = vand.u32 %v1201, 4294901760
      %v1203 = vsub.f32 %v1201, %v1202
      %v1204 = vand.u32 %v1203, 4294901760
      %1205 = vmatmul.f32.gmra.mxu0 %v1204
      %v1206 = vpop.f32.mrf.mxu0
      %v1207 = vadd.f32 %v1116, %v1206
      %v1208 = vand.u32 %v1081, 4294901760
      %v1209 = vsub.f32 %v1081, %v1208
      %v1210 = vand.u32 %v1209, 4294901760
      %v1211 = vsub.f32 %v1209, %v1210
      %v1212 = vand.u32 %v1211, 4294901760
      %1213 = vmatmul.f32.gmra.mxu0 %v1212
      %v1214 = vpop.f32.mrf.mxu0
      %v1215 = vadd.f32 %v1116, %v1214
      %1216 = vdwg.mxu0
      %v1217 = vand.u32 %v1112, 4294901760
      %v1218 = vsub.f32 %v1112, %v1217
      %v1219 = vand.u32 %v1218, 4294901760
      %v1220 = vsub.f32 %v1218, %v1219
      %v1221 = vand.u32 %v1220, 4294901760
      %1222 = vmatpush.msra.mxu0 %v1221
      %v1223 = vand.u32 %v1110, 4294901760
      %v1224 = vsub.f32 %v1110, %v1223
      %v1225 = vand.u32 %v1224, 4294901760
      %v1226 = vsub.f32 %v1224, %v1225
      %v1227 = vand.u32 %v1226, 4294901760
      %1228 = vmatpush.msra.mxu0 %v1227
      %v1229 = vand.u32 %v1108, 4294901760
      %v1230 = vsub.f32 %v1108, %v1229
      %v1231 = vand.u32 %v1230, 4294901760
      %v1232 = vsub.f32 %v1230, %v1231
      %v1233 = vand.u32 %v1232, 4294901760
      %1234 = vmatpush.msra.mxu0 %v1233
      %v1235 = vand.u32 %v1106, 4294901760
      %v1236 = vsub.f32 %v1106, %v1235
      %v1237 = vand.u32 %v1236, 4294901760
      %v1238 = vsub.f32 %v1236, %v1237
      %v1239 = vand.u32 %v1238, 4294901760
      %1240 = vmatpush.msra.mxu0 %v1239
      %v1241 = vand.u32 %v1104, 4294901760
      %v1242 = vsub.f32 %v1104, %v1241
      %v1243 = vand.u32 %v1242, 4294901760
      %v1244 = vsub.f32 %v1242, %v1243
      %v1245 = vand.u32 %v1244, 4294901760
      %1246 = vmatpush.msra.mxu0 %v1245
      %v1247 = vand.u32 %v1102, 4294901760
      %v1248 = vsub.f32 %v1102, %v1247
      %v1249 = vand.u32 %v1248, 4294901760
      %v1250 = vsub.f32 %v1248, %v1249
      %v1251 = vand.u32 %v1250, 4294901760
      %1252 = vmatpush.msra.mxu0 %v1251
      %v1253 = vand.u32 %v1100, 4294901760
      %v1254 = vsub.f32 %v1100, %v1253
      %v1255 = vand.u32 %v1254, 4294901760
      %v1256 = vsub.f32 %v1254, %v1255
      %v1257 = vand.u32 %v1256, 4294901760
      %1258 = vmatpush.msra.mxu0 %v1257
      %v1259 = vand.u32 %v1098, 4294901760
      %v1260 = vsub.f32 %v1098, %v1259
      %v1261 = vand.u32 %v1260, 4294901760
      %v1262 = vsub.f32 %v1260, %v1261
      %v1263 = vand.u32 %v1262, 4294901760
      %1264 = vmatpush.msra.mxu0 %v1263
      %v1265 = vand.u32 %v1096, 4294901760
      %v1266 = vsub.f32 %v1096, %v1265
      %v1267 = vand.u32 %v1266, 4294901760
      %v1268 = vsub.f32 %v1266, %v1267
      %v1269 = vand.u32 %v1268, 4294901760
      %1270 = vmatpush.msra.mxu0 %v1269
      %v1271 = vand.u32 %v1094, 4294901760
      %v1272 = vsub.f32 %v1094, %v1271
      %v1273 = vand.u32 %v1272, 4294901760
      %v1274 = vsub.f32 %v1272, %v1273
      %v1275 = vand.u32 %v1274, 4294901760
      %1276 = vmatpush.msra.mxu0 %v1275
      %v1277 = vand.u32 %v1092, 4294901760
      %v1278 = vsub.f32 %v1092, %v1277
      %v1279 = vand.u32 %v1278, 4294901760
      %v1280 = vsub.f32 %v1278, %v1279
      %v1281 = vand.u32 %v1280, 4294901760
      %1282 = vmatpush.msra.mxu0 %v1281
      %v1283 = vand.u32 %v1090, 4294901760
      %v1284 = vsub.f32 %v1090, %v1283
      %v1285 = vand.u32 %v1284, 4294901760
      %v1286 = vsub.f32 %v1284, %v1285
      %v1287 = vand.u32 %v1286, 4294901760
      %1288 = vmatpush.msra.mxu0 %v1287
      %v1289 = vand.u32 %v1088, 4294901760
      %v1290 = vsub.f32 %v1088, %v1289
      %v1291 = vand.u32 %v1290, 4294901760
      %v1292 = vsub.f32 %v1290, %v1291
      %v1293 = vand.u32 %v1292, 4294901760
      %1294 = vmatpush.msra.mxu0 %v1293
      %v1295 = vand.u32 %v1086, 4294901760
      %v1296 = vsub.f32 %v1086, %v1295
      %v1297 = vand.u32 %v1296, 4294901760
      %v1298 = vsub.f32 %v1296, %v1297
      %v1299 = vand.u32 %v1298, 4294901760
      %1300 = vmatpush.msra.mxu0 %v1299
      %v1301 = vand.u32 %v1084, 4294901760
      %v1302 = vsub.f32 %v1084, %v1301
      %v1303 = vand.u32 %v1302, 4294901760
      %v1304 = vsub.f32 %v1302, %v1303
      %v1305 = vand.u32 %v1304, 4294901760
      %1306 = vmatpush.msra.mxu0 %v1305
      %v1307 = vand.u32 %v1082, 4294901760
      %v1308 = vsub.f32 %v1082, %v1307
      %v1309 = vand.u32 %v1308, 4294901760
      %v1310 = vsub.f32 %v1308, %v1309
      %v1311 = vand.u32 %v1310, 4294901760
      %1312 = vmatpush.msra.mxu0 %v1311
      %v1313 = vand.u32 %v1074, 4294901760
      %1314 = vmatmul.f32.gmra.mxu0 %v1313
      %v1315 = vpop.f32.mrf.mxu0
      %v1316 = vadd.f32 %v1159, %v1315
      %v1317 = vand.u32 %v1075, 4294901760
      %1318 = vmatmul.f32.gmra.mxu0 %v1317
      %v1319 = vpop.f32.mrf.mxu0
      %v1320 = vadd.f32 %v1167, %v1319
      %v1321 = vand.u32 %v1076, 4294901760
      %1322 = vmatmul.f32.gmra.mxu0 %v1321
      %v1323 = vpop.f32.mrf.mxu0
      %v1324 = vadd.f32 %v1175, %v1323
      %v1325 = vand.u32 %v1077, 4294901760
      %1326 = vmatmul.f32.gmra.mxu0 %v1325
      %v1327 = vpop.f32.mrf.mxu0
      %v1328 = vadd.f32 %v1183, %v1327
      %v1329 = vand.u32 %v1078, 4294901760
      %1330 = vmatmul.f32.gmra.mxu0 %v1329
      %v1331 = vpop.f32.mrf.mxu0
      %v1332 = vadd.f32 %v1191, %v1331
      %v1333 = vand.u32 %v1079, 4294901760
      %1334 = vmatmul.f32.gmra.mxu0 %v1333
      %v1335 = vpop.f32.mrf.mxu0
      %v1336 = vadd.f32 %v1199, %v1335
      %v1337 = vand.u32 %v1080, 4294901760
      %1338 = vmatmul.f32.gmra.mxu0 %v1337
      %v1339 = vpop.f32.mrf.mxu0
      %v1340 = vadd.f32 %v1207, %v1339
      %v1341 = vand.u32 %v1081, 4294901760
      %1342 = vmatmul.f32.gmra.mxu0 %v1341
      %v1343 = vpop.f32.mrf.mxu0
      %v1344 = vadd.f32 %v1215, %v1343
      %1345 = vdwg.mxu0
      %v1346 = vand.u32 %v1112, 4294901760
      %v1347 = vsub.f32 %v1112, %v1346
      %1348 = vmatpush.msra.mxu0 %v1347
      %v1349 = vand.u32 %v1110, 4294901760
      %v1350 = vsub.f32 %v1110, %v1349
      %1351 = vmatpush.msra.mxu0 %v1350
      %v1352 = vand.u32 %v1108, 4294901760
      %v1353 = vsub.f32 %v1108, %v1352
      %1354 = vmatpush.msra.mxu0 %v1353
      %v1355 = vand.u32 %v1106, 4294901760
      %v1356 = vsub.f32 %v1106, %v1355
      %1357 = vmatpush.msra.mxu0 %v1356
      %v1358 = vand.u32 %v1104, 4294901760
      %v1359 = vsub.f32 %v1104, %v1358
      %1360 = vmatpush.msra.mxu0 %v1359
      %v1361 = vand.u32 %v1102, 4294901760
      %v1362 = vsub.f32 %v1102, %v1361
      %1363 = vmatpush.msra.mxu0 %v1362
      %v1364 = vand.u32 %v1100, 4294901760
      %v1365 = vsub.f32 %v1100, %v1364
      %1366 = vmatpush.msra.mxu0 %v1365
      %v1367 = vand.u32 %v1098, 4294901760
      %v1368 = vsub.f32 %v1098, %v1367
      %1369 = vmatpush.msra.mxu0 %v1368
      %v1370 = vand.u32 %v1096, 4294901760
      %v1371 = vsub.f32 %v1096, %v1370
      %1372 = vmatpush.msra.mxu0 %v1371
      %v1373 = vand.u32 %v1094, 4294901760
      %v1374 = vsub.f32 %v1094, %v1373
      %1375 = vmatpush.msra.mxu0 %v1374
      %v1376 = vand.u32 %v1092, 4294901760
      %v1377 = vsub.f32 %v1092, %v1376
      %1378 = vmatpush.msra.mxu0 %v1377
      %v1379 = vand.u32 %v1090, 4294901760
      %v1380 = vsub.f32 %v1090, %v1379
      %1381 = vmatpush.msra.mxu0 %v1380
      %v1382 = vand.u32 %v1088, 4294901760
      %v1383 = vsub.f32 %v1088, %v1382
      %1384 = vmatpush.msra.mxu0 %v1383
      %v1385 = vand.u32 %v1086, 4294901760
      %v1386 = vsub.f32 %v1086, %v1385
      %1387 = vmatpush.msra.mxu0 %v1386
      %v1388 = vand.u32 %v1084, 4294901760
      %v1389 = vsub.f32 %v1084, %v1388
      %1390 = vmatpush.msra.mxu0 %v1389
      %v1391 = vand.u32 %v1082, 4294901760
      %v1392 = vsub.f32 %v1082, %v1391
      %1393 = vmatpush.msra.mxu0 %v1392
      %v1394 = vand.u32 %v1074, 4294901760
      %v1395 = vsub.f32 %v1074, %v1394
      %1396 = vmatmul.f32.gmra.mxu0 %v1395
      %v1397 = vpop.f32.mrf.mxu0
      %v1398 = vadd.f32 %v1316, %v1397
      %v1399 = vand.u32 %v1075, 4294901760
      %v1400 = vsub.f32 %v1075, %v1399
      %1401 = vmatmul.f32.gmra.mxu0 %v1400
      %v1402 = vpop.f32.mrf.mxu0
      %v1403 = vadd.f32 %v1320, %v1402
      %v1404 = vand.u32 %v1076, 4294901760
      %v1405 = vsub.f32 %v1076, %v1404
      %1406 = vmatmul.f32.gmra.mxu0 %v1405
      %v1407 = vpop.f32.mrf.mxu0
      %v1408 = vadd.f32 %v1324, %v1407
      %v1409 = vand.u32 %v1077, 4294901760
      %v1410 = vsub.f32 %v1077, %v1409
      %1411 = vmatmul.f32.gmra.mxu0 %v1410
      %v1412 = vpop.f32.mrf.mxu0
      %v1413 = vadd.f32 %v1328, %v1412
      %v1414 = vand.u32 %v1078, 4294901760
      %v1415 = vsub.f32 %v1078, %v1414
      %1416 = vmatmul.f32.gmra.mxu0 %v1415
      %v1417 = vpop.f32.mrf.mxu0
      %v1418 = vadd.f32 %v1332, %v1417
      %v1419 = vand.u32 %v1079, 4294901760
      %v1420 = vsub.f32 %v1079, %v1419
      %1421 = vmatmul.f32.gmra.mxu0 %v1420
      %v1422 = vpop.f32.mrf.mxu0
      %v1423 = vadd.f32 %v1336, %v1422
      %v1424 = vand.u32 %v1080, 4294901760
      %v1425 = vsub.f32 %v1080, %v1424
      %1426 = vmatmul.f32.gmra.mxu0 %v1425
      %v1427 = vpop.f32.mrf.mxu0
      %v1428 = vadd.f32 %v1340, %v1427
      %v1429 = vand.u32 %v1081, 4294901760
      %v1430 = vsub.f32 %v1081, %v1429
      %1431 = vmatmul.f32.gmra.mxu0 %v1430
      %v1432 = vpop.f32.mrf.mxu0
      %v1433 = vadd.f32 %v1344, %v1432
      %1434 = vdwg.mxu0
      %v1435 = vand.u32 %v1112, 4294901760
      %1436 = vmatpush.msra.mxu0 %v1435
      %v1437 = vand.u32 %v1110, 4294901760
      %1438 = vmatpush.msra.mxu0 %v1437
      %v1439 = vand.u32 %v1108, 4294901760
      %1440 = vmatpush.msra.mxu0 %v1439
      %v1441 = vand.u32 %v1106, 4294901760
      %1442 = vmatpush.msra.mxu0 %v1441
      %v1443 = vand.u32 %v1104, 4294901760
      %1444 = vmatpush.msra.mxu0 %v1443
      %v1445 = vand.u32 %v1102, 4294901760
      %1446 = vmatpush.msra.mxu0 %v1445
      %v1447 = vand.u32 %v1100, 4294901760
      %1448 = vmatpush.msra.mxu0 %v1447
      %v1449 = vand.u32 %v1098, 4294901760
      %1450 = vmatpush.msra.mxu0 %v1449
      %v1451 = vand.u32 %v1096, 4294901760
      %1452 = vmatpush.msra.mxu0 %v1451
      %v1453 = vand.u32 %v1094, 4294901760
      %1454 = vmatpush.msra.mxu0 %v1453
      %v1455 = vand.u32 %v1092, 4294901760
      %1456 = vmatpush.msra.mxu0 %v1455
      %v1457 = vand.u32 %v1090, 4294901760
      %1458 = vmatpush.msra.mxu0 %v1457
      %v1459 = vand.u32 %v1088, 4294901760
      %1460 = vmatpush.msra.mxu0 %v1459
      %v1461 = vand.u32 %v1086, 4294901760
      %1462 = vmatpush.msra.mxu0 %v1461
      %v1463 = vand.u32 %v1084, 4294901760
      %1464 = vmatpush.msra.mxu0 %v1463
      %v1465 = vand.u32 %v1082, 4294901760
      %1466 = vmatpush.msra.mxu0 %v1465
      %v1467 = vand.u32 %v1074, 4294901760
      %v1468 = vsub.f32 %v1074, %v1467
      %v1469 = vand.u32 %v1468, 4294901760
      %1470 = vmatmul.f32.gmra.mxu0 %v1469
      %v1471 = vpop.f32.mrf.mxu0
      %v1472 = vadd.f32 %v1398, %v1471
      %v1473 = vand.u32 %v1075, 4294901760
      %v1474 = vsub.f32 %v1075, %v1473
      %v1475 = vand.u32 %v1474, 4294901760
      %1476 = vmatmul.f32.gmra.mxu0 %v1475
      %v1477 = vpop.f32.mrf.mxu0
      %v1478 = vadd.f32 %v1403, %v1477
      %v1479 = vand.u32 %v1076, 4294901760
      %v1480 = vsub.f32 %v1076, %v1479
      %v1481 = vand.u32 %v1480, 4294901760
      %1482 = vmatmul.f32.gmra.mxu0 %v1481
      %v1483 = vpop.f32.mrf.mxu0
      %v1484 = vadd.f32 %v1408, %v1483
      %v1485 = vand.u32 %v1077, 4294901760
      %v1486 = vsub.f32 %v1077, %v1485
      %v1487 = vand.u32 %v1486, 4294901760
      %1488 = vmatmul.f32.gmra.mxu0 %v1487
      %v1489 = vpop.f32.mrf.mxu0
      %v1490 = vadd.f32 %v1413, %v1489
      %v1491 = vand.u32 %v1078, 4294901760
      %v1492 = vsub.f32 %v1078, %v1491
      %v1493 = vand.u32 %v1492, 4294901760
      %1494 = vmatmul.f32.gmra.mxu0 %v1493
      %v1495 = vpop.f32.mrf.mxu0
      %v1496 = vadd.f32 %v1418, %v1495
      %v1497 = vand.u32 %v1079, 4294901760
      %v1498 = vsub.f32 %v1079, %v1497
      %v1499 = vand.u32 %v1498, 4294901760
      %1500 = vmatmul.f32.gmra.mxu0 %v1499
      %v1501 = vpop.f32.mrf.mxu0
      %v1502 = vadd.f32 %v1423, %v1501
      %v1503 = vand.u32 %v1080, 4294901760
      %v1504 = vsub.f32 %v1080, %v1503
      %v1505 = vand.u32 %v1504, 4294901760
      %1506 = vmatmul.f32.gmra.mxu0 %v1505
      %v1507 = vpop.f32.mrf.mxu0
      %v1508 = vadd.f32 %v1428, %v1507
      %v1509 = vand.u32 %v1081, 4294901760
      %v1510 = vsub.f32 %v1081, %v1509
      %v1511 = vand.u32 %v1510, 4294901760
      %1512 = vmatmul.f32.gmra.mxu0 %v1511
      %v1513 = vpop.f32.mrf.mxu0
      %v1514 = vadd.f32 %v1433, %v1513
      %1515 = vdwg.mxu0
      %v1516 = vand.u32 %v1112, 4294901760
      %v1517 = vsub.f32 %v1112, %v1516
      %v1518 = vand.u32 %v1517, 4294901760
      %1519 = vmatpush.msra.mxu0 %v1518
      %v1520 = vand.u32 %v1110, 4294901760
      %v1521 = vsub.f32 %v1110, %v1520
      %v1522 = vand.u32 %v1521, 4294901760
      %1523 = vmatpush.msra.mxu0 %v1522
      %v1524 = vand.u32 %v1108, 4294901760
      %v1525 = vsub.f32 %v1108, %v1524
      %v1526 = vand.u32 %v1525, 4294901760
      %1527 = vmatpush.msra.mxu0 %v1526
      %v1528 = vand.u32 %v1106, 4294901760
      %v1529 = vsub.f32 %v1106, %v1528
      %v1530 = vand.u32 %v1529, 4294901760
      %1531 = vmatpush.msra.mxu0 %v1530
      %v1532 = vand.u32 %v1104, 4294901760
      %v1533 = vsub.f32 %v1104, %v1532
      %v1534 = vand.u32 %v1533, 4294901760
      %1535 = vmatpush.msra.mxu0 %v1534
      %v1536 = vand.u32 %v1102, 4294901760
      %v1537 = vsub.f32 %v1102, %v1536
      %v1538 = vand.u32 %v1537, 4294901760
      %1539 = vmatpush.msra.mxu0 %v1538
      %v1540 = vand.u32 %v1100, 4294901760
      %v1541 = vsub.f32 %v1100, %v1540
      %v1542 = vand.u32 %v1541, 4294901760
      %1543 = vmatpush.msra.mxu0 %v1542
      %v1544 = vand.u32 %v1098, 4294901760
      %v1545 = vsub.f32 %v1098, %v1544
      %v1546 = vand.u32 %v1545, 4294901760
      %1547 = vmatpush.msra.mxu0 %v1546
      %v1548 = vand.u32 %v1096, 4294901760
      %v1549 = vsub.f32 %v1096, %v1548
      %v1550 = vand.u32 %v1549, 4294901760
      %1551 = vmatpush.msra.mxu0 %v1550
      %v1552 = vand.u32 %v1094, 4294901760
      %v1553 = vsub.f32 %v1094, %v1552
      %v1554 = vand.u32 %v1553, 4294901760
      %1555 = vmatpush.msra.mxu0 %v1554
      %v1556 = vand.u32 %v1092, 4294901760
      %v1557 = vsub.f32 %v1092, %v1556
      %v1558 = vand.u32 %v1557, 4294901760
      %1559 = vmatpush.msra.mxu0 %v1558
      %v1560 = vand.u32 %v1090, 4294901760
      %v1561 = vsub.f32 %v1090, %v1560
      %v1562 = vand.u32 %v1561, 4294901760
      %1563 = vmatpush.msra.mxu0 %v1562
      %v1564 = vand.u32 %v1088, 4294901760
      %v1565 = vsub.f32 %v1088, %v1564
      %v1566 = vand.u32 %v1565, 4294901760
      %1567 = vmatpush.msra.mxu0 %v1566
      %v1568 = vand.u32 %v1086, 4294901760
      %v1569 = vsub.f32 %v1086, %v1568
      %v1570 = vand.u32 %v1569, 4294901760
      %1571 = vmatpush.msra.mxu0 %v1570
      %v1572 = vand.u32 %v1084, 4294901760
      %v1573 = vsub.f32 %v1084, %v1572
      %v1574 = vand.u32 %v1573, 4294901760
      %1575 = vmatpush.msra.mxu0 %v1574
      %v1576 = vand.u32 %v1082, 4294901760
      %v1577 = vsub.f32 %v1082, %v1576
      %v1578 = vand.u32 %v1577, 4294901760
      %1579 = vmatpush.msra.mxu0 %v1578
      %v1580 = vand.u32 %v1074, 4294901760
      %1581 = vmatmul.f32.gmra.mxu0 %v1580
      %v1582 = vpop.f32.mrf.mxu0
      %v1583 = vadd.f32 %v1472, %v1582
      %v1584 = vand.u32 %v1075, 4294901760
      %1585 = vmatmul.f32.gmra.mxu0 %v1584
      %v1586 = vpop.f32.mrf.mxu0
      %v1587 = vadd.f32 %v1478, %v1586
      %v1588 = vand.u32 %v1076, 4294901760
      %1589 = vmatmul.f32.gmra.mxu0 %v1588
      %v1590 = vpop.f32.mrf.mxu0
      %v1591 = vadd.f32 %v1484, %v1590
      %v1592 = vand.u32 %v1077, 4294901760
      %1593 = vmatmul.f32.gmra.mxu0 %v1592
      %v1594 = vpop.f32.mrf.mxu0
      %v1595 = vadd.f32 %v1490, %v1594
      %v1596 = vand.u32 %v1078, 4294901760
      %1597 = vmatmul.f32.gmra.mxu0 %v1596
      %v1598 = vpop.f32.mrf.mxu0
      %v1599 = vadd.f32 %v1496, %v1598
      %v1600 = vand.u32 %v1079, 4294901760
      %1601 = vmatmul.f32.gmra.mxu0 %v1600
      %v1602 = vpop.f32.mrf.mxu0
      %v1603 = vadd.f32 %v1502, %v1602
      %v1604 = vand.u32 %v1080, 4294901760
      %1605 = vmatmul.f32.gmra.mxu0 %v1604
      %v1606 = vpop.f32.mrf.mxu0
      %v1607 = vadd.f32 %v1508, %v1606
      %v1608 = vand.u32 %v1081, 4294901760
      %1609 = vmatmul.f32.gmra.mxu0 %v1608
      %v1610 = vpop.f32.mrf.mxu0
      %v1611 = vadd.f32 %v1514, %v1610
      %1612 = vdwg.mxu0
      %v1613 = vand.u32 %v1112, 4294901760
      %1614 = vmatpush.msra.mxu0 %v1613
      %v1615 = vand.u32 %v1110, 4294901760
      %1616 = vmatpush.msra.mxu0 %v1615
      %v1617 = vand.u32 %v1108, 4294901760
      %1618 = vmatpush.msra.mxu0 %v1617
      %v1619 = vand.u32 %v1106, 4294901760
      %1620 = vmatpush.msra.mxu0 %v1619
      %v1621 = vand.u32 %v1104, 4294901760
      %1622 = vmatpush.msra.mxu0 %v1621
      %v1623 = vand.u32 %v1102, 4294901760
      %1624 = vmatpush.msra.mxu0 %v1623
      %v1625 = vand.u32 %v1100, 4294901760
      %1626 = vmatpush.msra.mxu0 %v1625
      %v1627 = vand.u32 %v1098, 4294901760
      %1628 = vmatpush.msra.mxu0 %v1627
      %v1629 = vand.u32 %v1096, 4294901760
      %1630 = vmatpush.msra.mxu0 %v1629
      %v1631 = vand.u32 %v1094, 4294901760
      %1632 = vmatpush.msra.mxu0 %v1631
      %v1633 = vand.u32 %v1092, 4294901760
      %1634 = vmatpush.msra.mxu0 %v1633
      %v1635 = vand.u32 %v1090, 4294901760
      %1636 = vmatpush.msra.mxu0 %v1635
      %v1637 = vand.u32 %v1088, 4294901760
      %1638 = vmatpush.msra.mxu0 %v1637
      %v1639 = vand.u32 %v1086, 4294901760
      %1640 = vmatpush.msra.mxu0 %v1639
      %v1641 = vand.u32 %v1084, 4294901760
      %1642 = vmatpush.msra.mxu0 %v1641
      %v1643 = vand.u32 %v1082, 4294901760
      %1644 = vmatpush.msra.mxu0 %v1643
      %v1645 = vand.u32 %v1074, 4294901760
      %1646 = vmatmul.f32.gmra.mxu0 %v1645
      %v1647 = vpop.f32.mrf.mxu0
      %v1648 = vadd.f32 %v1583, %v1647
      %v1649 = vand.u32 %v1075, 4294901760
      %1650 = vmatmul.f32.gmra.mxu0 %v1649
      %v1651 = vpop.f32.mrf.mxu0
      %v1652 = vadd.f32 %v1587, %v1651
      %v1653 = vand.u32 %v1076, 4294901760
      %1654 = vmatmul.f32.gmra.mxu0 %v1653
      %v1655 = vpop.f32.mrf.mxu0
      %v1656 = vadd.f32 %v1591, %v1655
      %v1657 = vand.u32 %v1077, 4294901760
      %1658 = vmatmul.f32.gmra.mxu0 %v1657
      %v1659 = vpop.f32.mrf.mxu0
      %v1660 = vadd.f32 %v1595, %v1659
      %v1661 = vand.u32 %v1078, 4294901760
      %1662 = vmatmul.f32.gmra.mxu0 %v1661
      %v1663 = vpop.f32.mrf.mxu0
      %v1664 = vadd.f32 %v1599, %v1663
      %v1665 = vand.u32 %v1079, 4294901760
      %1666 = vmatmul.f32.gmra.mxu0 %v1665
      %v1667 = vpop.f32.mrf.mxu0
      %v1668 = vadd.f32 %v1603, %v1667
      %v1669 = vand.u32 %v1080, 4294901760
      %1670 = vmatmul.f32.gmra.mxu0 %v1669
      %v1671 = vpop.f32.mrf.mxu0
      %v1672 = vadd.f32 %v1607, %v1671
      %v1673 = vand.u32 %v1081, 4294901760
      %1674 = vmatmul.f32.gmra.mxu0 %v1673
      %v1675 = vpop.f32.mrf.mxu0
      %v1676 = vadd.f32 %v1611, %v1675
      %1677 = vdwg.mxu0
      %v1678 = vand.u32 %v1113, 4294901760
      %1679 = vmatpush.msra.mxu0 %v1678
      %v1680 = vand.u32 %v1111, 4294901760
      %1681 = vmatpush.msra.mxu0 %v1680
      %v1682 = vand.u32 %v1109, 4294901760
      %1683 = vmatpush.msra.mxu0 %v1682
      %v1684 = vand.u32 %v1107, 4294901760
      %1685 = vmatpush.msra.mxu0 %v1684
      %v1686 = vand.u32 %v1105, 4294901760
      %1687 = vmatpush.msra.mxu0 %v1686
      %v1688 = vand.u32 %v1103, 4294901760
      %1689 = vmatpush.msra.mxu0 %v1688
      %v1690 = vand.u32 %v1101, 4294901760
      %1691 = vmatpush.msra.mxu0 %v1690
      %v1692 = vand.u32 %v1099, 4294901760
      %1693 = vmatpush.msra.mxu0 %v1692
      %v1694 = vand.u32 %v1097, 4294901760
      %1695 = vmatpush.msra.mxu0 %v1694
      %v1696 = vand.u32 %v1095, 4294901760
      %1697 = vmatpush.msra.mxu0 %v1696
      %v1698 = vand.u32 %v1093, 4294901760
      %1699 = vmatpush.msra.mxu0 %v1698
      %v1700 = vand.u32 %v1091, 4294901760
      %1701 = vmatpush.msra.mxu0 %v1700
      %v1702 = vand.u32 %v1089, 4294901760
      %1703 = vmatpush.msra.mxu0 %v1702
      %v1704 = vand.u32 %v1087, 4294901760
      %1705 = vmatpush.msra.mxu0 %v1704
      %v1706 = vand.u32 %v1085, 4294901760
      %1707 = vmatpush.msra.mxu0 %v1706
      %v1708 = vand.u32 %v1083, 4294901760
      %1709 = vmatpush.msra.mxu0 %v1708
      %v1710 = vand.u32 %v1074, 4294901760
      %v1711 = vsub.f32 %v1074, %v1710
      %v1712 = vand.u32 %v1711, 4294901760
      %v1713 = vsub.f32 %v1711, %v1712
      %v1714 = vand.u32 %v1713, 4294901760
      %1715 = vmatmul.f32.gmra.mxu0 %v1714
      %v1716 = vpop.f32.mrf.mxu0
      %v1717 = vadd.f32 %v1117, %v1716
      %v1718 = vand.u32 %v1075, 4294901760
      %v1719 = vsub.f32 %v1075, %v1718
      %v1720 = vand.u32 %v1719, 4294901760
      %v1721 = vsub.f32 %v1719, %v1720
      %v1722 = vand.u32 %v1721, 4294901760
      %1723 = vmatmul.f32.gmra.mxu0 %v1722
      %v1724 = vpop.f32.mrf.mxu0
      %v1725 = vadd.f32 %v1117, %v1724
      %v1726 = vand.u32 %v1076, 4294901760
      %v1727 = vsub.f32 %v1076, %v1726
      %v1728 = vand.u32 %v1727, 4294901760
      %v1729 = vsub.f32 %v1727, %v1728
      %v1730 = vand.u32 %v1729, 4294901760
      %1731 = vmatmul.f32.gmra.mxu0 %v1730
      %v1732 = vpop.f32.mrf.mxu0
      %v1733 = vadd.f32 %v1117, %v1732
      %v1734 = vand.u32 %v1077, 4294901760
      %v1735 = vsub.f32 %v1077, %v1734
      %v1736 = vand.u32 %v1735, 4294901760
      %v1737 = vsub.f32 %v1735, %v1736
      %v1738 = vand.u32 %v1737, 4294901760
      %1739 = vmatmul.f32.gmra.mxu0 %v1738
      %v1740 = vpop.f32.mrf.mxu0
      %v1741 = vadd.f32 %v1117, %v1740
      %v1742 = vand.u32 %v1078, 4294901760
      %v1743 = vsub.f32 %v1078, %v1742
      %v1744 = vand.u32 %v1743, 4294901760
      %v1745 = vsub.f32 %v1743, %v1744
      %v1746 = vand.u32 %v1745, 4294901760
      %1747 = vmatmul.f32.gmra.mxu0 %v1746
      %v1748 = vpop.f32.mrf.mxu0
      %v1749 = vadd.f32 %v1117, %v1748
      %v1750 = vand.u32 %v1079, 4294901760
      %v1751 = vsub.f32 %v1079, %v1750
      %v1752 = vand.u32 %v1751, 4294901760
      %v1753 = vsub.f32 %v1751, %v1752
      %v1754 = vand.u32 %v1753, 4294901760
      %1755 = vmatmul.f32.gmra.mxu0 %v1754
      %v1756 = vpop.f32.mrf.mxu0
      %v1757 = vadd.f32 %v1117, %v1756
      %v1758 = vand.u32 %v1080, 4294901760
      %v1759 = vsub.f32 %v1080, %v1758
      %v1760 = vand.u32 %v1759, 4294901760
      %v1761 = vsub.f32 %v1759, %v1760
      %v1762 = vand.u32 %v1761, 4294901760
      %1763 = vmatmul.f32.gmra.mxu0 %v1762
      %v1764 = vpop.f32.mrf.mxu0
      %v1765 = vadd.f32 %v1117, %v1764
      %v1766 = vand.u32 %v1081, 4294901760
      %v1767 = vsub.f32 %v1081, %v1766
      %v1768 = vand.u32 %v1767, 4294901760
      %v1769 = vsub.f32 %v1767, %v1768
      %v1770 = vand.u32 %v1769, 4294901760
      %1771 = vmatmul.f32.gmra.mxu0 %v1770
      %v1772 = vpop.f32.mrf.mxu0
      %v1773 = vadd.f32 %v1117, %v1772
      %1774 = vdwg.mxu0
      %v1775 = vand.u32 %v1113, 4294901760
      %v1776 = vsub.f32 %v1113, %v1775
      %v1777 = vand.u32 %v1776, 4294901760
      %v1778 = vsub.f32 %v1776, %v1777
      %v1779 = vand.u32 %v1778, 4294901760
      %1780 = vmatpush.msra.mxu0 %v1779
      %v1781 = vand.u32 %v1111, 4294901760
      %v1782 = vsub.f32 %v1111, %v1781
      %v1783 = vand.u32 %v1782, 4294901760
      %v1784 = vsub.f32 %v1782, %v1783
      %v1785 = vand.u32 %v1784, 4294901760
      %1786 = vmatpush.msra.mxu0 %v1785
      %v1787 = vand.u32 %v1109, 4294901760
      %v1788 = vsub.f32 %v1109, %v1787
      %v1789 = vand.u32 %v1788, 4294901760
      %v1790 = vsub.f32 %v1788, %v1789
      %v1791 = vand.u32 %v1790, 4294901760
      %1792 = vmatpush.msra.mxu0 %v1791
      %v1793 = vand.u32 %v1107, 4294901760
      %v1794 = vsub.f32 %v1107, %v1793
      %v1795 = vand.u32 %v1794, 4294901760
      %v1796 = vsub.f32 %v1794, %v1795
      %v1797 = vand.u32 %v1796, 4294901760
      %1798 = vmatpush.msra.mxu0 %v1797
      %v1799 = vand.u32 %v1105, 4294901760
      %v1800 = vsub.f32 %v1105, %v1799
      %v1801 = vand.u32 %v1800, 4294901760
      %v1802 = vsub.f32 %v1800, %v1801
      %v1803 = vand.u32 %v1802, 4294901760
      %1804 = vmatpush.msra.mxu0 %v1803
      %v1805 = vand.u32 %v1103, 4294901760
      %v1806 = vsub.f32 %v1103, %v1805
      %v1807 = vand.u32 %v1806, 4294901760
      %v1808 = vsub.f32 %v1806, %v1807
      %v1809 = vand.u32 %v1808, 4294901760
      %1810 = vmatpush.msra.mxu0 %v1809
      %v1811 = vand.u32 %v1101, 4294901760
      %v1812 = vsub.f32 %v1101, %v1811
      %v1813 = vand.u32 %v1812, 4294901760
      %v1814 = vsub.f32 %v1812, %v1813
      %v1815 = vand.u32 %v1814, 4294901760
      %1816 = vmatpush.msra.mxu0 %v1815
      %v1817 = vand.u32 %v1099, 4294901760
      %v1818 = vsub.f32 %v1099, %v1817
      %v1819 = vand.u32 %v1818, 4294901760
      %v1820 = vsub.f32 %v1818, %v1819
      %v1821 = vand.u32 %v1820, 4294901760
      %1822 = vmatpush.msra.mxu0 %v1821
      %v1823 = vand.u32 %v1097, 4294901760
      %v1824 = vsub.f32 %v1097, %v1823
      %v1825 = vand.u32 %v1824, 4294901760
      %v1826 = vsub.f32 %v1824, %v1825
      %v1827 = vand.u32 %v1826, 4294901760
      %1828 = vmatpush.msra.mxu0 %v1827
      %v1829 = vand.u32 %v1095, 4294901760
      %v1830 = vsub.f32 %v1095, %v1829
      %v1831 = vand.u32 %v1830, 4294901760
      %v1832 = vsub.f32 %v1830, %v1831
      %v1833 = vand.u32 %v1832, 4294901760
      %1834 = vmatpush.msra.mxu0 %v1833
      %v1835 = vand.u32 %v1093, 4294901760
      %v1836 = vsub.f32 %v1093, %v1835
      %v1837 = vand.u32 %v1836, 4294901760
      %v1838 = vsub.f32 %v1836, %v1837
      %v1839 = vand.u32 %v1838, 4294901760
      %1840 = vmatpush.msra.mxu0 %v1839
      %v1841 = vand.u32 %v1091, 4294901760
      %v1842 = vsub.f32 %v1091, %v1841
      %v1843 = vand.u32 %v1842, 4294901760
      %v1844 = vsub.f32 %v1842, %v1843
      %v1845 = vand.u32 %v1844, 4294901760
      %1846 = vmatpush.msra.mxu0 %v1845
      %v1847 = vand.u32 %v1089, 4294901760
      %v1848 = vsub.f32 %v1089, %v1847
      %v1849 = vand.u32 %v1848, 4294901760
      %v1850 = vsub.f32 %v1848, %v1849
      %v1851 = vand.u32 %v1850, 4294901760
      %1852 = vmatpush.msra.mxu0 %v1851
      %v1853 = vand.u32 %v1087, 4294901760
      %v1854 = vsub.f32 %v1087, %v1853
      %v1855 = vand.u32 %v1854, 4294901760
      %v1856 = vsub.f32 %v1854, %v1855
      %v1857 = vand.u32 %v1856, 4294901760
      %1858 = vmatpush.msra.mxu0 %v1857
      %v1859 = vand.u32 %v1085, 4294901760
      %v1860 = vsub.f32 %v1085, %v1859
      %v1861 = vand.u32 %v1860, 4294901760
      %v1862 = vsub.f32 %v1860, %v1861
      %v1863 = vand.u32 %v1862, 4294901760
      %1864 = vmatpush.msra.mxu0 %v1863
      %v1865 = vand.u32 %v1083, 4294901760
      %v1866 = vsub.f32 %v1083, %v1865
      %v1867 = vand.u32 %v1866, 4294901760
      %v1868 = vsub.f32 %v1866, %v1867
      %v1869 = vand.u32 %v1868, 4294901760
      %1870 = vmatpush.msra.mxu0 %v1869
      %v1871 = vand.u32 %v1074, 4294901760
      %1872 = vmatmul.f32.gmra.mxu0 %v1871
      %v1873 = vpop.f32.mrf.mxu0
      %v1874 = vadd.f32 %v1717, %v1873
      %v1875 = vand.u32 %v1075, 4294901760
      %1876 = vmatmul.f32.gmra.mxu0 %v1875
      %v1877 = vpop.f32.mrf.mxu0
      %v1878 = vadd.f32 %v1725, %v1877
      %v1879 = vand.u32 %v1076, 4294901760
      %1880 = vmatmul.f32.gmra.mxu0 %v1879
      %v1881 = vpop.f32.mrf.mxu0
      %v1882 = vadd.f32 %v1733, %v1881
      %v1883 = vand.u32 %v1077, 4294901760
      %1884 = vmatmul.f32.gmra.mxu0 %v1883
      %v1885 = vpop.f32.mrf.mxu0
      %v1886 = vadd.f32 %v1741, %v1885
      %v1887 = vand.u32 %v1078, 4294901760
      %1888 = vmatmul.f32.gmra.mxu0 %v1887
      %v1889 = vpop.f32.mrf.mxu0
      %v1890 = vadd.f32 %v1749, %v1889
      %v1891 = vand.u32 %v1079, 4294901760
      %1892 = vmatmul.f32.gmra.mxu0 %v1891
      %v1893 = vpop.f32.mrf.mxu0
      %v1894 = vadd.f32 %v1757, %v1893
      %v1895 = vand.u32 %v1080, 4294901760
      %1896 = vmatmul.f32.gmra.mxu0 %v1895
      %v1897 = vpop.f32.mrf.mxu0
      %v1898 = vadd.f32 %v1765, %v1897
      %v1899 = vand.u32 %v1081, 4294901760
      %1900 = vmatmul.f32.gmra.mxu0 %v1899
      %v1901 = vpop.f32.mrf.mxu0
      %v1902 = vadd.f32 %v1773, %v1901
      %1903 = vdwg.mxu0
      %v1904 = vand.u32 %v1113, 4294901760
      %v1905 = vsub.f32 %v1113, %v1904
      %1906 = vmatpush.msra.mxu0 %v1905
      %v1907 = vand.u32 %v1111, 4294901760
      %v1908 = vsub.f32 %v1111, %v1907
      %1909 = vmatpush.msra.mxu0 %v1908
      %v1910 = vand.u32 %v1109, 4294901760
      %v1911 = vsub.f32 %v1109, %v1910
      %1912 = vmatpush.msra.mxu0 %v1911
      %v1913 = vand.u32 %v1107, 4294901760
      %v1914 = vsub.f32 %v1107, %v1913
      %1915 = vmatpush.msra.mxu0 %v1914
      %v1916 = vand.u32 %v1105, 4294901760
      %v1917 = vsub.f32 %v1105, %v1916
      %1918 = vmatpush.msra.mxu0 %v1917
      %v1919 = vand.u32 %v1103, 4294901760
      %v1920 = vsub.f32 %v1103, %v1919
      %1921 = vmatpush.msra.mxu0 %v1920
      %v1922 = vand.u32 %v1101, 4294901760
      %v1923 = vsub.f32 %v1101, %v1922
      %1924 = vmatpush.msra.mxu0 %v1923
      %v1925 = vand.u32 %v1099, 4294901760
      %v1926 = vsub.f32 %v1099, %v1925
      %1927 = vmatpush.msra.mxu0 %v1926
      %v1928 = vand.u32 %v1097, 4294901760
      %v1929 = vsub.f32 %v1097, %v1928
      %1930 = vmatpush.msra.mxu0 %v1929
      %v1931 = vand.u32 %v1095, 4294901760
      %v1932 = vsub.f32 %v1095, %v1931
      %1933 = vmatpush.msra.mxu0 %v1932
      %v1934 = vand.u32 %v1093, 4294901760
      %v1935 = vsub.f32 %v1093, %v1934
      %1936 = vmatpush.msra.mxu0 %v1935
      %v1937 = vand.u32 %v1091, 4294901760
      %v1938 = vsub.f32 %v1091, %v1937
      %1939 = vmatpush.msra.mxu0 %v1938
      %v1940 = vand.u32 %v1089, 4294901760
      %v1941 = vsub.f32 %v1089, %v1940
      %1942 = vmatpush.msra.mxu0 %v1941
      %v1943 = vand.u32 %v1087, 4294901760
      %v1944 = vsub.f32 %v1087, %v1943
      %1945 = vmatpush.msra.mxu0 %v1944
      %v1946 = vand.u32 %v1085, 4294901760
      %v1947 = vsub.f32 %v1085, %v1946
      %1948 = vmatpush.msra.mxu0 %v1947
      %v1949 = vand.u32 %v1083, 4294901760
      %v1950 = vsub.f32 %v1083, %v1949
      %1951 = vmatpush.msra.mxu0 %v1950
      %v1952 = vand.u32 %v1074, 4294901760
      %v1953 = vsub.f32 %v1074, %v1952
      %1954 = vmatmul.f32.gmra.mxu0 %v1953
      %v1955 = vpop.f32.mrf.mxu0
      %v1956 = vadd.f32 %v1874, %v1955
      %v1957 = vand.u32 %v1075, 4294901760
      %v1958 = vsub.f32 %v1075, %v1957
      %1959 = vmatmul.f32.gmra.mxu0 %v1958
      %v1960 = vpop.f32.mrf.mxu0
      %v1961 = vadd.f32 %v1878, %v1960
      %v1962 = vand.u32 %v1076, 4294901760
      %v1963 = vsub.f32 %v1076, %v1962
      %1964 = vmatmul.f32.gmra.mxu0 %v1963
      %v1965 = vpop.f32.mrf.mxu0
      %v1966 = vadd.f32 %v1882, %v1965
      %v1967 = vand.u32 %v1077, 4294901760
      %v1968 = vsub.f32 %v1077, %v1967
      %1969 = vmatmul.f32.gmra.mxu0 %v1968
      %v1970 = vpop.f32.mrf.mxu0
      %v1971 = vadd.f32 %v1886, %v1970
      %v1972 = vand.u32 %v1078, 4294901760
      %v1973 = vsub.f32 %v1078, %v1972
      %1974 = vmatmul.f32.gmra.mxu0 %v1973
      %v1975 = vpop.f32.mrf.mxu0
      %v1976 = vadd.f32 %v1890, %v1975
      %v1977 = vand.u32 %v1079, 4294901760
      %v1978 = vsub.f32 %v1079, %v1977
      %1979 = vmatmul.f32.gmra.mxu0 %v1978
      %v1980 = vpop.f32.mrf.mxu0
      %v1981 = vadd.f32 %v1894, %v1980
      %v1982 = vand.u32 %v1080, 4294901760
      %v1983 = vsub.f32 %v1080, %v1982
      %1984 = vmatmul.f32.gmra.mxu0 %v1983
      %v1985 = vpop.f32.mrf.mxu0
      %v1986 = vadd.f32 %v1898, %v1985
      %v1987 = vand.u32 %v1081, 4294901760
      %v1988 = vsub.f32 %v1081, %v1987
      %1989 = vmatmul.f32.gmra.mxu0 %v1988
      %v1990 = vpop.f32.mrf.mxu0
      %v1991 = vadd.f32 %v1902, %v1990
      %1992 = vdwg.mxu0
      %v1993 = vand.u32 %v1113, 4294901760
      %1994 = vmatpush.msra.mxu0 %v1993
      %v1995 = vand.u32 %v1111, 4294901760
      %1996 = vmatpush.msra.mxu0 %v1995
      %v1997 = vand.u32 %v1109, 4294901760
      %1998 = vmatpush.msra.mxu0 %v1997
      %v1999 = vand.u32 %v1107, 4294901760
      %2000 = vmatpush.msra.mxu0 %v1999
      %v2001 = vand.u32 %v1105, 4294901760
      %2002 = vmatpush.msra.mxu0 %v2001
      %v2003 = vand.u32 %v1103, 4294901760
      %2004 = vmatpush.msra.mxu0 %v2003
      %v2005 = vand.u32 %v1101, 4294901760
      %2006 = vmatpush.msra.mxu0 %v2005
      %v2007 = vand.u32 %v1099, 4294901760
      %2008 = vmatpush.msra.mxu0 %v2007
      %v2009 = vand.u32 %v1097, 4294901760
      %2010 = vmatpush.msra.mxu0 %v2009
      %v2011 = vand.u32 %v1095, 4294901760
      %2012 = vmatpush.msra.mxu0 %v2011
      %v2013 = vand.u32 %v1093, 4294901760
      %2014 = vmatpush.msra.mxu0 %v2013
      %v2015 = vand.u32 %v1091, 4294901760
      %2016 = vmatpush.msra.mxu0 %v2015
      %v2017 = vand.u32 %v1089, 4294901760
      %2018 = vmatpush.msra.mxu0 %v2017
      %v2019 = vand.u32 %v1087, 4294901760
      %2020 = vmatpush.msra.mxu0 %v2019
      %v2021 = vand.u32 %v1085, 4294901760
      %2022 = vmatpush.msra.mxu0 %v2021
      %v2023 = vand.u32 %v1083, 4294901760
      %2024 = vmatpush.msra.mxu0 %v2023
      %v2025 = vand.u32 %v1074, 4294901760
      %v2026 = vsub.f32 %v1074, %v2025
      %v2027 = vand.u32 %v2026, 4294901760
      %2028 = vmatmul.f32.gmra.mxu0 %v2027
      %v2029 = vpop.f32.mrf.mxu0
      %v2030 = vadd.f32 %v1956, %v2029
      %v2031 = vand.u32 %v1075, 4294901760
      %v2032 = vsub.f32 %v1075, %v2031
      %v2033 = vand.u32 %v2032, 4294901760
      %2034 = vmatmul.f32.gmra.mxu0 %v2033
      %v2035 = vpop.f32.mrf.mxu0
      %v2036 = vadd.f32 %v1961, %v2035
      %v2037 = vand.u32 %v1076, 4294901760
      %v2038 = vsub.f32 %v1076, %v2037
      %v2039 = vand.u32 %v2038, 4294901760
      %2040 = vmatmul.f32.gmra.mxu0 %v2039
      %v2041 = vpop.f32.mrf.mxu0
      %v2042 = vadd.f32 %v1966, %v2041
      %v2043 = vand.u32 %v1077, 4294901760
      %v2044 = vsub.f32 %v1077, %v2043
      %v2045 = vand.u32 %v2044, 4294901760
      %2046 = vmatmul.f32.gmra.mxu0 %v2045
      %v2047 = vpop.f32.mrf.mxu0
      %v2048 = vadd.f32 %v1971, %v2047
      %v2049 = vand.u32 %v1078, 4294901760
      %v2050 = vsub.f32 %v1078, %v2049
      %v2051 = vand.u32 %v2050, 4294901760
      %2052 = vmatmul.f32.gmra.mxu0 %v2051
      %v2053 = vpop.f32.mrf.mxu0
      %v2054 = vadd.f32 %v1976, %v2053
      %v2055 = vand.u32 %v1079, 4294901760
      %v2056 = vsub.f32 %v1079, %v2055
      %v2057 = vand.u32 %v2056, 4294901760
      %2058 = vmatmul.f32.gmra.mxu0 %v2057
      %v2059 = vpop.f32.mrf.mxu0
      %v2060 = vadd.f32 %v1981, %v2059
      %v2061 = vand.u32 %v1080, 4294901760
      %v2062 = vsub.f32 %v1080, %v2061
      %v2063 = vand.u32 %v2062, 4294901760
      %2064 = vmatmul.f32.gmra.mxu0 %v2063
      %v2065 = vpop.f32.mrf.mxu0
      %v2066 = vadd.f32 %v1986, %v2065
      %v2067 = vand.u32 %v1081, 4294901760
      %v2068 = vsub.f32 %v1081, %v2067
      %v2069 = vand.u32 %v2068, 4294901760
      %2070 = vmatmul.f32.gmra.mxu0 %v2069
      %v2071 = vpop.f32.mrf.mxu0
      %v2072 = vadd.f32 %v1991, %v2071
      %2073 = vdwg.mxu0
      %v2074 = vand.u32 %v1113, 4294901760
      %v2075 = vsub.f32 %v1113, %v2074
      %v2076 = vand.u32 %v2075, 4294901760
      %2077 = vmatpush.msra.mxu0 %v2076
      %v2078 = vand.u32 %v1111, 4294901760
      %v2079 = vsub.f32 %v1111, %v2078
      %v2080 = vand.u32 %v2079, 4294901760
      %2081 = vmatpush.msra.mxu0 %v2080
      %v2082 = vand.u32 %v1109, 4294901760
      %v2083 = vsub.f32 %v1109, %v2082
      %v2084 = vand.u32 %v2083, 4294901760
      %2085 = vmatpush.msra.mxu0 %v2084
      %v2086 = vand.u32 %v1107, 4294901760
      %v2087 = vsub.f32 %v1107, %v2086
      %v2088 = vand.u32 %v2087, 4294901760
      %2089 = vmatpush.msra.mxu0 %v2088
      %v2090 = vand.u32 %v1105, 4294901760
      %v2091 = vsub.f32 %v1105, %v2090
      %v2092 = vand.u32 %v2091, 4294901760
      %2093 = vmatpush.msra.mxu0 %v2092
      %v2094 = vand.u32 %v1103, 4294901760
      %v2095 = vsub.f32 %v1103, %v2094
      %v2096 = vand.u32 %v2095, 4294901760
      %2097 = vmatpush.msra.mxu0 %v2096
      %v2098 = vand.u32 %v1101, 4294901760
      %v2099 = vsub.f32 %v1101, %v2098
      %v2100 = vand.u32 %v2099, 4294901760
      %2101 = vmatpush.msra.mxu0 %v2100
      %v2102 = vand.u32 %v1099, 4294901760
      %v2103 = vsub.f32 %v1099, %v2102
      %v2104 = vand.u32 %v2103, 4294901760
      %2105 = vmatpush.msra.mxu0 %v2104
      %v2106 = vand.u32 %v1097, 4294901760
      %v2107 = vsub.f32 %v1097, %v2106
      %v2108 = vand.u32 %v2107, 4294901760
      %2109 = vmatpush.msra.mxu0 %v2108
      %v2110 = vand.u32 %v1095, 4294901760
      %v2111 = vsub.f32 %v1095, %v2110
      %v2112 = vand.u32 %v2111, 4294901760
      %2113 = vmatpush.msra.mxu0 %v2112
      %v2114 = vand.u32 %v1093, 4294901760
      %v2115 = vsub.f32 %v1093, %v2114
      %v2116 = vand.u32 %v2115, 4294901760
      %2117 = vmatpush.msra.mxu0 %v2116
      %v2118 = vand.u32 %v1091, 4294901760
      %v2119 = vsub.f32 %v1091, %v2118
      %v2120 = vand.u32 %v2119, 4294901760
      %2121 = vmatpush.msra.mxu0 %v2120
      %v2122 = vand.u32 %v1089, 4294901760
      %v2123 = vsub.f32 %v1089, %v2122
      %v2124 = vand.u32 %v2123, 4294901760
      %2125 = vmatpush.msra.mxu0 %v2124
      %v2126 = vand.u32 %v1087, 4294901760
      %v2127 = vsub.f32 %v1087, %v2126
      %v2128 = vand.u32 %v2127, 4294901760
      %2129 = vmatpush.msra.mxu0 %v2128
      %v2130 = vand.u32 %v1085, 4294901760
      %v2131 = vsub.f32 %v1085, %v2130
      %v2132 = vand.u32 %v2131, 4294901760
      %2133 = vmatpush.msra.mxu0 %v2132
      %v2134 = vand.u32 %v1083, 4294901760
      %v2135 = vsub.f32 %v1083, %v2134
      %v2136 = vand.u32 %v2135, 4294901760
      %2137 = vmatpush.msra.mxu0 %v2136
      %v2138 = vand.u32 %v1074, 4294901760
      %2139 = vmatmul.f32.gmra.mxu0 %v2138
      %v2140 = vpop.f32.mrf.mxu0
      %v2141 = vadd.f32 %v2030, %v2140
      %v2142 = vand.u32 %v1075, 4294901760
      %2143 = vmatmul.f32.gmra.mxu0 %v2142
      %v2144 = vpop.f32.mrf.mxu0
      %v2145 = vadd.f32 %v2036, %v2144
      %v2146 = vand.u32 %v1076, 4294901760
      %2147 = vmatmul.f32.gmra.mxu0 %v2146
      %v2148 = vpop.f32.mrf.mxu0
      %v2149 = vadd.f32 %v2042, %v2148
      %v2150 = vand.u32 %v1077, 4294901760
      %2151 = vmatmul.f32.gmra.mxu0 %v2150
      %v2152 = vpop.f32.mrf.mxu0
      %v2153 = vadd.f32 %v2048, %v2152
      %v2154 = vand.u32 %v1078, 4294901760
      %2155 = vmatmul.f32.gmra.mxu0 %v2154
      %v2156 = vpop.f32.mrf.mxu0
      %v2157 = vadd.f32 %v2054, %v2156
      %v2158 = vand.u32 %v1079, 4294901760
      %2159 = vmatmul.f32.gmra.mxu0 %v2158
      %v2160 = vpop.f32.mrf.mxu0
      %v2161 = vadd.f32 %v2060, %v2160
      %v2162 = vand.u32 %v1080, 4294901760
      %2163 = vmatmul.f32.gmra.mxu0 %v2162
      %v2164 = vpop.f32.mrf.mxu0
      %v2165 = vadd.f32 %v2066, %v2164
      %v2166 = vand.u32 %v1081, 4294901760
      %2167 = vmatmul.f32.gmra.mxu0 %v2166
      %v2168 = vpop.f32.mrf.mxu0
      %v2169 = vadd.f32 %v2072, %v2168
      %2170 = vdwg.mxu0
      %v2171 = vand.u32 %v1113, 4294901760
      %2172 = vmatpush.msra.mxu0 %v2171
      %v2173 = vand.u32 %v1111, 4294901760
      %2174 = vmatpush.msra.mxu0 %v2173
      %v2175 = vand.u32 %v1109, 4294901760
      %2176 = vmatpush.msra.mxu0 %v2175
      %v2177 = vand.u32 %v1107, 4294901760
      %2178 = vmatpush.msra.mxu0 %v2177
      %v2179 = vand.u32 %v1105, 4294901760
      %2180 = vmatpush.msra.mxu0 %v2179
      %v2181 = vand.u32 %v1103, 4294901760
      %2182 = vmatpush.msra.mxu0 %v2181
      %v2183 = vand.u32 %v1101, 4294901760
      %2184 = vmatpush.msra.mxu0 %v2183
      %v2185 = vand.u32 %v1099, 4294901760
      %2186 = vmatpush.msra.mxu0 %v2185
      %v2187 = vand.u32 %v1097, 4294901760
      %2188 = vmatpush.msra.mxu0 %v2187
      %v2189 = vand.u32 %v1095, 4294901760
      %2190 = vmatpush.msra.mxu0 %v2189
      %v2191 = vand.u32 %v1093, 4294901760
      %2192 = vmatpush.msra.mxu0 %v2191
      %v2193 = vand.u32 %v1091, 4294901760
      %2194 = vmatpush.msra.mxu0 %v2193
      %v2195 = vand.u32 %v1089, 4294901760
      %2196 = vmatpush.msra.mxu0 %v2195
      %v2197 = vand.u32 %v1087, 4294901760
      %2198 = vmatpush.msra.mxu0 %v2197
      %v2199 = vand.u32 %v1085, 4294901760
      %2200 = vmatpush.msra.mxu0 %v2199
      %v2201 = vand.u32 %v1083, 4294901760
      %2202 = vmatpush.msra.mxu0 %v2201
      %v2203 = vand.u32 %v1074, 4294901760
      %2204 = vmatmul.f32.gmra.mxu0 %v2203
      %v2205 = vpop.f32.mrf.mxu0
      %v2206 = vadd.f32 %v2141, %v2205
      %v2207 = vand.u32 %v1075, 4294901760
      %2208 = vmatmul.f32.gmra.mxu0 %v2207
      %v2209 = vpop.f32.mrf.mxu0
      %v2210 = vadd.f32 %v2145, %v2209
      %v2211 = vand.u32 %v1076, 4294901760
      %2212 = vmatmul.f32.gmra.mxu0 %v2211
      %v2213 = vpop.f32.mrf.mxu0
      %v2214 = vadd.f32 %v2149, %v2213
      %v2215 = vand.u32 %v1077, 4294901760
      %2216 = vmatmul.f32.gmra.mxu0 %v2215
      %v2217 = vpop.f32.mrf.mxu0
      %v2218 = vadd.f32 %v2153, %v2217
      %v2219 = vand.u32 %v1078, 4294901760
      %2220 = vmatmul.f32.gmra.mxu0 %v2219
      %v2221 = vpop.f32.mrf.mxu0
      %v2222 = vadd.f32 %v2157, %v2221
      %v2223 = vand.u32 %v1079, 4294901760
      %2224 = vmatmul.f32.gmra.mxu0 %v2223
      %v2225 = vpop.f32.mrf.mxu0
      %v2226 = vadd.f32 %v2161, %v2225
      %v2227 = vand.u32 %v1080, 4294901760
      %2228 = vmatmul.f32.gmra.mxu0 %v2227
      %v2229 = vpop.f32.mrf.mxu0
      %v2230 = vadd.f32 %v2165, %v2229
      %v2231 = vand.u32 %v1081, 4294901760
      %2232 = vmatmul.f32.gmra.mxu0 %v2231
      %v2233 = vpop.f32.mrf.mxu0
      %v2234 = vadd.f32 %v2169, %v2233
      %2235 = vdwg.mxu0
      %v2236 = vld [vmem:[%s450] sm:$0xff]
      %v2237 = vld [vmem:[%s450 + $0x8] sm:$0xff]
      %v2238 = vld [vmem:[%s450 + $0x10] sm:$0xff]
      %s2239 = smul.u32 %s28, 8
      %s2240 = sshra.s32 %s2239, 3
      %s2241 = sand.u32 %s2239, 7
      %s2242 = smul.u32 %s2240, 3
      %s2243 = smul.addr %s2242, 8
      %s2244 = scalar_lea.vmem %s450, %s2243
      %v2245 = vld [vmem:[%s2244] sm:$0xff]
      %v2247 = vrot.slane %v2245, 1
      %v2248 = vrot.slane %v2245, 2
      %v2249 = vrot.slane %v2245, 3
      %v2250 = vrot.slane %v2245, 4
      %v2251 = vrot.slane %v2245, 5
      %v2252 = vrot.slane %v2245, 6
      %v2253 = vrot.slane %v2245, 7
      %v2254 = vperm.slane %v2245, 0
      %v2255 = vperm.slane %v2247, 0
      %v2256 = vperm.slane %v2248, 0
      %v2257 = vperm.slane %v2249, 0
      %v2258 = vperm.slane %v2250, 0
      %v2259 = vperm.slane %v2251, 0
      %v2260 = vperm.slane %v2252, 0
      %v2261 = vperm.slane %v2253, 0
      %v2270 = vmul.f32 %v2254, %v2237
      %v2271 = vmul.f32 %v2255, %v2237
      %v2272 = vmul.f32 %v2256, %v2237
      %v2273 = vmul.f32 %v2257, %v2237
      %v2274 = vmul.f32 %v2258, %v2237
      %v2275 = vmul.f32 %v2259, %v2237
      %v2276 = vmul.f32 %v2260, %v2237
      %v2277 = vmul.f32 %v2261, %v2237
      %v2278 = vld [vmem:[%s0] sm:$0xff]
      %v2279 = vld [vmem:[%s0 + $0x8] sm:$0xff]
      %v2280 = vld [vmem:[%s0 + $0x10] sm:$0xff]
      %v2281 = vld [vmem:[%s0 + $0x18] sm:$0xff]
      %v2282 = vld [vmem:[%s0 + $0x20] sm:$0xff]
      %v2283 = vld [vmem:[%s0 + $0x28] sm:$0xff]
      %v2284 = vld [vmem:[%s0 + $0x30] sm:$0xff]
      %v2285 = vld [vmem:[%s0 + $0x38] sm:$0xff]
      %v2286 = vld [vmem:[%s0 + $0x40] sm:$0xff]
      %v2287 = vld [vmem:[%s0 + $0x48] sm:$0xff]
      %v2288 = vld [vmem:[%s0 + $0x50] sm:$0xff]
      %v2289 = vld [vmem:[%s0 + $0x58] sm:$0xff]
      %v2290 = vld [vmem:[%s0 + $0x60] sm:$0xff]
      %v2291 = vld [vmem:[%s0 + $0x68] sm:$0xff]
      %v2292 = vld [vmem:[%s0 + $0x70] sm:$0xff]
      %v2293 = vld [vmem:[%s0 + $0x78] sm:$0xff]
      %v2294 = vmul.f32 %v2206, %v2236
      %v2295 = vmul.f32 %v2210, %v2236
      %v2296 = vmul.f32 %v2214, %v2236
      %v2297 = vmul.f32 %v2218, %v2236
      %v2298 = vmul.f32 %v2222, %v2236
      %v2299 = vmul.f32 %v2226, %v2236
      %v2300 = vmul.f32 %v2230, %v2236
      %v2301 = vmul.f32 %v2234, %v2236
      %v2302 = vand.u32 %v2293, 4294901760
      %2303 = vmatpush.msra.mxu0 %v2302
      %v2304 = vand.u32 %v2292, 4294901760
      %2305 = vmatpush.msra.mxu0 %v2304
      %v2306 = vand.u32 %v2291, 4294901760
      %2307 = vmatpush.msra.mxu0 %v2306
      %v2308 = vand.u32 %v2290, 4294901760
      %2309 = vmatpush.msra.mxu0 %v2308
      %v2310 = vand.u32 %v2289, 4294901760
      %2311 = vmatpush.msra.mxu0 %v2310
      %v2312 = vand.u32 %v2288, 4294901760
      %2313 = vmatpush.msra.mxu0 %v2312
      %v2314 = vand.u32 %v2287, 4294901760
      %2315 = vmatpush.msra.mxu0 %v2314
      %v2316 = vand.u32 %v2286, 4294901760
      %2317 = vmatpush.msra.mxu0 %v2316
      %v2318 = vand.u32 %v2285, 4294901760
      %2319 = vmatpush.msra.mxu0 %v2318
      %v2320 = vand.u32 %v2284, 4294901760
      %2321 = vmatpush.msra.mxu0 %v2320
      %v2322 = vand.u32 %v2283, 4294901760
      %2323 = vmatpush.msra.mxu0 %v2322
      %v2324 = vand.u32 %v2282, 4294901760
      %2325 = vmatpush.msra.mxu0 %v2324
      %v2326 = vand.u32 %v2281, 4294901760
      %2327 = vmatpush.msra.mxu0 %v2326
      %v2328 = vand.u32 %v2280, 4294901760
      %2329 = vmatpush.msra.mxu0 %v2328
      %v2330 = vand.u32 %v2279, 4294901760
      %2331 = vmatpush.msra.mxu0 %v2330
      %v2332 = vand.u32 %v2278, 4294901760
      %2333 = vmatpush.msra.mxu0 %v2332
      %v2334 = vand.u32 %v2294, 4294901760
      %v2335 = vsub.f32 %v2294, %v2334
      %v2336 = vand.u32 %v2335, 4294901760
      %v2337 = vsub.f32 %v2335, %v2336
      %v2338 = vand.u32 %v2337, 4294901760
      %2339 = vmatmul.f32.gmra.mxu0 %v2338
      %v2340 = vpop.f32.mrf.mxu0
      %v2341 = vadd.f32 0.0, %v2340
      %v2342 = vand.u32 %v2295, 4294901760
      %v2343 = vsub.f32 %v2295, %v2342
      %v2344 = vand.u32 %v2343, 4294901760
      %v2345 = vsub.f32 %v2343, %v2344
      %v2346 = vand.u32 %v2345, 4294901760
      %2347 = vmatmul.f32.gmra.mxu0 %v2346
      %v2348 = vpop.f32.mrf.mxu0
      %v2349 = vadd.f32 0.0, %v2348
      %v2350 = vand.u32 %v2296, 4294901760
      %v2351 = vsub.f32 %v2296, %v2350
      %v2352 = vand.u32 %v2351, 4294901760
      %v2353 = vsub.f32 %v2351, %v2352
      %v2354 = vand.u32 %v2353, 4294901760
      %2355 = vmatmul.f32.gmra.mxu0 %v2354
      %v2356 = vpop.f32.mrf.mxu0
      %v2357 = vadd.f32 0.0, %v2356
      %v2358 = vand.u32 %v2297, 4294901760
      %v2359 = vsub.f32 %v2297, %v2358
      %v2360 = vand.u32 %v2359, 4294901760
      %v2361 = vsub.f32 %v2359, %v2360
      %v2362 = vand.u32 %v2361, 4294901760
      %2363 = vmatmul.f32.gmra.mxu0 %v2362
      %v2364 = vpop.f32.mrf.mxu0
      %v2365 = vadd.f32 0.0, %v2364
      %v2366 = vand.u32 %v2298, 4294901760
      %v2367 = vsub.f32 %v2298, %v2366
      %v2368 = vand.u32 %v2367, 4294901760
      %v2369 = vsub.f32 %v2367, %v2368
      %v2370 = vand.u32 %v2369, 4294901760
      %2371 = vmatmul.f32.gmra.mxu0 %v2370
      %v2372 = vpop.f32.mrf.mxu0
      %v2373 = vadd.f32 0.0, %v2372
      %v2374 = vand.u32 %v2299, 4294901760
      %v2375 = vsub.f32 %v2299, %v2374
      %v2376 = vand.u32 %v2375, 4294901760
      %v2377 = vsub.f32 %v2375, %v2376
      %v2378 = vand.u32 %v2377, 4294901760
      %2379 = vmatmul.f32.gmra.mxu0 %v2378
      %v2380 = vpop.f32.mrf.mxu0
      %v2381 = vadd.f32 0.0, %v2380
      %v2382 = vand.u32 %v2300, 4294901760
      %v2383 = vsub.f32 %v2300, %v2382
      %v2384 = vand.u32 %v2383, 4294901760
      %v2385 = vsub.f32 %v2383, %v2384
      %v2386 = vand.u32 %v2385, 4294901760
      %2387 = vmatmul.f32.gmra.mxu0 %v2386
      %v2388 = vpop.f32.mrf.mxu0
      %v2389 = vadd.f32 0.0, %v2388
      %v2390 = vand.u32 %v2301, 4294901760
      %v2391 = vsub.f32 %v2301, %v2390
      %v2392 = vand.u32 %v2391, 4294901760
      %v2393 = vsub.f32 %v2391, %v2392
      %v2394 = vand.u32 %v2393, 4294901760
      %2395 = vmatmul.f32.gmra.mxu0 %v2394
      %v2396 = vpop.f32.mrf.mxu0
      %v2397 = vadd.f32 0.0, %v2396
      %2398 = vdwg.mxu0
      %v2399 = vand.u32 %v2293, 4294901760
      %v2400 = vsub.f32 %v2293, %v2399
      %v2401 = vand.u32 %v2400, 4294901760
      %v2402 = vsub.f32 %v2400, %v2401
      %v2403 = vand.u32 %v2402, 4294901760
      %2404 = vmatpush.msra.mxu0 %v2403
      %v2405 = vand.u32 %v2292, 4294901760
      %v2406 = vsub.f32 %v2292, %v2405
      %v2407 = vand.u32 %v2406, 4294901760
      %v2408 = vsub.f32 %v2406, %v2407
      %v2409 = vand.u32 %v2408, 4294901760
      %2410 = vmatpush.msra.mxu0 %v2409
      %v2411 = vand.u32 %v2291, 4294901760
      %v2412 = vsub.f32 %v2291, %v2411
      %v2413 = vand.u32 %v2412, 4294901760
      %v2414 = vsub.f32 %v2412, %v2413
      %v2415 = vand.u32 %v2414, 4294901760
      %2416 = vmatpush.msra.mxu0 %v2415
      %v2417 = vand.u32 %v2290, 4294901760
      %v2418 = vsub.f32 %v2290, %v2417
      %v2419 = vand.u32 %v2418, 4294901760
      %v2420 = vsub.f32 %v2418, %v2419
      %v2421 = vand.u32 %v2420, 4294901760
      %2422 = vmatpush.msra.mxu0 %v2421
      %v2423 = vand.u32 %v2289, 4294901760
      %v2424 = vsub.f32 %v2289, %v2423
      %v2425 = vand.u32 %v2424, 4294901760
      %v2426 = vsub.f32 %v2424, %v2425
      %v2427 = vand.u32 %v2426, 4294901760
      %2428 = vmatpush.msra.mxu0 %v2427
      %v2429 = vand.u32 %v2288, 4294901760
      %v2430 = vsub.f32 %v2288, %v2429
      %v2431 = vand.u32 %v2430, 4294901760
      %v2432 = vsub.f32 %v2430, %v2431
      %v2433 = vand.u32 %v2432, 4294901760
      %2434 = vmatpush.msra.mxu0 %v2433
      %v2435 = vand.u32 %v2287, 4294901760
      %v2436 = vsub.f32 %v2287, %v2435
      %v2437 = vand.u32 %v2436, 4294901760
      %v2438 = vsub.f32 %v2436, %v2437
      %v2439 = vand.u32 %v2438, 4294901760
      %2440 = vmatpush.msra.mxu0 %v2439
      %v2441 = vand.u32 %v2286, 4294901760
      %v2442 = vsub.f32 %v2286, %v2441
      %v2443 = vand.u32 %v2442, 4294901760
      %v2444 = vsub.f32 %v2442, %v2443
      %v2445 = vand.u32 %v2444, 4294901760
      %2446 = vmatpush.msra.mxu0 %v2445
      %v2447 = vand.u32 %v2285, 4294901760
      %v2448 = vsub.f32 %v2285, %v2447
      %v2449 = vand.u32 %v2448, 4294901760
      %v2450 = vsub.f32 %v2448, %v2449
      %v2451 = vand.u32 %v2450, 4294901760
      %2452 = vmatpush.msra.mxu0 %v2451
      %v2453 = vand.u32 %v2284, 4294901760
      %v2454 = vsub.f32 %v2284, %v2453
      %v2455 = vand.u32 %v2454, 4294901760
      %v2456 = vsub.f32 %v2454, %v2455
      %v2457 = vand.u32 %v2456, 4294901760
      %2458 = vmatpush.msra.mxu0 %v2457
      %v2459 = vand.u32 %v2283, 4294901760
      %v2460 = vsub.f32 %v2283, %v2459
      %v2461 = vand.u32 %v2460, 4294901760
      %v2462 = vsub.f32 %v2460, %v2461
      %v2463 = vand.u32 %v2462, 4294901760
      %2464 = vmatpush.msra.mxu0 %v2463
      %v2465 = vand.u32 %v2282, 4294901760
      %v2466 = vsub.f32 %v2282, %v2465
      %v2467 = vand.u32 %v2466, 4294901760
      %v2468 = vsub.f32 %v2466, %v2467
      %v2469 = vand.u32 %v2468, 4294901760
      %2470 = vmatpush.msra.mxu0 %v2469
      %v2471 = vand.u32 %v2281, 4294901760
      %v2472 = vsub.f32 %v2281, %v2471
      %v2473 = vand.u32 %v2472, 4294901760
      %v2474 = vsub.f32 %v2472, %v2473
      %v2475 = vand.u32 %v2474, 4294901760
      %2476 = vmatpush.msra.mxu0 %v2475
      %v2477 = vand.u32 %v2280, 4294901760
      %v2478 = vsub.f32 %v2280, %v2477
      %v2479 = vand.u32 %v2478, 4294901760
      %v2480 = vsub.f32 %v2478, %v2479
      %v2481 = vand.u32 %v2480, 4294901760
      %2482 = vmatpush.msra.mxu0 %v2481
      %v2483 = vand.u32 %v2279, 4294901760
      %v2484 = vsub.f32 %v2279, %v2483
      %v2485 = vand.u32 %v2484, 4294901760
      %v2486 = vsub.f32 %v2484, %v2485
      %v2487 = vand.u32 %v2486, 4294901760
      %2488 = vmatpush.msra.mxu0 %v2487
      %v2489 = vand.u32 %v2278, 4294901760
      %v2490 = vsub.f32 %v2278, %v2489
      %v2491 = vand.u32 %v2490, 4294901760
      %v2492 = vsub.f32 %v2490, %v2491
      %v2493 = vand.u32 %v2492, 4294901760
      %2494 = vmatpush.msra.mxu0 %v2493
      %v2495 = vand.u32 %v2294, 4294901760
      %2496 = vmatmul.f32.gmra.mxu0 %v2495
      %v2497 = vpop.f32.mrf.mxu0
      %v2498 = vadd.f32 %v2341, %v2497
      %v2499 = vand.u32 %v2295, 4294901760
      %2500 = vmatmul.f32.gmra.mxu0 %v2499
      %v2501 = vpop.f32.mrf.mxu0
      %v2502 = vadd.f32 %v2349, %v2501
      %v2503 = vand.u32 %v2296, 4294901760
      %2504 = vmatmul.f32.gmra.mxu0 %v2503
      %v2505 = vpop.f32.mrf.mxu0
      %v2506 = vadd.f32 %v2357, %v2505
      %v2507 = vand.u32 %v2297, 4294901760
      %2508 = vmatmul.f32.gmra.mxu0 %v2507
      %v2509 = vpop.f32.mrf.mxu0
      %v2510 = vadd.f32 %v2365, %v2509
      %v2511 = vand.u32 %v2298, 4294901760
      %2512 = vmatmul.f32.gmra.mxu0 %v2511
      %v2513 = vpop.f32.mrf.mxu0
      %v2514 = vadd.f32 %v2373, %v2513
      %v2515 = vand.u32 %v2299, 4294901760
      %2516 = vmatmul.f32.gmra.mxu0 %v2515
      %v2517 = vpop.f32.mrf.mxu0
      %v2518 = vadd.f32 %v2381, %v2517
      %v2519 = vand.u32 %v2300, 4294901760
      %2520 = vmatmul.f32.gmra.mxu0 %v2519
      %v2521 = vpop.f32.mrf.mxu0
      %v2522 = vadd.f32 %v2389, %v2521
      %v2523 = vand.u32 %v2301, 4294901760
      %2524 = vmatmul.f32.gmra.mxu0 %v2523
      %v2525 = vpop.f32.mrf.mxu0
      %v2526 = vadd.f32 %v2397, %v2525
      %2527 = vdwg.mxu0
      %v2528 = vand.u32 %v2293, 4294901760
      %v2529 = vsub.f32 %v2293, %v2528
      %2530 = vmatpush.msra.mxu0 %v2529
      %v2531 = vand.u32 %v2292, 4294901760
      %v2532 = vsub.f32 %v2292, %v2531
      %2533 = vmatpush.msra.mxu0 %v2532
      %v2534 = vand.u32 %v2291, 4294901760
      %v2535 = vsub.f32 %v2291, %v2534
      %2536 = vmatpush.msra.mxu0 %v2535
      %v2537 = vand.u32 %v2290, 4294901760
      %v2538 = vsub.f32 %v2290, %v2537
      %2539 = vmatpush.msra.mxu0 %v2538
      %v2540 = vand.u32 %v2289, 4294901760
      %v2541 = vsub.f32 %v2289, %v2540
      %2542 = vmatpush.msra.mxu0 %v2541
      %v2543 = vand.u32 %v2288, 4294901760
      %v2544 = vsub.f32 %v2288, %v2543
      %2545 = vmatpush.msra.mxu0 %v2544
      %v2546 = vand.u32 %v2287, 4294901760
      %v2547 = vsub.f32 %v2287, %v2546
      %2548 = vmatpush.msra.mxu0 %v2547
      %v2549 = vand.u32 %v2286, 4294901760
      %v2550 = vsub.f32 %v2286, %v2549
      %2551 = vmatpush.msra.mxu0 %v2550
      %v2552 = vand.u32 %v2285, 4294901760
      %v2553 = vsub.f32 %v2285, %v2552
      %2554 = vmatpush.msra.mxu0 %v2553
      %v2555 = vand.u32 %v2284, 4294901760
      %v2556 = vsub.f32 %v2284, %v2555
      %2557 = vmatpush.msra.mxu0 %v2556
      %v2558 = vand.u32 %v2283, 4294901760
      %v2559 = vsub.f32 %v2283, %v2558
      %2560 = vmatpush.msra.mxu0 %v2559
      %v2561 = vand.u32 %v2282, 4294901760
      %v2562 = vsub.f32 %v2282, %v2561
      %2563 = vmatpush.msra.mxu0 %v2562
      %v2564 = vand.u32 %v2281, 4294901760
      %v2565 = vsub.f32 %v2281, %v2564
      %2566 = vmatpush.msra.mxu0 %v2565
      %v2567 = vand.u32 %v2280, 4294901760
      %v2568 = vsub.f32 %v2280, %v2567
      %2569 = vmatpush.msra.mxu0 %v2568
      %v2570 = vand.u32 %v2279, 4294901760
      %v2571 = vsub.f32 %v2279, %v2570
      %2572 = vmatpush.msra.mxu0 %v2571
      %v2573 = vand.u32 %v2278, 4294901760
      %v2574 = vsub.f32 %v2278, %v2573
      %2575 = vmatpush.msra.mxu0 %v2574
      %v2576 = vand.u32 %v2294, 4294901760
      %v2577 = vsub.f32 %v2294, %v2576
      %2578 = vmatmul.f32.gmra.mxu0 %v2577
      %v2579 = vpop.f32.mrf.mxu0
      %v2580 = vadd.f32 %v2498, %v2579
      %v2581 = vand.u32 %v2295, 4294901760
      %v2582 = vsub.f32 %v2295, %v2581
      %2583 = vmatmul.f32.gmra.mxu0 %v2582
      %v2584 = vpop.f32.mrf.mxu0
      %v2585 = vadd.f32 %v2502, %v2584
      %v2586 = vand.u32 %v2296, 4294901760
      %v2587 = vsub.f32 %v2296, %v2586
      %2588 = vmatmul.f32.gmra.mxu0 %v2587
      %v2589 = vpop.f32.mrf.mxu0
      %v2590 = vadd.f32 %v2506, %v2589
      %v2591 = vand.u32 %v2297, 4294901760
      %v2592 = vsub.f32 %v2297, %v2591
      %2593 = vmatmul.f32.gmra.mxu0 %v2592
      %v2594 = vpop.f32.mrf.mxu0
      %v2595 = vadd.f32 %v2510, %v2594
      %v2596 = vand.u32 %v2298, 4294901760
      %v2597 = vsub.f32 %v2298, %v2596
      %2598 = vmatmul.f32.gmra.mxu0 %v2597
      %v2599 = vpop.f32.mrf.mxu0
      %v2600 = vadd.f32 %v2514, %v2599
      %v2601 = vand.u32 %v2299, 4294901760
      %v2602 = vsub.f32 %v2299, %v2601
      %2603 = vmatmul.f32.gmra.mxu0 %v2602
      %v2604 = vpop.f32.mrf.mxu0
      %v2605 = vadd.f32 %v2518, %v2604
      %v2606 = vand.u32 %v2300, 4294901760
      %v2607 = vsub.f32 %v2300, %v2606
      %2608 = vmatmul.f32.gmra.mxu0 %v2607
      %v2609 = vpop.f32.mrf.mxu0
      %v2610 = vadd.f32 %v2522, %v2609
      %v2611 = vand.u32 %v2301, 4294901760
      %v2612 = vsub.f32 %v2301, %v2611
      %2613 = vmatmul.f32.gmra.mxu0 %v2612
      %v2614 = vpop.f32.mrf.mxu0
      %v2615 = vadd.f32 %v2526, %v2614
      %2616 = vdwg.mxu0
      %v2617 = vand.u32 %v2293, 4294901760
      %2618 = vmatpush.msra.mxu0 %v2617
      %v2619 = vand.u32 %v2292, 4294901760
      %2620 = vmatpush.msra.mxu0 %v2619
      %v2621 = vand.u32 %v2291, 4294901760
      %2622 = vmatpush.msra.mxu0 %v2621
      %v2623 = vand.u32 %v2290, 4294901760
      %2624 = vmatpush.msra.mxu0 %v2623
      %v2625 = vand.u32 %v2289, 4294901760
      %2626 = vmatpush.msra.mxu0 %v2625
      %v2627 = vand.u32 %v2288, 4294901760
      %2628 = vmatpush.msra.mxu0 %v2627
      %v2629 = vand.u32 %v2287, 4294901760
      %2630 = vmatpush.msra.mxu0 %v2629
      %v2631 = vand.u32 %v2286, 4294901760
      %2632 = vmatpush.msra.mxu0 %v2631
      %v2633 = vand.u32 %v2285, 4294901760
      %2634 = vmatpush.msra.mxu0 %v2633
      %v2635 = vand.u32 %v2284, 4294901760
      %2636 = vmatpush.msra.mxu0 %v2635
      %v2637 = vand.u32 %v2283, 4294901760
      %2638 = vmatpush.msra.mxu0 %v2637
      %v2639 = vand.u32 %v2282, 4294901760
      %2640 = vmatpush.msra.mxu0 %v2639
      %v2641 = vand.u32 %v2281, 4294901760
      %2642 = vmatpush.msra.mxu0 %v2641
      %v2643 = vand.u32 %v2280, 4294901760
      %2644 = vmatpush.msra.mxu0 %v2643
      %v2645 = vand.u32 %v2279, 4294901760
      %2646 = vmatpush.msra.mxu0 %v2645
      %v2647 = vand.u32 %v2278, 4294901760
      %2648 = vmatpush.msra.mxu0 %v2647
      %v2649 = vand.u32 %v2294, 4294901760
      %v2650 = vsub.f32 %v2294, %v2649
      %v2651 = vand.u32 %v2650, 4294901760
      %2652 = vmatmul.f32.gmra.mxu0 %v2651
      %v2653 = vpop.f32.mrf.mxu0
      %v2654 = vadd.f32 %v2580, %v2653
      %v2655 = vand.u32 %v2295, 4294901760
      %v2656 = vsub.f32 %v2295, %v2655
      %v2657 = vand.u32 %v2656, 4294901760
      %2658 = vmatmul.f32.gmra.mxu0 %v2657
      %v2659 = vpop.f32.mrf.mxu0
      %v2660 = vadd.f32 %v2585, %v2659
      %v2661 = vand.u32 %v2296, 4294901760
      %v2662 = vsub.f32 %v2296, %v2661
      %v2663 = vand.u32 %v2662, 4294901760
      %2664 = vmatmul.f32.gmra.mxu0 %v2663
      %v2665 = vpop.f32.mrf.mxu0
      %v2666 = vadd.f32 %v2590, %v2665
      %v2667 = vand.u32 %v2297, 4294901760
      %v2668 = vsub.f32 %v2297, %v2667
      %v2669 = vand.u32 %v2668, 4294901760
      %2670 = vmatmul.f32.gmra.mxu0 %v2669
      %v2671 = vpop.f32.mrf.mxu0
      %v2672 = vadd.f32 %v2595, %v2671
      %v2673 = vand.u32 %v2298, 4294901760
      %v2674 = vsub.f32 %v2298, %v2673
      %v2675 = vand.u32 %v2674, 4294901760
      %2676 = vmatmul.f32.gmra.mxu0 %v2675
      %v2677 = vpop.f32.mrf.mxu0
      %v2678 = vadd.f32 %v2600, %v2677
      %v2679 = vand.u32 %v2299, 4294901760
      %v2680 = vsub.f32 %v2299, %v2679
      %v2681 = vand.u32 %v2680, 4294901760
      %2682 = vmatmul.f32.gmra.mxu0 %v2681
      %v2683 = vpop.f32.mrf.mxu0
      %v2684 = vadd.f32 %v2605, %v2683
      %v2685 = vand.u32 %v2300, 4294901760
      %v2686 = vsub.f32 %v2300, %v2685
      %v2687 = vand.u32 %v2686, 4294901760
      %2688 = vmatmul.f32.gmra.mxu0 %v2687
      %v2689 = vpop.f32.mrf.mxu0
      %v2690 = vadd.f32 %v2610, %v2689
      %v2691 = vand.u32 %v2301, 4294901760
      %v2692 = vsub.f32 %v2301, %v2691
      %v2693 = vand.u32 %v2692, 4294901760
      %2694 = vmatmul.f32.gmra.mxu0 %v2693
      %v2695 = vpop.f32.mrf.mxu0
      %v2696 = vadd.f32 %v2615, %v2695
      %2697 = vdwg.mxu0
      %v2698 = vand.u32 %v2293, 4294901760
      %v2699 = vsub.f32 %v2293, %v2698
      %v2700 = vand.u32 %v2699, 4294901760
      %2701 = vmatpush.msra.mxu0 %v2700
      %v2702 = vand.u32 %v2292, 4294901760
      %v2703 = vsub.f32 %v2292, %v2702
      %v2704 = vand.u32 %v2703, 4294901760
      %2705 = vmatpush.msra.mxu0 %v2704
      %v2706 = vand.u32 %v2291, 4294901760
      %v2707 = vsub.f32 %v2291, %v2706
      %v2708 = vand.u32 %v2707, 4294901760
      %2709 = vmatpush.msra.mxu0 %v2708
      %v2710 = vand.u32 %v2290, 4294901760
      %v2711 = vsub.f32 %v2290, %v2710
      %v2712 = vand.u32 %v2711, 4294901760
      %2713 = vmatpush.msra.mxu0 %v2712
      %v2714 = vand.u32 %v2289, 4294901760
      %v2715 = vsub.f32 %v2289, %v2714
      %v2716 = vand.u32 %v2715, 4294901760
      %2717 = vmatpush.msra.mxu0 %v2716
      %v2718 = vand.u32 %v2288, 4294901760
      %v2719 = vsub.f32 %v2288, %v2718
      %v2720 = vand.u32 %v2719, 4294901760
      %2721 = vmatpush.msra.mxu0 %v2720
      %v2722 = vand.u32 %v2287, 4294901760
      %v2723 = vsub.f32 %v2287, %v2722
      %v2724 = vand.u32 %v2723, 4294901760
      %2725 = vmatpush.msra.mxu0 %v2724
      %v2726 = vand.u32 %v2286, 4294901760
      %v2727 = vsub.f32 %v2286, %v2726
      %v2728 = vand.u32 %v2727, 4294901760
      %2729 = vmatpush.msra.mxu0 %v2728
      %v2730 = vand.u32 %v2285, 4294901760
      %v2731 = vsub.f32 %v2285, %v2730
      %v2732 = vand.u32 %v2731, 4294901760
      %2733 = vmatpush.msra.mxu0 %v2732
      %v2734 = vand.u32 %v2284, 4294901760
      %v2735 = vsub.f32 %v2284, %v2734
      %v2736 = vand.u32 %v2735, 4294901760
      %2737 = vmatpush.msra.mxu0 %v2736
      %v2738 = vand.u32 %v2283, 4294901760
      %v2739 = vsub.f32 %v2283, %v2738
      %v2740 = vand.u32 %v2739, 4294901760
      %2741 = vmatpush.msra.mxu0 %v2740
      %v2742 = vand.u32 %v2282, 4294901760
      %v2743 = vsub.f32 %v2282, %v2742
      %v2744 = vand.u32 %v2743, 4294901760
      %2745 = vmatpush.msra.mxu0 %v2744
      %v2746 = vand.u32 %v2281, 4294901760
      %v2747 = vsub.f32 %v2281, %v2746
      %v2748 = vand.u32 %v2747, 4294901760
      %2749 = vmatpush.msra.mxu0 %v2748
      %v2750 = vand.u32 %v2280, 4294901760
      %v2751 = vsub.f32 %v2280, %v2750
      %v2752 = vand.u32 %v2751, 4294901760
      %2753 = vmatpush.msra.mxu0 %v2752
      %v2754 = vand.u32 %v2279, 4294901760
      %v2755 = vsub.f32 %v2279, %v2754
      %v2756 = vand.u32 %v2755, 4294901760
      %2757 = vmatpush.msra.mxu0 %v2756
      %v2758 = vand.u32 %v2278, 4294901760
      %v2759 = vsub.f32 %v2278, %v2758
      %v2760 = vand.u32 %v2759, 4294901760
      %2761 = vmatpush.msra.mxu0 %v2760
      %v2762 = vand.u32 %v2294, 4294901760
      %2763 = vmatmul.f32.gmra.mxu0 %v2762
      %v2764 = vpop.f32.mrf.mxu0
      %v2765 = vadd.f32 %v2654, %v2764
      %v2766 = vand.u32 %v2295, 4294901760
      %2767 = vmatmul.f32.gmra.mxu0 %v2766
      %v2768 = vpop.f32.mrf.mxu0
      %v2769 = vadd.f32 %v2660, %v2768
      %v2770 = vand.u32 %v2296, 4294901760
      %2771 = vmatmul.f32.gmra.mxu0 %v2770
      %v2772 = vpop.f32.mrf.mxu0
      %v2773 = vadd.f32 %v2666, %v2772
      %v2774 = vand.u32 %v2297, 4294901760
      %2775 = vmatmul.f32.gmra.mxu0 %v2774
      %v2776 = vpop.f32.mrf.mxu0
      %v2777 = vadd.f32 %v2672, %v2776
      %v2778 = vand.u32 %v2298, 4294901760
      %2779 = vmatmul.f32.gmra.mxu0 %v2778
      %v2780 = vpop.f32.mrf.mxu0
      %v2781 = vadd.f32 %v2678, %v2780
      %v2782 = vand.u32 %v2299, 4294901760
      %2783 = vmatmul.f32.gmra.mxu0 %v2782
      %v2784 = vpop.f32.mrf.mxu0
      %v2785 = vadd.f32 %v2684, %v2784
      %v2786 = vand.u32 %v2300, 4294901760
      %2787 = vmatmul.f32.gmra.mxu0 %v2786
      %v2788 = vpop.f32.mrf.mxu0
      %v2789 = vadd.f32 %v2690, %v2788
      %v2790 = vand.u32 %v2301, 4294901760
      %2791 = vmatmul.f32.gmra.mxu0 %v2790
      %v2792 = vpop.f32.mrf.mxu0
      %v2793 = vadd.f32 %v2696, %v2792
      %2794 = vdwg.mxu0
      %v2795 = vand.u32 %v2293, 4294901760
      %2796 = vmatpush.msra.mxu0 %v2795
      %v2797 = vand.u32 %v2292, 4294901760
      %2798 = vmatpush.msra.mxu0 %v2797
      %v2799 = vand.u32 %v2291, 4294901760
      %2800 = vmatpush.msra.mxu0 %v2799
      %v2801 = vand.u32 %v2290, 4294901760
      %2802 = vmatpush.msra.mxu0 %v2801
      %v2803 = vand.u32 %v2289, 4294901760
      %2804 = vmatpush.msra.mxu0 %v2803
      %v2805 = vand.u32 %v2288, 4294901760
      %2806 = vmatpush.msra.mxu0 %v2805
      %v2807 = vand.u32 %v2287, 4294901760
      %2808 = vmatpush.msra.mxu0 %v2807
      %v2809 = vand.u32 %v2286, 4294901760
      %2810 = vmatpush.msra.mxu0 %v2809
      %v2811 = vand.u32 %v2285, 4294901760
      %2812 = vmatpush.msra.mxu0 %v2811
      %v2813 = vand.u32 %v2284, 4294901760
      %2814 = vmatpush.msra.mxu0 %v2813
      %v2815 = vand.u32 %v2283, 4294901760
      %2816 = vmatpush.msra.mxu0 %v2815
      %v2817 = vand.u32 %v2282, 4294901760
      %2818 = vmatpush.msra.mxu0 %v2817
      %v2819 = vand.u32 %v2281, 4294901760
      %2820 = vmatpush.msra.mxu0 %v2819
      %v2821 = vand.u32 %v2280, 4294901760
      %2822 = vmatpush.msra.mxu0 %v2821
      %v2823 = vand.u32 %v2279, 4294901760
      %2824 = vmatpush.msra.mxu0 %v2823
      %v2825 = vand.u32 %v2278, 4294901760
      %2826 = vmatpush.msra.mxu0 %v2825
      %v2827 = vand.u32 %v2294, 4294901760
      %2828 = vmatmul.f32.gmra.mxu0 %v2827
      %v2829 = vpop.f32.mrf.mxu0
      %v2830 = vadd.f32 %v2765, %v2829
      %v2831 = vand.u32 %v2295, 4294901760
      %2832 = vmatmul.f32.gmra.mxu0 %v2831
      %v2833 = vpop.f32.mrf.mxu0
      %v2834 = vadd.f32 %v2769, %v2833
      %v2835 = vand.u32 %v2296, 4294901760
      %2836 = vmatmul.f32.gmra.mxu0 %v2835
      %v2837 = vpop.f32.mrf.mxu0
      %v2838 = vadd.f32 %v2773, %v2837
      %v2839 = vand.u32 %v2297, 4294901760
      %2840 = vmatmul.f32.gmra.mxu0 %v2839
      %v2841 = vpop.f32.mrf.mxu0
      %v2842 = vadd.f32 %v2777, %v2841
      %v2843 = vand.u32 %v2298, 4294901760
      %2844 = vmatmul.f32.gmra.mxu0 %v2843
      %v2845 = vpop.f32.mrf.mxu0
      %v2846 = vadd.f32 %v2781, %v2845
      %v2847 = vand.u32 %v2299, 4294901760
      %2848 = vmatmul.f32.gmra.mxu0 %v2847
      %v2849 = vpop.f32.mrf.mxu0
      %v2850 = vadd.f32 %v2785, %v2849
      %v2851 = vand.u32 %v2300, 4294901760
      %2852 = vmatmul.f32.gmra.mxu0 %v2851
      %v2853 = vpop.f32.mrf.mxu0
      %v2854 = vadd.f32 %v2789, %v2853
      %v2855 = vand.u32 %v2301, 4294901760
      %2856 = vmatmul.f32.gmra.mxu0 %v2855
      %v2857 = vpop.f32.mrf.mxu0
      %v2858 = vadd.f32 %v2793, %v2857
      %2859 = vdwg.mxu0
      %v2860 = vand.u32 %v2293, 4294901760
      %2861 = vmatpush.msra.mxu0 %v2860
      %v2862 = vand.u32 %v2292, 4294901760
      %2863 = vmatpush.msra.mxu0 %v2862
      %v2864 = vand.u32 %v2291, 4294901760
      %2865 = vmatpush.msra.mxu0 %v2864
      %v2866 = vand.u32 %v2290, 4294901760
      %2867 = vmatpush.msra.mxu0 %v2866
      %v2868 = vand.u32 %v2289, 4294901760
      %2869 = vmatpush.msra.mxu0 %v2868
      %v2870 = vand.u32 %v2288, 4294901760
      %2871 = vmatpush.msra.mxu0 %v2870
      %v2872 = vand.u32 %v2287, 4294901760
      %2873 = vmatpush.msra.mxu0 %v2872
      %v2874 = vand.u32 %v2286, 4294901760
      %2875 = vmatpush.msra.mxu0 %v2874
      %v2876 = vand.u32 %v2285, 4294901760
      %2877 = vmatpush.msra.mxu0 %v2876
      %v2878 = vand.u32 %v2284, 4294901760
      %2879 = vmatpush.msra.mxu0 %v2878
      %v2880 = vand.u32 %v2283, 4294901760
      %2881 = vmatpush.msra.mxu0 %v2880
      %v2882 = vand.u32 %v2282, 4294901760
      %2883 = vmatpush.msra.mxu0 %v2882
      %v2884 = vand.u32 %v2281, 4294901760
      %2885 = vmatpush.msra.mxu0 %v2884
      %v2886 = vand.u32 %v2280, 4294901760
      %2887 = vmatpush.msra.mxu0 %v2886
      %v2888 = vand.u32 %v2279, 4294901760
      %2889 = vmatpush.msra.mxu0 %v2888
      %v2890 = vand.u32 %v2278, 4294901760
      %2891 = vmatpush.msra.mxu0 %v2890
      %v2892 = vand.u32 %v2270, 4294901760
      %v2893 = vsub.f32 %v2270, %v2892
      %v2894 = vand.u32 %v2893, 4294901760
      %v2895 = vsub.f32 %v2893, %v2894
      %v2896 = vand.u32 %v2895, 4294901760
      %2897 = vmatmul.f32.gmra.mxu0 %v2896
      %v2898 = vpop.f32.mrf.mxu0
      %v2899 = vadd.f32 %v2830, %v2898
      %v2900 = vand.u32 %v2271, 4294901760
      %v2901 = vsub.f32 %v2271, %v2900
      %v2902 = vand.u32 %v2901, 4294901760
      %v2903 = vsub.f32 %v2901, %v2902
      %v2904 = vand.u32 %v2903, 4294901760
      %2905 = vmatmul.f32.gmra.mxu0 %v2904
      %v2906 = vpop.f32.mrf.mxu0
      %v2907 = vadd.f32 %v2834, %v2906
      %v2908 = vand.u32 %v2272, 4294901760
      %v2909 = vsub.f32 %v2272, %v2908
      %v2910 = vand.u32 %v2909, 4294901760
      %v2911 = vsub.f32 %v2909, %v2910
      %v2912 = vand.u32 %v2911, 4294901760
      %2913 = vmatmul.f32.gmra.mxu0 %v2912
      %v2914 = vpop.f32.mrf.mxu0
      %v2915 = vadd.f32 %v2838, %v2914
      %v2916 = vand.u32 %v2273, 4294901760
      %v2917 = vsub.f32 %v2273, %v2916
      %v2918 = vand.u32 %v2917, 4294901760
      %v2919 = vsub.f32 %v2917, %v2918
      %v2920 = vand.u32 %v2919, 4294901760
      %2921 = vmatmul.f32.gmra.mxu0 %v2920
      %v2922 = vpop.f32.mrf.mxu0
      %v2923 = vadd.f32 %v2842, %v2922
      %v2924 = vand.u32 %v2274, 4294901760
      %v2925 = vsub.f32 %v2274, %v2924
      %v2926 = vand.u32 %v2925, 4294901760
      %v2927 = vsub.f32 %v2925, %v2926
      %v2928 = vand.u32 %v2927, 4294901760
      %2929 = vmatmul.f32.gmra.mxu0 %v2928
      %v2930 = vpop.f32.mrf.mxu0
      %v2931 = vadd.f32 %v2846, %v2930
      %v2932 = vand.u32 %v2275, 4294901760
      %v2933 = vsub.f32 %v2275, %v2932
      %v2934 = vand.u32 %v2933, 4294901760
      %v2935 = vsub.f32 %v2933, %v2934
      %v2936 = vand.u32 %v2935, 4294901760
      %2937 = vmatmul.f32.gmra.mxu0 %v2936
      %v2938 = vpop.f32.mrf.mxu0
      %v2939 = vadd.f32 %v2850, %v2938
      %v2940 = vand.u32 %v2276, 4294901760
      %v2941 = vsub.f32 %v2276, %v2940
      %v2942 = vand.u32 %v2941, 4294901760
      %v2943 = vsub.f32 %v2941, %v2942
      %v2944 = vand.u32 %v2943, 4294901760
      %2945 = vmatmul.f32.gmra.mxu0 %v2944
      %v2946 = vpop.f32.mrf.mxu0
      %v2947 = vadd.f32 %v2854, %v2946
      %v2948 = vand.u32 %v2277, 4294901760
      %v2949 = vsub.f32 %v2277, %v2948
      %v2950 = vand.u32 %v2949, 4294901760
      %v2951 = vsub.f32 %v2949, %v2950
      %v2952 = vand.u32 %v2951, 4294901760
      %2953 = vmatmul.f32.gmra.mxu0 %v2952
      %v2954 = vpop.f32.mrf.mxu0
      %v2955 = vadd.f32 %v2858, %v2954
      %2956 = vdwg.mxu0
      %v2957 = vand.u32 %v2293, 4294901760
      %v2958 = vsub.f32 %v2293, %v2957
      %v2959 = vand.u32 %v2958, 4294901760
      %v2960 = vsub.f32 %v2958, %v2959
      %v2961 = vand.u32 %v2960, 4294901760
      %2962 = vmatpush.msra.mxu0 %v2961
      %v2963 = vand.u32 %v2292, 4294901760
      %v2964 = vsub.f32 %v2292, %v2963
      %v2965 = vand.u32 %v2964, 4294901760
      %v2966 = vsub.f32 %v2964, %v2965
      %v2967 = vand.u32 %v2966, 4294901760
      %2968 = vmatpush.msra.mxu0 %v2967
      %v2969 = vand.u32 %v2291, 4294901760
      %v2970 = vsub.f32 %v2291, %v2969
      %v2971 = vand.u32 %v2970, 4294901760
      %v2972 = vsub.f32 %v2970, %v2971
      %v2973 = vand.u32 %v2972, 4294901760
      %2974 = vmatpush.msra.mxu0 %v2973
      %v2975 = vand.u32 %v2290, 4294901760
      %v2976 = vsub.f32 %v2290, %v2975
      %v2977 = vand.u32 %v2976, 4294901760
      %v2978 = vsub.f32 %v2976, %v2977
      %v2979 = vand.u32 %v2978, 4294901760
      %2980 = vmatpush.msra.mxu0 %v2979
      %v2981 = vand.u32 %v2289, 4294901760
      %v2982 = vsub.f32 %v2289, %v2981
      %v2983 = vand.u32 %v2982, 4294901760
      %v2984 = vsub.f32 %v2982, %v2983
      %v2985 = vand.u32 %v2984, 4294901760
      %2986 = vmatpush.msra.mxu0 %v2985
      %v2987 = vand.u32 %v2288, 4294901760
      %v2988 = vsub.f32 %v2288, %v2987
      %v2989 = vand.u32 %v2988, 4294901760
      %v2990 = vsub.f32 %v2988, %v2989
      %v2991 = vand.u32 %v2990, 4294901760
      %2992 = vmatpush.msra.mxu0 %v2991
      %v2993 = vand.u32 %v2287, 4294901760
      %v2994 = vsub.f32 %v2287, %v2993
      %v2995 = vand.u32 %v2994, 4294901760
      %v2996 = vsub.f32 %v2994, %v2995
      %v2997 = vand.u32 %v2996, 4294901760
      %2998 = vmatpush.msra.mxu0 %v2997
      %v2999 = vand.u32 %v2286, 4294901760
      %v3000 = vsub.f32 %v2286, %v2999
      %v3001 = vand.u32 %v3000, 4294901760
      %v3002 = vsub.f32 %v3000, %v3001
      %v3003 = vand.u32 %v3002, 4294901760
      %3004 = vmatpush.msra.mxu0 %v3003
      %v3005 = vand.u32 %v2285, 4294901760
      %v3006 = vsub.f32 %v2285, %v3005
      %v3007 = vand.u32 %v3006, 4294901760
      %v3008 = vsub.f32 %v3006, %v3007
      %v3009 = vand.u32 %v3008, 4294901760
      %3010 = vmatpush.msra.mxu0 %v3009
      %v3011 = vand.u32 %v2284, 4294901760
      %v3012 = vsub.f32 %v2284, %v3011
      %v3013 = vand.u32 %v3012, 4294901760
      %v3014 = vsub.f32 %v3012, %v3013
      %v3015 = vand.u32 %v3014, 4294901760
      %3016 = vmatpush.msra.mxu0 %v3015
      %v3017 = vand.u32 %v2283, 4294901760
      %v3018 = vsub.f32 %v2283, %v3017
      %v3019 = vand.u32 %v3018, 4294901760
      %v3020 = vsub.f32 %v3018, %v3019
      %v3021 = vand.u32 %v3020, 4294901760
      %3022 = vmatpush.msra.mxu0 %v3021
      %v3023 = vand.u32 %v2282, 4294901760
      %v3024 = vsub.f32 %v2282, %v3023
      %v3025 = vand.u32 %v3024, 4294901760
      %v3026 = vsub.f32 %v3024, %v3025
      %v3027 = vand.u32 %v3026, 4294901760
      %3028 = vmatpush.msra.mxu0 %v3027
      %v3029 = vand.u32 %v2281, 4294901760
      %v3030 = vsub.f32 %v2281, %v3029
      %v3031 = vand.u32 %v3030, 4294901760
      %v3032 = vsub.f32 %v3030, %v3031
      %v3033 = vand.u32 %v3032, 4294901760
      %3034 = vmatpush.msra.mxu0 %v3033
      %v3035 = vand.u32 %v2280, 4294901760
      %v3036 = vsub.f32 %v2280, %v3035
      %v3037 = vand.u32 %v3036, 4294901760
      %v3038 = vsub.f32 %v3036, %v3037
      %v3039 = vand.u32 %v3038, 4294901760
      %3040 = vmatpush.msra.mxu0 %v3039
      %v3041 = vand.u32 %v2279, 4294901760
      %v3042 = vsub.f32 %v2279, %v3041
      %v3043 = vand.u32 %v3042, 4294901760
      %v3044 = vsub.f32 %v3042, %v3043
      %v3045 = vand.u32 %v3044, 4294901760
      %3046 = vmatpush.msra.mxu0 %v3045
      %v3047 = vand.u32 %v2278, 4294901760
      %v3048 = vsub.f32 %v2278, %v3047
      %v3049 = vand.u32 %v3048, 4294901760
      %v3050 = vsub.f32 %v3048, %v3049
      %v3051 = vand.u32 %v3050, 4294901760
      %3052 = vmatpush.msra.mxu0 %v3051
      %v3053 = vand.u32 %v2270, 4294901760
      %3054 = vmatmul.f32.gmra.mxu0 %v3053
      %v3055 = vpop.f32.mrf.mxu0
      %v3056 = vadd.f32 %v2899, %v3055
      %v3057 = vand.u32 %v2271, 4294901760
      %3058 = vmatmul.f32.gmra.mxu0 %v3057
      %v3059 = vpop.f32.mrf.mxu0
      %v3060 = vadd.f32 %v2907, %v3059
      %v3061 = vand.u32 %v2272, 4294901760
      %3062 = vmatmul.f32.gmra.mxu0 %v3061
      %v3063 = vpop.f32.mrf.mxu0
      %v3064 = vadd.f32 %v2915, %v3063
      %v3065 = vand.u32 %v2273, 4294901760
      %3066 = vmatmul.f32.gmra.mxu0 %v3065
      %v3067 = vpop.f32.mrf.mxu0
      %v3068 = vadd.f32 %v2923, %v3067
      %v3069 = vand.u32 %v2274, 4294901760
      %3070 = vmatmul.f32.gmra.mxu0 %v3069
      %v3071 = vpop.f32.mrf.mxu0
      %v3072 = vadd.f32 %v2931, %v3071
      %v3073 = vand.u32 %v2275, 4294901760
      %3074 = vmatmul.f32.gmra.mxu0 %v3073
      %v3075 = vpop.f32.mrf.mxu0
      %v3076 = vadd.f32 %v2939, %v3075
      %v3077 = vand.u32 %v2276, 4294901760
      %3078 = vmatmul.f32.gmra.mxu0 %v3077
      %v3079 = vpop.f32.mrf.mxu0
      %v3080 = vadd.f32 %v2947, %v3079
      %v3081 = vand.u32 %v2277, 4294901760
      %3082 = vmatmul.f32.gmra.mxu0 %v3081
      %v3083 = vpop.f32.mrf.mxu0
      %v3084 = vadd.f32 %v2955, %v3083
      %3085 = vdwg.mxu0
      %v3086 = vand.u32 %v2293, 4294901760
      %v3087 = vsub.f32 %v2293, %v3086
      %3088 = vmatpush.msra.mxu0 %v3087
      %v3089 = vand.u32 %v2292, 4294901760
      %v3090 = vsub.f32 %v2292, %v3089
      %3091 = vmatpush.msra.mxu0 %v3090
      %v3092 = vand.u32 %v2291, 4294901760
      %v3093 = vsub.f32 %v2291, %v3092
      %3094 = vmatpush.msra.mxu0 %v3093
      %v3095 = vand.u32 %v2290, 4294901760
      %v3096 = vsub.f32 %v2290, %v3095
      %3097 = vmatpush.msra.mxu0 %v3096
      %v3098 = vand.u32 %v2289, 4294901760
      %v3099 = vsub.f32 %v2289, %v3098
      %3100 = vmatpush.msra.mxu0 %v3099
      %v3101 = vand.u32 %v2288, 4294901760
      %v3102 = vsub.f32 %v2288, %v3101
      %3103 = vmatpush.msra.mxu0 %v3102
      %v3104 = vand.u32 %v2287, 4294901760
      %v3105 = vsub.f32 %v2287, %v3104
      %3106 = vmatpush.msra.mxu0 %v3105
      %v3107 = vand.u32 %v2286, 4294901760
      %v3108 = vsub.f32 %v2286, %v3107
      %3109 = vmatpush.msra.mxu0 %v3108
      %v3110 = vand.u32 %v2285, 4294901760
      %v3111 = vsub.f32 %v2285, %v3110
      %3112 = vmatpush.msra.mxu0 %v3111
      %v3113 = vand.u32 %v2284, 4294901760
      %v3114 = vsub.f32 %v2284, %v3113
      %3115 = vmatpush.msra.mxu0 %v3114
      %v3116 = vand.u32 %v2283, 4294901760
      %v3117 = vsub.f32 %v2283, %v3116
      %3118 = vmatpush.msra.mxu0 %v3117
      %v3119 = vand.u32 %v2282, 4294901760
      %v3120 = vsub.f32 %v2282, %v3119
      %3121 = vmatpush.msra.mxu0 %v3120
      %v3122 = vand.u32 %v2281, 4294901760
      %v3123 = vsub.f32 %v2281, %v3122
      %3124 = vmatpush.msra.mxu0 %v3123
      %v3125 = vand.u32 %v2280, 4294901760
      %v3126 = vsub.f32 %v2280, %v3125
      %3127 = vmatpush.msra.mxu0 %v3126
      %v3128 = vand.u32 %v2279, 4294901760
      %v3129 = vsub.f32 %v2279, %v3128
      %3130 = vmatpush.msra.mxu0 %v3129
      %v3131 = vand.u32 %v2278, 4294901760
      %v3132 = vsub.f32 %v2278, %v3131
      %3133 = vmatpush.msra.mxu0 %v3132
      %v3134 = vand.u32 %v2270, 4294901760
      %v3135 = vsub.f32 %v2270, %v3134
      %3136 = vmatmul.f32.gmra.mxu0 %v3135
      %v3137 = vpop.f32.mrf.mxu0
      %v3138 = vadd.f32 %v3056, %v3137
      %v3139 = vand.u32 %v2271, 4294901760
      %v3140 = vsub.f32 %v2271, %v3139
      %3141 = vmatmul.f32.gmra.mxu0 %v3140
      %v3142 = vpop.f32.mrf.mxu0
      %v3143 = vadd.f32 %v3060, %v3142
      %v3144 = vand.u32 %v2272, 4294901760
      %v3145 = vsub.f32 %v2272, %v3144
      %3146 = vmatmul.f32.gmra.mxu0 %v3145
      %v3147 = vpop.f32.mrf.mxu0
      %v3148 = vadd.f32 %v3064, %v3147
      %v3149 = vand.u32 %v2273, 4294901760
      %v3150 = vsub.f32 %v2273, %v3149
      %3151 = vmatmul.f32.gmra.mxu0 %v3150
      %v3152 = vpop.f32.mrf.mxu0
      %v3153 = vadd.f32 %v3068, %v3152
      %v3154 = vand.u32 %v2274, 4294901760
      %v3155 = vsub.f32 %v2274, %v3154
      %3156 = vmatmul.f32.gmra.mxu0 %v3155
      %v3157 = vpop.f32.mrf.mxu0
      %v3158 = vadd.f32 %v3072, %v3157
      %v3159 = vand.u32 %v2275, 4294901760
      %v3160 = vsub.f32 %v2275, %v3159
      %3161 = vmatmul.f32.gmra.mxu0 %v3160
      %v3162 = vpop.f32.mrf.mxu0
      %v3163 = vadd.f32 %v3076, %v3162
      %v3164 = vand.u32 %v2276, 4294901760
      %v3165 = vsub.f32 %v2276, %v3164
      %3166 = vmatmul.f32.gmra.mxu0 %v3165
      %v3167 = vpop.f32.mrf.mxu0
      %v3168 = vadd.f32 %v3080, %v3167
      %v3169 = vand.u32 %v2277, 4294901760
      %v3170 = vsub.f32 %v2277, %v3169
      %3171 = vmatmul.f32.gmra.mxu0 %v3170
      %v3172 = vpop.f32.mrf.mxu0
      %v3173 = vadd.f32 %v3084, %v3172
      %3174 = vdwg.mxu0
      %v3175 = vand.u32 %v2293, 4294901760
      %3176 = vmatpush.msra.mxu0 %v3175
      %v3177 = vand.u32 %v2292, 4294901760
      %3178 = vmatpush.msra.mxu0 %v3177
      %v3179 = vand.u32 %v2291, 4294901760
      %3180 = vmatpush.msra.mxu0 %v3179
      %v3181 = vand.u32 %v2290, 4294901760
      %3182 = vmatpush.msra.mxu0 %v3181
      %v3183 = vand.u32 %v2289, 4294901760
      %3184 = vmatpush.msra.mxu0 %v3183
      %v3185 = vand.u32 %v2288, 4294901760
      %3186 = vmatpush.msra.mxu0 %v3185
      %v3187 = vand.u32 %v2287, 4294901760
      %3188 = vmatpush.msra.mxu0 %v3187
      %v3189 = vand.u32 %v2286, 4294901760
      %3190 = vmatpush.msra.mxu0 %v3189
      %v3191 = vand.u32 %v2285, 4294901760
      %3192 = vmatpush.msra.mxu0 %v3191
      %v3193 = vand.u32 %v2284, 4294901760
      %3194 = vmatpush.msra.mxu0 %v3193
      %v3195 = vand.u32 %v2283, 4294901760
      %3196 = vmatpush.msra.mxu0 %v3195
      %v3197 = vand.u32 %v2282, 4294901760
      %3198 = vmatpush.msra.mxu0 %v3197
      %v3199 = vand.u32 %v2281, 4294901760
      %3200 = vmatpush.msra.mxu0 %v3199
      %v3201 = vand.u32 %v2280, 4294901760
      %3202 = vmatpush.msra.mxu0 %v3201
      %v3203 = vand.u32 %v2279, 4294901760
      %3204 = vmatpush.msra.mxu0 %v3203
      %v3205 = vand.u32 %v2278, 4294901760
      %3206 = vmatpush.msra.mxu0 %v3205
      %v3207 = vand.u32 %v2270, 4294901760
      %v3208 = vsub.f32 %v2270, %v3207
      %v3209 = vand.u32 %v3208, 4294901760
      %3210 = vmatmul.f32.gmra.mxu0 %v3209
      %v3211 = vpop.f32.mrf.mxu0
      %v3212 = vadd.f32 %v3138, %v3211
      %v3213 = vand.u32 %v2271, 4294901760
      %v3214 = vsub.f32 %v2271, %v3213
      %v3215 = vand.u32 %v3214, 4294901760
      %3216 = vmatmul.f32.gmra.mxu0 %v3215
      %v3217 = vpop.f32.mrf.mxu0
      %v3218 = vadd.f32 %v3143, %v3217
      %v3219 = vand.u32 %v2272, 4294901760
      %v3220 = vsub.f32 %v2272, %v3219
      %v3221 = vand.u32 %v3220, 4294901760
      %3222 = vmatmul.f32.gmra.mxu0 %v3221
      %v3223 = vpop.f32.mrf.mxu0
      %v3224 = vadd.f32 %v3148, %v3223
      %v3225 = vand.u32 %v2273, 4294901760
      %v3226 = vsub.f32 %v2273, %v3225
      %v3227 = vand.u32 %v3226, 4294901760
      %3228 = vmatmul.f32.gmra.mxu0 %v3227
      %v3229 = vpop.f32.mrf.mxu0
      %v3230 = vadd.f32 %v3153, %v3229
      %v3231 = vand.u32 %v2274, 4294901760
      %v3232 = vsub.f32 %v2274, %v3231
      %v3233 = vand.u32 %v3232, 4294901760
      %3234 = vmatmul.f32.gmra.mxu0 %v3233
      %v3235 = vpop.f32.mrf.mxu0
      %v3236 = vadd.f32 %v3158, %v3235
      %v3237 = vand.u32 %v2275, 4294901760
      %v3238 = vsub.f32 %v2275, %v3237
      %v3239 = vand.u32 %v3238, 4294901760
      %3240 = vmatmul.f32.gmra.mxu0 %v3239
      %v3241 = vpop.f32.mrf.mxu0
      %v3242 = vadd.f32 %v3163, %v3241
      %v3243 = vand.u32 %v2276, 4294901760
      %v3244 = vsub.f32 %v2276, %v3243
      %v3245 = vand.u32 %v3244, 4294901760
      %3246 = vmatmul.f32.gmra.mxu0 %v3245
      %v3247 = vpop.f32.mrf.mxu0
      %v3248 = vadd.f32 %v3168, %v3247
      %v3249 = vand.u32 %v2277, 4294901760
      %v3250 = vsub.f32 %v2277, %v3249
      %v3251 = vand.u32 %v3250, 4294901760
      %3252 = vmatmul.f32.gmra.mxu0 %v3251
      %v3253 = vpop.f32.mrf.mxu0
      %v3254 = vadd.f32 %v3173, %v3253
      %3255 = vdwg.mxu0
      %v3256 = vand.u32 %v2293, 4294901760
      %v3257 = vsub.f32 %v2293, %v3256
      %v3258 = vand.u32 %v3257, 4294901760
      %3259 = vmatpush.msra.mxu0 %v3258
      %v3260 = vand.u32 %v2292, 4294901760
      %v3261 = vsub.f32 %v2292, %v3260
      %v3262 = vand.u32 %v3261, 4294901760
      %3263 = vmatpush.msra.mxu0 %v3262
      %v3264 = vand.u32 %v2291, 4294901760
      %v3265 = vsub.f32 %v2291, %v3264
      %v3266 = vand.u32 %v3265, 4294901760
      %3267 = vmatpush.msra.mxu0 %v3266
      %v3268 = vand.u32 %v2290, 4294901760
      %v3269 = vsub.f32 %v2290, %v3268
      %v3270 = vand.u32 %v3269, 4294901760
      %3271 = vmatpush.msra.mxu0 %v3270
      %v3272 = vand.u32 %v2289, 4294901760
      %v3273 = vsub.f32 %v2289, %v3272
      %v3274 = vand.u32 %v3273, 4294901760
      %3275 = vmatpush.msra.mxu0 %v3274
      %v3276 = vand.u32 %v2288, 4294901760
      %v3277 = vsub.f32 %v2288, %v3276
      %v3278 = vand.u32 %v3277, 4294901760
      %3279 = vmatpush.msra.mxu0 %v3278
      %v3280 = vand.u32 %v2287, 4294901760
      %v3281 = vsub.f32 %v2287, %v3280
      %v3282 = vand.u32 %v3281, 4294901760
      %3283 = vmatpush.msra.mxu0 %v3282
      %v3284 = vand.u32 %v2286, 4294901760
      %v3285 = vsub.f32 %v2286, %v3284
      %v3286 = vand.u32 %v3285, 4294901760
      %3287 = vmatpush.msra.mxu0 %v3286
      %v3288 = vand.u32 %v2285, 4294901760
      %v3289 = vsub.f32 %v2285, %v3288
      %v3290 = vand.u32 %v3289, 4294901760
      %3291 = vmatpush.msra.mxu0 %v3290
      %v3292 = vand.u32 %v2284, 4294901760
      %v3293 = vsub.f32 %v2284, %v3292
      %v3294 = vand.u32 %v3293, 4294901760
      %3295 = vmatpush.msra.mxu0 %v3294
      %v3296 = vand.u32 %v2283, 4294901760
      %v3297 = vsub.f32 %v2283, %v3296
      %v3298 = vand.u32 %v3297, 4294901760
      %3299 = vmatpush.msra.mxu0 %v3298
      %v3300 = vand.u32 %v2282, 4294901760
      %v3301 = vsub.f32 %v2282, %v3300
      %v3302 = vand.u32 %v3301, 4294901760
      %3303 = vmatpush.msra.mxu0 %v3302
      %v3304 = vand.u32 %v2281, 4294901760
      %v3305 = vsub.f32 %v2281, %v3304
      %v3306 = vand.u32 %v3305, 4294901760
      %3307 = vmatpush.msra.mxu0 %v3306
      %v3308 = vand.u32 %v2280, 4294901760
      %v3309 = vsub.f32 %v2280, %v3308
      %v3310 = vand.u32 %v3309, 4294901760
      %3311 = vmatpush.msra.mxu0 %v3310
      %v3312 = vand.u32 %v2279, 4294901760
      %v3313 = vsub.f32 %v2279, %v3312
      %v3314 = vand.u32 %v3313, 4294901760
      %3315 = vmatpush.msra.mxu0 %v3314
      %v3316 = vand.u32 %v2278, 4294901760
      %v3317 = vsub.f32 %v2278, %v3316
      %v3318 = vand.u32 %v3317, 4294901760
      %3319 = vmatpush.msra.mxu0 %v3318
      %v3320 = vand.u32 %v2270, 4294901760
      %3321 = vmatmul.f32.gmra.mxu0 %v3320
      %v3322 = vpop.f32.mrf.mxu0
      %v3323 = vadd.f32 %v3212, %v3322
      %v3324 = vand.u32 %v2271, 4294901760
      %3325 = vmatmul.f32.gmra.mxu0 %v3324
      %v3326 = vpop.f32.mrf.mxu0
      %v3327 = vadd.f32 %v3218, %v3326
      %v3328 = vand.u32 %v2272, 4294901760
      %3329 = vmatmul.f32.gmra.mxu0 %v3328
      %v3330 = vpop.f32.mrf.mxu0
      %v3331 = vadd.f32 %v3224, %v3330
      %v3332 = vand.u32 %v2273, 4294901760
      %3333 = vmatmul.f32.gmra.mxu0 %v3332
      %v3334 = vpop.f32.mrf.mxu0
      %v3335 = vadd.f32 %v3230, %v3334
      %v3336 = vand.u32 %v2274, 4294901760
      %3337 = vmatmul.f32.gmra.mxu0 %v3336
      %v3338 = vpop.f32.mrf.mxu0
      %v3339 = vadd.f32 %v3236, %v3338
      %v3340 = vand.u32 %v2275, 4294901760
      %3341 = vmatmul.f32.gmra.mxu0 %v3340
      %v3342 = vpop.f32.mrf.mxu0
      %v3343 = vadd.f32 %v3242, %v3342
      %v3344 = vand.u32 %v2276, 4294901760
      %3345 = vmatmul.f32.gmra.mxu0 %v3344
      %v3346 = vpop.f32.mrf.mxu0
      %v3347 = vadd.f32 %v3248, %v3346
      %v3348 = vand.u32 %v2277, 4294901760
      %3349 = vmatmul.f32.gmra.mxu0 %v3348
      %v3350 = vpop.f32.mrf.mxu0
      %v3351 = vadd.f32 %v3254, %v3350
      %3352 = vdwg.mxu0
      %v3353 = vand.u32 %v2293, 4294901760
      %3354 = vmatpush.msra.mxu0 %v3353
      %v3355 = vand.u32 %v2292, 4294901760
      %3356 = vmatpush.msra.mxu0 %v3355
      %v3357 = vand.u32 %v2291, 4294901760
      %3358 = vmatpush.msra.mxu0 %v3357
      %v3359 = vand.u32 %v2290, 4294901760
      %3360 = vmatpush.msra.mxu0 %v3359
      %v3361 = vand.u32 %v2289, 4294901760
      %3362 = vmatpush.msra.mxu0 %v3361
      %v3363 = vand.u32 %v2288, 4294901760
      %3364 = vmatpush.msra.mxu0 %v3363
      %v3365 = vand.u32 %v2287, 4294901760
      %3366 = vmatpush.msra.mxu0 %v3365
      %v3367 = vand.u32 %v2286, 4294901760
      %3368 = vmatpush.msra.mxu0 %v3367
      %v3369 = vand.u32 %v2285, 4294901760
      %3370 = vmatpush.msra.mxu0 %v3369
      %v3371 = vand.u32 %v2284, 4294901760
      %3372 = vmatpush.msra.mxu0 %v3371
      %v3373 = vand.u32 %v2283, 4294901760
      %3374 = vmatpush.msra.mxu0 %v3373
      %v3375 = vand.u32 %v2282, 4294901760
      %3376 = vmatpush.msra.mxu0 %v3375
      %v3377 = vand.u32 %v2281, 4294901760
      %3378 = vmatpush.msra.mxu0 %v3377
      %v3379 = vand.u32 %v2280, 4294901760
      %3380 = vmatpush.msra.mxu0 %v3379
      %v3381 = vand.u32 %v2279, 4294901760
      %3382 = vmatpush.msra.mxu0 %v3381
      %v3383 = vand.u32 %v2278, 4294901760
      %3384 = vmatpush.msra.mxu0 %v3383
      %v3385 = vand.u32 %v2270, 4294901760
      %3386 = vmatmul.f32.gmra.mxu0 %v3385
      %v3387 = vpop.f32.mrf.mxu0
      %v3388 = vadd.f32 %v3323, %v3387
      %v3389 = vand.u32 %v2271, 4294901760
      %3390 = vmatmul.f32.gmra.mxu0 %v3389
      %v3391 = vpop.f32.mrf.mxu0
      %v3392 = vadd.f32 %v3327, %v3391
      %v3393 = vand.u32 %v2272, 4294901760
      %3394 = vmatmul.f32.gmra.mxu0 %v3393
      %v3395 = vpop.f32.mrf.mxu0
      %v3396 = vadd.f32 %v3331, %v3395
      %v3397 = vand.u32 %v2273, 4294901760
      %3398 = vmatmul.f32.gmra.mxu0 %v3397
      %v3399 = vpop.f32.mrf.mxu0
      %v3400 = vadd.f32 %v3335, %v3399
      %v3401 = vand.u32 %v2274, 4294901760
      %3402 = vmatmul.f32.gmra.mxu0 %v3401
      %v3403 = vpop.f32.mrf.mxu0
      %v3404 = vadd.f32 %v3339, %v3403
      %v3405 = vand.u32 %v2275, 4294901760
      %3406 = vmatmul.f32.gmra.mxu0 %v3405
      %v3407 = vpop.f32.mrf.mxu0
      %v3408 = vadd.f32 %v3343, %v3407
      %v3409 = vand.u32 %v2276, 4294901760
      %3410 = vmatmul.f32.gmra.mxu0 %v3409
      %v3411 = vpop.f32.mrf.mxu0
      %v3412 = vadd.f32 %v3347, %v3411
      %v3413 = vand.u32 %v2277, 4294901760
      %3414 = vmatmul.f32.gmra.mxu0 %v3413
      %v3415 = vpop.f32.mrf.mxu0
      %v3416 = vadd.f32 %v3351, %v3415
      %3417 = vdwg.mxu0
      %v3418 = vmul.f32 %v3388, 0.25
      %v3419 = vmul.f32 %v3392, 0.25
      %v3420 = vmul.f32 %v3396, 0.25
      %v3421 = vmul.f32 %v3400, 0.25
      %v3422 = vmul.f32 %v3404, 0.25
      %v3423 = vmul.f32 %v3408, 0.25
      %v3424 = vmul.f32 %v3412, 0.25
      %v3425 = vmul.f32 %v3416, 0.25
      %vm3426 = vcmask 64512
      %v3427 = vsel %vm3426, %v3418, -inf
      %v3428 = vrot.slane %v3427, 4
      %v3429 = vmax.f32 %v3427, %v3428
      %v3430 = vrot.slane %v3429, 2
      %v3431 = vmax.f32 %v3429, %v3430
      %v3432 = vrot.slane %v3431, 1
      %v3433 = vmax.f32 %v3431, %v3432
      %v3434 = vsel %vm3426, %v3419, -inf
      %v3435 = vrot.slane %v3434, 4
      %v3436 = vmax.f32 %v3434, %v3435
      %v3437 = vrot.slane %v3436, 2
      %v3438 = vmax.f32 %v3436, %v3437
      %v3439 = vrot.slane %v3438, 1
      %v3440 = vmax.f32 %v3438, %v3439
      %v3441 = vsel %vm3426, %v3420, -inf
      %v3442 = vrot.slane %v3441, 4
      %v3443 = vmax.f32 %v3441, %v3442
      %v3444 = vrot.slane %v3443, 2
      %v3445 = vmax.f32 %v3443, %v3444
      %v3446 = vrot.slane %v3445, 1
      %v3447 = vmax.f32 %v3445, %v3446
      %v3448 = vsel %vm3426, %v3421, -inf
      %v3449 = vrot.slane %v3448, 4
      %v3450 = vmax.f32 %v3448, %v3449
      %v3451 = vrot.slane %v3450, 2
      %v3452 = vmax.f32 %v3450, %v3451
      %v3453 = vrot.slane %v3452, 1
      %v3454 = vmax.f32 %v3452, %v3453
      %v3455 = vsel %vm3426, %v3422, -inf
      %v3456 = vrot.slane %v3455, 4
      %v3457 = vmax.f32 %v3455, %v3456
      %v3458 = vrot.slane %v3457, 2
      %v3459 = vmax.f32 %v3457, %v3458
      %v3460 = vrot.slane %v3459, 1
      %v3461 = vmax.f32 %v3459, %v3460
      %v3462 = vsel %vm3426, %v3423, -inf
      %v3463 = vrot.slane %v3462, 4
      %v3464 = vmax.f32 %v3462, %v3463
      %v3465 = vrot.slane %v3464, 2
      %v3466 = vmax.f32 %v3464, %v3465
      %v3467 = vrot.slane %v3466, 1
      %v3468 = vmax.f32 %v3466, %v3467
      %v3469 = vsel %vm3426, %v3424, -inf
      %v3470 = vrot.slane %v3469, 4
      %v3471 = vmax.f32 %v3469, %v3470
      %v3472 = vrot.slane %v3471, 2
      %v3473 = vmax.f32 %v3471, %v3472
      %v3474 = vrot.slane %v3473, 1
      %v3475 = vmax.f32 %v3473, %v3474
      %v3476 = vsel %vm3426, %v3425, -inf
      %v3477 = vrot.slane %v3476, 4
      %v3478 = vmax.f32 %v3476, %v3477
      %v3479 = vrot.slane %v3478, 2
      %v3480 = vmax.f32 %v3478, %v3479
      %v3481 = vrot.slane %v3480, 1
      %v3482 = vmax.f32 %v3480, %v3481
      %v3483 = vsub.f32 %v3418, %v3433
      %v3484 = vsub.f32 %v3419, %v3440
      %v3485 = vsub.f32 %v3420, %v3447
      %v3486 = vsub.f32 %v3421, %v3454
      %v3487 = vsub.f32 %v3422, %v3461
      %v3488 = vsub.f32 %v3423, %v3468
      %v3489 = vsub.f32 %v3424, %v3475
      %v3490 = vsub.f32 %v3425, %v3482
      %v3491 = vmul.f32 %v3483, 1.442695
      %v3492 = vpow.pop %v3491
      %v3493 = vmul.f32 %v3484, 1.442695
      %v3494 = vpow.pop %v3493
      %v3495 = vmul.f32 %v3485, 1.442695
      %v3496 = vpow.pop %v3495
      %v3497 = vmul.f32 %v3486, 1.442695
      %v3498 = vpow.pop %v3497
      %v3499 = vmul.f32 %v3487, 1.442695
      %v3500 = vpow.pop %v3499
      %v3501 = vmul.f32 %v3488, 1.442695
      %v3502 = vpow.pop %v3501
      %v3503 = vmul.f32 %v3489, 1.442695
      %v3504 = vpow.pop %v3503
      %v3505 = vmul.f32 %v3490, 1.442695
      %v3506 = vpow.pop %v3505
      %v3507 = vsel %vm3426, %v3492, 0.0
      %v3508 = vrot.slane %v3507, 4
      %v3509 = vadd.f32 %v3507, %v3508
      %v3510 = vrot.slane %v3509, 2
      %v3511 = vadd.f32 %v3509, %v3510
      %v3512 = vrot.slane %v3511, 1
      %v3513 = vadd.f32 %v3511, %v3512
      %v3514 = vsel %vm3426, %v3494, 0.0
      %v3515 = vrot.slane %v3514, 4
      %v3516 = vadd.f32 %v3514, %v3515
      %v3517 = vrot.slane %v3516, 2
      %v3518 = vadd.f32 %v3516, %v3517
      %v3519 = vrot.slane %v3518, 1
      %v3520 = vadd.f32 %v3518, %v3519
      %v3521 = vsel %vm3426, %v3496, 0.0
      %v3522 = vrot.slane %v3521, 4
      %v3523 = vadd.f32 %v3521, %v3522
      %v3524 = vrot.slane %v3523, 2
      %v3525 = vadd.f32 %v3523, %v3524
      %v3526 = vrot.slane %v3525, 1
      %v3527 = vadd.f32 %v3525, %v3526
      %v3528 = vsel %vm3426, %v3498, 0.0
      %v3529 = vrot.slane %v3528, 4
      %v3530 = vadd.f32 %v3528, %v3529
      %v3531 = vrot.slane %v3530, 2
      %v3532 = vadd.f32 %v3530, %v3531
      %v3533 = vrot.slane %v3532, 1
      %v3534 = vadd.f32 %v3532, %v3533
      %v3535 = vsel %vm3426, %v3500, 0.0
      %v3536 = vrot.slane %v3535, 4
      %v3537 = vadd.f32 %v3535, %v3536
      %v3538 = vrot.slane %v3537, 2
      %v3539 = vadd.f32 %v3537, %v3538
      %v3540 = vrot.slane %v3539, 1
      %v3541 = vadd.f32 %v3539, %v3540
      %v3542 = vsel %vm3426, %v3502, 0.0
      %v3543 = vrot.slane %v3542, 4
      %v3544 = vadd.f32 %v3542, %v3543
      %v3545 = vrot.slane %v3544, 2
      %v3546 = vadd.f32 %v3544, %v3545
      %v3547 = vrot.slane %v3546, 1
      %v3548 = vadd.f32 %v3546, %v3547
      %v3549 = vsel %vm3426, %v3504, 0.0
      %v3550 = vrot.slane %v3549, 4
      %v3551 = vadd.f32 %v3549, %v3550
      %v3552 = vrot.slane %v3551, 2
      %v3553 = vadd.f32 %v3551, %v3552
      %v3554 = vrot.slane %v3553, 1
      %v3555 = vadd.f32 %v3553, %v3554
      %v3556 = vsel %vm3426, %v3506, 0.0
      %v3557 = vrot.slane %v3556, 4
      %v3558 = vadd.f32 %v3556, %v3557
      %v3559 = vrot.slane %v3558, 2
      %v3560 = vadd.f32 %v3558, %v3559
      %v3561 = vrot.slane %v3560, 1
      %v3562 = vadd.f32 %v3560, %v3561
      %v3563 = vrcp.pop %v3513
      %v3564 = vmul.f32 %v3513, %v3563
      %v3565 = vsub.f32 1.0, %v3564
      %v3566 = vmul.f32 %v3563, %v3565
      %v3567 = vadd.f32 %v3563, %v3566
      %vm3568 = vweird.f32 %v3513
      %vm3569 = vweird.f32 %v3563
      %vm3570 = vmor %vm3568, %vm3569
      %v3571 = vsel %vm3570, %v3563, %v3567
      %v3572 = vand.u32 2147483647, %v3513
      %vm3573 = vcmp.eq.f32.partialorder %v3572, 8.507059e+37
      %v3574 = vand.u32 %v3513, 2147483648
      %v3575 = vor.u32 1.1754944e-38, %v3574
      %v3576 = vsel %vm3573, %v3575, %v3571
      %v3577 = vrcp.pop %v3520
      %v3578 = vmul.f32 %v3520, %v3577
      %v3579 = vsub.f32 1.0, %v3578
      %v3580 = vmul.f32 %v3577, %v3579
      %v3581 = vadd.f32 %v3577, %v3580
      %vm3582 = vweird.f32 %v3520
      %vm3583 = vweird.f32 %v3577
      %vm3584 = vmor %vm3582, %vm3583
      %v3585 = vsel %vm3584, %v3577, %v3581
      %v3586 = vand.u32 2147483647, %v3520
      %vm3587 = vcmp.eq.f32.partialorder %v3586, 8.507059e+37
      %v3588 = vand.u32 %v3520, 2147483648
      %v3589 = vor.u32 1.1754944e-38, %v3588
      %v3590 = vsel %vm3587, %v3589, %v3585
      %v3591 = vrcp.pop %v3527
      %v3592 = vmul.f32 %v3527, %v3591
      %v3593 = vsub.f32 1.0, %v3592
      %v3594 = vmul.f32 %v3591, %v3593
      %v3595 = vadd.f32 %v3591, %v3594
      %vm3596 = vweird.f32 %v3527
      %vm3597 = vweird.f32 %v3591
      %vm3598 = vmor %vm3596, %vm3597
      %v3599 = vsel %vm3598, %v3591, %v3595
      %v3600 = vand.u32 2147483647, %v3527
      %vm3601 = vcmp.eq.f32.partialorder %v3600, 8.507059e+37
      %v3602 = vand.u32 %v3527, 2147483648
      %v3603 = vor.u32 1.1754944e-38, %v3602
      %v3604 = vsel %vm3601, %v3603, %v3599
      %v3605 = vrcp.pop %v3534
      %v3606 = vmul.f32 %v3534, %v3605
      %v3607 = vsub.f32 1.0, %v3606
      %v3608 = vmul.f32 %v3605, %v3607
      %v3609 = vadd.f32 %v3605, %v3608
      %vm3610 = vweird.f32 %v3534
      %vm3611 = vweird.f32 %v3605
      %vm3612 = vmor %vm3610, %vm3611
      %v3613 = vsel %vm3612, %v3605, %v3609
      %v3614 = vand.u32 2147483647, %v3534
      %vm3615 = vcmp.eq.f32.partialorder %v3614, 8.507059e+37
      %v3616 = vand.u32 %v3534, 2147483648
      %v3617 = vor.u32 1.1754944e-38, %v3616
      %v3618 = vsel %vm3615, %v3617, %v3613
      %v3619 = vrcp.pop %v3541
      %v3620 = vmul.f32 %v3541, %v3619
      %v3621 = vsub.f32 1.0, %v3620
      %v3622 = vmul.f32 %v3619, %v3621
      %v3623 = vadd.f32 %v3619, %v3622
      %vm3624 = vweird.f32 %v3541
      %vm3625 = vweird.f32 %v3619
      %vm3626 = vmor %vm3624, %vm3625
      %v3627 = vsel %vm3626, %v3619, %v3623
      %v3628 = vand.u32 2147483647, %v3541
      %vm3629 = vcmp.eq.f32.partialorder %v3628, 8.507059e+37
      %v3630 = vand.u32 %v3541, 2147483648
      %v3631 = vor.u32 1.1754944e-38, %v3630
      %v3632 = vsel %vm3629, %v3631, %v3627
      %v3633 = vrcp.pop %v3548
      %v3634 = vmul.f32 %v3548, %v3633
      %v3635 = vsub.f32 1.0, %v3634
      %v3636 = vmul.f32 %v3633, %v3635
      %v3637 = vadd.f32 %v3633, %v3636
      %vm3638 = vweird.f32 %v3548
      %vm3639 = vweird.f32 %v3633
      %vm3640 = vmor %vm3638, %vm3639
      %v3641 = vsel %vm3640, %v3633, %v3637
      %v3642 = vand.u32 2147483647, %v3548
      %vm3643 = vcmp.eq.f32.partialorder %v3642, 8.507059e+37
      %v3644 = vand.u32 %v3548, 2147483648
      %v3645 = vor.u32 1.1754944e-38, %v3644
      %v3646 = vsel %vm3643, %v3645, %v3641
      %v3647 = vrcp.pop %v3555
      %v3648 = vmul.f32 %v3555, %v3647
      %v3649 = vsub.f32 1.0, %v3648
      %v3650 = vmul.f32 %v3647, %v3649
      %v3651 = vadd.f32 %v3647, %v3650
      %vm3652 = vweird.f32 %v3555
      %vm3653 = vweird.f32 %v3647
      %vm3654 = vmor %vm3652, %vm3653
      %v3655 = vsel %vm3654, %v3647, %v3651
      %v3656 = vand.u32 2147483647, %v3555
      %vm3657 = vcmp.eq.f32.partialorder %v3656, 8.507059e+37
      %v3658 = vand.u32 %v3555, 2147483648
      %v3659 = vor.u32 1.1754944e-38, %v3658
      %v3660 = vsel %vm3657, %v3659, %v3655
      %v3661 = vrcp.pop %v3562
      %v3662 = vmul.f32 %v3562, %v3661
      %v3663 = vsub.f32 1.0, %v3662
      %v3664 = vmul.f32 %v3661, %v3663
      %v3665 = vadd.f32 %v3661, %v3664
      %vm3666 = vweird.f32 %v3562
      %vm3667 = vweird.f32 %v3661
      %vm3668 = vmor %vm3666, %vm3667
      %v3669 = vsel %vm3668, %v3661, %v3665
      %v3670 = vand.u32 2147483647, %v3562
      %vm3671 = vcmp.eq.f32.partialorder %v3670, 8.507059e+37
      %v3672 = vand.u32 %v3562, 2147483648
      %v3673 = vor.u32 1.1754944e-38, %v3672
      %v3674 = vsel %vm3671, %v3673, %v3669
      %v3675 = vmul.f32 %v3492, %v3576
      %v3676 = vmul.f32 %v3494, %v3590
      %v3677 = vmul.f32 %v3496, %v3604
      %v3678 = vmul.f32 %v3498, %v3618
      %v3679 = vmul.f32 %v3500, %v3632
      %v3680 = vmul.f32 %v3502, %v3646
      %v3681 = vmul.f32 %v3504, %v3660
      %v3682 = vmul.f32 %v3506, %v3674
      %v3683 = vld [vmem:[%s1] sm:$0xff]
      %v3685 = vsel %vm3426, %v3675, 0
      %v3688 = vsel %vm3426, %v3676, 0
      %v3691 = vsel %vm3426, %v3677, 0
      %v3694 = vsel %vm3426, %v3678, 0
      %v3697 = vsel %vm3426, %v3679, 0
      %v3700 = vsel %vm3426, %v3680, 0
      %v3703 = vsel %vm3426, %v3681, 0
      %v3706 = vsel %vm3426, %v3682, 0
      %3708 = vmatpush.msra.mxu0 0.0
      %3709 = vmatpush.msra.mxu0 0.0
      %3710 = vmatpush.msra.mxu0 0.0
      %3711 = vmatpush.msra.mxu0 0.0
      %3712 = vmatpush.msra.mxu0 0.0
      %3713 = vmatpush.msra.mxu0 0.0
      %3714 = vmatpush.msra.mxu0 0.0
      %3715 = vmatpush.msra.mxu0 0.0
      %3716 = vmatpush.msra.mxu0 0.0
      %3717 = vmatpush.msra.mxu0 0.0
      %3718 = vmatpush.msra.mxu0 0.0
      %3719 = vmatpush.msra.mxu0 0.0
      %3720 = vmatpush.msra.mxu0 0.0
      %3721 = vmatpush.msra.mxu0 0.0
      %3722 = vmatpush.msra.mxu0 0.0
      %v3723 = vand.u32 %v3683, 4294901760
      %3724 = vmatpush.msra.mxu0 %v3723
      %v3725 = vand.u32 %v3685, 4294901760
      %v3726 = vsub.f32 %v3685, %v3725
      %v3727 = vand.u32 %v3726, 4294901760
      %v3728 = vsub.f32 %v3726, %v3727
      %v3729 = vand.u32 %v3728, 4294901760
      %3730 = vmatmul.f32.gmra.mxu0 %v3729
      %v3731 = vpop.f32.mrf.mxu0
      %v3732 = vadd.f32 0.0, %v3731
      %v3733 = vand.u32 %v3688, 4294901760
      %v3734 = vsub.f32 %v3688, %v3733
      %v3735 = vand.u32 %v3734, 4294901760
      %v3736 = vsub.f32 %v3734, %v3735
      %v3737 = vand.u32 %v3736, 4294901760
      %3738 = vmatmul.f32.gmra.mxu0 %v3737
      %v3739 = vpop.f32.mrf.mxu0
      %v3740 = vadd.f32 0.0, %v3739
      %v3741 = vand.u32 %v3691, 4294901760
      %v3742 = vsub.f32 %v3691, %v3741
      %v3743 = vand.u32 %v3742, 4294901760
      %v3744 = vsub.f32 %v3742, %v3743
      %v3745 = vand.u32 %v3744, 4294901760
      %3746 = vmatmul.f32.gmra.mxu0 %v3745
      %v3747 = vpop.f32.mrf.mxu0
      %v3748 = vadd.f32 0.0, %v3747
      %v3749 = vand.u32 %v3694, 4294901760
      %v3750 = vsub.f32 %v3694, %v3749
      %v3751 = vand.u32 %v3750, 4294901760
      %v3752 = vsub.f32 %v3750, %v3751
      %v3753 = vand.u32 %v3752, 4294901760
      %3754 = vmatmul.f32.gmra.mxu0 %v3753
      %v3755 = vpop.f32.mrf.mxu0
      %v3756 = vadd.f32 0.0, %v3755
      %v3757 = vand.u32 %v3697, 4294901760
      %v3758 = vsub.f32 %v3697, %v3757
      %v3759 = vand.u32 %v3758, 4294901760
      %v3760 = vsub.f32 %v3758, %v3759
      %v3761 = vand.u32 %v3760, 4294901760
      %3762 = vmatmul.f32.gmra.mxu0 %v3761
      %v3763 = vpop.f32.mrf.mxu0
      %v3764 = vadd.f32 0.0, %v3763
      %v3765 = vand.u32 %v3700, 4294901760
      %v3766 = vsub.f32 %v3700, %v3765
      %v3767 = vand.u32 %v3766, 4294901760
      %v3768 = vsub.f32 %v3766, %v3767
      %v3769 = vand.u32 %v3768, 4294901760
      %3770 = vmatmul.f32.gmra.mxu0 %v3769
      %v3771 = vpop.f32.mrf.mxu0
      %v3772 = vadd.f32 0.0, %v3771
      %v3773 = vand.u32 %v3703, 4294901760
      %v3774 = vsub.f32 %v3703, %v3773
      %v3775 = vand.u32 %v3774, 4294901760
      %v3776 = vsub.f32 %v3774, %v3775
      %v3777 = vand.u32 %v3776, 4294901760
      %3778 = vmatmul.f32.gmra.mxu0 %v3777
      %v3779 = vpop.f32.mrf.mxu0
      %v3780 = vadd.f32 0.0, %v3779
      %v3781 = vand.u32 %v3706, 4294901760
      %v3782 = vsub.f32 %v3706, %v3781
      %v3783 = vand.u32 %v3782, 4294901760
      %v3784 = vsub.f32 %v3782, %v3783
      %v3785 = vand.u32 %v3784, 4294901760
      %3786 = vmatmul.f32.gmra.mxu0 %v3785
      %v3787 = vpop.f32.mrf.mxu0
      %v3788 = vadd.f32 0.0, %v3787
      %3789 = vdwg.mxu0
      %3790 = vmatpush.msra.mxu0 0.0
      %3791 = vmatpush.msra.mxu0 0.0
      %3792 = vmatpush.msra.mxu0 0.0
      %3793 = vmatpush.msra.mxu0 0.0
      %3794 = vmatpush.msra.mxu0 0.0
      %3795 = vmatpush.msra.mxu0 0.0
      %3796 = vmatpush.msra.mxu0 0.0
      %3797 = vmatpush.msra.mxu0 0.0
      %3798 = vmatpush.msra.mxu0 0.0
      %3799 = vmatpush.msra.mxu0 0.0
      %3800 = vmatpush.msra.mxu0 0.0
      %3801 = vmatpush.msra.mxu0 0.0
      %3802 = vmatpush.msra.mxu0 0.0
      %3803 = vmatpush.msra.mxu0 0.0
      %3804 = vmatpush.msra.mxu0 0.0
      %v3805 = vand.u32 %v3683, 4294901760
      %v3806 = vsub.f32 %v3683, %v3805
      %v3807 = vand.u32 %v3806, 4294901760
      %v3808 = vsub.f32 %v3806, %v3807
      %v3809 = vand.u32 %v3808, 4294901760
      %3810 = vmatpush.msra.mxu0 %v3809
      %v3811 = vand.u32 %v3685, 4294901760
      %3812 = vmatmul.f32.gmra.mxu0 %v3811
      %v3813 = vpop.f32.mrf.mxu0
      %v3814 = vadd.f32 %v3732, %v3813
      %v3815 = vand.u32 %v3688, 4294901760
      %3816 = vmatmul.f32.gmra.mxu0 %v3815
      %v3817 = vpop.f32.mrf.mxu0
      %v3818 = vadd.f32 %v3740, %v3817
      %v3819 = vand.u32 %v3691, 4294901760
      %3820 = vmatmul.f32.gmra.mxu0 %v3819
      %v3821 = vpop.f32.mrf.mxu0
      %v3822 = vadd.f32 %v3748, %v3821
      %v3823 = vand.u32 %v3694, 4294901760
      %3824 = vmatmul.f32.gmra.mxu0 %v3823
      %v3825 = vpop.f32.mrf.mxu0
      %v3826 = vadd.f32 %v3756, %v3825
      %v3827 = vand.u32 %v3697, 4294901760
      %3828 = vmatmul.f32.gmra.mxu0 %v3827
      %v3829 = vpop.f32.mrf.mxu0
      %v3830 = vadd.f32 %v3764, %v3829
      %v3831 = vand.u32 %v3700, 4294901760
      %3832 = vmatmul.f32.gmra.mxu0 %v3831
      %v3833 = vpop.f32.mrf.mxu0
      %v3834 = vadd.f32 %v3772, %v3833
      %v3835 = vand.u32 %v3703, 4294901760
      %3836 = vmatmul.f32.gmra.mxu0 %v3835
      %v3837 = vpop.f32.mrf.mxu0
      %v3838 = vadd.f32 %v3780, %v3837
      %v3839 = vand.u32 %v3706, 4294901760
      %3840 = vmatmul.f32.gmra.mxu0 %v3839
      %v3841 = vpop.f32.mrf.mxu0
      %v3842 = vadd.f32 %v3788, %v3841
      %3843 = vdwg.mxu0
      %3844 = vmatpush.msra.mxu0 0.0
      %3845 = vmatpush.msra.mxu0 0.0
      %3846 = vmatpush.msra.mxu0 0.0
      %3847 = vmatpush.msra.mxu0 0.0
      %3848 = vmatpush.msra.mxu0 0.0
      %3849 = vmatpush.msra.mxu0 0.0
      %3850 = vmatpush.msra.mxu0 0.0
      %3851 = vmatpush.msra.mxu0 0.0
      %3852 = vmatpush.msra.mxu0 0.0
      %3853 = vmatpush.msra.mxu0 0.0
      %3854 = vmatpush.msra.mxu0 0.0
      %3855 = vmatpush.msra.mxu0 0.0
      %3856 = vmatpush.msra.mxu0 0.0
      %3857 = vmatpush.msra.mxu0 0.0
      %3858 = vmatpush.msra.mxu0 0.0
      %v3859 = vand.u32 %v3683, 4294901760
      %v3860 = vsub.f32 %v3683, %v3859
      %3861 = vmatpush.msra.mxu0 %v3860
      %v3862 = vand.u32 %v3685, 4294901760
      %v3863 = vsub.f32 %v3685, %v3862
      %3864 = vmatmul.f32.gmra.mxu0 %v3863
      %v3865 = vpop.f32.mrf.mxu0
      %v3866 = vadd.f32 %v3814, %v3865
      %v3867 = vand.u32 %v3688, 4294901760
      %v3868 = vsub.f32 %v3688, %v3867
      %3869 = vmatmul.f32.gmra.mxu0 %v3868
      %v3870 = vpop.f32.mrf.mxu0
      %v3871 = vadd.f32 %v3818, %v3870
      %v3872 = vand.u32 %v3691, 4294901760
      %v3873 = vsub.f32 %v3691, %v3872
      %3874 = vmatmul.f32.gmra.mxu0 %v3873
      %v3875 = vpop.f32.mrf.mxu0
      %v3876 = vadd.f32 %v3822, %v3875
      %v3877 = vand.u32 %v3694, 4294901760
      %v3878 = vsub.f32 %v3694, %v3877
      %3879 = vmatmul.f32.gmra.mxu0 %v3878
      %v3880 = vpop.f32.mrf.mxu0
      %v3881 = vadd.f32 %v3826, %v3880
      %v3882 = vand.u32 %v3697, 4294901760
      %v3883 = vsub.f32 %v3697, %v3882
      %3884 = vmatmul.f32.gmra.mxu0 %v3883
      %v3885 = vpop.f32.mrf.mxu0
      %v3886 = vadd.f32 %v3830, %v3885
      %v3887 = vand.u32 %v3700, 4294901760
      %v3888 = vsub.f32 %v3700, %v3887
      %3889 = vmatmul.f32.gmra.mxu0 %v3888
      %v3890 = vpop.f32.mrf.mxu0
      %v3891 = vadd.f32 %v3834, %v3890
      %v3892 = vand.u32 %v3703, 4294901760
      %v3893 = vsub.f32 %v3703, %v3892
      %3894 = vmatmul.f32.gmra.mxu0 %v3893
      %v3895 = vpop.f32.mrf.mxu0
      %v3896 = vadd.f32 %v3838, %v3895
      %v3897 = vand.u32 %v3706, 4294901760
      %v3898 = vsub.f32 %v3706, %v3897
      %3899 = vmatmul.f32.gmra.mxu0 %v3898
      %v3900 = vpop.f32.mrf.mxu0
      %v3901 = vadd.f32 %v3842, %v3900
      %3902 = vdwg.mxu0
      %3903 = vmatpush.msra.mxu0 0.0
      %3904 = vmatpush.msra.mxu0 0.0
      %3905 = vmatpush.msra.mxu0 0.0
      %3906 = vmatpush.msra.mxu0 0.0
      %3907 = vmatpush.msra.mxu0 0.0
      %3908 = vmatpush.msra.mxu0 0.0
      %3909 = vmatpush.msra.mxu0 0.0
      %3910 = vmatpush.msra.mxu0 0.0
      %3911 = vmatpush.msra.mxu0 0.0
      %3912 = vmatpush.msra.mxu0 0.0
      %3913 = vmatpush.msra.mxu0 0.0
      %3914 = vmatpush.msra.mxu0 0.0
      %3915 = vmatpush.msra.mxu0 0.0
      %3916 = vmatpush.msra.mxu0 0.0
      %3917 = vmatpush.msra.mxu0 0.0
      %v3918 = vand.u32 %v3683, 4294901760
      %3919 = vmatpush.msra.mxu0 %v3918
      %v3920 = vand.u32 %v3685, 4294901760
      %v3921 = vsub.f32 %v3685, %v3920
      %v3922 = vand.u32 %v3921, 4294901760
      %3923 = vmatmul.f32.gmra.mxu0 %v3922
      %v3924 = vpop.f32.mrf.mxu0
      %v3925 = vadd.f32 %v3866, %v3924
      %v3926 = vand.u32 %v3688, 4294901760
      %v3927 = vsub.f32 %v3688, %v3926
      %v3928 = vand.u32 %v3927, 4294901760
      %3929 = vmatmul.f32.gmra.mxu0 %v3928
      %v3930 = vpop.f32.mrf.mxu0
      %v3931 = vadd.f32 %v3871, %v3930
      %v3932 = vand.u32 %v3691, 4294901760
      %v3933 = vsub.f32 %v3691, %v3932
      %v3934 = vand.u32 %v3933, 4294901760
      %3935 = vmatmul.f32.gmra.mxu0 %v3934
      %v3936 = vpop.f32.mrf.mxu0
      %v3937 = vadd.f32 %v3876, %v3936
      %v3938 = vand.u32 %v3694, 4294901760
      %v3939 = vsub.f32 %v3694, %v3938
      %v3940 = vand.u32 %v3939, 4294901760
      %3941 = vmatmul.f32.gmra.mxu0 %v3940
      %v3942 = vpop.f32.mrf.mxu0
      %v3943 = vadd.f32 %v3881, %v3942
      %v3944 = vand.u32 %v3697, 4294901760
      %v3945 = vsub.f32 %v3697, %v3944
      %v3946 = vand.u32 %v3945, 4294901760
      %3947 = vmatmul.f32.gmra.mxu0 %v3946
      %v3948 = vpop.f32.mrf.mxu0
      %v3949 = vadd.f32 %v3886, %v3948
      %v3950 = vand.u32 %v3700, 4294901760
      %v3951 = vsub.f32 %v3700, %v3950
      %v3952 = vand.u32 %v3951, 4294901760
      %3953 = vmatmul.f32.gmra.mxu0 %v3952
      %v3954 = vpop.f32.mrf.mxu0
      %v3955 = vadd.f32 %v3891, %v3954
      %v3956 = vand.u32 %v3703, 4294901760
      %v3957 = vsub.f32 %v3703, %v3956
      %v3958 = vand.u32 %v3957, 4294901760
      %3959 = vmatmul.f32.gmra.mxu0 %v3958
      %v3960 = vpop.f32.mrf.mxu0
      %v3961 = vadd.f32 %v3896, %v3960
      %v3962 = vand.u32 %v3706, 4294901760
      %v3963 = vsub.f32 %v3706, %v3962
      %v3964 = vand.u32 %v3963, 4294901760
      %3965 = vmatmul.f32.gmra.mxu0 %v3964
      %v3966 = vpop.f32.mrf.mxu0
      %v3967 = vadd.f32 %v3901, %v3966
      %3968 = vdwg.mxu0
      %3969 = vmatpush.msra.mxu0 0.0
      %3970 = vmatpush.msra.mxu0 0.0
      %3971 = vmatpush.msra.mxu0 0.0
      %3972 = vmatpush.msra.mxu0 0.0
      %3973 = vmatpush.msra.mxu0 0.0
      %3974 = vmatpush.msra.mxu0 0.0
      %3975 = vmatpush.msra.mxu0 0.0
      %3976 = vmatpush.msra.mxu0 0.0
      %3977 = vmatpush.msra.mxu0 0.0
      %3978 = vmatpush.msra.mxu0 0.0
      %3979 = vmatpush.msra.mxu0 0.0
      %3980 = vmatpush.msra.mxu0 0.0
      %3981 = vmatpush.msra.mxu0 0.0
      %3982 = vmatpush.msra.mxu0 0.0
      %3983 = vmatpush.msra.mxu0 0.0
      %v3984 = vand.u32 %v3683, 4294901760
      %v3985 = vsub.f32 %v3683, %v3984
      %v3986 = vand.u32 %v3985, 4294901760
      %3987 = vmatpush.msra.mxu0 %v3986
      %v3988 = vand.u32 %v3685, 4294901760
      %3989 = vmatmul.f32.gmra.mxu0 %v3988
      %v3990 = vpop.f32.mrf.mxu0
      %v3991 = vadd.f32 %v3925, %v3990
      %v3992 = vand.u32 %v3688, 4294901760
      %3993 = vmatmul.f32.gmra.mxu0 %v3992
      %v3994 = vpop.f32.mrf.mxu0
      %v3995 = vadd.f32 %v3931, %v3994
      %v3996 = vand.u32 %v3691, 4294901760
      %3997 = vmatmul.f32.gmra.mxu0 %v3996
      %v3998 = vpop.f32.mrf.mxu0
      %v3999 = vadd.f32 %v3937, %v3998
      %v4000 = vand.u32 %v3694, 4294901760
      %4001 = vmatmul.f32.gmra.mxu0 %v4000
      %v4002 = vpop.f32.mrf.mxu0
      %v4003 = vadd.f32 %v3943, %v4002
      %v4004 = vand.u32 %v3697, 4294901760
      %4005 = vmatmul.f32.gmra.mxu0 %v4004
      %v4006 = vpop.f32.mrf.mxu0
      %v4007 = vadd.f32 %v3949, %v4006
      %v4008 = vand.u32 %v3700, 4294901760
      %4009 = vmatmul.f32.gmra.mxu0 %v4008
      %v4010 = vpop.f32.mrf.mxu0
      %v4011 = vadd.f32 %v3955, %v4010
      %v4012 = vand.u32 %v3703, 4294901760
      %4013 = vmatmul.f32.gmra.mxu0 %v4012
      %v4014 = vpop.f32.mrf.mxu0
      %v4015 = vadd.f32 %v3961, %v4014
      %v4016 = vand.u32 %v3706, 4294901760
      %4017 = vmatmul.f32.gmra.mxu0 %v4016
      %v4018 = vpop.f32.mrf.mxu0
      %v4019 = vadd.f32 %v3967, %v4018
      %4020 = vdwg.mxu0
      %4021 = vmatpush.msra.mxu0 0.0
      %4022 = vmatpush.msra.mxu0 0.0
      %4023 = vmatpush.msra.mxu0 0.0
      %4024 = vmatpush.msra.mxu0 0.0
      %4025 = vmatpush.msra.mxu0 0.0
      %4026 = vmatpush.msra.mxu0 0.0
      %4027 = vmatpush.msra.mxu0 0.0
      %4028 = vmatpush.msra.mxu0 0.0
      %4029 = vmatpush.msra.mxu0 0.0
      %4030 = vmatpush.msra.mxu0 0.0
      %4031 = vmatpush.msra.mxu0 0.0
      %4032 = vmatpush.msra.mxu0 0.0
      %4033 = vmatpush.msra.mxu0 0.0
      %4034 = vmatpush.msra.mxu0 0.0
      %4035 = vmatpush.msra.mxu0 0.0
      %v4036 = vand.u32 %v3683, 4294901760
      %4037 = vmatpush.msra.mxu0 %v4036
      %v4038 = vand.u32 %v3685, 4294901760
      %4039 = vmatmul.f32.gmra.mxu0 %v4038
      %v4040 = vpop.f32.mrf.mxu0
      %v4041 = vadd.f32 %v3991, %v4040
      %v4042 = vand.u32 %v3688, 4294901760
      %4043 = vmatmul.f32.gmra.mxu0 %v4042
      %v4044 = vpop.f32.mrf.mxu0
      %v4045 = vadd.f32 %v3995, %v4044
      %v4046 = vand.u32 %v3691, 4294901760
      %4047 = vmatmul.f32.gmra.mxu0 %v4046
      %v4048 = vpop.f32.mrf.mxu0
      %v4049 = vadd.f32 %v3999, %v4048
      %v4050 = vand.u32 %v3694, 4294901760
      %4051 = vmatmul.f32.gmra.mxu0 %v4050
      %v4052 = vpop.f32.mrf.mxu0
      %v4053 = vadd.f32 %v4003, %v4052
      %v4054 = vand.u32 %v3697, 4294901760
      %4055 = vmatmul.f32.gmra.mxu0 %v4054
      %v4056 = vpop.f32.mrf.mxu0
      %v4057 = vadd.f32 %v4007, %v4056
      %v4058 = vand.u32 %v3700, 4294901760
      %4059 = vmatmul.f32.gmra.mxu0 %v4058
      %v4060 = vpop.f32.mrf.mxu0
      %v4061 = vadd.f32 %v4011, %v4060
      %v4062 = vand.u32 %v3703, 4294901760
      %4063 = vmatmul.f32.gmra.mxu0 %v4062
      %v4064 = vpop.f32.mrf.mxu0
      %v4065 = vadd.f32 %v4015, %v4064
      %v4066 = vand.u32 %v3706, 4294901760
      %4067 = vmatmul.f32.gmra.mxu0 %v4066
      %v4068 = vpop.f32.mrf.mxu0
      %v4069 = vadd.f32 %v4019, %v4068
      %4070 = vdwg.mxu0
      %v4072 = vsel %vm3426, %v3418, 0
      %v4075 = vsel %vm3426, %v3419, 0
      %v4078 = vsel %vm3426, %v3420, 0
      %v4081 = vsel %vm3426, %v3421, 0
      %v4084 = vsel %vm3426, %v3422, 0
      %v4087 = vsel %vm3426, %v3423, 0
      %v4090 = vsel %vm3426, %v3424, 0
      %v4093 = vsel %vm3426, %v3425, 0
      %4095 = vmatpush.msra.mxu0 0.0
      %4096 = vmatpush.msra.mxu0 0.0
      %4097 = vmatpush.msra.mxu0 0.0
      %4098 = vmatpush.msra.mxu0 0.0
      %4099 = vmatpush.msra.mxu0 0.0
      %4100 = vmatpush.msra.mxu0 0.0
      %4101 = vmatpush.msra.mxu0 0.0
      %4102 = vmatpush.msra.mxu0 0.0
      %4103 = vmatpush.msra.mxu0 0.0
      %4104 = vmatpush.msra.mxu0 0.0
      %4105 = vmatpush.msra.mxu0 0.0
      %4106 = vmatpush.msra.mxu0 0.0
      %4107 = vmatpush.msra.mxu0 0.0
      %4108 = vmatpush.msra.mxu0 0.0
      %4109 = vmatpush.msra.mxu0 0.0
      %v4110 = vand.u32 %v3683, 4294901760
      %4111 = vmatpush.msra.mxu0 %v4110
      %v4112 = vand.u32 %v4072, 4294901760
      %v4113 = vsub.f32 %v4072, %v4112
      %v4114 = vand.u32 %v4113, 4294901760
      %v4115 = vsub.f32 %v4113, %v4114
      %v4116 = vand.u32 %v4115, 4294901760
      %4117 = vmatmul.f32.gmra.mxu0 %v4116
      %v4118 = vpop.f32.mrf.mxu0
      %v4119 = vadd.f32 0.0, %v4118
      %v4120 = vand.u32 %v4075, 4294901760
      %v4121 = vsub.f32 %v4075, %v4120
      %v4122 = vand.u32 %v4121, 4294901760
      %v4123 = vsub.f32 %v4121, %v4122
      %v4124 = vand.u32 %v4123, 4294901760
      %4125 = vmatmul.f32.gmra.mxu0 %v4124
      %v4126 = vpop.f32.mrf.mxu0
      %v4127 = vadd.f32 0.0, %v4126
      %v4128 = vand.u32 %v4078, 4294901760
      %v4129 = vsub.f32 %v4078, %v4128
      %v4130 = vand.u32 %v4129, 4294901760
      %v4131 = vsub.f32 %v4129, %v4130
      %v4132 = vand.u32 %v4131, 4294901760
      %4133 = vmatmul.f32.gmra.mxu0 %v4132
      %v4134 = vpop.f32.mrf.mxu0
      %v4135 = vadd.f32 0.0, %v4134
      %v4136 = vand.u32 %v4081, 4294901760
      %v4137 = vsub.f32 %v4081, %v4136
      %v4138 = vand.u32 %v4137, 4294901760
      %v4139 = vsub.f32 %v4137, %v4138
      %v4140 = vand.u32 %v4139, 4294901760
      %4141 = vmatmul.f32.gmra.mxu0 %v4140
      %v4142 = vpop.f32.mrf.mxu0
      %v4143 = vadd.f32 0.0, %v4142
      %v4144 = vand.u32 %v4084, 4294901760
      %v4145 = vsub.f32 %v4084, %v4144
      %v4146 = vand.u32 %v4145, 4294901760
      %v4147 = vsub.f32 %v4145, %v4146
      %v4148 = vand.u32 %v4147, 4294901760
      %4149 = vmatmul.f32.gmra.mxu0 %v4148
      %v4150 = vpop.f32.mrf.mxu0
      %v4151 = vadd.f32 0.0, %v4150
      %v4152 = vand.u32 %v4087, 4294901760
      %v4153 = vsub.f32 %v4087, %v4152
      %v4154 = vand.u32 %v4153, 4294901760
      %v4155 = vsub.f32 %v4153, %v4154
      %v4156 = vand.u32 %v4155, 4294901760
      %4157 = vmatmul.f32.gmra.mxu0 %v4156
      %v4158 = vpop.f32.mrf.mxu0
      %v4159 = vadd.f32 0.0, %v4158
      %v4160 = vand.u32 %v4090, 4294901760
      %v4161 = vsub.f32 %v4090, %v4160
      %v4162 = vand.u32 %v4161, 4294901760
      %v4163 = vsub.f32 %v4161, %v4162
      %v4164 = vand.u32 %v4163, 4294901760
      %4165 = vmatmul.f32.gmra.mxu0 %v4164
      %v4166 = vpop.f32.mrf.mxu0
      %v4167 = vadd.f32 0.0, %v4166
      %v4168 = vand.u32 %v4093, 4294901760
      %v4169 = vsub.f32 %v4093, %v4168
      %v4170 = vand.u32 %v4169, 4294901760
      %v4171 = vsub.f32 %v4169, %v4170
      %v4172 = vand.u32 %v4171, 4294901760
      %4173 = vmatmul.f32.gmra.mxu0 %v4172
      %v4174 = vpop.f32.mrf.mxu0
      %v4175 = vadd.f32 0.0, %v4174
      %4176 = vdwg.mxu0
      %4177 = vmatpush.msra.mxu0 0.0
      %4178 = vmatpush.msra.mxu0 0.0
      %4179 = vmatpush.msra.mxu0 0.0
      %4180 = vmatpush.msra.mxu0 0.0
      %4181 = vmatpush.msra.mxu0 0.0
      %4182 = vmatpush.msra.mxu0 0.0
      %4183 = vmatpush.msra.mxu0 0.0
      %4184 = vmatpush.msra.mxu0 0.0
      %4185 = vmatpush.msra.mxu0 0.0
      %4186 = vmatpush.msra.mxu0 0.0
      %4187 = vmatpush.msra.mxu0 0.0
      %4188 = vmatpush.msra.mxu0 0.0
      %4189 = vmatpush.msra.mxu0 0.0
      %4190 = vmatpush.msra.mxu0 0.0
      %4191 = vmatpush.msra.mxu0 0.0
      %v4192 = vand.u32 %v3683, 4294901760
      %v4193 = vsub.f32 %v3683, %v4192
      %v4194 = vand.u32 %v4193, 4294901760
      %v4195 = vsub.f32 %v4193, %v4194
      %v4196 = vand.u32 %v4195, 4294901760
      %4197 = vmatpush.msra.mxu0 %v4196
      %v4198 = vand.u32 %v4072, 4294901760
      %4199 = vmatmul.f32.gmra.mxu0 %v4198
      %v4200 = vpop.f32.mrf.mxu0
      %v4201 = vadd.f32 %v4119, %v4200
      %v4202 = vand.u32 %v4075, 4294901760
      %4203 = vmatmul.f32.gmra.mxu0 %v4202
      %v4204 = vpop.f32.mrf.mxu0
      %v4205 = vadd.f32 %v4127, %v4204
      %v4206 = vand.u32 %v4078, 4294901760
      %4207 = vmatmul.f32.gmra.mxu0 %v4206
      %v4208 = vpop.f32.mrf.mxu0
      %v4209 = vadd.f32 %v4135, %v4208
      %v4210 = vand.u32 %v4081, 4294901760
      %4211 = vmatmul.f32.gmra.mxu0 %v4210
      %v4212 = vpop.f32.mrf.mxu0
      %v4213 = vadd.f32 %v4143, %v4212
      %v4214 = vand.u32 %v4084, 4294901760
      %4215 = vmatmul.f32.gmra.mxu0 %v4214
      %v4216 = vpop.f32.mrf.mxu0
      %v4217 = vadd.f32 %v4151, %v4216
      %v4218 = vand.u32 %v4087, 4294901760
      %4219 = vmatmul.f32.gmra.mxu0 %v4218
      %v4220 = vpop.f32.mrf.mxu0
      %v4221 = vadd.f32 %v4159, %v4220
      %v4222 = vand.u32 %v4090, 4294901760
      %4223 = vmatmul.f32.gmra.mxu0 %v4222
      %v4224 = vpop.f32.mrf.mxu0
      %v4225 = vadd.f32 %v4167, %v4224
      %v4226 = vand.u32 %v4093, 4294901760
      %4227 = vmatmul.f32.gmra.mxu0 %v4226
      %v4228 = vpop.f32.mrf.mxu0
      %v4229 = vadd.f32 %v4175, %v4228
      %4230 = vdwg.mxu0
      %4231 = vmatpush.msra.mxu0 0.0
      %4232 = vmatpush.msra.mxu0 0.0
      %4233 = vmatpush.msra.mxu0 0.0
      %4234 = vmatpush.msra.mxu0 0.0
      %4235 = vmatpush.msra.mxu0 0.0
      %4236 = vmatpush.msra.mxu0 0.0
      %4237 = vmatpush.msra.mxu0 0.0
      %4238 = vmatpush.msra.mxu0 0.0
      %4239 = vmatpush.msra.mxu0 0.0
      %4240 = vmatpush.msra.mxu0 0.0
      %4241 = vmatpush.msra.mxu0 0.0
      %4242 = vmatpush.msra.mxu0 0.0
      %4243 = vmatpush.msra.mxu0 0.0
      %4244 = vmatpush.msra.mxu0 0.0
      %4245 = vmatpush.msra.mxu0 0.0
      %v4246 = vand.u32 %v3683, 4294901760
      %v4247 = vsub.f32 %v3683, %v4246
      %4248 = vmatpush.msra.mxu0 %v4247
      %v4249 = vand.u32 %v4072, 4294901760
      %v4250 = vsub.f32 %v4072, %v4249
      %4251 = vmatmul.f32.gmra.mxu0 %v4250
      %v4252 = vpop.f32.mrf.mxu0
      %v4253 = vadd.f32 %v4201, %v4252
      %v4254 = vand.u32 %v4075, 4294901760
      %v4255 = vsub.f32 %v4075, %v4254
      %4256 = vmatmul.f32.gmra.mxu0 %v4255
      %v4257 = vpop.f32.mrf.mxu0
      %v4258 = vadd.f32 %v4205, %v4257
      %v4259 = vand.u32 %v4078, 4294901760
      %v4260 = vsub.f32 %v4078, %v4259
      %4261 = vmatmul.f32.gmra.mxu0 %v4260
      %v4262 = vpop.f32.mrf.mxu0
      %v4263 = vadd.f32 %v4209, %v4262
      %v4264 = vand.u32 %v4081, 4294901760
      %v4265 = vsub.f32 %v4081, %v4264
      %4266 = vmatmul.f32.gmra.mxu0 %v4265
      %v4267 = vpop.f32.mrf.mxu0
      %v4268 = vadd.f32 %v4213, %v4267
      %v4269 = vand.u32 %v4084, 4294901760
      %v4270 = vsub.f32 %v4084, %v4269
      %4271 = vmatmul.f32.gmra.mxu0 %v4270
      %v4272 = vpop.f32.mrf.mxu0
      %v4273 = vadd.f32 %v4217, %v4272
      %v4274 = vand.u32 %v4087, 4294901760
      %v4275 = vsub.f32 %v4087, %v4274
      %4276 = vmatmul.f32.gmra.mxu0 %v4275
      %v4277 = vpop.f32.mrf.mxu0
      %v4278 = vadd.f32 %v4221, %v4277
      %v4279 = vand.u32 %v4090, 4294901760
      %v4280 = vsub.f32 %v4090, %v4279
      %4281 = vmatmul.f32.gmra.mxu0 %v4280
      %v4282 = vpop.f32.mrf.mxu0
      %v4283 = vadd.f32 %v4225, %v4282
      %v4284 = vand.u32 %v4093, 4294901760
      %v4285 = vsub.f32 %v4093, %v4284
      %4286 = vmatmul.f32.gmra.mxu0 %v4285
      %v4287 = vpop.f32.mrf.mxu0
      %v4288 = vadd.f32 %v4229, %v4287
      %4289 = vdwg.mxu0
      %4290 = vmatpush.msra.mxu0 0.0
      %4291 = vmatpush.msra.mxu0 0.0
      %4292 = vmatpush.msra.mxu0 0.0
      %4293 = vmatpush.msra.mxu0 0.0
      %4294 = vmatpush.msra.mxu0 0.0
      %4295 = vmatpush.msra.mxu0 0.0
      %4296 = vmatpush.msra.mxu0 0.0
      %4297 = vmatpush.msra.mxu0 0.0
      %4298 = vmatpush.msra.mxu0 0.0
      %4299 = vmatpush.msra.mxu0 0.0
      %4300 = vmatpush.msra.mxu0 0.0
      %4301 = vmatpush.msra.mxu0 0.0
      %4302 = vmatpush.msra.mxu0 0.0
      %4303 = vmatpush.msra.mxu0 0.0
      %4304 = vmatpush.msra.mxu0 0.0
      %v4305 = vand.u32 %v3683, 4294901760
      %4306 = vmatpush.msra.mxu0 %v4305
      %v4307 = vand.u32 %v4072, 4294901760
      %v4308 = vsub.f32 %v4072, %v4307
      %v4309 = vand.u32 %v4308, 4294901760
      %4310 = vmatmul.f32.gmra.mxu0 %v4309
      %v4311 = vpop.f32.mrf.mxu0
      %v4312 = vadd.f32 %v4253, %v4311
      %v4313 = vand.u32 %v4075, 4294901760
      %v4314 = vsub.f32 %v4075, %v4313
      %v4315 = vand.u32 %v4314, 4294901760
      %4316 = vmatmul.f32.gmra.mxu0 %v4315
      %v4317 = vpop.f32.mrf.mxu0
      %v4318 = vadd.f32 %v4258, %v4317
      %v4319 = vand.u32 %v4078, 4294901760
      %v4320 = vsub.f32 %v4078, %v4319
      %v4321 = vand.u32 %v4320, 4294901760
      %4322 = vmatmul.f32.gmra.mxu0 %v4321
      %v4323 = vpop.f32.mrf.mxu0
      %v4324 = vadd.f32 %v4263, %v4323
      %v4325 = vand.u32 %v4081, 4294901760
      %v4326 = vsub.f32 %v4081, %v4325
      %v4327 = vand.u32 %v4326, 4294901760
      %4328 = vmatmul.f32.gmra.mxu0 %v4327
      %v4329 = vpop.f32.mrf.mxu0
      %v4330 = vadd.f32 %v4268, %v4329
      %v4331 = vand.u32 %v4084, 4294901760
      %v4332 = vsub.f32 %v4084, %v4331
      %v4333 = vand.u32 %v4332, 4294901760
      %4334 = vmatmul.f32.gmra.mxu0 %v4333
      %v4335 = vpop.f32.mrf.mxu0
      %v4336 = vadd.f32 %v4273, %v4335
      %v4337 = vand.u32 %v4087, 4294901760
      %v4338 = vsub.f32 %v4087, %v4337
      %v4339 = vand.u32 %v4338, 4294901760
      %4340 = vmatmul.f32.gmra.mxu0 %v4339
      %v4341 = vpop.f32.mrf.mxu0
      %v4342 = vadd.f32 %v4278, %v4341
      %v4343 = vand.u32 %v4090, 4294901760
      %v4344 = vsub.f32 %v4090, %v4343
      %v4345 = vand.u32 %v4344, 4294901760
      %4346 = vmatmul.f32.gmra.mxu0 %v4345
      %v4347 = vpop.f32.mrf.mxu0
      %v4348 = vadd.f32 %v4283, %v4347
      %v4349 = vand.u32 %v4093, 4294901760
      %v4350 = vsub.f32 %v4093, %v4349
      %v4351 = vand.u32 %v4350, 4294901760
      %4352 = vmatmul.f32.gmra.mxu0 %v4351
      %v4353 = vpop.f32.mrf.mxu0
      %v4354 = vadd.f32 %v4288, %v4353
      %4355 = vdwg.mxu0
      %4356 = vmatpush.msra.mxu0 0.0
      %4357 = vmatpush.msra.mxu0 0.0
      %4358 = vmatpush.msra.mxu0 0.0
      %4359 = vmatpush.msra.mxu0 0.0
      %4360 = vmatpush.msra.mxu0 0.0
      %4361 = vmatpush.msra.mxu0 0.0
      %4362 = vmatpush.msra.mxu0 0.0
      %4363 = vmatpush.msra.mxu0 0.0
      %4364 = vmatpush.msra.mxu0 0.0
      %4365 = vmatpush.msra.mxu0 0.0
      %4366 = vmatpush.msra.mxu0 0.0
      %4367 = vmatpush.msra.mxu0 0.0
      %4368 = vmatpush.msra.mxu0 0.0
      %4369 = vmatpush.msra.mxu0 0.0
      %4370 = vmatpush.msra.mxu0 0.0
      %v4371 = vand.u32 %v3683, 4294901760
      %v4372 = vsub.f32 %v3683, %v4371
      %v4373 = vand.u32 %v4372, 4294901760
      %4374 = vmatpush.msra.mxu0 %v4373
      %v4375 = vand.u32 %v4072, 4294901760
      %4376 = vmatmul.f32.gmra.mxu0 %v4375
      %v4377 = vpop.f32.mrf.mxu0
      %v4378 = vadd.f32 %v4312, %v4377
      %v4379 = vand.u32 %v4075, 4294901760
      %4380 = vmatmul.f32.gmra.mxu0 %v4379
      %v4381 = vpop.f32.mrf.mxu0
      %v4382 = vadd.f32 %v4318, %v4381
      %v4383 = vand.u32 %v4078, 4294901760
      %4384 = vmatmul.f32.gmra.mxu0 %v4383
      %v4385 = vpop.f32.mrf.mxu0
      %v4386 = vadd.f32 %v4324, %v4385
      %v4387 = vand.u32 %v4081, 4294901760
      %4388 = vmatmul.f32.gmra.mxu0 %v4387
      %v4389 = vpop.f32.mrf.mxu0
      %v4390 = vadd.f32 %v4330, %v4389
      %v4391 = vand.u32 %v4084, 4294901760
      %4392 = vmatmul.f32.gmra.mxu0 %v4391
      %v4393 = vpop.f32.mrf.mxu0
      %v4394 = vadd.f32 %v4336, %v4393
      %v4395 = vand.u32 %v4087, 4294901760
      %4396 = vmatmul.f32.gmra.mxu0 %v4395
      %v4397 = vpop.f32.mrf.mxu0
      %v4398 = vadd.f32 %v4342, %v4397
      %v4399 = vand.u32 %v4090, 4294901760
      %4400 = vmatmul.f32.gmra.mxu0 %v4399
      %v4401 = vpop.f32.mrf.mxu0
      %v4402 = vadd.f32 %v4348, %v4401
      %v4403 = vand.u32 %v4093, 4294901760
      %4404 = vmatmul.f32.gmra.mxu0 %v4403
      %v4405 = vpop.f32.mrf.mxu0
      %v4406 = vadd.f32 %v4354, %v4405
      %4407 = vdwg.mxu0
      %4408 = vmatpush.msra.mxu0 0.0
      %4409 = vmatpush.msra.mxu0 0.0
      %4410 = vmatpush.msra.mxu0 0.0
      %4411 = vmatpush.msra.mxu0 0.0
      %4412 = vmatpush.msra.mxu0 0.0
      %4413 = vmatpush.msra.mxu0 0.0
      %4414 = vmatpush.msra.mxu0 0.0
      %4415 = vmatpush.msra.mxu0 0.0
      %4416 = vmatpush.msra.mxu0 0.0
      %4417 = vmatpush.msra.mxu0 0.0
      %4418 = vmatpush.msra.mxu0 0.0
      %4419 = vmatpush.msra.mxu0 0.0
      %4420 = vmatpush.msra.mxu0 0.0
      %4421 = vmatpush.msra.mxu0 0.0
      %4422 = vmatpush.msra.mxu0 0.0
      %v4423 = vand.u32 %v3683, 4294901760
      %4424 = vmatpush.msra.mxu0 %v4423
      %v4425 = vand.u32 %v4072, 4294901760
      %4426 = vmatmul.f32.gmra.mxu0 %v4425
      %v4427 = vpop.f32.mrf.mxu0
      %v4428 = vadd.f32 %v4378, %v4427
      %v4429 = vand.u32 %v4075, 4294901760
      %4430 = vmatmul.f32.gmra.mxu0 %v4429
      %v4431 = vpop.f32.mrf.mxu0
      %v4432 = vadd.f32 %v4382, %v4431
      %v4433 = vand.u32 %v4078, 4294901760
      %4434 = vmatmul.f32.gmra.mxu0 %v4433
      %v4435 = vpop.f32.mrf.mxu0
      %v4436 = vadd.f32 %v4386, %v4435
      %v4437 = vand.u32 %v4081, 4294901760
      %4438 = vmatmul.f32.gmra.mxu0 %v4437
      %v4439 = vpop.f32.mrf.mxu0
      %v4440 = vadd.f32 %v4390, %v4439
      %v4441 = vand.u32 %v4084, 4294901760
      %4442 = vmatmul.f32.gmra.mxu0 %v4441
      %v4443 = vpop.f32.mrf.mxu0
      %v4444 = vadd.f32 %v4394, %v4443
      %v4445 = vand.u32 %v4087, 4294901760
      %4446 = vmatmul.f32.gmra.mxu0 %v4445
      %v4447 = vpop.f32.mrf.mxu0
      %v4448 = vadd.f32 %v4398, %v4447
      %v4449 = vand.u32 %v4090, 4294901760
      %4450 = vmatmul.f32.gmra.mxu0 %v4449
      %v4451 = vpop.f32.mrf.mxu0
      %v4452 = vadd.f32 %v4402, %v4451
      %v4453 = vand.u32 %v4093, 4294901760
      %4454 = vmatmul.f32.gmra.mxu0 %v4453
      %v4455 = vpop.f32.mrf.mxu0
      %v4456 = vadd.f32 %v4406, %v4455
      %4457 = vdwg.mxu0
      %v4458 = vmul.f32 %v4041, %v2238
      %v4459 = vmul.f32 %v4045, %v2238
      %v4460 = vmul.f32 %v4049, %v2238
      %v4461 = vmul.f32 %v4053, %v2238
      %v4462 = vmul.f32 %v4057, %v2238
      %v4463 = vmul.f32 %v4061, %v2238
      %v4464 = vmul.f32 %v4065, %v2238
      %v4465 = vmul.f32 %v4069, %v2238
      %v4466 = vmul.f32 %v4428, %v1648
      %v4467 = vmul.f32 %v4432, %v1652
      %v4468 = vmul.f32 %v4436, %v1656
      %v4469 = vmul.f32 %v4440, %v1660
      %v4470 = vmul.f32 %v4444, %v1664
      %v4471 = vmul.f32 %v4448, %v1668
      %v4472 = vmul.f32 %v4452, %v1672
      %v4473 = vmul.f32 %v4456, %v1676
      %v4474 = vadd.f32 %v4458, %v4466
      %v4475 = vadd.f32 %v4459, %v4467
      %v4476 = vadd.f32 %v4460, %v4468
      %v4477 = vadd.f32 %v4461, %v4469
      %v4478 = vadd.f32 %v4462, %v4470
      %v4479 = vadd.f32 %v4463, %v4471
      %v4480 = vadd.f32 %v4464, %v4472
      %v4481 = vadd.f32 %v4465, %v4473
      %v4482 = vrot.slane %v4474, 4
      %v4483 = vadd.f32 %v4474, %v4482
      %v4484 = vrot.slane %v4483, 2
      %v4485 = vadd.f32 %v4483, %v4484
      %v4486 = vrot.slane %v4485, 1
      %v4487 = vadd.f32 %v4485, %v4486
      %v4488 = vrot.slane %v4475, 4
      %v4489 = vadd.f32 %v4475, %v4488
      %v4490 = vrot.slane %v4489, 2
      %v4491 = vadd.f32 %v4489, %v4490
      %v4492 = vrot.slane %v4491, 1
      %v4493 = vadd.f32 %v4491, %v4492
      %v4494 = vrot.slane %v4476, 4
      %v4495 = vadd.f32 %v4476, %v4494
      %v4496 = vrot.slane %v4495, 2
      %v4497 = vadd.f32 %v4495, %v4496
      %v4498 = vrot.slane %v4497, 1
      %v4499 = vadd.f32 %v4497, %v4498
      %v4500 = vrot.slane %v4477, 4
      %v4501 = vadd.f32 %v4477, %v4500
      %v4502 = vrot.slane %v4501, 2
      %v4503 = vadd.f32 %v4501, %v4502
      %v4504 = vrot.slane %v4503, 1
      %v4505 = vadd.f32 %v4503, %v4504
      %v4506 = vrot.slane %v4478, 4
      %v4507 = vadd.f32 %v4478, %v4506
      %v4508 = vrot.slane %v4507, 2
      %v4509 = vadd.f32 %v4507, %v4508
      %v4510 = vrot.slane %v4509, 1
      %v4511 = vadd.f32 %v4509, %v4510
      %v4512 = vrot.slane %v4479, 4
      %v4513 = vadd.f32 %v4479, %v4512
      %v4514 = vrot.slane %v4513, 2
      %v4515 = vadd.f32 %v4513, %v4514
      %v4516 = vrot.slane %v4515, 1
      %v4517 = vadd.f32 %v4515, %v4516
      %v4518 = vrot.slane %v4480, 4
      %v4519 = vadd.f32 %v4480, %v4518
      %v4520 = vrot.slane %v4519, 2
      %v4521 = vadd.f32 %v4519, %v4520
      %v4522 = vrot.slane %v4521, 1
      %v4523 = vadd.f32 %v4521, %v4522
      %v4524 = vrot.slane %v4481, 4
      %v4525 = vadd.f32 %v4481, %v4524
      %v4526 = vrot.slane %v4525, 2
      %v4527 = vadd.f32 %v4525, %v4526
      %v4528 = vrot.slane %v4527, 1
      %v4529 = vadd.f32 %v4527, %v4528
      %v4530 = vld [vmem:[%s10] sm:$0xff]
      %v4531 = vld [vmem:[%s10 + $0x8] sm:$0xff]
      %v4532 = vld [vmem:[%s10 + $0x10] sm:$0xff]
      %v4533 = vld [vmem:[%s10 + $0x18] sm:$0xff]
      %v4534 = vld [vmem:[%s10 + $0x20] sm:$0xff]
      %v4535 = vld [vmem:[%s10 + $0x28] sm:$0xff]
      %v4536 = vld [vmem:[%s10 + $0x30] sm:$0xff]
      %v4537 = vld [vmem:[%s10 + $0x38] sm:$0xff]
      %v4538 = vld [vmem:[%s10 + $0x40] sm:$0xff]
      %v4539 = vld [vmem:[%s10 + $0x48] sm:$0xff]
      %v4540 = vld [vmem:[%s10 + $0x50] sm:$0xff]
      %v4541 = vld [vmem:[%s10 + $0x58] sm:$0xff]
      %v4542 = vld [vmem:[%s10 + $0x60] sm:$0xff]
      %v4543 = vld [vmem:[%s10 + $0x68] sm:$0xff]
      %v4544 = vld [vmem:[%s10 + $0x70] sm:$0xff]
      %v4545 = vld [vmem:[%s10 + $0x78] sm:$0xff]
      %v4546 = vld [vmem:[%s11] sm:$0x1]
      %v4548 = vperm.slane %v4546, 0
      %vm4558 = vcmask 1041409
      %v4559 = vsel %vm4558, %v4493, %v4487
      %vm4560 = vcmask 1042434
      %v4561 = vsel %vm4560, %v4499, %v4559
      %vm4562 = vcmask 1043459
      %v4563 = vsel %vm4562, %v4505, %v4561
      %vm4564 = vcmask 1044484
      %v4565 = vsel %vm4564, %v4511, %v4563
      %vm4566 = vcmask 1045509
      %v4567 = vsel %vm4566, %v4517, %v4565
      %vm4568 = vcmask 1046534
      %v4569 = vsel %vm4568, %v4523, %v4567
      %vm4570 = vcmask 1047559
      %v4571 = vsel %vm4570, %v4529, %v4569
      %v4573 = vand.u32 %v4545, 4294901760
      %4574 = vmatpush.msra.mxu0 %v4573
      %v4575 = vand.u32 %v4544, 4294901760
      %4576 = vmatpush.msra.mxu0 %v4575
      %v4577 = vand.u32 %v4543, 4294901760
      %4578 = vmatpush.msra.mxu0 %v4577
      %v4579 = vand.u32 %v4542, 4294901760
      %4580 = vmatpush.msra.mxu0 %v4579
      %v4581 = vand.u32 %v4541, 4294901760
      %4582 = vmatpush.msra.mxu0 %v4581
      %v4583 = vand.u32 %v4540, 4294901760
      %4584 = vmatpush.msra.mxu0 %v4583
      %v4585 = vand.u32 %v4539, 4294901760
      %4586 = vmatpush.msra.mxu0 %v4585
      %v4587 = vand.u32 %v4538, 4294901760
      %4588 = vmatpush.msra.mxu0 %v4587
      %v4589 = vand.u32 %v4537, 4294901760
      %4590 = vmatpush.msra.mxu0 %v4589
      %v4591 = vand.u32 %v4536, 4294901760
      %4592 = vmatpush.msra.mxu0 %v4591
      %v4593 = vand.u32 %v4535, 4294901760
      %4594 = vmatpush.msra.mxu0 %v4593
      %v4595 = vand.u32 %v4534, 4294901760
      %4596 = vmatpush.msra.mxu0 %v4595
      %v4597 = vand.u32 %v4533, 4294901760
      %4598 = vmatpush.msra.mxu0 %v4597
      %v4599 = vand.u32 %v4532, 4294901760
      %4600 = vmatpush.msra.mxu0 %v4599
      %v4601 = vand.u32 %v4531, 4294901760
      %4602 = vmatpush.msra.mxu0 %v4601
      %v4603 = vand.u32 %v4530, 4294901760
      %4604 = vmatpush.msra.mxu0 %v4603
      %v4605 = vand.u32 %v4571, 4294901760
      %v4606 = vsub.f32 %v4571, %v4605
      %v4607 = vand.u32 %v4606, 4294901760
      %v4608 = vsub.f32 %v4606, %v4607
      %v4609 = vand.u32 %v4608, 4294901760
      %4610 = vmatmul.f32.gmra.mxu0 %v4609
      %v4611 = vpop.f32.mrf.mxu0
      %v4612 = vadd.f32 %v4548, %v4611
      %4613 = vdwg.mxu0
      %v4614 = vand.u32 %v4545, 4294901760
      %v4615 = vsub.f32 %v4545, %v4614
      %v4616 = vand.u32 %v4615, 4294901760
      %v4617 = vsub.f32 %v4615, %v4616
      %v4618 = vand.u32 %v4617, 4294901760
      %4619 = vmatpush.msra.mxu0 %v4618
      %v4620 = vand.u32 %v4544, 4294901760
      %v4621 = vsub.f32 %v4544, %v4620
      %v4622 = vand.u32 %v4621, 4294901760
      %v4623 = vsub.f32 %v4621, %v4622
      %v4624 = vand.u32 %v4623, 4294901760
      %4625 = vmatpush.msra.mxu0 %v4624
      %v4626 = vand.u32 %v4543, 4294901760
      %v4627 = vsub.f32 %v4543, %v4626
      %v4628 = vand.u32 %v4627, 4294901760
      %v4629 = vsub.f32 %v4627, %v4628
      %v4630 = vand.u32 %v4629, 4294901760
      %4631 = vmatpush.msra.mxu0 %v4630
      %v4632 = vand.u32 %v4542, 4294901760
      %v4633 = vsub.f32 %v4542, %v4632
      %v4634 = vand.u32 %v4633, 4294901760
      %v4635 = vsub.f32 %v4633, %v4634
      %v4636 = vand.u32 %v4635, 4294901760
      %4637 = vmatpush.msra.mxu0 %v4636
      %v4638 = vand.u32 %v4541, 4294901760
      %v4639 = vsub.f32 %v4541, %v4638
      %v4640 = vand.u32 %v4639, 4294901760
      %v4641 = vsub.f32 %v4639, %v4640
      %v4642 = vand.u32 %v4641, 4294901760
      %4643 = vmatpush.msra.mxu0 %v4642
      %v4644 = vand.u32 %v4540, 4294901760
      %v4645 = vsub.f32 %v4540, %v4644
      %v4646 = vand.u32 %v4645, 4294901760
      %v4647 = vsub.f32 %v4645, %v4646
      %v4648 = vand.u32 %v4647, 4294901760
      %4649 = vmatpush.msra.mxu0 %v4648
      %v4650 = vand.u32 %v4539, 4294901760
      %v4651 = vsub.f32 %v4539, %v4650
      %v4652 = vand.u32 %v4651, 4294901760
      %v4653 = vsub.f32 %v4651, %v4652
      %v4654 = vand.u32 %v4653, 4294901760
      %4655 = vmatpush.msra.mxu0 %v4654
      %v4656 = vand.u32 %v4538, 4294901760
      %v4657 = vsub.f32 %v4538, %v4656
      %v4658 = vand.u32 %v4657, 4294901760
      %v4659 = vsub.f32 %v4657, %v4658
      %v4660 = vand.u32 %v4659, 4294901760
      %4661 = vmatpush.msra.mxu0 %v4660
      %v4662 = vand.u32 %v4537, 4294901760
      %v4663 = vsub.f32 %v4537, %v4662
      %v4664 = vand.u32 %v4663, 4294901760
      %v4665 = vsub.f32 %v4663, %v4664
      %v4666 = vand.u32 %v4665, 4294901760
      %4667 = vmatpush.msra.mxu0 %v4666
      %v4668 = vand.u32 %v4536, 4294901760
      %v4669 = vsub.f32 %v4536, %v4668
      %v4670 = vand.u32 %v4669, 4294901760
      %v4671 = vsub.f32 %v4669, %v4670
      %v4672 = vand.u32 %v4671, 4294901760
      %4673 = vmatpush.msra.mxu0 %v4672
      %v4674 = vand.u32 %v4535, 4294901760
      %v4675 = vsub.f32 %v4535, %v4674
      %v4676 = vand.u32 %v4675, 4294901760
      %v4677 = vsub.f32 %v4675, %v4676
      %v4678 = vand.u32 %v4677, 4294901760
      %4679 = vmatpush.msra.mxu0 %v4678
      %v4680 = vand.u32 %v4534, 4294901760
      %v4681 = vsub.f32 %v4534, %v4680
      %v4682 = vand.u32 %v4681, 4294901760
      %v4683 = vsub.f32 %v4681, %v4682
      %v4684 = vand.u32 %v4683, 4294901760
      %4685 = vmatpush.msra.mxu0 %v4684
      %v4686 = vand.u32 %v4533, 4294901760
      %v4687 = vsub.f32 %v4533, %v4686
      %v4688 = vand.u32 %v4687, 4294901760
      %v4689 = vsub.f32 %v4687, %v4688
      %v4690 = vand.u32 %v4689, 4294901760
      %4691 = vmatpush.msra.mxu0 %v4690
      %v4692 = vand.u32 %v4532, 4294901760
      %v4693 = vsub.f32 %v4532, %v4692
      %v4694 = vand.u32 %v4693, 4294901760
      %v4695 = vsub.f32 %v4693, %v4694
      %v4696 = vand.u32 %v4695, 4294901760
      %4697 = vmatpush.msra.mxu0 %v4696
      %v4698 = vand.u32 %v4531, 4294901760
      %v4699 = vsub.f32 %v4531, %v4698
      %v4700 = vand.u32 %v4699, 4294901760
      %v4701 = vsub.f32 %v4699, %v4700
      %v4702 = vand.u32 %v4701, 4294901760
      %4703 = vmatpush.msra.mxu0 %v4702
      %v4704 = vand.u32 %v4530, 4294901760
      %v4705 = vsub.f32 %v4530, %v4704
      %v4706 = vand.u32 %v4705, 4294901760
      %v4707 = vsub.f32 %v4705, %v4706
      %v4708 = vand.u32 %v4707, 4294901760
      %4709 = vmatpush.msra.mxu0 %v4708
      %v4710 = vand.u32 %v4571, 4294901760
      %4711 = vmatmul.f32.gmra.mxu0 %v4710
      %v4712 = vpop.f32.mrf.mxu0
      %v4713 = vadd.f32 %v4612, %v4712
      %4714 = vdwg.mxu0
      %v4715 = vand.u32 %v4545, 4294901760
      %v4716 = vsub.f32 %v4545, %v4715
      %4717 = vmatpush.msra.mxu0 %v4716
      %v4718 = vand.u32 %v4544, 4294901760
      %v4719 = vsub.f32 %v4544, %v4718
      %4720 = vmatpush.msra.mxu0 %v4719
      %v4721 = vand.u32 %v4543, 4294901760
      %v4722 = vsub.f32 %v4543, %v4721
      %4723 = vmatpush.msra.mxu0 %v4722
      %v4724 = vand.u32 %v4542, 4294901760
      %v4725 = vsub.f32 %v4542, %v4724
      %4726 = vmatpush.msra.mxu0 %v4725
      %v4727 = vand.u32 %v4541, 4294901760
      %v4728 = vsub.f32 %v4541, %v4727
      %4729 = vmatpush.msra.mxu0 %v4728
      %v4730 = vand.u32 %v4540, 4294901760
      %v4731 = vsub.f32 %v4540, %v4730
      %4732 = vmatpush.msra.mxu0 %v4731
      %v4733 = vand.u32 %v4539, 4294901760
      %v4734 = vsub.f32 %v4539, %v4733
      %4735 = vmatpush.msra.mxu0 %v4734
      %v4736 = vand.u32 %v4538, 4294901760
      %v4737 = vsub.f32 %v4538, %v4736
      %4738 = vmatpush.msra.mxu0 %v4737
      %v4739 = vand.u32 %v4537, 4294901760
      %v4740 = vsub.f32 %v4537, %v4739
      %4741 = vmatpush.msra.mxu0 %v4740
      %v4742 = vand.u32 %v4536, 4294901760
      %v4743 = vsub.f32 %v4536, %v4742
      %4744 = vmatpush.msra.mxu0 %v4743
      %v4745 = vand.u32 %v4535, 4294901760
      %v4746 = vsub.f32 %v4535, %v4745
      %4747 = vmatpush.msra.mxu0 %v4746
      %v4748 = vand.u32 %v4534, 4294901760
      %v4749 = vsub.f32 %v4534, %v4748
      %4750 = vmatpush.msra.mxu0 %v4749
      %v4751 = vand.u32 %v4533, 4294901760
      %v4752 = vsub.f32 %v4533, %v4751
      %4753 = vmatpush.msra.mxu0 %v4752
      %v4754 = vand.u32 %v4532, 4294901760
      %v4755 = vsub.f32 %v4532, %v4754
      %4756 = vmatpush.msra.mxu0 %v4755
      %v4757 = vand.u32 %v4531, 4294901760
      %v4758 = vsub.f32 %v4531, %v4757
      %4759 = vmatpush.msra.mxu0 %v4758
      %v4760 = vand.u32 %v4530, 4294901760
      %v4761 = vsub.f32 %v4530, %v4760
      %4762 = vmatpush.msra.mxu0 %v4761
      %v4763 = vand.u32 %v4571, 4294901760
      %v4764 = vsub.f32 %v4571, %v4763
      %4765 = vmatmul.f32.gmra.mxu0 %v4764
      %v4766 = vpop.f32.mrf.mxu0
      %v4767 = vadd.f32 %v4713, %v4766
      %4768 = vdwg.mxu0
      %v4769 = vand.u32 %v4545, 4294901760
      %4770 = vmatpush.msra.mxu0 %v4769
      %v4771 = vand.u32 %v4544, 4294901760
      %4772 = vmatpush.msra.mxu0 %v4771
      %v4773 = vand.u32 %v4543, 4294901760
      %4774 = vmatpush.msra.mxu0 %v4773
      %v4775 = vand.u32 %v4542, 4294901760
      %4776 = vmatpush.msra.mxu0 %v4775
      %v4777 = vand.u32 %v4541, 4294901760
      %4778 = vmatpush.msra.mxu0 %v4777
      %v4779 = vand.u32 %v4540, 4294901760
      %4780 = vmatpush.msra.mxu0 %v4779
      %v4781 = vand.u32 %v4539, 4294901760
      %4782 = vmatpush.msra.mxu0 %v4781
      %v4783 = vand.u32 %v4538, 4294901760
      %4784 = vmatpush.msra.mxu0 %v4783
      %v4785 = vand.u32 %v4537, 4294901760
      %4786 = vmatpush.msra.mxu0 %v4785
      %v4787 = vand.u32 %v4536, 4294901760
      %4788 = vmatpush.msra.mxu0 %v4787
      %v4789 = vand.u32 %v4535, 4294901760
      %4790 = vmatpush.msra.mxu0 %v4789
      %v4791 = vand.u32 %v4534, 4294901760
      %4792 = vmatpush.msra.mxu0 %v4791
      %v4793 = vand.u32 %v4533, 4294901760
      %4794 = vmatpush.msra.mxu0 %v4793
      %v4795 = vand.u32 %v4532, 4294901760
      %4796 = vmatpush.msra.mxu0 %v4795
      %v4797 = vand.u32 %v4531, 4294901760
      %4798 = vmatpush.msra.mxu0 %v4797
      %v4799 = vand.u32 %v4530, 4294901760
      %4800 = vmatpush.msra.mxu0 %v4799
      %v4801 = vand.u32 %v4571, 4294901760
      %v4802 = vsub.f32 %v4571, %v4801
      %v4803 = vand.u32 %v4802, 4294901760
      %4804 = vmatmul.f32.gmra.mxu0 %v4803
      %v4805 = vpop.f32.mrf.mxu0
      %v4806 = vadd.f32 %v4767, %v4805
      %4807 = vdwg.mxu0
      %v4808 = vand.u32 %v4545, 4294901760
      %v4809 = vsub.f32 %v4545, %v4808
      %v4810 = vand.u32 %v4809, 4294901760
      %4811 = vmatpush.msra.mxu0 %v4810
      %v4812 = vand.u32 %v4544, 4294901760
      %v4813 = vsub.f32 %v4544, %v4812
      %v4814 = vand.u32 %v4813, 4294901760
      %4815 = vmatpush.msra.mxu0 %v4814
      %v4816 = vand.u32 %v4543, 4294901760
      %v4817 = vsub.f32 %v4543, %v4816
      %v4818 = vand.u32 %v4817, 4294901760
      %4819 = vmatpush.msra.mxu0 %v4818
      %v4820 = vand.u32 %v4542, 4294901760
      %v4821 = vsub.f32 %v4542, %v4820
      %v4822 = vand.u32 %v4821, 4294901760
      %4823 = vmatpush.msra.mxu0 %v4822
      %v4824 = vand.u32 %v4541, 4294901760
      %v4825 = vsub.f32 %v4541, %v4824
      %v4826 = vand.u32 %v4825, 4294901760
      %4827 = vmatpush.msra.mxu0 %v4826
      %v4828 = vand.u32 %v4540, 4294901760
      %v4829 = vsub.f32 %v4540, %v4828
      %v4830 = vand.u32 %v4829, 4294901760
      %4831 = vmatpush.msra.mxu0 %v4830
      %v4832 = vand.u32 %v4539, 4294901760
      %v4833 = vsub.f32 %v4539, %v4832
      %v4834 = vand.u32 %v4833, 4294901760
      %4835 = vmatpush.msra.mxu0 %v4834
      %v4836 = vand.u32 %v4538, 4294901760
      %v4837 = vsub.f32 %v4538, %v4836
      %v4838 = vand.u32 %v4837, 4294901760
      %4839 = vmatpush.msra.mxu0 %v4838
      %v4840 = vand.u32 %v4537, 4294901760
      %v4841 = vsub.f32 %v4537, %v4840
      %v4842 = vand.u32 %v4841, 4294901760
      %4843 = vmatpush.msra.mxu0 %v4842
      %v4844 = vand.u32 %v4536, 4294901760
      %v4845 = vsub.f32 %v4536, %v4844
      %v4846 = vand.u32 %v4845, 4294901760
      %4847 = vmatpush.msra.mxu0 %v4846
      %v4848 = vand.u32 %v4535, 4294901760
      %v4849 = vsub.f32 %v4535, %v4848
      %v4850 = vand.u32 %v4849, 4294901760
      %4851 = vmatpush.msra.mxu0 %v4850
      %v4852 = vand.u32 %v4534, 4294901760
      %v4853 = vsub.f32 %v4534, %v4852
      %v4854 = vand.u32 %v4853, 4294901760
      %4855 = vmatpush.msra.mxu0 %v4854
      %v4856 = vand.u32 %v4533, 4294901760
      %v4857 = vsub.f32 %v4533, %v4856
      %v4858 = vand.u32 %v4857, 4294901760
      %4859 = vmatpush.msra.mxu0 %v4858
      %v4860 = vand.u32 %v4532, 4294901760
      %v4861 = vsub.f32 %v4532, %v4860
      %v4862 = vand.u32 %v4861, 4294901760
      %4863 = vmatpush.msra.mxu0 %v4862
      %v4864 = vand.u32 %v4531, 4294901760
      %v4865 = vsub.f32 %v4531, %v4864
      %v4866 = vand.u32 %v4865, 4294901760
      %4867 = vmatpush.msra.mxu0 %v4866
      %v4868 = vand.u32 %v4530, 4294901760
      %v4869 = vsub.f32 %v4530, %v4868
      %v4870 = vand.u32 %v4869, 4294901760
      %4871 = vmatpush.msra.mxu0 %v4870
      %v4872 = vand.u32 %v4571, 4294901760
      %4873 = vmatmul.f32.gmra.mxu0 %v4872
      %v4874 = vpop.f32.mrf.mxu0
      %v4875 = vadd.f32 %v4806, %v4874
      %4876 = vdwg.mxu0
      %v4877 = vand.u32 %v4545, 4294901760
      %4878 = vmatpush.msra.mxu0 %v4877
      %v4879 = vand.u32 %v4544, 4294901760
      %4880 = vmatpush.msra.mxu0 %v4879
      %v4881 = vand.u32 %v4543, 4294901760
      %4882 = vmatpush.msra.mxu0 %v4881
      %v4883 = vand.u32 %v4542, 4294901760
      %4884 = vmatpush.msra.mxu0 %v4883
      %v4885 = vand.u32 %v4541, 4294901760
      %4886 = vmatpush.msra.mxu0 %v4885
      %v4887 = vand.u32 %v4540, 4294901760
      %4888 = vmatpush.msra.mxu0 %v4887
      %v4889 = vand.u32 %v4539, 4294901760
      %4890 = vmatpush.msra.mxu0 %v4889
      %v4891 = vand.u32 %v4538, 4294901760
      %4892 = vmatpush.msra.mxu0 %v4891
      %v4893 = vand.u32 %v4537, 4294901760
      %4894 = vmatpush.msra.mxu0 %v4893
      %v4895 = vand.u32 %v4536, 4294901760
      %4896 = vmatpush.msra.mxu0 %v4895
      %v4897 = vand.u32 %v4535, 4294901760
      %4898 = vmatpush.msra.mxu0 %v4897
      %v4899 = vand.u32 %v4534, 4294901760
      %4900 = vmatpush.msra.mxu0 %v4899
      %v4901 = vand.u32 %v4533, 4294901760
      %4902 = vmatpush.msra.mxu0 %v4901
      %v4903 = vand.u32 %v4532, 4294901760
      %4904 = vmatpush.msra.mxu0 %v4903
      %v4905 = vand.u32 %v4531, 4294901760
      %4906 = vmatpush.msra.mxu0 %v4905
      %v4907 = vand.u32 %v4530, 4294901760
      %4908 = vmatpush.msra.mxu0 %v4907
      %v4909 = vand.u32 %v4571, 4294901760
      %4910 = vmatmul.f32.gmra.mxu0 %v4909
      %v4911 = vpop.f32.mrf.mxu0
      %v4912 = vadd.f32 %v4875, %v4911
      %4913 = vdwg.mxu0
      %4914 = vst [vmem:[%s467] sm:$0xff] %v4912
      %p4915 = scmp.lt.s32.totalorder %s27, 1
      %s4916 = scalar_select %p4915, %s27, 1
      %p4917 = scmp.lt.s32.totalorder %s28, 0
      %s4918 = scalar_select %p4917, %s28, 0
      %s4919 = sadd.s32 %s4918, %s4916
      %s4920 = smul.addr %s4919, 8
      %s4921 = scalar_lea.vmem %s12, %s4920
      // Predicated region
      $region69: #{x3d_transformer_layer.4} parent=67 // pred_check
        %p4922 = pneg %p319
      $region70: #{x3d_transformer_layer.4} parent=67 // pred_check_branch
        %4924 = sbr.rel (%p4922) target = $region72
      $region71: #{x3d_transformer_layer.4} parent=67 // pred_region
        _
      $region72: #{x3d_transformer_layer.4} parent=67 // pred_fallthru
        _
    $region68: #{x3d_transformer_layer.4} parent=5 // pred_fallthru
      _
    %p4925 = scmp.le.s32.totalorder 2, %s18
    // Predicated region
    $region73: #{x3d_transformer_layer.4} parent=5 // pred_check
      %p4926 = pneg %p4925
    $region74: #{x3d_transformer_layer.4} parent=5 // pred_check_branch
      %4928 = sbr.rel (%p4926) target = $region76
    $region75: #{x3d_transformer_layer.4} parent=5 // pred_region
      %s4929 = ssub.s32 %s18, 2
      // Predicated region
      $region77: #{x3d_transformer_layer.4} parent=75 // pred_check
        %p4930 = pneg %p325
      $region78: #{x3d_transformer_layer.4} parent=75 // pred_check_branch
        %4932 = sbr.rel (%p4930) target = $region80
      $region79: #{x3d_transformer_layer.4} parent=75 // pred_region
        %p4933 = scmp.lt.s32.totalorder %s29, 1
        %s4934 = scalar_select %p4933, %s29, 1
        %p4935 = scmp.lt.s32.totalorder %s30, 0
        %s4936 = scalar_select %p4935, %s30, 0
        %s4937 = sadd.s32 %s4936, %s4934
        %s4938 = smul.addr %s4937, 8
        %s4939 = scalar_lea.vmem %s12, %s4938
      $region80: #{x3d_transformer_layer.4} parent=75 // pred_fallthru
        _
    $region76: #{x3d_transformer_layer.4} parent=5 // pred_fallthru
      _
  $region6: #{x3d_transformer_layer.4} parent=0 // loop_footer
    %s22 = sadd.s32 1, %s18
  $region7: #{x3d_transformer_layer.4} parent=0 // loop_footer_branch
    %17 = sbr.rel target = $region3
  $region8: #{x3d_transformer_layer.4} parent=0 // loop_exit
    _

</llo_original>
